<compile_context>
chip_gen: v5e
topology: v5e:2x2
jax: 0.10.0
libtpu: 0.0.40
codegen_flags: <defaults>
</compile_context>

<pallas_src>
import functools
import math

import jax
import jax.numpy as jnp
import numpy as np
from jax.experimental import pallas as pl
from jax.experimental.pallas import tpu as pltpu

LRELU_SLOPE = 0.2
_VMEM_LIMIT = 32 * 1024 * 1024


def _round_up(x, m):
    return (x + m - 1) // m * m


def _sigmoid(x):
    # overflow-safe sigmoid (single exp -> EUP slot)
    z = jnp.exp(-jnp.abs(x))
    return jnp.where(x >= 0, 1.0 / (1.0 + z), z / (1.0 + z))


def _lrelu(x):
    return jnp.where(x >= 0, x, LRELU_SLOPE * x)


# ---------------------------------------------------------------------------
# Tiled matmul kernel with fused epilogues
#   out[b, co, m] = epilogue( sum_k w[co, k] * x[b, k, m] )
# ---------------------------------------------------------------------------
def _mm_kernel(*refs, has_bias, has_aux, act, epi, post_act, gate_halves):
    w_ref, x_ref = refs[0], refs[1]
    i = 2
    bias_ref = aux_ref = None
    if has_bias:
        bias_ref = refs[i]
        i += 1
    if has_aux:
        aux_ref = refs[i]
        i += 1
    o_ref, acc_ref = refs[i], refs[i + 1]

    k = pl.program_id(2)

    @pl.when(k == 0)
    def _():
        acc_ref[...] = jnp.zeros_like(acc_ref)

    acc_ref[...] += jnp.dot(w_ref[...], x_ref[0],
                            preferred_element_type=jnp.float32)

    @pl.when(k == pl.num_programs(2) - 1)
    def _():
        r = acc_ref[...]
        if has_bias:
            r = r + bias_ref[...]                       # [Co,1] broadcast
        if gate_halves:                                 # PACnv: k3(x)*sigmoid(k2(x))
            half = r.shape[0] // 2
            r = r[:half, :] * _sigmoid(r[half:, :])
        if act == "lrelu":
            r = _lrelu(r)
        elif act == "sigmoid":
            r = _sigmoid(r)
        if has_aux:
            a = aux_ref[0].astype(jnp.float32)
            r = r + a if epi == "add" else r * a
        if post_act == "lrelu":
            r = _lrelu(r)
        o_ref[0] = r.astype(o_ref.dtype)


def matmul_pallas(w, x, bias=None, aux=None, act=None, epi=None,
                  post_act=None, gate_halves=False,
                  out_dtype=jnp.bfloat16, tm_max=512, tk_max=1024):
    """w: [Co, K], x: [B, K, M], bias: [Co]|None, aux: [B, Ro, M]|None.
    Returns [B, Ro, M] with Ro = Co//2 if gate_halves else Co."""
    assert (aux is None) == (epi is None)
    B, K, M = x.shape
    Co = int(w.shape[0])
    Ro = Co // 2 if gate_halves else Co

    # tile selection (small enough for v7x's 64 MiB VMEM incl. double-buffering)
    Mp = _round_up(M, 128)
    TM = min(tm_max, Mp)
    while Mp % TM:
        TM -= 128
    if K <= tk_max:
        Kp = TK = K
    else:
        TK = 512
        Kp = _round_up(K, TK)
    nk = Kp // TK

    w = jnp.asarray(w, jnp.bfloat16)
    x = x.astype(jnp.bfloat16)
    if Kp != K:
        w = jnp.pad(w, ((0, 0), (0, Kp - K)))
        x = jnp.pad(x, ((0, 0), (0, Kp - K), (0, 0)))
    if Mp != M:
        x = jnp.pad(x, ((0, 0), (0, 0), (0, Mp - M)))

    in_specs = [
        pl.BlockSpec((Co, TK), lambda b, mi, ki: (0, ki)),
        pl.BlockSpec((1, TK, TM), lambda b, mi, ki: (b, ki, mi)),
    ]
    operands = [w, x]
    if bias is not None:
        in_specs.append(pl.BlockSpec((Co, 1), lambda b, mi, ki: (0, 0)))
        operands.append(jnp.asarray(bias, jnp.float32).reshape(Co, 1))
    if aux is not None:
        if Mp != M:
            aux = jnp.pad(aux, ((0, 0), (0, 0), (0, Mp - M)))
        in_specs.append(pl.BlockSpec((1, Ro, TM), lambda b, mi, ki: (b, 0, mi)))
        operands.append(aux)

    kern = functools.partial(
        _mm_kernel, has_bias=bias is not None, has_aux=aux is not None,
        act=act, epi=epi, post_act=post_act, gate_halves=gate_halves)

    out = pl.pallas_call(
        kern,
        out_shape=jax.ShapeDtypeStruct((B, Ro, Mp), out_dtype),
        grid=(B, Mp // TM, nk),
        in_specs=in_specs,
        out_specs=pl.BlockSpec((1, Ro, TM), lambda b, mi, ki: (b, 0, mi)),
        scratch_shapes=[pltpu.VMEM((Co, TM), jnp.float32)],
        compiler_params=pltpu.CompilerParams(
            dimension_semantics=("parallel", "parallel", "arbitrary"),
            vmem_limit_bytes=_VMEM_LIMIT),
    )(*operands)
    return out[:, :, :M]


# ---------------------------------------------------------------------------
# Flash-style self-attention (online softmax over the key axis)
#   out[b, c, i] = sum_j softmax_j( f[b,:,i].g[b,:,j] ) * h[b, c, j]
# ---------------------------------------------------------------------------
def _attn_kernel(f_ref, g_ref, h_ref, o_ref, m_ref, l_ref, acc_ref, *,
                 n_valid, tk):
    ki = pl.program_id(2)

    @pl.when(ki == 0)
    def _():
        m_ref[...] = jnp.full_like(m_ref, -1e30)
        l_ref[...] = jnp.zeros_like(l_ref)
        acc_ref[...] = jnp.zeros_like(acc_ref)

    f = f_ref[0]                                  # [C8, TQ] queries on lanes
    g = g_ref[0]                                  # [C8, TK]
    h = h_ref[0]                                  # [C,  TK]
    # s[j, i] = sum_c g[c, j] * f[c, i]
    s = jax.lax.dot_general(g, f, (((0,), (0,)), ((), ())),
                            preferred_element_type=jnp.float32)   # [TK, TQ]
    key_idx = ki * tk + jax.lax.broadcasted_iota(jnp.int32, s.shape, 0)
    s = jnp.where(key_idx < n_valid, s, -1e30)

    m_prev = m_ref[...]
    m_new = jnp.maximum(m_prev, jnp.max(s, axis=0, keepdims=True))  # [1, TQ]
    alpha = jnp.exp(m_prev - m_new)
    p = jnp.exp(s - m_new)                                          # [TK, TQ]
    l_ref[...] = alpha * l_ref[...] + jnp.sum(p, axis=0, keepdims=True)
    acc_ref[...] = alpha * acc_ref[...] + jnp.dot(
        h, p, preferred_element_type=jnp.float32)                   # [C, TQ]
    m_ref[...] = m_new

    @pl.when(ki == pl.num_programs(2) - 1)
    def _():
        o_ref[0] = (acc_ref[...] *
                    pl.reciprocal(l_ref[...], approx=True)).astype(o_ref.dtype)


def attention_pallas(f, g, h):
    B, C8, N = f.shape
    C = h.shape[1]
    if N <= 512:
        Np = N
        TQ = TK = N
    else:
        TQ = TK = 256
        Np = _round_up(N, 256)
        pad = ((0, 0), (0, 0), (0, Np - N))
        f, g, h = jnp.pad(f, pad), jnp.pad(g, pad), jnp.pad(h, pad)

    kern = functools.partial(_attn_kernel, n_valid=N, tk=TK)
    out = pl.pallas_call(
        kern,
        out_shape=jax.ShapeDtypeStruct((B, C, Np), jnp.float32),
        grid=(B, Np // TQ, Np // TK),
        in_specs=[
            pl.BlockSpec((1, C8, TQ), lambda b, qi, ki: (b, 0, qi)),
            pl.BlockSpec((1, C8, TK), lambda b, qi, ki: (b, 0, ki)),
            pl.BlockSpec((1, C, TK), lambda b, qi, ki: (b, 0, ki)),
        ],
        out_specs=pl.BlockSpec((1, C, TQ), lambda b, qi, ki: (b, 0, qi)),
        scratch_shapes=[pltpu.VMEM((1, TQ), jnp.float32),
                        pltpu.VMEM((1, TQ), jnp.float32),
                        pltpu.VMEM((C, TQ), jnp.float32)],
        compiler_params=pltpu.CompilerParams(
            dimension_semantics=("parallel", "parallel", "arbitrary"),
            vmem_limit_bytes=_VMEM_LIMIT),
    )(f.astype(jnp.float32), g.astype(jnp.float32), h.astype(jnp.float32))
    return out[:, :, :N]


# ---------------------------------------------------------------------------
# Tiled elementwise add (only used once: FSA residual)
# ---------------------------------------------------------------------------
def _add_kernel(a_ref, b_ref, o_ref):
    o_ref[...] = (a_ref[...].astype(jnp.float32) +
                  b_ref[...].astype(jnp.float32)).astype(o_ref.dtype)


def add_pallas(a, b, out_dtype=jnp.bfloat16):
    B, C, H, W = a.shape
    R, M = B * C, H * W
    Rp, Mp = _round_up(R, 8), _round_up(M, 128)
    a2 = jnp.pad(a.reshape(R, M), ((0, Rp - R), (0, Mp - M)))
    b2 = jnp.pad(b.reshape(R, M), ((0, Rp - R), (0, Mp - M)))
    TR = Rp if Rp <= 512 else 256
    while Rp % TR:
        TR -= 8
    TM = Mp if Mp <= 1024 else 512
    while Mp % TM:
        TM -= 128
    out = pl.pallas_call(
        _add_kernel,
        out_shape=jax.ShapeDtypeStruct((Rp, Mp), out_dtype),
        grid=(Rp // TR, Mp // TM),
        in_specs=[pl.BlockSpec((TR, TM), lambda i, j: (i, j)),
                  pl.BlockSpec((TR, TM), lambda i, j: (i, j))],
        out_specs=pl.BlockSpec((TR, TM), lambda i, j: (i, j)),
        compiler_params=pltpu.CompilerParams(
            dimension_semantics=("parallel", "parallel"),
            vmem_limit_bytes=_VMEM_LIMIT),
    )(a2, b2)
    return out[:R, :M].reshape(B, C, H, W)


# ---------------------------------------------------------------------------
# Convolutions (stride 1, 'same' padding) through the tiled matmul
# ---------------------------------------------------------------------------
def conv2d(x, w, bias=None, act=None, aux=None, epi=None, post_act=None,
           gate_halves=False, out_dtype=jnp.bfloat16):
    """x: [B, C, H, W], w: [Co, C, kh, kw] -> [B, Ro, H, W]."""
    B, C, H, W = x.shape
    Co, Ci, kh, kw = w.shape
    M = H * W
    if kh == 1 and kw == 1:
        patches = x.reshape(B, C, M)
    else:
        # TODO(synk): fold the kh*kw shifted taps into the matmul's K grid axis
        # (halo-indexed BlockSpec on the padded input) instead of materialising
        # the im2col tensor in HBM.
        pad = (kh - 1) // 2
        xp = jnp.pad(x, ((0, 0), (0, 0), (pad, pad), (pad, pad)))
        taps = [xp[:, :, dy:dy + H, dx:dx + W]
                for dy in range(kh) for dx in range(kw)]
        patches = jnp.stack(taps, axis=2).reshape(B, C * kh * kw, M)
    wm = w.reshape(Co, Ci * kh * kw)
    aux_r = None if aux is None else aux.reshape(B, -1, M)
    out = matmul_pallas(wm, patches, bias, aux_r, act, epi, post_act,
                        gate_halves, out_dtype)
    Ro = Co // 2 if gate_halves else Co
    return out.reshape(B, Ro, H, W)


# ---------------------------------------------------------------------------
# Separable resize (host-built matrices, applied with the tiled matmul)
# ---------------------------------------------------------------------------
def _cubic(x, a=-0.75):
    x = abs(x)
    if x <= 1.0:
        return (a + 2.0) * x ** 3 - (a + 3.0) * x ** 2 + 1.0
    if x < 2.0:
        return a * x ** 3 - 5.0 * a * x ** 2 + 8.0 * a * x - 4.0 * a
    return 0.0


@functools.lru_cache(maxsize=None)
def bicubic_matrix(n_in, n_out):
    # PyTorch bicubic, align_corners=False, A=-0.75, border-clamped.
    scale = n_in / n_out
    M = np.zeros((n_out, n_in), np.float32)
    for o in range(n_out):
        src = (o + 0.5) * scale - 0.5
        fl = math.floor(src)
        t = src - fl
        ws = [_cubic(1.0 + t), _cubic(t), _cubic(1.0 - t), _cubic(2.0 - t)]
        for k, wgt in zip(range(-1, 3), ws):
            idx = min(max(fl + k, 0), n_in - 1)
            M[o, idx] += wgt
    return M


@functools.lru_cache(maxsize=None)
def bilinear_matrix_ac(n_in, n_out):
    # PyTorch bilinear, align_corners=True.
    M = np.zeros((n_out, n_in), np.float32)
    if n_out == 1:
        M[0, 0] = 1.0
    else:
        scale = (n_in - 1) / (n_out - 1)
        for o in range(n_out):
            src = o * scale
            i0 = int(math.floor(src))
            t = src - i0
            i1 = min(i0 + 1, n_in - 1)
            M[o, i0] += 1.0 - t
            M[o, i1] += t
    return M


def resize_separable(x, Mh, Mw):
    # x: [B, C, Hin, Win]; Mh: [Hout, Hin]; Mw: [Wout, Win]
    B, C, Hin, Win = x.shape
    Hout, Wout = Mh.shape[0], Mw.shape[0]
    xh = x.transpose(2, 0, 1, 3).reshape(1, Hin, B * C * Win)
    y = matmul_pallas(Mh, xh, out_dtype=jnp.float32)[0]       # [Hout, B*C*Win]
    y = y.reshape(Hout, B, C, Win).transpose(1, 2, 0, 3)      # [B, C, Hout, Win]
    xw = y.transpose(3, 0, 1, 2).reshape(1, Win, B * C * Hout)
    z = matmul_pallas(Mw, xw, out_dtype=jnp.float32)[0]       # [Wout, B*C*Hout]
    return z.reshape(Wout, B, C, Hout).transpose(1, 2, 3, 0)  # [B, C, Hout, Wout]


# ---------------------------------------------------------------------------
# PAN blocks
# ---------------------------------------------------------------------------
def scpa_forward(p, x):
    gw = p["w1a"].shape[0]
    # conv1_a / conv1_b share the input -> one fused 1x1 matmul (+lrelu)
    w1 = jnp.concatenate([p["w1a"], p["w1b"]], axis=0)          # [2gw, nf, 1, 1]
    ab = conv2d(x, w1, act="lrelu")
    out_a, out_b = ab[:, :gw], ab[:, gw:]
    out_a = conv2d(out_a, p["wk1"], act="lrelu")                # lrelu(k1(.))
    # PACnv: k3(out_b) * sigmoid(k2(out_b)) in ONE matmul — k2 embedded at the
    # centre tap of a 3x3 kernel, gated epilogue does split + sigmoid + mul.
    k2_full = jnp.zeros_like(p["wk3"]).at[:, :, 1, 1].set(p["wk2"][:, :, 0, 0])
    w23 = jnp.concatenate([p["wk3"], k2_full], axis=0)          # [2gw, gw, 3, 3]
    b23 = jnp.concatenate([jnp.zeros((gw,), jnp.float32), p["bk2"]])
    gated = conv2d(out_b, w23, b23, gate_halves=True)
    out_b = conv2d(gated, p["wk4"], act="lrelu")                # lrelu(k4(.))
    # conv3 on the concat with the residual add fused into its epilogue
    return conv2d(jnp.concatenate([out_a, out_b], axis=1), p["w3"],
                  aux=x, epi="add")


def fsa_forward(p, x):
    # SelfAttentionBlock(max_pool=True, poolsize=4, spectral_norm=False)
    B, C, H, W = x.shape
    ps = 4
    pooled = x.reshape(B, C, H // ps, ps, W // ps, ps).max(axis=(3, 5))
    hp, wp = pooled.shape[2], pooled.shape[3]
    N = hp * wp
    xv = pooled.reshape(B, C, N)
    c8 = C // 8
    # f / g / h 1x1 projections batched into a single matmul
    w_fgh = jnp.concatenate([p["wf"][:, :, 0], p["wg"][:, :, 0],
                             p["wh"][:, :, 0]], axis=0)         # [2*c8 + C, C]
    b_fgh = jnp.concatenate([p["bf"], p["bg"], p["bh"]])
    fgh = matmul_pallas(w_fgh, xv, b_fgh, out_dtype=jnp.float32)
    f, g, h = fgh[:, :c8], fgh[:, c8:2 * c8], fgh[:, 2 * c8:]
    att = attention_pallas(f, g, h).reshape(B, C, hp, wp)
    # bicubic upsample back to (H, W); gamma folded into the tiny resize matrix
    Mh = jnp.asarray(bicubic_matrix(hp, H)) * p["gamma"][0]
    Mw = jnp.asarray(bicubic_matrix(wp, W))
    up = resize_separable(att, Mh, Mw)
    return add_pallas(up, x, out_dtype=x.dtype)                 # gamma*up + x


def upconv_block(p, x):
    # Upsample(nearest x2) -> Conv3x3 -> PA -> lrelu -> HRConv3x3 -> lrelu
    # TODO(synk): fold the nearest x2 repeat into the following conv's
    # index_map instead of materialising the 4x tensor in HBM.
    x = jnp.repeat(jnp.repeat(x, 2, axis=2), 2, axis=3)
    x = conv2d(x, p["w_up"], p["b_up"])
    # PA: lrelu(x * sigmoid(conv1x1(x))) fully fused into one matmul epilogue
    x = conv2d(x, p["w_pa"], p["b_pa"], act="sigmoid",
               aux=x, epi="mul", post_act="lrelu")
    return conv2d(x, p["w_hr"], p["b_hr"], act="lrelu")


def pan_forward(params, x, scale):
    B, _, H, W = x.shape
    fea = conv2d(x, params["w_first"], params["b_first"])
    trunk = fea
    for p in params["scpa"]:
        trunk = scpa_forward(p, trunk)
    # trunk_conv with the "fea + trunk" residual fused into its epilogue
    fea = conv2d(trunk, params["w_trunk"], params["b_trunk"],
                 aux=fea, epi="add")
    fea = fsa_forward(params["fsa"], fea)
    for p in params["ups"]:
        fea = upconv_block(p, fea)
    if scale > 1:
        ILR = resize_separable(x, jnp.asarray(bilinear_matrix_ac(H, H * scale)),
                               jnp.asarray(bilinear_matrix_ac(W, W * scale)))
    else:
        ILR = x
    # conv_last with "out + ILR" fused into its epilogue
    return conv2d(fea, params["w_last"], params["b_last"],
                  aux=ILR, epi="add", out_dtype=jnp.float32)


# ---------------------------------------------------------------------------
# Deterministic parameter init (shapes follow the PyTorch __init__)
# ---------------------------------------------------------------------------
def init_params(key, in_nc, out_nc, nf, unf, nb, scale):
    keys = iter(jax.random.split(key, 256))

    def w(shape, s=0.1):
        return jax.random.normal(next(keys), shape, jnp.float32) * s

    def b(n):
        return jax.random.normal(next(keys), (n,), jnp.float32) * 0.05

    gw = nf // 2  # reduction = 2
    p = {}
    p["w_first"], p["b_first"] = w((nf, in_nc, 3, 3)), b(nf)
    p["scpa"] = []
    for _ in range(nb):
        p["scpa"].append(dict(
            w1a=w((gw, nf, 1, 1)), w1b=w((gw, nf, 1, 1)),
            wk1=w((gw, gw, 3, 3)),
            wk2=w((gw, gw, 1, 1)), bk2=b(gw),
            wk3=w((gw, gw, 3, 3)), wk4=w((gw, gw, 3, 3)),
            w3=w((nf, 2 * gw, 1, 1)),
        ))
    p["w_trunk"], p["b_trunk"] = w((nf, nf, 3, 3)), b(nf)
    p["fsa"] = dict(
        wf=w((nf // 8, nf, 1)), bf=b(nf // 8),
        wg=w((nf // 8, nf, 1)), bg=b(nf // 8),
        wh=w((nf, nf, 1)), bh=b(nf),
        gamma=jnp.zeros((1,), jnp.float32),   # torch.zeros(1)
    )
    n_up = 1 if scale == 3 else int(math.log(scale, 2))
    p["ups"] = []
    for i in range(n_up):
        cin = nf if i == 0 else unf
        p["ups"].append(dict(
            w_up=w((unf, cin, 3, 3)), b_up=b(unf),
            w_pa=w((unf, unf, 1, 1)), b_pa=b(unf),
            w_hr=w((unf, unf, 3, 3)), b_hr=b(unf),
        ))
    p["w_last"], p["b_last"] = w((out_nc, unf, 3, 3)), b(out_nc)
    return p


if __name__ == "__main__":
    key = jax.random.PRNGKey(0)
    k_param, k_in = jax.random.split(key)

    B, in_nc, out_nc = 2, 3, 3
    nf, unf, nb, scale = 16, 16, 2, 2
    H = W = 16

    params = init_params(k_param, in_nc, out_nc, nf, unf, nb, scale)
    x = jax.random.normal(k_in, (B, in_nc, H, W), jnp.float32)

    fwd = jax.jit(pan_forward, static_argnums=(2,))
    out = jax.block_until_ready(fwd(params, x, scale))

    assert out.shape == (B, out_nc, H * scale, W * scale), out.shape
    assert bool(jnp.all(jnp.isfinite(out)))
    print("KERNEL_OK")
</pallas_src>

<mosaic_0001>
module attributes {stable_mosaic.version = 11 : i64} {
  func.func @_mm_kernel(%arg0: i32, %arg1: i32, %arg2: i32, %arg3: memref<16x27xbf16, #tpu.memory_space<vmem>>, %arg4: memref<1x27x256xbf16, #tpu.memory_space<vmem>>, %arg5: memref<16x1xf32, #tpu.memory_space<vmem>>, %arg6: memref<1x16x256xbf16, #tpu.memory_space<vmem>>, %arg7: memref<16x256xf32, #tpu.memory_space<vmem>>) attributes {dimension_semantics = [#tpu.dimension_semantics<parallel>, #tpu.dimension_semantics<parallel>, #tpu.dimension_semantics<arbitrary>], iteration_bounds = array<i64: 2, 1, 1>, scalar_prefetch = 0 : i64, scratch_operands = 1 : i64, tpu.core_type = #tpu.core_type<tc>, window_params = [{transform_indices = @transform_0, window_bounds = array<i64: 16, 27>}, {transform_indices = @transform_1, window_bounds = array<i64: 1, 27, 256>}, {pipeline_mode = #tpu.pipeline_mode<synchronous>, transform_indices = @transform_2, window_bounds = array<i64: 16, 1>}, {transform_indices = @transform_3, window_bounds = array<i64: 1, 16, 256>}]} {
    %c0_i32 = arith.constant 0 : i32
    %0 = arith.cmpi eq, %arg2, %c0_i32 : i32
    %1 = arith.extui %0 : i1 to i32
    %c0_i32_0 = arith.constant 0 : i32
    %2 = arith.cmpi ne, %1, %c0_i32_0 : i32
    scf.if %2 {
      %cst_11 = arith.constant 0.000000e+00 : f32
      %13 = vector.broadcast %cst_11 : f32 to vector<16x256xf32>
      %c0_12 = arith.constant 0 : index
      %c0_13 = arith.constant 0 : index
      %14 = vector.load %arg7[%c0_12, %c0_13] : memref<16x256xf32, #tpu.memory_space<vmem>>, vector<16x256xf32>
      tpu.vector_store %arg7[%c0_12, %c0_13], %13 {strides = array<i32>} : memref<16x256xf32, #tpu.memory_space<vmem>>, vector<16x256xf32>,
    } else {
    }
    %c0 = arith.constant 0 : index
    %c0_1 = arith.constant 0 : index
    %3 = vector.load %arg7[%c0, %c0_1] : memref<16x256xf32, #tpu.memory_space<vmem>>, vector<16x256xf32>
    %c0_2 = arith.constant 0 : index
    %c0_3 = arith.constant 0 : index
    %4 = vector.load %arg3[%c0_2, %c0_3] : memref<16x27xbf16, #tpu.memory_space<vmem>>, vector<16x27xbf16>
    %c0_4 = arith.constant 0 : index
    %c0_5 = arith.constant 0 : index
    %c0_6 = arith.constant 0 : index
    %5 = vector.load %arg4[%c0_4, %c0_5, %c0_6] : memref<1x27x256xbf16, #tpu.memory_space<vmem>>, vector<1x27x256xbf16>
    %6 = vector.shape_cast %5 : vector<1x27x256xbf16> to vector<27x256xbf16>
    %cst = arith.constant dense<0.000000e+00> : vector<16x256xf32>
    %7 = tpu.matmul %4, %6, %cst {dimension_numbers = #tpu.dot_dimension_numbers<[1], [0], [0], [1], [0, 0, 1, 1], [], []>} : vector<16x27xbf16>, vector<27x256xbf16>, vector<16x256xf32> -> vector<16x256xf32>
    %8 = arith.addf %3, %7 : vector<16x256xf32>
    %c0_7 = arith.constant 0 : index
    %c0_8 = arith.constant 0 : index
    %9 = vector.load %arg7[%c0_7, %c0_8] : memref<16x256xf32, #tpu.memory_space<vmem>>, vector<16x256xf32>
    tpu.vector_store %arg7[%c0_7, %c0_8], %8 {strides = array<i32>} : memref<16x256xf32, #tpu.memory_space<vmem>>, vector<16x256xf32>,
    %c0_i32_9 = arith.constant 0 : i32
    %10 = arith.cmpi eq, %arg2, %c0_i32_9 : i32
    %11 = arith.extui %10 : i1 to i32
    %c0_i32_10 = arith.constant 0 : i32
    %12 = arith.cmpi ne, %11, %c0_i32_10 : i32
    scf.if %12 {
      %c0_11 = arith.constant 0 : index
      %c0_12 = arith.constant 0 : index
      %13 = vector.load %arg7[%c0_11, %c0_12] : memref<16x256xf32, #tpu.memory_space<vmem>>, vector<16x256xf32>
      %c0_13 = arith.constant 0 : index
      %c0_14 = arith.constant 0 : index
      %14 = vector.load %arg5[%c0_13, %c0_14] : memref<16x1xf32, #tpu.memory_space<vmem>>, vector<16x1xf32>
      %15 = vector.broadcast %14 : vector<16x1xf32> to vector<16x256xf32>
      %16 = arith.addf %13, %15 : vector<16x256xf32>
      %17 = arith.truncf %16 : vector<16x256xf32> to vector<16x256xbf16>
      %c0_15 = arith.constant 0 : index
      %c0_16 = arith.constant 0 : index
      %c0_17 = arith.constant 0 : index
      %18 = vector.load %arg6[%c0_15, %c0_16, %c0_17] : memref<1x16x256xbf16, #tpu.memory_space<vmem>>, vector<1x16x256xbf16>
      %19 = vector.shape_cast %18 : vector<1x16x256xbf16> to vector<16x256xbf16>
      %20 = vector.shape_cast %17 : vector<16x256xbf16> to vector<1x16x256xbf16>
      tpu.vector_store %arg6[%c0_15, %c0_16, %c0_17], %20 {strides = array<i32>} : memref<1x16x256xbf16, #tpu.memory_space<vmem>>, vector<1x16x256xbf16>,
    } else {
    }
    return
  }
  func.func @transform_0(%arg0: i32, %arg1: i32, %arg2: i32) -> (i32, i32) {
    %c0_i32 = arith.constant 0 : i32
    %c0_i32_0 = arith.constant 0 : i32
    return %c0_i32, %arg2 : i32, i32
  }
  func.func @transform_1(%arg0: i32, %arg1: i32, %arg2: i32) -> (i32, i32, i32) {
    %c0_i32 = arith.constant 0 : i32
    return %arg0, %arg2, %arg1 : i32, i32, i32
  }
  func.func @transform_2(%arg0: i32, %arg1: i32, %arg2: i32) -> (i32, i32) {
    %c0_i32 = arith.constant 0 : i32
    %c0_i32_0 = arith.constant 0 : i32
    %c0_i32_1 = arith.constant 0 : i32
    return %c0_i32, %c0_i32_0 : i32, i32
  }
  func.func @transform_3(%arg0: i32, %arg1: i32, %arg2: i32) -> (i32, i32, i32) {
    %c0_i32 = arith.constant 0 : i32
    %c0_i32_0 = arith.constant 0 : i32
    return %arg0, %c0_i32, %arg1 : i32, i32, i32
  }
}

module attributes {stable_mosaic.version = 11 : i64} {
  func.func @_mm_kernel(%arg0: i32, %arg1: i32, %arg2: i32, %arg3: memref<16x16xbf16, #tpu.memory_space<vmem>>, %arg4: memref<1x16x256xbf16, #tpu.memory_space<vmem>>, %arg5: memref<1x16x256xbf16, #tpu.memory_space<vmem>>, %arg6: memref<16x256xf32, #tpu.memory_space<vmem>>) attributes {dimension_semantics = [#tpu.dimension_semantics<parallel>, #tpu.dimension_semantics<parallel>, #tpu.dimension_semantics<arbitrary>], iteration_bounds = array<i64: 2, 1, 1>, scalar_prefetch = 0 : i64, scratch_operands = 1 : i64, tpu.core_type = #tpu.core_type<tc>, window_params = [{transform_indices = @transform_0, window_bounds = array<i64: 16, 16>}, {transform_indices = @transform_1, window_bounds = array<i64: 1, 16, 256>}, {transform_indices = @transform_2, window_bounds = array<i64: 1, 16, 256>}]} {
    %c0_i32 = arith.constant 0 : i32
    %0 = arith.cmpi eq, %arg2, %c0_i32 : i32
    %1 = arith.extui %0 : i1 to i32
    %c0_i32_0 = arith.constant 0 : i32
    %2 = arith.cmpi ne, %1, %c0_i32_0 : i32
    scf.if %2 {
      %cst_11 = arith.constant 0.000000e+00 : f32
      %13 = vector.broadcast %cst_11 : f32 to vector<16x256xf32>
      %c0_12 = arith.constant 0 : index
      %c0_13 = arith.constant 0 : index
      %14 = vector.load %arg6[%c0_12, %c0_13] : memref<16x256xf32, #tpu.memory_space<vmem>>, vector<16x256xf32>
      tpu.vector_store %arg6[%c0_12, %c0_13], %13 {strides = array<i32>} : memref<16x256xf32, #tpu.memory_space<vmem>>, vector<16x256xf32>,
    } else {
    }
    %c0 = arith.constant 0 : index
    %c0_1 = arith.constant 0 : index
    %3 = vector.load %arg6[%c0, %c0_1] : memref<16x256xf32, #tpu.memory_space<vmem>>, vector<16x256xf32>
    %c0_2 = arith.constant 0 : index
    %c0_3 = arith.constant 0 : index
    %4 = vector.load %arg3[%c0_2, %c0_3] : memref<16x16xbf16, #tpu.memory_space<vmem>>, vector<16x16xbf16>
    %c0_4 = arith.constant 0 : index
    %c0_5 = arith.constant 0 : index
    %c0_6 = arith.constant 0 : index
    %5 = vector.load %arg4[%c0_4, %c0_5, %c0_6] : memref<1x16x256xbf16, #tpu.memory_space<vmem>>, vector<1x16x256xbf16>
    %6 = vector.shape_cast %5 : vector<1x16x256xbf16> to vector<16x256xbf16>
    %cst = arith.constant dense<0.000000e+00> : vector<16x256xf32>
    %7 = tpu.matmul %4, %6, %cst {dimension_numbers = #tpu.dot_dimension_numbers<[1], [0], [0], [1], [0, 0, 1, 1], [], []>} : vector<16x16xbf16>, vector<16x256xbf16>, vector<16x256xf32> -> vector<16x256xf32>
    %8 = arith.addf %3, %7 : vector<16x256xf32>
    %c0_7 = arith.constant 0 : index
    %c0_8 = arith.constant 0 : index
    %9 = vector.load %arg6[%c0_7, %c0_8] : memref<16x256xf32, #tpu.memory_space<vmem>>, vector<16x256xf32>
    tpu.vector_store %arg6[%c0_7, %c0_8], %8 {strides = array<i32>} : memref<16x256xf32, #tpu.memory_space<vmem>>, vector<16x256xf32>,
    %c0_i32_9 = arith.constant 0 : i32
    %10 = arith.cmpi eq, %arg2, %c0_i32_9 : i32
    %11 = arith.extui %10 : i1 to i32
    %c0_i32_10 = arith.constant 0 : i32
    %12 = arith.cmpi ne, %11, %c0_i32_10 : i32
    scf.if %12 {
      %c0_11 = arith.constant 0 : index
      %c0_12 = arith.constant 0 : index
      %13 = vector.load %arg6[%c0_11, %c0_12] : memref<16x256xf32, #tpu.memory_space<vmem>>, vector<16x256xf32>
      %cst_13 = arith.constant 0.000000e+00 : f32
      %14 = vector.broadcast %cst_13 : f32 to vector<16x256xf32>
      %15 = arith.cmpf oge, %13, %14 : vector<16x256xf32>
      %cst_14 = arith.constant 2.000000e-01 : f32
      %16 = vector.broadcast %cst_14 : f32 to vector<16x256xf32>
      %17 = arith.mulf %16, %13 : vector<16x256xf32>
      %18 = arith.select %15, %13, %17 : vector<16x256xi1>, vector<16x256xf32>
      %19 = arith.truncf %18 : vector<16x256xf32> to vector<16x256xbf16>
      %c0_15 = arith.constant 0 : index
      %c0_16 = arith.constant 0 : index
      %c0_17 = arith.constant 0 : index
      %20 = vector.load %arg5[%c0_15, %c0_16, %c0_17] : memref<1x16x256xbf16, #tpu.memory_space<vmem>>, vector<1x16x256xbf16>
      %21 = vector.shape_cast %20 : vector<1x16x256xbf16> to vector<16x256xbf16>
      %22 = vector.shape_cast %19 : vector<16x256xbf16> to vector<1x16x256xbf16>
      tpu.vector_store %arg5[%c0_15, %c0_16, %c0_17], %22 {strides = array<i32>} : memref<1x16x256xbf16, #tpu.memory_space<vmem>>, vector<1x16x256xbf16>,
    } else {
    }
    return
  }
  func.func @transform_0(%arg0: i32, %arg1: i32, %arg2: i32) -> (i32, i32) {
    %c0_i32 = arith.constant 0 : i32
    %c0_i32_0 = arith.constant 0 : i32
    return %c0_i32, %arg2 : i32, i32
  }
  func.func @transform_1(%arg0: i32, %arg1: i32, %arg2: i32) -> (i32, i32, i32) {
    %c0_i32 = arith.constant 0 : i32
    return %arg0, %arg2, %arg1 : i32, i32, i32
  }
  func.func @transform_2(%arg0: i32, %arg1: i32, %arg2: i32) -> (i32, i32, i32) {
    %c0_i32 = arith.constant 0 : i32
    %c0_i32_0 = arith.constant 0 : i32
    return %arg0, %c0_i32, %arg1 : i32, i32, i32
  }
}

module attributes {stable_mosaic.version = 11 : i64} {
  func.func @_mm_kernel(%arg0: i32, %arg1: i32, %arg2: i32, %arg3: memref<8x72xbf16, #tpu.memory_space<vmem>>, %arg4: memref<1x72x256xbf16, #tpu.memory_space<vmem>>, %arg5: memref<1x8x256xbf16, #tpu.memory_space<vmem>>, %arg6: memref<8x256xf32, #tpu.memory_space<vmem>>) attributes {dimension_semantics = [#tpu.dimension_semantics<parallel>, #tpu.dimension_semantics<parallel>, #tpu.dimension_semantics<arbitrary>], iteration_bounds = array<i64: 2, 1, 1>, scalar_prefetch = 0 : i64, scratch_operands = 1 : i64, tpu.core_type = #tpu.core_type<tc>, window_params = [{transform_indices = @transform_0, window_bounds = array<i64: 8, 72>}, {transform_indices = @transform_1, window_bounds = array<i64: 1, 72, 256>}, {transform_indices = @transform_2, window_bounds = array<i64: 1, 8, 256>}]} {
    %c0_i32 = arith.constant 0 : i32
    %0 = arith.cmpi eq, %arg2, %c0_i32 : i32
    %1 = arith.extui %0 : i1 to i32
    %c0_i32_0 = arith.constant 0 : i32
    %2 = arith.cmpi ne, %1, %c0_i32_0 : i32
    scf.if %2 {
      %cst_11 = arith.constant 0.000000e+00 : f32
      %13 = vector.broadcast %cst_11 : f32 to vector<8x256xf32>
      %c0_12 = arith.constant 0 : index
      %c0_13 = arith.constant 0 : index
      %14 = vector.load %arg6[%c0_12, %c0_13] : memref<8x256xf32, #tpu.memory_space<vmem>>, vector<8x256xf32>
      tpu.vector_store %arg6[%c0_12, %c0_13], %13 {strides = array<i32>} : memref<8x256xf32, #tpu.memory_space<vmem>>, vector<8x256xf32>,
    } else {
    }
    %c0 = arith.constant 0 : index
    %c0_1 = arith.constant 0 : index
    %3 = vector.load %arg6[%c0, %c0_1] : memref<8x256xf32, #tpu.memory_space<vmem>>, vector<8x256xf32>
    %c0_2 = arith.constant 0 : index
    %c0_3 = arith.constant 0 : index
    %4 = vector.load %arg3[%c0_2, %c0_3] : memref<8x72xbf16, #tpu.memory_space<vmem>>, vector<8x72xbf16>
    %c0_4 = arith.constant 0 : index
    %c0_5 = arith.constant 0 : index
    %c0_6 = arith.constant 0 : index
    %5 = vector.load %arg4[%c0_4, %c0_5, %c0_6] : memref<1x72x256xbf16, #tpu.memory_space<vmem>>, vector<1x72x256xbf16>
    %6 = vector.shape_cast %5 : vector<1x72x256xbf16> to vector<72x256xbf16>
    %cst = arith.constant dense<0.000000e+00> : vector<8x256xf32>
    %7 = tpu.matmul %4, %6, %cst {dimension_numbers = #tpu.dot_dimension_numbers<[1], [0], [0], [1], [0, 0, 1, 1], [], []>} : vector<8x72xbf16>, vector<72x256xbf16>, vector<8x256xf32> -> vector<8x256xf32>
    %8 = arith.addf %3, %7 : vector<8x256xf32>
    %c0_7 = arith.constant 0 : index
    %c0_8 = arith.constant 0 : index
    %9 = vector.load %arg6[%c0_7, %c0_8] : memref<8x256xf32, #tpu.memory_space<vmem>>, vector<8x256xf32>
    tpu.vector_store %arg6[%c0_7, %c0_8], %8 {strides = array<i32>} : memref<8x256xf32, #tpu.memory_space<vmem>>, vector<8x256xf32>,
    %c0_i32_9 = arith.constant 0 : i32
    %10 = arith.cmpi eq, %arg2, %c0_i32_9 : i32
    %11 = arith.extui %10 : i1 to i32
    %c0_i32_10 = arith.constant 0 : i32
    %12 = arith.cmpi ne, %11, %c0_i32_10 : i32
    scf.if %12 {
      %c0_11 = arith.constant 0 : index
      %c0_12 = arith.constant 0 : index
      %13 = vector.load %arg6[%c0_11, %c0_12] : memref<8x256xf32, #tpu.memory_space<vmem>>, vector<8x256xf32>
      %cst_13 = arith.constant 0.000000e+00 : f32
      %14 = vector.broadcast %cst_13 : f32 to vector<8x256xf32>
      %15 = arith.cmpf oge, %13, %14 : vector<8x256xf32>
      %cst_14 = arith.constant 2.000000e-01 : f32
      %16 = vector.broadcast %cst_14 : f32 to vector<8x256xf32>
      %17 = arith.mulf %16, %13 : vector<8x256xf32>
      %18 = arith.select %15, %13, %17 : vector<8x256xi1>, vector<8x256xf32>
      %19 = arith.truncf %18 : vector<8x256xf32> to vector<8x256xbf16>
      %c0_15 = arith.constant 0 : index
      %c0_16 = arith.constant 0 : index
      %c0_17 = arith.constant 0 : index
      %20 = vector.load %arg5[%c0_15, %c0_16, %c0_17] : memref<1x8x256xbf16, #tpu.memory_space<vmem>>, vector<1x8x256xbf16>
      %21 = vector.shape_cast %20 : vector<1x8x256xbf16> to vector<8x256xbf16>
      %22 = vector.shape_cast %19 : vector<8x256xbf16> to vector<1x8x256xbf16>
      tpu.vector_store %arg5[%c0_15, %c0_16, %c0_17], %22 {strides = array<i32>} : memref<1x8x256xbf16, #tpu.memory_space<vmem>>, vector<1x8x256xbf16>,
    } else {
    }
    return
  }
  func.func @transform_0(%arg0: i32, %arg1: i32, %arg2: i32) -> (i32, i32) {
    %c0_i32 = arith.constant 0 : i32
    %c0_i32_0 = arith.constant 0 : i32
    return %c0_i32, %arg2 : i32, i32
  }
  func.func @transform_1(%arg0: i32, %arg1: i32, %arg2: i32) -> (i32, i32, i32) {
    %c0_i32 = arith.constant 0 : i32
    return %arg0, %arg2, %arg1 : i32, i32, i32
  }
  func.func @transform_2(%arg0: i32, %arg1: i32, %arg2: i32) -> (i32, i32, i32) {
    %c0_i32 = arith.constant 0 : i32
    %c0_i32_0 = arith.constant 0 : i32
    return %arg0, %c0_i32, %arg1 : i32, i32, i32
  }
}

module attributes {stable_mosaic.version = 11 : i64} {
  func.func @_mm_kernel(%arg0: i32, %arg1: i32, %arg2: i32, %arg3: memref<16x72xbf16, #tpu.memory_space<vmem>>, %arg4: memref<1x72x256xbf16, #tpu.memory_space<vmem>>, %arg5: memref<16x1xf32, #tpu.memory_space<vmem>>, %arg6: memref<1x8x256xbf16, #tpu.memory_space<vmem>>, %arg7: memref<16x256xf32, #tpu.memory_space<vmem>>) attributes {dimension_semantics = [#tpu.dimension_semantics<parallel>, #tpu.dimension_semantics<parallel>, #tpu.dimension_semantics<arbitrary>], iteration_bounds = array<i64: 2, 1, 1>, scalar_prefetch = 0 : i64, scratch_operands = 1 : i64, tpu.core_type = #tpu.core_type<tc>, window_params = [{transform_indices = @transform_0, window_bounds = array<i64: 16, 72>}, {transform_indices = @transform_1, window_bounds = array<i64: 1, 72, 256>}, {pipeline_mode = #tpu.pipeline_mode<synchronous>, transform_indices = @transform_2, window_bounds = array<i64: 16, 1>}, {transform_indices = @transform_3, window_bounds = array<i64: 1, 8, 256>}]} {
    %c0_i32 = arith.constant 0 : i32
    %0 = arith.cmpi eq, %arg2, %c0_i32 : i32
    %1 = arith.extui %0 : i1 to i32
    %c0_i32_0 = arith.constant 0 : i32
    %2 = arith.cmpi ne, %1, %c0_i32_0 : i32
    scf.if %2 {
      %cst_11 = arith.constant 0.000000e+00 : f32
      %13 = vector.broadcast %cst_11 : f32 to vector<16x256xf32>
      %c0_12 = arith.constant 0 : index
      %c0_13 = arith.constant 0 : index
      %14 = vector.load %arg7[%c0_12, %c0_13] : memref<16x256xf32, #tpu.memory_space<vmem>>, vector<16x256xf32>
      tpu.vector_store %arg7[%c0_12, %c0_13], %13 {strides = array<i32>} : memref<16x256xf32, #tpu.memory_space<vmem>>, vector<16x256xf32>,
    } else {
    }
    %c0 = arith.constant 0 : index
    %c0_1 = arith.constant 0 : index
    %3 = vector.load %arg7[%c0, %c0_1] : memref<16x256xf32, #tpu.memory_space<vmem>>, vector<16x256xf32>
    %c0_2 = arith.constant 0 : index
    %c0_3 = arith.constant 0 : index
    %4 = vector.load %arg3[%c0_2, %c0_3] : memref<16x72xbf16, #tpu.memory_space<vmem>>, vector<16x72xbf16>
    %c0_4 = arith.constant 0 : index
    %c0_5 = arith.constant 0 : index
    %c0_6 = arith.constant 0 : index
    %5 = vector.load %arg4[%c0_4, %c0_5, %c0_6] : memref<1x72x256xbf16, #tpu.memory_space<vmem>>, vector<1x72x256xbf16>
    %6 = vector.shape_cast %5 : vector<1x72x256xbf16> to vector<72x256xbf16>
    %cst = arith.constant dense<0.000000e+00> : vector<16x256xf32>
    %7 = tpu.matmul %4, %6, %cst {dimension_numbers = #tpu.dot_dimension_numbers<[1], [0], [0], [1], [0, 0, 1, 1], [], []>} : vector<16x72xbf16>, vector<72x256xbf16>, vector<16x256xf32> -> vector<16x256xf32>
    %8 = arith.addf %3, %7 : vector<16x256xf32>
    %c0_7 = arith.constant 0 : index
    %c0_8 = arith.constant 0 : index
    %9 = vector.load %arg7[%c0_7, %c0_8] : memref<16x256xf32, #tpu.memory_space<vmem>>, vector<16x256xf32>
    tpu.vector_store %arg7[%c0_7, %c0_8], %8 {strides = array<i32>} : memref<16x256xf32, #tpu.memory_space<vmem>>, vector<16x256xf32>,
    %c0_i32_9 = arith.constant 0 : i32
    %10 = arith.cmpi eq, %arg2, %c0_i32_9 : i32
    %11 = arith.extui %10 : i1 to i32
    %c0_i32_10 = arith.constant 0 : i32
    %12 = arith.cmpi ne, %11, %c0_i32_10 : i32
    scf.if %12 {
      %c0_11 = arith.constant 0 : index
      %c0_12 = arith.constant 0 : index
      %13 = vector.load %arg7[%c0_11, %c0_12] : memref<16x256xf32, #tpu.memory_space<vmem>>, vector<16x256xf32>
      %c0_13 = arith.constant 0 : index
      %c0_14 = arith.constant 0 : index
      %14 = vector.load %arg5[%c0_13, %c0_14] : memref<16x1xf32, #tpu.memory_space<vmem>>, vector<16x1xf32>
      %15 = vector.broadcast %14 : vector<16x1xf32> to vector<16x256xf32>
      %16 = arith.addf %13, %15 : vector<16x256xf32>
      %17 = vector.extract_strided_slice %16 {offsets = [0, 0], sizes = [8, 256], strides = [1, 1]} : vector<16x256xf32> to vector<8x256xf32>
      %18 = vector.extract_strided_slice %16 {offsets = [8, 0], sizes = [8, 256], strides = [1, 1]} : vector<16x256xf32> to vector<8x256xf32>
      %19 = math.absf %18 : vector<8x256xf32>
      %cst_15 = arith.constant 0.000000e+00 : f32
      %20 = vector.broadcast %cst_15 : f32 to vector<8x256xf32>
      %21 = arith.subf %20, %19 : vector<8x256xf32>
      %22 = math.exp %21 : vector<8x256xf32>
      %cst_16 = arith.constant 0.000000e+00 : f32
      %23 = vector.broadcast %cst_16 : f32 to vector<8x256xf32>
      %24 = arith.cmpf oge, %18, %23 : vector<8x256xf32>
      %cst_17 = arith.constant 1.000000e+00 : f32
      %25 = vector.broadcast %cst_17 : f32 to vector<8x256xf32>
      %26 = arith.addf %25, %22 : vector<8x256xf32>
      %cst_18 = arith.constant 1.000000e+00 : f32
      %27 = vector.broadcast %cst_18 : f32 to vector<8x256xf32>
      %28 = arith.divf %27, %26 : vector<8x256xf32>
      %cst_19 = arith.constant 1.000000e+00 : f32
      %29 = vector.broadcast %cst_19 : f32 to vector<8x256xf32>
      %30 = arith.addf %29, %22 : vector<8x256xf32>
      %31 = arith.divf %22, %30 : vector<8x256xf32>
      %32 = arith.select %24, %28, %31 : vector<8x256xi1>, vector<8x256xf32>
      %33 = arith.mulf %17, %32 : vector<8x256xf32>
      %34 = arith.truncf %33 : vector<8x256xf32> to vector<8x256xbf16>
      %c0_20 = arith.constant 0 : index
      %c0_21 = arith.constant 0 : index
      %c0_22 = arith.constant 0 : index
      %35 = vector.load %arg6[%c0_20, %c0_21, %c0_22] : memref<1x8x256xbf16, #tpu.memory_space<vmem>>, vector<1x8x256xbf16>
      %36 = vector.shape_cast %35 : vector<1x8x256xbf16> to vector<8x256xbf16>
      %37 = vector.shape_cast %34 : vector<8x256xbf16> to vector<1x8x256xbf16>
      tpu.vector_store %arg6[%c0_20, %c0_21, %c0_22], %37 {strides = array<i32>} : memref<1x8x256xbf16, #tpu.memory_space<vmem>>, vector<1x8x256xbf16>,
    } else {
    }
    return
  }
  func.func @transform_0(%arg0: i32, %arg1: i32, %arg2: i32) -> (i32, i32) {
    %c0_i32 = arith.constant 0 : i32
    %c0_i32_0 = arith.constant 0 : i32
    return %c0_i32, %arg2 : i32, i32
  }
  func.func @transform_1(%arg0: i32, %arg1: i32, %arg2: i32) -> (i32, i32, i32) {
    %c0_i32 = arith.constant 0 : i32
    return %arg0, %arg2, %arg1 : i32, i32, i32
  }
  func.func @transform_2(%arg0: i32, %arg1: i32, %arg2: i32) -> (i32, i32) {
    %c0_i32 = arith.constant 0 : i32
    %c0_i32_0 = arith.constant 0 : i32
    %c0_i32_1 = arith.constant 0 : i32
    return %c0_i32, %c0_i32_0 : i32, i32
  }
  func.func @transform_3(%arg0: i32, %arg1: i32, %arg2: i32) -> (i32, i32, i32) {
    %c0_i32 = arith.constant 0 : i32
    %c0_i32_0 = arith.constant 0 : i32
    return %arg0, %c0_i32, %arg1 : i32, i32, i32
  }
}

module attributes {stable_mosaic.version = 11 : i64} {
  func.func @_mm_kernel(%arg0: i32, %arg1: i32, %arg2: i32, %arg3: memref<16x16xbf16, #tpu.memory_space<vmem>>, %arg4: memref<1x16x256xbf16, #tpu.memory_space<vmem>>, %arg5: memref<1x16x256xbf16, #tpu.memory_space<vmem>>, %arg6: memref<1x16x256xbf16, #tpu.memory_space<vmem>>, %arg7: memref<16x256xf32, #tpu.memory_space<vmem>>) attributes {dimension_semantics = [#tpu.dimension_semantics<parallel>, #tpu.dimension_semantics<parallel>, #tpu.dimension_semantics<arbitrary>], iteration_bounds = array<i64: 2, 1, 1>, scalar_prefetch = 0 : i64, scratch_operands = 1 : i64, tpu.core_type = #tpu.core_type<tc>, window_params = [{transform_indices = @transform_0, window_bounds = array<i64: 16, 16>}, {transform_indices = @transform_1, window_bounds = array<i64: 1, 16, 256>}, {transform_indices = @transform_2, window_bounds = array<i64: 1, 16, 256>}, {transform_indices = @transform_3, window_bounds = array<i64: 1, 16, 256>}]} {
    %c0_i32 = arith.constant 0 : i32
    %0 = arith.cmpi eq, %arg2, %c0_i32 : i32
    %1 = arith.extui %0 : i1 to i32
    %c0_i32_0 = arith.constant 0 : i32
    %2 = arith.cmpi ne, %1, %c0_i32_0 : i32
    scf.if %2 {
      %cst_11 = arith.constant 0.000000e+00 : f32
      %13 = vector.broadcast %cst_11 : f32 to vector<16x256xf32>
      %c0_12 = arith.constant 0 : index
      %c0_13 = arith.constant 0 : index
      %14 = vector.load %arg7[%c0_12, %c0_13] : memref<16x256xf32, #tpu.memory_space<vmem>>, vector<16x256xf32>
      tpu.vector_store %arg7[%c0_12, %c0_13], %13 {strides = array<i32>} : memref<16x256xf32, #tpu.memory_space<vmem>>, vector<16x256xf32>,
    } else {
    }
    %c0 = arith.constant 0 : index
    %c0_1 = arith.constant 0 : index
    %3 = vector.load %arg7[%c0, %c0_1] : memref<16x256xf32, #tpu.memory_space<vmem>>, vector<16x256xf32>
    %c0_2 = arith.constant 0 : index
    %c0_3 = arith.constant 0 : index
    %4 = vector.load %arg3[%c0_2, %c0_3] : memref<16x16xbf16, #tpu.memory_space<vmem>>, vector<16x16xbf16>
    %c0_4 = arith.constant 0 : index
    %c0_5 = arith.constant 0 : index
    %c0_6 = arith.constant 0 : index
    %5 = vector.load %arg4[%c0_4, %c0_5, %c0_6] : memref<1x16x256xbf16, #tpu.memory_space<vmem>>, vector<1x16x256xbf16>
    %6 = vector.shape_cast %5 : vector<1x16x256xbf16> to vector<16x256xbf16>
    %cst = arith.constant dense<0.000000e+00> : vector<16x256xf32>
    %7 = tpu.matmul %4, %6, %cst {dimension_numbers = #tpu.dot_dimension_numbers<[1], [0], [0], [1], [0, 0, 1, 1], [], []>} : vector<16x16xbf16>, vector<16x256xbf16>, vector<16x256xf32> -> vector<16x256xf32>
    %8 = arith.addf %3, %7 : vector<16x256xf32>
    %c0_7 = arith.constant 0 : index
    %c0_8 = arith.constant 0 : index
    %9 = vector.load %arg7[%c0_7, %c0_8] : memref<16x256xf32, #tpu.memory_space<vmem>>, vector<16x256xf32>
    tpu.vector_store %arg7[%c0_7, %c0_8], %8 {strides = array<i32>} : memref<16x256xf32, #tpu.memory_space<vmem>>, vector<16x256xf32>,
    %c0_i32_9 = arith.constant 0 : i32
    %10 = arith.cmpi eq, %arg2, %c0_i32_9 : i32
    %11 = arith.extui %10 : i1 to i32
    %c0_i32_10 = arith.constant 0 : i32
    %12 = arith.cmpi ne, %11, %c0_i32_10 : i32
    scf.if %12 {
      %c0_11 = arith.constant 0 : index
      %c0_12 = arith.constant 0 : index
      %13 = vector.load %arg7[%c0_11, %c0_12] : memref<16x256xf32, #tpu.memory_space<vmem>>, vector<16x256xf32>
      %c0_13 = arith.constant 0 : index
      %c0_14 = arith.constant 0 : index
      %c0_15 = arith.constant 0 : index
      %14 = vector.load %arg5[%c0_13, %c0_14, %c0_15] : memref<1x16x256xbf16, #tpu.memory_space<vmem>>, vector<1x16x256xbf16>
      %15 = vector.shape_cast %14 : vector<1x16x256xbf16> to vector<16x256xbf16>
      %16 = arith.extf %15 : vector<16x256xbf16> to vector<16x256xf32>
      %17 = arith.addf %13, %16 : vector<16x256xf32>
      %18 = arith.truncf %17 : vector<16x256xf32> to vector<16x256xbf16>
      %c0_16 = arith.constant 0 : index
      %c0_17 = arith.constant 0 : index
      %c0_18 = arith.constant 0 : index
      %19 = vector.load %arg6[%c0_16, %c0_17, %c0_18] : memref<1x16x256xbf16, #tpu.memory_space<vmem>>, vector<1x16x256xbf16>
      %20 = vector.shape_cast %19 : vector<1x16x256xbf16> to vector<16x256xbf16>
      %21 = vector.shape_cast %18 : vector<16x256xbf16> to vector<1x16x256xbf16>
      tpu.vector_store %arg6[%c0_16, %c0_17, %c0_18], %21 {strides = array<i32>} : memref<1x16x256xbf16, #tpu.memory_space<vmem>>, vector<1x16x256xbf16>,
    } else {
    }
    return
  }
  func.func @transform_0(%arg0: i32, %arg1: i32, %arg2: i32) -> (i32, i32) {
    %c0_i32 = arith.constant 0 : i32
    %c0_i32_0 = arith.constant 0 : i32
    return %c0_i32, %arg2 : i32, i32
  }
  func.func @transform_1(%arg0: i32, %arg1: i32, %arg2: i32) -> (i32, i32, i32) {
    %c0_i32 = arith.constant 0 : i32
    return %arg0, %arg2, %arg1 : i32, i32, i32
  }
  func.func @transform_2(%arg0: i32, %arg1: i32, %arg2: i32) -> (i32, i32, i32) {
    %c0_i32 = arith.constant 0 : i32
    %c0_i32_0 = arith.constant 0 : i32
    return %arg0, %c0_i32, %arg1 : i32, i32, i32
  }
  func.func @transform_3(%arg0: i32, %arg1: i32, %arg2: i32) -> (i32, i32, i32) {
    %c0_i32 = arith.constant 0 : i32
    %c0_i32_0 = arith.constant 0 : i32
    return %arg0, %c0_i32, %arg1 : i32, i32, i32
  }
}

module attributes {stable_mosaic.version = 11 : i64} {
  func.func @_mm_kernel(%arg0: i32, %arg1: i32, %arg2: i32, %arg3: memref<16x144xbf16, #tpu.memory_space<vmem>>, %arg4: memref<1x144x256xbf16, #tpu.memory_space<vmem>>, %arg5: memref<16x1xf32, #tpu.memory_space<vmem>>, %arg6: memref<1x16x256xbf16, #tpu.memory_space<vmem>>, %arg7: memref<1x16x256xbf16, #tpu.memory_space<vmem>>, %arg8: memref<16x256xf32, #tpu.memory_space<vmem>>) attributes {dimension_semantics = [#tpu.dimension_semantics<parallel>, #tpu.dimension_semantics<parallel>, #tpu.dimension_semantics<arbitrary>], iteration_bounds = array<i64: 2, 1, 1>, scalar_prefetch = 0 : i64, scratch_operands = 1 : i64, tpu.core_type = #tpu.core_type<tc>, window_params = [{transform_indices = @transform_0, window_bounds = array<i64: 16, 144>}, {transform_indices = @transform_1, window_bounds = array<i64: 1, 144, 256>}, {pipeline_mode = #tpu.pipeline_mode<synchronous>, transform_indices = @transform_2, window_bounds = array<i64: 16, 1>}, {transform_indices = @transform_3, window_bounds = array<i64: 1, 16, 256>}, {transform_indices = @transform_4, window_bounds = array<i64: 1, 16, 256>}]} {
    %c0_i32 = arith.constant 0 : i32
    %0 = arith.cmpi eq, %arg2, %c0_i32 : i32
    %1 = arith.extui %0 : i1 to i32
    %c0_i32_0 = arith.constant 0 : i32
    %2 = arith.cmpi ne, %1, %c0_i32_0 : i32
    scf.if %2 {
      %cst_11 = arith.constant 0.000000e+00 : f32
      %13 = vector.broadcast %cst_11 : f32 to vector<16x256xf32>
      %c0_12 = arith.constant 0 : index
      %c0_13 = arith.constant 0 : index
      %14 = vector.load %arg8[%c0_12, %c0_13] : memref<16x256xf32, #tpu.memory_space<vmem>>, vector<16x256xf32>
      tpu.vector_store %arg8[%c0_12, %c0_13], %13 {strides = array<i32>} : memref<16x256xf32, #tpu.memory_space<vmem>>, vector<16x256xf32>,
    } else {
    }
    %c0 = arith.constant 0 : index
    %c0_1 = arith.constant 0 : index
    %3 = vector.load %arg8[%c0, %c0_1] : memref<16x256xf32, #tpu.memory_space<vmem>>, vector<16x256xf32>
    %c0_2 = arith.constant 0 : index
    %c0_3 = arith.constant 0 : index
    %4 = vector.load %arg3[%c0_2, %c0_3] : memref<16x144xbf16, #tpu.memory_space<vmem>>, vector<16x144xbf16>
    %c0_4 = arith.constant 0 : index
    %c0_5 = arith.constant 0 : index
    %c0_6 = arith.constant 0 : index
    %5 = vector.load %arg4[%c0_4, %c0_5, %c0_6] : memref<1x144x256xbf16, #tpu.memory_space<vmem>>, vector<1x144x256xbf16>
    %6 = vector.shape_cast %5 : vector<1x144x256xbf16> to vector<144x256xbf16>
    %cst = arith.constant dense<0.000000e+00> : vector<16x256xf32>
    %7 = tpu.matmul %4, %6, %cst {dimension_numbers = #tpu.dot_dimension_numbers<[1], [0], [0], [1], [0, 0, 1, 1], [], []>} : vector<16x144xbf16>, vector<144x256xbf16>, vector<16x256xf32> -> vector<16x256xf32>
    %8 = arith.addf %3, %7 : vector<16x256xf32>
    %c0_7 = arith.constant 0 : index
    %c0_8 = arith.constant 0 : index
    %9 = vector.load %arg8[%c0_7, %c0_8] : memref<16x256xf32, #tpu.memory_space<vmem>>, vector<16x256xf32>
    tpu.vector_store %arg8[%c0_7, %c0_8], %8 {strides = array<i32>} : memref<16x256xf32, #tpu.memory_space<vmem>>, vector<16x256xf32>,
    %c0_i32_9 = arith.constant 0 : i32
    %10 = arith.cmpi eq, %arg2, %c0_i32_9 : i32
    %11 = arith.extui %10 : i1 to i32
    %c0_i32_10 = arith.constant 0 : i32
    %12 = arith.cmpi ne, %11, %c0_i32_10 : i32
    scf.if %12 {
      %c0_11 = arith.constant 0 : index
      %c0_12 = arith.constant 0 : index
      %13 = vector.load %arg8[%c0_11, %c0_12] : memref<16x256xf32, #tpu.memory_space<vmem>>, vector<16x256xf32>
      %c0_13 = arith.constant 0 : index
      %c0_14 = arith.constant 0 : index
      %14 = vector.load %arg5[%c0_13, %c0_14] : memref<16x1xf32, #tpu.memory_space<vmem>>, vector<16x1xf32>
      %15 = vector.broadcast %14 : vector<16x1xf32> to vector<16x256xf32>
      %16 = arith.addf %13, %15 : vector<16x256xf32>
      %c0_15 = arith.constant 0 : index
      %c0_16 = arith.constant 0 : index
      %c0_17 = arith.constant 0 : index
      %17 = vector.load %arg6[%c0_15, %c0_16, %c0_17] : memref<1x16x256xbf16, #tpu.memory_space<vmem>>, vector<1x16x256xbf16>
      %18 = vector.shape_cast %17 : vector<1x16x256xbf16> to vector<16x256xbf16>
      %19 = arith.extf %18 : vector<16x256xbf16> to vector<16x256xf32>
      %20 = arith.addf %16, %19 : vector<16x256xf32>
      %21 = arith.truncf %20 : vector<16x256xf32> to vector<16x256xbf16>
      %c0_18 = arith.constant 0 : index
      %c0_19 = arith.constant 0 : index
      %c0_20 = arith.constant 0 : index
      %22 = vector.load %arg7[%c0_18, %c0_19, %c0_20] : memref<1x16x256xbf16, #tpu.memory_space<vmem>>, vector<1x16x256xbf16>
      %23 = vector.shape_cast %22 : vector<1x16x256xbf16> to vector<16x256xbf16>
      %24 = vector.shape_cast %21 : vector<16x256xbf16> to vector<1x16x256xbf16>
      tpu.vector_store %arg7[%c0_18, %c0_19, %c0_20], %24 {strides = array<i32>} : memref<1x16x256xbf16, #tpu.memory_space<vmem>>, vector<1x16x256xbf16>,
    } else {
    }
    return
  }
  func.func @transform_0(%arg0: i32, %arg1: i32, %arg2: i32) -> (i32, i32) {
    %c0_i32 = arith.constant 0 : i32
    %c0_i32_0 = arith.constant 0 : i32
    return %c0_i32, %arg2 : i32, i32
  }
  func.func @transform_1(%arg0: i32, %arg1: i32, %arg2: i32) -> (i32, i32, i32) {
    %c0_i32 = arith.constant 0 : i32
    return %arg0, %arg2, %arg1 : i32, i32, i32
  }
  func.func @transform_2(%arg0: i32, %arg1: i32, %arg2: i32) -> (i32, i32) {
    %c0_i32 = arith.constant 0 : i32
    %c0_i32_0 = arith.constant 0 : i32
    %c0_i32_1 = arith.constant 0 : i32
    return %c0_i32, %c0_i32_0 : i32, i32
  }
  func.func @transform_3(%arg0: i32, %arg1: i32, %arg2: i32) -> (i32, i32, i32) {
    %c0_i32 = arith.constant 0 : i32
    %c0_i32_0 = arith.constant 0 : i32
    return %arg0, %c0_i32, %arg1 : i32, i32, i32
  }
  func.func @transform_4(%arg0: i32, %arg1: i32, %arg2: i32) -> (i32, i32, i32) {
    %c0_i32 = arith.constant 0 : i32
    %c0_i32_0 = arith.constant 0 : i32
    return %arg0, %c0_i32, %arg1 : i32, i32, i32
  }
}

module attributes {stable_mosaic.version = 11 : i64} {
  func.func @_mm_kernel(%arg0: i32, %arg1: i32, %arg2: i32, %arg3: memref<20x16xbf16, #tpu.memory_space<vmem>>, %arg4: memref<1x16x128xbf16, #tpu.memory_space<vmem>>, %arg5: memref<20x1xf32, #tpu.memory_space<vmem>>, %arg6: memref<1x20x128xf32, #tpu.memory_space<vmem>>, %arg7: memref<20x128xf32, #tpu.memory_space<vmem>>) attributes {dimension_semantics = [#tpu.dimension_semantics<parallel>, #tpu.dimension_semantics<parallel>, #tpu.dimension_semantics<arbitrary>], iteration_bounds = array<i64: 2, 1, 1>, scalar_prefetch = 0 : i64, scratch_operands = 1 : i64, tpu.core_type = #tpu.core_type<tc>, window_params = [{transform_indices = @transform_0, window_bounds = array<i64: 20, 16>}, {transform_indices = @transform_1, window_bounds = array<i64: 1, 16, 128>}, {pipeline_mode = #tpu.pipeline_mode<synchronous>, transform_indices = @transform_2, window_bounds = array<i64: 20, 1>}, {transform_indices = @transform_3, window_bounds = array<i64: 1, 20, 128>}]} {
    %c0_i32 = arith.constant 0 : i32
    %0 = arith.cmpi eq, %arg2, %c0_i32 : i32
    %1 = arith.extui %0 : i1 to i32
    %c0_i32_0 = arith.constant 0 : i32
    %2 = arith.cmpi ne, %1, %c0_i32_0 : i32
    scf.if %2 {
      %cst_11 = arith.constant 0.000000e+00 : f32
      %13 = vector.broadcast %cst_11 : f32 to vector<20x128xf32>
      %c0_12 = arith.constant 0 : index
      %c0_13 = arith.constant 0 : index
      %14 = vector.load %arg7[%c0_12, %c0_13] : memref<20x128xf32, #tpu.memory_space<vmem>>, vector<20x128xf32>
      tpu.vector_store %arg7[%c0_12, %c0_13], %13 {strides = array<i32>} : memref<20x128xf32, #tpu.memory_space<vmem>>, vector<20x128xf32>,
    } else {
    }
    %c0 = arith.constant 0 : index
    %c0_1 = arith.constant 0 : index
    %3 = vector.load %arg7[%c0, %c0_1] : memref<20x128xf32, #tpu.memory_space<vmem>>, vector<20x128xf32>
    %c0_2 = arith.constant 0 : index
    %c0_3 = arith.constant 0 : index
    %4 = vector.load %arg3[%c0_2, %c0_3] : memref<20x16xbf16, #tpu.memory_space<vmem>>, vector<20x16xbf16>
    %c0_4 = arith.constant 0 : index
    %c0_5 = arith.constant 0 : index
    %c0_6 = arith.constant 0 : index
    %5 = vector.load %arg4[%c0_4, %c0_5, %c0_6] : memref<1x16x128xbf16, #tpu.memory_space<vmem>>, vector<1x16x128xbf16>
    %6 = vector.shape_cast %5 : vector<1x16x128xbf16> to vector<16x128xbf16>
    %cst = arith.constant dense<0.000000e+00> : vector<20x128xf32>
    %7 = tpu.matmul %4, %6, %cst {dimension_numbers = #tpu.dot_dimension_numbers<[1], [0], [0], [1], [0, 0, 1, 1], [], []>} : vector<20x16xbf16>, vector<16x128xbf16>, vector<20x128xf32> -> vector<20x128xf32>
    %8 = arith.addf %3, %7 : vector<20x128xf32>
    %c0_7 = arith.constant 0 : index
    %c0_8 = arith.constant 0 : index
    %9 = vector.load %arg7[%c0_7, %c0_8] : memref<20x128xf32, #tpu.memory_space<vmem>>, vector<20x128xf32>
    tpu.vector_store %arg7[%c0_7, %c0_8], %8 {strides = array<i32>} : memref<20x128xf32, #tpu.memory_space<vmem>>, vector<20x128xf32>,
    %c0_i32_9 = arith.constant 0 : i32
    %10 = arith.cmpi eq, %arg2, %c0_i32_9 : i32
    %11 = arith.extui %10 : i1 to i32
    %c0_i32_10 = arith.constant 0 : i32
    %12 = arith.cmpi ne, %11, %c0_i32_10 : i32
    scf.if %12 {
      %c0_11 = arith.constant 0 : index
      %c0_12 = arith.constant 0 : index
      %13 = vector.load %arg7[%c0_11, %c0_12] : memref<20x128xf32, #tpu.memory_space<vmem>>, vector<20x128xf32>
      %c0_13 = arith.constant 0 : index
      %c0_14 = arith.constant 0 : index
      %14 = vector.load %arg5[%c0_13, %c0_14] : memref<20x1xf32, #tpu.memory_space<vmem>>, vector<20x1xf32>
      %15 = vector.broadcast %14 : vector<20x1xf32> to vector<20x128xf32>
      %16 = arith.addf %13, %15 : vector<20x128xf32>
      %c0_15 = arith.constant 0 : index
      %c0_16 = arith.constant 0 : index
      %c0_17 = arith.constant 0 : index
      %17 = vector.load %arg6[%c0_15, %c0_16, %c0_17] : memref<1x20x128xf32, #tpu.memory_space<vmem>>, vector<1x20x128xf32>
      %18 = vector.shape_cast %17 : vector<1x20x128xf32> to vector<20x128xf32>
      %19 = vector.shape_cast %16 : vector<20x128xf32> to vector<1x20x128xf32>
      tpu.vector_store %arg6[%c0_15, %c0_16, %c0_17], %19 {strides = array<i32>} : memref<1x20x128xf32, #tpu.memory_space<vmem>>, vector<1x20x128xf32>,
    } else {
    }
    return
  }
  func.func @transform_0(%arg0: i32, %arg1: i32, %arg2: i32) -> (i32, i32) {
    %c0_i32 = arith.constant 0 : i32
    %c0_i32_0 = arith.constant 0 : i32
    return %c0_i32, %arg2 : i32, i32
  }
  func.func @transform_1(%arg0: i32, %arg1: i32, %arg2: i32) -> (i32, i32, i32) {
    %c0_i32 = arith.constant 0 : i32
    return %arg0, %arg2, %arg1 : i32, i32, i32
  }
  func.func @transform_2(%arg0: i32, %arg1: i32, %arg2: i32) -> (i32, i32) {
    %c0_i32 = arith.constant 0 : i32
    %c0_i32_0 = arith.constant 0 : i32
    %c0_i32_1 = arith.constant 0 : i32
    return %c0_i32, %c0_i32_0 : i32, i32
  }
  func.func @transform_3(%arg0: i32, %arg1: i32, %arg2: i32) -> (i32, i32, i32) {
    %c0_i32 = arith.constant 0 : i32
    %c0_i32_0 = arith.constant 0 : i32
    return %arg0, %c0_i32, %arg1 : i32, i32, i32
  }
}

module attributes {stable_mosaic.version = 11 : i64} {
  func.func @_attn_kernel(%arg0: i32, %arg1: i32, %arg2: i32, %arg3: memref<1x2x16xf32, #tpu.memory_space<vmem>>, %arg4: memref<1x2x16xf32, #tpu.memory_space<vmem>>, %arg5: memref<1x16x16xf32, #tpu.memory_space<vmem>>, %arg6: memref<1x16x16xf32, #tpu.memory_space<vmem>>, %arg7: memref<1x16xf32, #tpu.memory_space<vmem>>, %arg8: memref<1x16xf32, #tpu.memory_space<vmem>>, %arg9: memref<16x16xf32, #tpu.memory_space<vmem>>) attributes {dimension_semantics = [#tpu.dimension_semantics<parallel>, #tpu.dimension_semantics<parallel>, #tpu.dimension_semantics<arbitrary>], iteration_bounds = array<i64: 2, 1, 1>, scalar_prefetch = 0 : i64, scratch_operands = 3 : i64, tpu.core_type = #tpu.core_type<tc>, window_params = [{transform_indices = @transform_0, window_bounds = array<i64: 1, 2, 16>}, {transform_indices = @transform_1, window_bounds = array<i64: 1, 2, 16>}, {transform_indices = @transform_2, window_bounds = array<i64: 1, 16, 16>}, {transform_indices = @transform_3, window_bounds = array<i64: 1, 16, 16>}]} {
    %c0_i32 = arith.constant 0 : i32
    %0 = arith.cmpi eq, %arg2, %c0_i32 : i32
    %1 = arith.extui %0 : i1 to i32
    %c0_i32_0 = arith.constant 0 : i32
    %2 = arith.cmpi ne, %1, %c0_i32_0 : i32
    scf.if %2 {
      %cst_28 = arith.constant -1.000000e+30 : f32
      %43 = vector.broadcast %cst_28 : f32 to vector<1x16xf32>
      %c0_29 = arith.constant 0 : index
      %c0_30 = arith.constant 0 : index
      %44 = vector.load %arg7[%c0_29, %c0_30] : memref<1x16xf32, #tpu.memory_space<vmem>>, vector<1x16xf32>
      tpu.vector_store %arg7[%c0_29, %c0_30], %43 {strides = array<i32>} : memref<1x16xf32, #tpu.memory_space<vmem>>, vector<1x16xf32>,
      %cst_31 = arith.constant 0.000000e+00 : f32
      %45 = vector.broadcast %cst_31 : f32 to vector<1x16xf32>
      %c0_32 = arith.constant 0 : index
      %c0_33 = arith.constant 0 : index
      %46 = vector.load %arg8[%c0_32, %c0_33] : memref<1x16xf32, #tpu.memory_space<vmem>>, vector<1x16xf32>
      tpu.vector_store %arg8[%c0_32, %c0_33], %45 {strides = array<i32>} : memref<1x16xf32, #tpu.memory_space<vmem>>, vector<1x16xf32>,
      %cst_34 = arith.constant 0.000000e+00 : f32
      %47 = vector.broadcast %cst_34 : f32 to vector<16x16xf32>
      %c0_35 = arith.constant 0 : index
      %c0_36 = arith.constant 0 : index
      %48 = vector.load %arg9[%c0_35, %c0_36] : memref<16x16xf32, #tpu.memory_space<vmem>>, vector<16x16xf32>
      tpu.vector_store %arg9[%c0_35, %c0_36], %47 {strides = array<i32>} : memref<16x16xf32, #tpu.memory_space<vmem>>, vector<16x16xf32>,
    } else {
    }
    %c0 = arith.constant 0 : index
    %c0_1 = arith.constant 0 : index
    %c0_2 = arith.constant 0 : index
    %3 = vector.load %arg3[%c0, %c0_1, %c0_2] : memref<1x2x16xf32, #tpu.memory_space<vmem>>, vector<1x2x16xf32>
    %4 = vector.shape_cast %3 : vector<1x2x16xf32> to vector<2x16xf32>
    %c0_3 = arith.constant 0 : index
    %c0_4 = arith.constant 0 : index
    %c0_5 = arith.constant 0 : index
    %5 = vector.load %arg4[%c0_3, %c0_4, %c0_5] : memref<1x2x16xf32, #tpu.memory_space<vmem>>, vector<1x2x16xf32>
    %6 = vector.shape_cast %5 : vector<1x2x16xf32> to vector<2x16xf32>
    %c0_6 = arith.constant 0 : index
    %c0_7 = arith.constant 0 : index
    %c0_8 = arith.constant 0 : index
    %7 = vector.load %arg5[%c0_6, %c0_7, %c0_8] : memref<1x16x16xf32, #tpu.memory_space<vmem>>, vector<1x16x16xf32>
    %8 = vector.shape_cast %7 : vector<1x16x16xf32> to vector<16x16xf32>
    %cst = arith.constant dense<0.000000e+00> : vector<16x16xf32>
    %9 = tpu.matmul %6, %4, %cst {dimension_numbers = #tpu.dot_dimension_numbers<[0], [0], [1], [1], [0, 1, 1, 1], [], []>} : vector<2x16xf32>, vector<2x16xf32>, vector<16x16xf32> -> vector<16x16xf32>
    %c16_i32 = arith.constant 16 : i32
    %10 = arith.muli %arg2, %c16_i32 : i32
    %11 = tpu.iota {dimensions = array<i32: 0>} : vector<16x16xi32>
    %12 = vector.broadcast %10 : i32 to vector<16x16xi32>
    %13 = arith.addi %12, %11 : vector<16x16xi32>
    %c16_i32_9 = arith.constant 16 : i32
    %14 = vector.broadcast %c16_i32_9 : i32 to vector<16x16xi32>
    %15 = arith.cmpi slt, %13, %14 : vector<16x16xi32>
    %cst_10 = arith.constant -1.000000e+30 : f32
    %16 = vector.broadcast %cst_10 : f32 to vector<16x16xf32>
    %17 = arith.select %15, %9, %16 : vector<16x16xi1>, vector<16x16xf32>
    %c0_11 = arith.constant 0 : index
    %c0_12 = arith.constant 0 : index
    %18 = vector.load %arg7[%c0_11, %c0_12] : memref<1x16xf32, #tpu.memory_space<vmem>>, vector<1x16xf32>
    %cst_13 = arith.constant dense<0xFF800000> : vector<16xf32>
    %19 = vector.multi_reduction <maximumf>, %17, %cst_13 [0] : vector<16x16xf32> to vector<16xf32>
    %20 = vector.shape_cast %19 : vector<16xf32> to vector<1x16xf32>
    %21 = arith.maximumf %18, %20 : vector<1x16xf32>
    %22 = arith.subf %18, %21 : vector<1x16xf32>
    %23 = math.exp %22 : vector<1x16xf32>
    %24 = vector.broadcast %21 : vector<1x16xf32> to vector<16x16xf32>
    %25 = arith.subf %17, %24 : vector<16x16xf32>
    %26 = math.exp %25 : vector<16x16xf32>
    %c0_14 = arith.constant 0 : index
    %c0_15 = arith.constant 0 : index
    %27 = vector.load %arg8[%c0_14, %c0_15] : memref<1x16xf32, #tpu.memory_space<vmem>>, vector<1x16xf32>
    %28 = arith.mulf %23, %27 : vector<1x16xf32>
    %cst_16 = arith.constant dense<0.000000e+00> : vector<16xf32>
    %29 = vector.multi_reduction <add>, %26, %cst_16 [0] : vector<16x16xf32> to vector<16xf32>
    %30 = vector.shape_cast %29 : vector<16xf32> to vector<1x16xf32>
    %31 = arith.addf %28, %30 : vector<1x16xf32>
    %c0_17 = arith.constant 0 : index
    %c0_18 = arith.constant 0 : index
    %32 = vector.load %arg8[%c0_17, %c0_18] : memref<1x16xf32, #tpu.memory_space<vmem>>, vector<1x16xf32>
    tpu.vector_store %arg8[%c0_17, %c0_18], %31 {strides = array<i32>} : memref<1x16xf32, #tpu.memory_space<vmem>>, vector<1x16xf32>,
    %c0_19 = arith.constant 0 : index
    %c0_20 = arith.constant 0 : index
    %33 = vector.load %arg9[%c0_19, %c0_20] : memref<16x16xf32, #tpu.memory_space<vmem>>, vector<16x16xf32>
    %34 = vector.broadcast %23 : vector<1x16xf32> to vector<16x16xf32>
    %35 = arith.mulf %34, %33 : vector<16x16xf32>
    %cst_21 = arith.constant dense<0.000000e+00> : vector<16x16xf32>
    %36 = tpu.matmul %8, %26, %cst_21 {dimension_numbers = #tpu.dot_dimension_numbers<[1], [0], [0], [1], [0, 0, 1, 1], [], []>} : vector<16x16xf32>, vector<16x16xf32>, vector<16x16xf32> -> vector<16x16xf32>
    %37 = arith.addf %35, %36 : vector<16x16xf32>
    %c0_22 = arith.constant 0 : index
    %c0_23 = arith.constant 0 : index
    %38 = vector.load %arg9[%c0_22, %c0_23] : memref<16x16xf32, #tpu.memory_space<vmem>>, vector<16x16xf32>
    tpu.vector_store %arg9[%c0_22, %c0_23], %37 {strides = array<i32>} : memref<16x16xf32, #tpu.memory_space<vmem>>, vector<16x16xf32>,
    %c0_24 = arith.constant 0 : index
    %c0_25 = arith.constant 0 : index
    %39 = vector.load %arg7[%c0_24, %c0_25] : memref<1x16xf32, #tpu.memory_space<vmem>>, vector<1x16xf32>
    tpu.vector_store %arg7[%c0_24, %c0_25], %21 {strides = array<i32>} : memref<1x16xf32, #tpu.memory_space<vmem>>, vector<1x16xf32>,
    %c0_i32_26 = arith.constant 0 : i32
    %40 = arith.cmpi eq, %arg2, %c0_i32_26 : i32
    %41 = arith.extui %40 : i1 to i32
    %c0_i32_27 = arith.constant 0 : i32
    %42 = arith.cmpi ne, %41, %c0_i32_27 : i32
    scf.if %42 {
      %c0_28 = arith.constant 0 : index
      %c0_29 = arith.constant 0 : index
      %43 = vector.load %arg9[%c0_28, %c0_29] : memref<16x16xf32, #tpu.memory_space<vmem>>, vector<16x16xf32>
      %c0_30 = arith.constant 0 : index
      %c0_31 = arith.constant 0 : index
      %44 = vector.load %arg8[%c0_30, %c0_31] : memref<1x16xf32, #tpu.memory_space<vmem>>, vector<1x16xf32>
      %45 = tpu.reciprocal %44 {approx = true} : vector<1x16xf32> -> vector<1x16xf32>
      %46 = vector.broadcast %45 : vector<1x16xf32> to vector<16x16xf32>
      %47 = arith.mulf %43, %46 : vector<16x16xf32>
      %c0_32 = arith.constant 0 : index
      %c0_33 = arith.constant 0 : index
      %c0_34 = arith.constant 0 : index
      %48 = vector.load %arg6[%c0_32, %c0_33, %c0_34] : memref<1x16x16xf32, #tpu.memory_space<vmem>>, vector<1x16x16xf32>
      %49 = vector.shape_cast %48 : vector<1x16x16xf32> to vector<16x16xf32>
      %50 = vector.shape_cast %47 : vector<16x16xf32> to vector<1x16x16xf32>
      tpu.vector_store %arg6[%c0_32, %c0_33, %c0_34], %50 {strides = array<i32>} : memref<1x16x16xf32, #tpu.memory_space<vmem>>, vector<1x16x16xf32>,
    } else {
    }
    return
  }
  func.func @transform_0(%arg0: i32, %arg1: i32, %arg2: i32) -> (i32, i32, i32) {
    %c0_i32 = arith.constant 0 : i32
    %c0_i32_0 = arith.constant 0 : i32
    return %arg0, %c0_i32, %arg1 : i32, i32, i32
  }
  func.func @transform_1(%arg0: i32, %arg1: i32, %arg2: i32) -> (i32, i32, i32) {
    %c0_i32 = arith.constant 0 : i32
    %c0_i32_0 = arith.constant 0 : i32
    return %arg0, %c0_i32, %arg2 : i32, i32, i32
  }
  func.func @transform_2(%arg0: i32, %arg1: i32, %arg2: i32) -> (i32, i32, i32) {
    %c0_i32 = arith.constant 0 : i32
    %c0_i32_0 = arith.constant 0 : i32
    return %arg0, %c0_i32, %arg2 : i32, i32, i32
  }
  func.func @transform_3(%arg0: i32, %arg1: i32, %arg2: i32) -> (i32, i32, i32) {
    %c0_i32 = arith.constant 0 : i32
    %c0_i32_0 = arith.constant 0 : i32
    return %arg0, %c0_i32, %arg1 : i32, i32, i32
  }
}

module attributes {stable_mosaic.version = 11 : i64} {
  func.func @_mm_kernel(%arg0: i32, %arg1: i32, %arg2: i32, %arg3: memref<16x4xbf16, #tpu.memory_space<vmem>>, %arg4: memref<1x4x128xbf16, #tpu.memory_space<vmem>>, %arg5: memref<1x16x128xf32, #tpu.memory_space<vmem>>, %arg6: memref<16x128xf32, #tpu.memory_space<vmem>>) attributes {dimension_semantics = [#tpu.dimension_semantics<parallel>, #tpu.dimension_semantics<parallel>, #tpu.dimension_semantics<arbitrary>], iteration_bounds = array<i64: 1, 1, 1>, scalar_prefetch = 0 : i64, scratch_operands = 1 : i64, tpu.core_type = #tpu.core_type<tc>, window_params = [{transform_indices = @transform_0, window_bounds = array<i64: 16, 4>}, {transform_indices = @transform_1, window_bounds = array<i64: 1, 4, 128>}, {transform_indices = @transform_2, window_bounds = array<i64: 1, 16, 128>}]} {
    %c0_i32 = arith.constant 0 : i32
    %0 = arith.cmpi eq, %arg2, %c0_i32 : i32
    %1 = arith.extui %0 : i1 to i32
    %c0_i32_0 = arith.constant 0 : i32
    %2 = arith.cmpi ne, %1, %c0_i32_0 : i32
    scf.if %2 {
      %cst_11 = arith.constant 0.000000e+00 : f32
      %13 = vector.broadcast %cst_11 : f32 to vector<16x128xf32>
      %c0_12 = arith.constant 0 : index
      %c0_13 = arith.constant 0 : index
      %14 = vector.load %arg6[%c0_12, %c0_13] : memref<16x128xf32, #tpu.memory_space<vmem>>, vector<16x128xf32>
      tpu.vector_store %arg6[%c0_12, %c0_13], %13 {strides = array<i32>} : memref<16x128xf32, #tpu.memory_space<vmem>>, vector<16x128xf32>,
    } else {
    }
    %c0 = arith.constant 0 : index
    %c0_1 = arith.constant 0 : index
    %3 = vector.load %arg6[%c0, %c0_1] : memref<16x128xf32, #tpu.memory_space<vmem>>, vector<16x128xf32>
    %c0_2 = arith.constant 0 : index
    %c0_3 = arith.constant 0 : index
    %4 = vector.load %arg3[%c0_2, %c0_3] : memref<16x4xbf16, #tpu.memory_space<vmem>>, vector<16x4xbf16>
    %c0_4 = arith.constant 0 : index
    %c0_5 = arith.constant 0 : index
    %c0_6 = arith.constant 0 : index
    %5 = vector.load %arg4[%c0_4, %c0_5, %c0_6] : memref<1x4x128xbf16, #tpu.memory_space<vmem>>, vector<1x4x128xbf16>
    %6 = vector.shape_cast %5 : vector<1x4x128xbf16> to vector<4x128xbf16>
    %cst = arith.constant dense<0.000000e+00> : vector<16x128xf32>
    %7 = tpu.matmul %4, %6, %cst {dimension_numbers = #tpu.dot_dimension_numbers<[1], [0], [0], [1], [0, 0, 1, 1], [], []>} : vector<16x4xbf16>, vector<4x128xbf16>, vector<16x128xf32> -> vector<16x128xf32>
    %8 = arith.addf %3, %7 : vector<16x128xf32>
    %c0_7 = arith.constant 0 : index
    %c0_8 = arith.constant 0 : index
    %9 = vector.load %arg6[%c0_7, %c0_8] : memref<16x128xf32, #tpu.memory_space<vmem>>, vector<16x128xf32>
    tpu.vector_store %arg6[%c0_7, %c0_8], %8 {strides = array<i32>} : memref<16x128xf32, #tpu.memory_space<vmem>>, vector<16x128xf32>,
    %c0_i32_9 = arith.constant 0 : i32
    %10 = arith.cmpi eq, %arg2, %c0_i32_9 : i32
    %11 = arith.extui %10 : i1 to i32
    %c0_i32_10 = arith.constant 0 : i32
    %12 = arith.cmpi ne, %11, %c0_i32_10 : i32
    scf.if %12 {
      %c0_11 = arith.constant 0 : index
      %c0_12 = arith.constant 0 : index
      %13 = vector.load %arg6[%c0_11, %c0_12] : memref<16x128xf32, #tpu.memory_space<vmem>>, vector<16x128xf32>
      %c0_13 = arith.constant 0 : index
      %c0_14 = arith.constant 0 : index
      %c0_15 = arith.constant 0 : index
      %14 = vector.load %arg5[%c0_13, %c0_14, %c0_15] : memref<1x16x128xf32, #tpu.memory_space<vmem>>, vector<1x16x128xf32>
      %15 = vector.shape_cast %14 : vector<1x16x128xf32> to vector<16x128xf32>
      %16 = vector.shape_cast %13 : vector<16x128xf32> to vector<1x16x128xf32>
      tpu.vector_store %arg5[%c0_13, %c0_14, %c0_15], %16 {strides = array<i32>} : memref<1x16x128xf32, #tpu.memory_space<vmem>>, vector<1x16x128xf32>,
    } else {
    }
    return
  }
  func.func @transform_0(%arg0: i32, %arg1: i32, %arg2: i32) -> (i32, i32) {
    %c0_i32 = arith.constant 0 : i32
    %c0_i32_0 = arith.constant 0 : i32
    return %c0_i32, %arg2 : i32, i32
  }
  func.func @transform_1(%arg0: i32, %arg1: i32, %arg2: i32) -> (i32, i32, i32) {
    %c0_i32 = arith.constant 0 : i32
    return %arg0, %arg2, %arg1 : i32, i32, i32
  }
  func.func @transform_2(%arg0: i32, %arg1: i32, %arg2: i32) -> (i32, i32, i32) {
    %c0_i32 = arith.constant 0 : i32
    %c0_i32_0 = arith.constant 0 : i32
    return %arg0, %c0_i32, %arg1 : i32, i32, i32
  }
}

module attributes {stable_mosaic.version = 11 : i64} {
  func.func @_mm_kernel(%arg0: i32, %arg1: i32, %arg2: i32, %arg3: memref<16x4xbf16, #tpu.memory_space<vmem>>, %arg4: memref<1x4x512xbf16, #tpu.memory_space<vmem>>, %arg5: memref<1x16x512xf32, #tpu.memory_space<vmem>>, %arg6: memref<16x512xf32, #tpu.memory_space<vmem>>) attributes {dimension_semantics = [#tpu.dimension_semantics<parallel>, #tpu.dimension_semantics<parallel>, #tpu.dimension_semantics<arbitrary>], iteration_bounds = array<i64: 1, 1, 1>, scalar_prefetch = 0 : i64, scratch_operands = 1 : i64, tpu.core_type = #tpu.core_type<tc>, window_params = [{transform_indices = @transform_0, window_bounds = array<i64: 16, 4>}, {transform_indices = @transform_1, window_bounds = array<i64: 1, 4, 512>}, {transform_indices = @transform_2, window_bounds = array<i64: 1, 16, 512>}]} {
    %c0_i32 = arith.constant 0 : i32
    %0 = arith.cmpi eq, %arg2, %c0_i32 : i32
    %1 = arith.extui %0 : i1 to i32
    %c0_i32_0 = arith.constant 0 : i32
    %2 = arith.cmpi ne, %1, %c0_i32_0 : i32
    scf.if %2 {
      %cst_11 = arith.constant 0.000000e+00 : f32
      %13 = vector.broadcast %cst_11 : f32 to vector<16x512xf32>
      %c0_12 = arith.constant 0 : index
      %c0_13 = arith.constant 0 : index
      %14 = vector.load %arg6[%c0_12, %c0_13] : memref<16x512xf32, #tpu.memory_space<vmem>>, vector<16x512xf32>
      tpu.vector_store %arg6[%c0_12, %c0_13], %13 {strides = array<i32>} : memref<16x512xf32, #tpu.memory_space<vmem>>, vector<16x512xf32>,
    } else {
    }
    %c0 = arith.constant 0 : index
    %c0_1 = arith.constant 0 : index
    %3 = vector.load %arg6[%c0, %c0_1] : memref<16x512xf32, #tpu.memory_space<vmem>>, vector<16x512xf32>
    %c0_2 = arith.constant 0 : index
    %c0_3 = arith.constant 0 : index
    %4 = vector.load %arg3[%c0_2, %c0_3] : memref<16x4xbf16, #tpu.memory_space<vmem>>, vector<16x4xbf16>
    %c0_4 = arith.constant 0 : index
    %c0_5 = arith.constant 0 : index
    %c0_6 = arith.constant 0 : index
    %5 = vector.load %arg4[%c0_4, %c0_5, %c0_6] : memref<1x4x512xbf16, #tpu.memory_space<vmem>>, vector<1x4x512xbf16>
    %6 = vector.shape_cast %5 : vector<1x4x512xbf16> to vector<4x512xbf16>
    %cst = arith.constant dense<0.000000e+00> : vector<16x512xf32>
    %7 = tpu.matmul %4, %6, %cst {dimension_numbers = #tpu.dot_dimension_numbers<[1], [0], [0], [1], [0, 0, 1, 1], [], []>} : vector<16x4xbf16>, vector<4x512xbf16>, vector<16x512xf32> -> vector<16x512xf32>
    %8 = arith.addf %3, %7 : vector<16x512xf32>
    %c0_7 = arith.constant 0 : index
    %c0_8 = arith.constant 0 : index
    %9 = vector.load %arg6[%c0_7, %c0_8] : memref<16x512xf32, #tpu.memory_space<vmem>>, vector<16x512xf32>
    tpu.vector_store %arg6[%c0_7, %c0_8], %8 {strides = array<i32>} : memref<16x512xf32, #tpu.memory_space<vmem>>, vector<16x512xf32>,
    %c0_i32_9 = arith.constant 0 : i32
    %10 = arith.cmpi eq, %arg2, %c0_i32_9 : i32
    %11 = arith.extui %10 : i1 to i32
    %c0_i32_10 = arith.constant 0 : i32
    %12 = arith.cmpi ne, %11, %c0_i32_10 : i32
    scf.if %12 {
      %c0_11 = arith.constant 0 : index
      %c0_12 = arith.constant 0 : index
      %13 = vector.load %arg6[%c0_11, %c0_12] : memref<16x512xf32, #tpu.memory_space<vmem>>, vector<16x512xf32>
      %c0_13 = arith.constant 0 : index
      %c0_14 = arith.constant 0 : index
      %c0_15 = arith.constant 0 : index
      %14 = vector.load %arg5[%c0_13, %c0_14, %c0_15] : memref<1x16x512xf32, #tpu.memory_space<vmem>>, vector<1x16x512xf32>
      %15 = vector.shape_cast %14 : vector<1x16x512xf32> to vector<16x512xf32>
      %16 = vector.shape_cast %13 : vector<16x512xf32> to vector<1x16x512xf32>
      tpu.vector_store %arg5[%c0_13, %c0_14, %c0_15], %16 {strides = array<i32>} : memref<1x16x512xf32, #tpu.memory_space<vmem>>, vector<1x16x512xf32>,
    } else {
    }
    return
  }
  func.func @transform_0(%arg0: i32, %arg1: i32, %arg2: i32) -> (i32, i32) {
    %c0_i32 = arith.constant 0 : i32
    %c0_i32_0 = arith.constant 0 : i32
    return %c0_i32, %arg2 : i32, i32
  }
  func.func @transform_1(%arg0: i32, %arg1: i32, %arg2: i32) -> (i32, i32, i32) {
    %c0_i32 = arith.constant 0 : i32
    return %arg0, %arg2, %arg1 : i32, i32, i32
  }
  func.func @transform_2(%arg0: i32, %arg1: i32, %arg2: i32) -> (i32, i32, i32) {
    %c0_i32 = arith.constant 0 : i32
    %c0_i32_0 = arith.constant 0 : i32
    return %arg0, %c0_i32, %arg1 : i32, i32, i32
  }
}

module attributes {stable_mosaic.version = 11 : i64} {
  func.func @_add_kernel(%arg0: i32, %arg1: i32, %arg2: memref<32x256xf32, #tpu.memory_space<vmem>>, %arg3: memref<32x256xbf16, #tpu.memory_space<vmem>>, %arg4: memref<32x256xbf16, #tpu.memory_space<vmem>>) attributes {dimension_semantics = [#tpu.dimension_semantics<parallel>, #tpu.dimension_semantics<parallel>], iteration_bounds = array<i64: 1, 1>, scalar_prefetch = 0 : i64, scratch_operands = 0 : i64, tpu.core_type = #tpu.core_type<tc>, window_params = [{transform_indices = @transform_0, window_bounds = array<i64: 32, 256>}, {transform_indices = @transform_1, window_bounds = array<i64: 32, 256>}, {transform_indices = @transform_2, window_bounds = array<i64: 32, 256>}]} {
    %c0 = arith.constant 0 : index
    %c0_0 = arith.constant 0 : index
    %0 = vector.load %arg2[%c0, %c0_0] : memref<32x256xf32, #tpu.memory_space<vmem>>, vector<32x256xf32>
    %c0_1 = arith.constant 0 : index
    %c0_2 = arith.constant 0 : index
    %1 = vector.load %arg3[%c0_1, %c0_2] : memref<32x256xbf16, #tpu.memory_space<vmem>>, vector<32x256xbf16>
    %2 = arith.extf %1 : vector<32x256xbf16> to vector<32x256xf32>
    %3 = arith.addf %0, %2 : vector<32x256xf32>
    %4 = arith.truncf %3 : vector<32x256xf32> to vector<32x256xbf16>
    %c0_3 = arith.constant 0 : index
    %c0_4 = arith.constant 0 : index
    %5 = vector.load %arg4[%c0_3, %c0_4] : memref<32x256xbf16, #tpu.memory_space<vmem>>, vector<32x256xbf16>
    tpu.vector_store %arg4[%c0_3, %c0_4], %4 {strides = array<i32>} : memref<32x256xbf16, #tpu.memory_space<vmem>>, vector<32x256xbf16>,
    return
  }
  func.func @transform_0(%arg0: i32, %arg1: i32) -> (i32, i32) {
    %c0_i32 = arith.constant 0 : i32
    return %arg0, %arg1 : i32, i32
  }
  func.func @transform_1(%arg0: i32, %arg1: i32) -> (i32, i32) {
    %c0_i32 = arith.constant 0 : i32
    return %arg0, %arg1 : i32, i32
  }
  func.func @transform_2(%arg0: i32, %arg1: i32) -> (i32, i32) {
    %c0_i32 = arith.constant 0 : i32
    return %arg0, %arg1 : i32, i32
  }
}

module attributes {stable_mosaic.version = 11 : i64} {
  func.func @_mm_kernel(%arg0: i32, %arg1: i32, %arg2: i32, %arg3: memref<16x144xbf16, #tpu.memory_space<vmem>>, %arg4: memref<1x144x512xbf16, #tpu.memory_space<vmem>>, %arg5: memref<16x1xf32, #tpu.memory_space<vmem>>, %arg6: memref<1x16x512xbf16, #tpu.memory_space<vmem>>, %arg7: memref<16x512xf32, #tpu.memory_space<vmem>>) attributes {dimension_semantics = [#tpu.dimension_semantics<parallel>, #tpu.dimension_semantics<parallel>, #tpu.dimension_semantics<arbitrary>], iteration_bounds = array<i64: 2, 2, 1>, scalar_prefetch = 0 : i64, scratch_operands = 1 : i64, tpu.core_type = #tpu.core_type<tc>, window_params = [{transform_indices = @transform_0, window_bounds = array<i64: 16, 144>}, {transform_indices = @transform_1, window_bounds = array<i64: 1, 144, 512>}, {pipeline_mode = #tpu.pipeline_mode<synchronous>, transform_indices = @transform_2, window_bounds = array<i64: 16, 1>}, {transform_indices = @transform_3, window_bounds = array<i64: 1, 16, 512>}]} {
    %c0_i32 = arith.constant 0 : i32
    %0 = arith.cmpi eq, %arg2, %c0_i32 : i32
    %1 = arith.extui %0 : i1 to i32
    %c0_i32_0 = arith.constant 0 : i32
    %2 = arith.cmpi ne, %1, %c0_i32_0 : i32
    scf.if %2 {
      %cst_11 = arith.constant 0.000000e+00 : f32
      %13 = vector.broadcast %cst_11 : f32 to vector<16x512xf32>
      %c0_12 = arith.constant 0 : index
      %c0_13 = arith.constant 0 : index
      %14 = vector.load %arg7[%c0_12, %c0_13] : memref<16x512xf32, #tpu.memory_space<vmem>>, vector<16x512xf32>
      tpu.vector_store %arg7[%c0_12, %c0_13], %13 {strides = array<i32>} : memref<16x512xf32, #tpu.memory_space<vmem>>, vector<16x512xf32>,
    } else {
    }
    %c0 = arith.constant 0 : index
    %c0_1 = arith.constant 0 : index
    %3 = vector.load %arg7[%c0, %c0_1] : memref<16x512xf32, #tpu.memory_space<vmem>>, vector<16x512xf32>
    %c0_2 = arith.constant 0 : index
    %c0_3 = arith.constant 0 : index
    %4 = vector.load %arg3[%c0_2, %c0_3] : memref<16x144xbf16, #tpu.memory_space<vmem>>, vector<16x144xbf16>
    %c0_4 = arith.constant 0 : index
    %c0_5 = arith.constant 0 : index
    %c0_6 = arith.constant 0 : index
    %5 = vector.load %arg4[%c0_4, %c0_5, %c0_6] : memref<1x144x512xbf16, #tpu.memory_space<vmem>>, vector<1x144x512xbf16>
    %6 = vector.shape_cast %5 : vector<1x144x512xbf16> to vector<144x512xbf16>
    %cst = arith.constant dense<0.000000e+00> : vector<16x512xf32>
    %7 = tpu.matmul %4, %6, %cst {dimension_numbers = #tpu.dot_dimension_numbers<[1], [0], [0], [1], [0, 0, 1, 1], [], []>} : vector<16x144xbf16>, vector<144x512xbf16>, vector<16x512xf32> -> vector<16x512xf32>
    %8 = arith.addf %3, %7 : vector<16x512xf32>
    %c0_7 = arith.constant 0 : index
    %c0_8 = arith.constant 0 : index
    %9 = vector.load %arg7[%c0_7, %c0_8] : memref<16x512xf32, #tpu.memory_space<vmem>>, vector<16x512xf32>
    tpu.vector_store %arg7[%c0_7, %c0_8], %8 {strides = array<i32>} : memref<16x512xf32, #tpu.memory_space<vmem>>, vector<16x512xf32>,
    %c0_i32_9 = arith.constant 0 : i32
    %10 = arith.cmpi eq, %arg2, %c0_i32_9 : i32
    %11 = arith.extui %10 : i1 to i32
    %c0_i32_10 = arith.constant 0 : i32
    %12 = arith.cmpi ne, %11, %c0_i32_10 : i32
    scf.if %12 {
      %c0_11 = arith.constant 0 : index
      %c0_12 = arith.constant 0 : index
      %13 = vector.load %arg7[%c0_11, %c0_12] : memref<16x512xf32, #tpu.memory_space<vmem>>, vector<16x512xf32>
      %c0_13 = arith.constant 0 : index
      %c0_14 = arith.constant 0 : index
      %14 = vector.load %arg5[%c0_13, %c0_14] : memref<16x1xf32, #tpu.memory_space<vmem>>, vector<16x1xf32>
      %15 = vector.broadcast %14 : vector<16x1xf32> to vector<16x512xf32>
      %16 = arith.addf %13, %15 : vector<16x512xf32>
      %17 = arith.truncf %16 : vector<16x512xf32> to vector<16x512xbf16>
      %c0_15 = arith.constant 0 : index
      %c0_16 = arith.constant 0 : index
      %c0_17 = arith.constant 0 : index
      %18 = vector.load %arg6[%c0_15, %c0_16, %c0_17] : memref<1x16x512xbf16, #tpu.memory_space<vmem>>, vector<1x16x512xbf16>
      %19 = vector.shape_cast %18 : vector<1x16x512xbf16> to vector<16x512xbf16>
      %20 = vector.shape_cast %17 : vector<16x512xbf16> to vector<1x16x512xbf16>
      tpu.vector_store %arg6[%c0_15, %c0_16, %c0_17], %20 {strides = array<i32>} : memref<1x16x512xbf16, #tpu.memory_space<vmem>>, vector<1x16x512xbf16>,
    } else {
    }
    return
  }
  func.func @transform_0(%arg0: i32, %arg1: i32, %arg2: i32) -> (i32, i32) {
    %c0_i32 = arith.constant 0 : i32
    %c0_i32_0 = arith.constant 0 : i32
    return %c0_i32, %arg2 : i32, i32
  }
  func.func @transform_1(%arg0: i32, %arg1: i32, %arg2: i32) -> (i32, i32, i32) {
    %c0_i32 = arith.constant 0 : i32
    return %arg0, %arg2, %arg1 : i32, i32, i32
  }
  func.func @transform_2(%arg0: i32, %arg1: i32, %arg2: i32) -> (i32, i32) {
    %c0_i32 = arith.constant 0 : i32
    %c0_i32_0 = arith.constant 0 : i32
    %c0_i32_1 = arith.constant 0 : i32
    return %c0_i32, %c0_i32_0 : i32, i32
  }
  func.func @transform_3(%arg0: i32, %arg1: i32, %arg2: i32) -> (i32, i32, i32) {
    %c0_i32 = arith.constant 0 : i32
    %c0_i32_0 = arith.constant 0 : i32
    return %arg0, %c0_i32, %arg1 : i32, i32, i32
  }
}

module attributes {stable_mosaic.version = 11 : i64} {
  func.func @_mm_kernel(%arg0: i32, %arg1: i32, %arg2: i32, %arg3: memref<16x16xbf16, #tpu.memory_space<vmem>>, %arg4: memref<1x16x512xbf16, #tpu.memory_space<vmem>>, %arg5: memref<16x1xf32, #tpu.memory_space<vmem>>, %arg6: memref<1x16x512xbf16, #tpu.memory_space<vmem>>, %arg7: memref<1x16x512xbf16, #tpu.memory_space<vmem>>, %arg8: memref<16x512xf32, #tpu.memory_space<vmem>>) attributes {dimension_semantics = [#tpu.dimension_semantics<parallel>, #tpu.dimension_semantics<parallel>, #tpu.dimension_semantics<arbitrary>], iteration_bounds = array<i64: 2, 2, 1>, scalar_prefetch = 0 : i64, scratch_operands = 1 : i64, tpu.core_type = #tpu.core_type<tc>, window_params = [{transform_indices = @transform_0, window_bounds = array<i64: 16, 16>}, {transform_indices = @transform_1, window_bounds = array<i64: 1, 16, 512>}, {pipeline_mode = #tpu.pipeline_mode<synchronous>, transform_indices = @transform_2, window_bounds = array<i64: 16, 1>}, {transform_indices = @transform_3, window_bounds = array<i64: 1, 16, 512>}, {transform_indices = @transform_4, window_bounds = array<i64: 1, 16, 512>}]} {
    %c0_i32 = arith.constant 0 : i32
    %0 = arith.cmpi eq, %arg2, %c0_i32 : i32
    %1 = arith.extui %0 : i1 to i32
    %c0_i32_0 = arith.constant 0 : i32
    %2 = arith.cmpi ne, %1, %c0_i32_0 : i32
    scf.if %2 {
      %cst_11 = arith.constant 0.000000e+00 : f32
      %13 = vector.broadcast %cst_11 : f32 to vector<16x512xf32>
      %c0_12 = arith.constant 0 : index
      %c0_13 = arith.constant 0 : index
      %14 = vector.load %arg8[%c0_12, %c0_13] : memref<16x512xf32, #tpu.memory_space<vmem>>, vector<16x512xf32>
      tpu.vector_store %arg8[%c0_12, %c0_13], %13 {strides = array<i32>} : memref<16x512xf32, #tpu.memory_space<vmem>>, vector<16x512xf32>,
    } else {
    }
    %c0 = arith.constant 0 : index
    %c0_1 = arith.constant 0 : index
    %3 = vector.load %arg8[%c0, %c0_1] : memref<16x512xf32, #tpu.memory_space<vmem>>, vector<16x512xf32>
    %c0_2 = arith.constant 0 : index
    %c0_3 = arith.constant 0 : index
    %4 = vector.load %arg3[%c0_2, %c0_3] : memref<16x16xbf16, #tpu.memory_space<vmem>>, vector<16x16xbf16>
    %c0_4 = arith.constant 0 : index
    %c0_5 = arith.constant 0 : index
    %c0_6 = arith.constant 0 : index
    %5 = vector.load %arg4[%c0_4, %c0_5, %c0_6] : memref<1x16x512xbf16, #tpu.memory_space<vmem>>, vector<1x16x512xbf16>
    %6 = vector.shape_cast %5 : vector<1x16x512xbf16> to vector<16x512xbf16>
    %cst = arith.constant dense<0.000000e+00> : vector<16x512xf32>
    %7 = tpu.matmul %4, %6, %cst {dimension_numbers = #tpu.dot_dimension_numbers<[1], [0], [0], [1], [0, 0, 1, 1], [], []>} : vector<16x16xbf16>, vector<16x512xbf16>, vector<16x512xf32> -> vector<16x512xf32>
    %8 = arith.addf %3, %7 : vector<16x512xf32>
    %c0_7 = arith.constant 0 : index
    %c0_8 = arith.constant 0 : index
    %9 = vector.load %arg8[%c0_7, %c0_8] : memref<16x512xf32, #tpu.memory_space<vmem>>, vector<16x512xf32>
    tpu.vector_store %arg8[%c0_7, %c0_8], %8 {strides = array<i32>} : memref<16x512xf32, #tpu.memory_space<vmem>>, vector<16x512xf32>,
    %c0_i32_9 = arith.constant 0 : i32
    %10 = arith.cmpi eq, %arg2, %c0_i32_9 : i32
    %11 = arith.extui %10 : i1 to i32
    %c0_i32_10 = arith.constant 0 : i32
    %12 = arith.cmpi ne, %11, %c0_i32_10 : i32
    scf.if %12 {
      %c0_11 = arith.constant 0 : index
      %c0_12 = arith.constant 0 : index
      %13 = vector.load %arg8[%c0_11, %c0_12] : memref<16x512xf32, #tpu.memory_space<vmem>>, vector<16x512xf32>
      %c0_13 = arith.constant 0 : index
      %c0_14 = arith.constant 0 : index
      %14 = vector.load %arg5[%c0_13, %c0_14] : memref<16x1xf32, #tpu.memory_space<vmem>>, vector<16x1xf32>
      %15 = vector.broadcast %14 : vector<16x1xf32> to vector<16x512xf32>
      %16 = arith.addf %13, %15 : vector<16x512xf32>
      %17 = math.absf %16 : vector<16x512xf32>
      %cst_15 = arith.constant 0.000000e+00 : f32
      %18 = vector.broadcast %cst_15 : f32 to vector<16x512xf32>
      %19 = arith.subf %18, %17 : vector<16x512xf32>
      %20 = math.exp %19 : vector<16x512xf32>
      %cst_16 = arith.constant 0.000000e+00 : f32
      %21 = vector.broadcast %cst_16 : f32 to vector<16x512xf32>
      %22 = arith.cmpf oge, %16, %21 : vector<16x512xf32>
      %cst_17 = arith.constant 1.000000e+00 : f32
      %23 = vector.broadcast %cst_17 : f32 to vector<16x512xf32>
      %24 = arith.addf %23, %20 : vector<16x512xf32>
      %cst_18 = arith.constant 1.000000e+00 : f32
      %25 = vector.broadcast %cst_18 : f32 to vector<16x512xf32>
      %26 = arith.divf %25, %24 : vector<16x512xf32>
      %cst_19 = arith.constant 1.000000e+00 : f32
      %27 = vector.broadcast %cst_19 : f32 to vector<16x512xf32>
      %28 = arith.addf %27, %20 : vector<16x512xf32>
      %29 = arith.divf %20, %28 : vector<16x512xf32>
      %30 = arith.select %22, %26, %29 : vector<16x512xi1>, vector<16x512xf32>
      %c0_20 = arith.constant 0 : index
      %c0_21 = arith.constant 0 : index
      %c0_22 = arith.constant 0 : index
      %31 = vector.load %arg6[%c0_20, %c0_21, %c0_22] : memref<1x16x512xbf16, #tpu.memory_space<vmem>>, vector<1x16x512xbf16>
      %32 = vector.shape_cast %31 : vector<1x16x512xbf16> to vector<16x512xbf16>
      %33 = arith.extf %32 : vector<16x512xbf16> to vector<16x512xf32>
      %34 = arith.mulf %30, %33 : vector<16x512xf32>
      %cst_23 = arith.constant 0.000000e+00 : f32
      %35 = vector.broadcast %cst_23 : f32 to vector<16x512xf32>
      %36 = arith.cmpf oge, %34, %35 : vector<16x512xf32>
      %cst_24 = arith.constant 2.000000e-01 : f32
      %37 = vector.broadcast %cst_24 : f32 to vector<16x512xf32>
      %38 = arith.mulf %37, %34 : vector<16x512xf32>
      %39 = arith.select %36, %34, %38 : vector<16x512xi1>, vector<16x512xf32>
      %40 = arith.truncf %39 : vector<16x512xf32> to vector<16x512xbf16>
      %c0_25 = arith.constant 0 : index
      %c0_26 = arith.constant 0 : index
      %c0_27 = arith.constant 0 : index
      %41 = vector.load %arg7[%c0_25, %c0_26, %c0_27] : memref<1x16x512xbf16, #tpu.memory_space<vmem>>, vector<1x16x512xbf16>
      %42 = vector.shape_cast %41 : vector<1x16x512xbf16> to vector<16x512xbf16>
      %43 = vector.shape_cast %40 : vector<16x512xbf16> to vector<1x16x512xbf16>
      tpu.vector_store %arg7[%c0_25, %c0_26, %c0_27], %43 {strides = array<i32>} : memref<1x16x512xbf16, #tpu.memory_space<vmem>>, vector<1x16x512xbf16>,
    } else {
    }
    return
  }
  func.func @transform_0(%arg0: i32, %arg1: i32, %arg2: i32) -> (i32, i32) {
    %c0_i32 = arith.constant 0 : i32
    %c0_i32_0 = arith.constant 0 : i32
    return %c0_i32, %arg2 : i32, i32
  }
  func.func @transform_1(%arg0: i32, %arg1: i32, %arg2: i32) -> (i32, i32, i32) {
    %c0_i32 = arith.constant 0 : i32
    return %arg0, %arg2, %arg1 : i32, i32, i32
  }
  func.func @transform_2(%arg0: i32, %arg1: i32, %arg2: i32) -> (i32, i32) {
    %c0_i32 = arith.constant 0 : i32
    %c0_i32_0 = arith.constant 0 : i32
    %c0_i32_1 = arith.constant 0 : i32
    return %c0_i32, %c0_i32_0 : i32, i32
  }
  func.func @transform_3(%arg0: i32, %arg1: i32, %arg2: i32) -> (i32, i32, i32) {
    %c0_i32 = arith.constant 0 : i32
    %c0_i32_0 = arith.constant 0 : i32
    return %arg0, %c0_i32, %arg1 : i32, i32, i32
  }
  func.func @transform_4(%arg0: i32, %arg1: i32, %arg2: i32) -> (i32, i32, i32) {
    %c0_i32 = arith.constant 0 : i32
    %c0_i32_0 = arith.constant 0 : i32
    return %arg0, %c0_i32, %arg1 : i32, i32, i32
  }
}

module attributes {stable_mosaic.version = 11 : i64} {
  func.func @_mm_kernel(%arg0: i32, %arg1: i32, %arg2: i32, %arg3: memref<16x144xbf16, #tpu.memory_space<vmem>>, %arg4: memref<1x144x512xbf16, #tpu.memory_space<vmem>>, %arg5: memref<16x1xf32, #tpu.memory_space<vmem>>, %arg6: memref<1x16x512xbf16, #tpu.memory_space<vmem>>, %arg7: memref<16x512xf32, #tpu.memory_space<vmem>>) attributes {dimension_semantics = [#tpu.dimension_semantics<parallel>, #tpu.dimension_semantics<parallel>, #tpu.dimension_semantics<arbitrary>], iteration_bounds = array<i64: 2, 2, 1>, scalar_prefetch = 0 : i64, scratch_operands = 1 : i64, tpu.core_type = #tpu.core_type<tc>, window_params = [{transform_indices = @transform_0, window_bounds = array<i64: 16, 144>}, {transform_indices = @transform_1, window_bounds = array<i64: 1, 144, 512>}, {pipeline_mode = #tpu.pipeline_mode<synchronous>, transform_indices = @transform_2, window_bounds = array<i64: 16, 1>}, {transform_indices = @transform_3, window_bounds = array<i64: 1, 16, 512>}]} {
    %c0_i32 = arith.constant 0 : i32
    %0 = arith.cmpi eq, %arg2, %c0_i32 : i32
    %1 = arith.extui %0 : i1 to i32
    %c0_i32_0 = arith.constant 0 : i32
    %2 = arith.cmpi ne, %1, %c0_i32_0 : i32
    scf.if %2 {
      %cst_11 = arith.constant 0.000000e+00 : f32
      %13 = vector.broadcast %cst_11 : f32 to vector<16x512xf32>
      %c0_12 = arith.constant 0 : index
      %c0_13 = arith.constant 0 : index
      %14 = vector.load %arg7[%c0_12, %c0_13] : memref<16x512xf32, #tpu.memory_space<vmem>>, vector<16x512xf32>
      tpu.vector_store %arg7[%c0_12, %c0_13], %13 {strides = array<i32>} : memref<16x512xf32, #tpu.memory_space<vmem>>, vector<16x512xf32>,
    } else {
    }
    %c0 = arith.constant 0 : index
    %c0_1 = arith.constant 0 : index
    %3 = vector.load %arg7[%c0, %c0_1] : memref<16x512xf32, #tpu.memory_space<vmem>>, vector<16x512xf32>
    %c0_2 = arith.constant 0 : index
    %c0_3 = arith.constant 0 : index
    %4 = vector.load %arg3[%c0_2, %c0_3] : memref<16x144xbf16, #tpu.memory_space<vmem>>, vector<16x144xbf16>
    %c0_4 = arith.constant 0 : index
    %c0_5 = arith.constant 0 : index
    %c0_6 = arith.constant 0 : index
    %5 = vector.load %arg4[%c0_4, %c0_5, %c0_6] : memref<1x144x512xbf16, #tpu.memory_space<vmem>>, vector<1x144x512xbf16>
    %6 = vector.shape_cast %5 : vector<1x144x512xbf16> to vector<144x512xbf16>
    %cst = arith.constant dense<0.000000e+00> : vector<16x512xf32>
    %7 = tpu.matmul %4, %6, %cst {dimension_numbers = #tpu.dot_dimension_numbers<[1], [0], [0], [1], [0, 0, 1, 1], [], []>} : vector<16x144xbf16>, vector<144x512xbf16>, vector<16x512xf32> -> vector<16x512xf32>
    %8 = arith.addf %3, %7 : vector<16x512xf32>
    %c0_7 = arith.constant 0 : index
    %c0_8 = arith.constant 0 : index
    %9 = vector.load %arg7[%c0_7, %c0_8] : memref<16x512xf32, #tpu.memory_space<vmem>>, vector<16x512xf32>
    tpu.vector_store %arg7[%c0_7, %c0_8], %8 {strides = array<i32>} : memref<16x512xf32, #tpu.memory_space<vmem>>, vector<16x512xf32>,
    %c0_i32_9 = arith.constant 0 : i32
    %10 = arith.cmpi eq, %arg2, %c0_i32_9 : i32
    %11 = arith.extui %10 : i1 to i32
    %c0_i32_10 = arith.constant 0 : i32
    %12 = arith.cmpi ne, %11, %c0_i32_10 : i32
    scf.if %12 {
      %c0_11 = arith.constant 0 : index
      %c0_12 = arith.constant 0 : index
      %13 = vector.load %arg7[%c0_11, %c0_12] : memref<16x512xf32, #tpu.memory_space<vmem>>, vector<16x512xf32>
      %c0_13 = arith.constant 0 : index
      %c0_14 = arith.constant 0 : index
      %14 = vector.load %arg5[%c0_13, %c0_14] : memref<16x1xf32, #tpu.memory_space<vmem>>, vector<16x1xf32>
      %15 = vector.broadcast %14 : vector<16x1xf32> to vector<16x512xf32>
      %16 = arith.addf %13, %15 : vector<16x512xf32>
      %cst_15 = arith.constant 0.000000e+00 : f32
      %17 = vector.broadcast %cst_15 : f32 to vector<16x512xf32>
      %18 = arith.cmpf oge, %16, %17 : vector<16x512xf32>
      %cst_16 = arith.constant 2.000000e-01 : f32
      %19 = vector.broadcast %cst_16 : f32 to vector<16x512xf32>
      %20 = arith.mulf %19, %16 : vector<16x512xf32>
      %21 = arith.select %18, %16, %20 : vector<16x512xi1>, vector<16x512xf32>
      %22 = arith.truncf %21 : vector<16x512xf32> to vector<16x512xbf16>
      %c0_17 = arith.constant 0 : index
      %c0_18 = arith.constant 0 : index
      %c0_19 = arith.constant 0 : index
      %23 = vector.load %arg6[%c0_17, %c0_18, %c0_19] : memref<1x16x512xbf16, #tpu.memory_space<vmem>>, vector<1x16x512xbf16>
      %24 = vector.shape_cast %23 : vector<1x16x512xbf16> to vector<16x512xbf16>
      %25 = vector.shape_cast %22 : vector<16x512xbf16> to vector<1x16x512xbf16>
      tpu.vector_store %arg6[%c0_17, %c0_18, %c0_19], %25 {strides = array<i32>} : memref<1x16x512xbf16, #tpu.memory_space<vmem>>, vector<1x16x512xbf16>,
    } else {
    }
    return
  }
  func.func @transform_0(%arg0: i32, %arg1: i32, %arg2: i32) -> (i32, i32) {
    %c0_i32 = arith.constant 0 : i32
    %c0_i32_0 = arith.constant 0 : i32
    return %c0_i32, %arg2 : i32, i32
  }
  func.func @transform_1(%arg0: i32, %arg1: i32, %arg2: i32) -> (i32, i32, i32) {
    %c0_i32 = arith.constant 0 : i32
    return %arg0, %arg2, %arg1 : i32, i32, i32
  }
  func.func @transform_2(%arg0: i32, %arg1: i32, %arg2: i32) -> (i32, i32) {
    %c0_i32 = arith.constant 0 : i32
    %c0_i32_0 = arith.constant 0 : i32
    %c0_i32_1 = arith.constant 0 : i32
    return %c0_i32, %c0_i32_0 : i32, i32
  }
  func.func @transform_3(%arg0: i32, %arg1: i32, %arg2: i32) -> (i32, i32, i32) {
    %c0_i32 = arith.constant 0 : i32
    %c0_i32_0 = arith.constant 0 : i32
    return %arg0, %c0_i32, %arg1 : i32, i32, i32
  }
}

module attributes {stable_mosaic.version = 11 : i64} {
  func.func @_mm_kernel(%arg0: i32, %arg1: i32, %arg2: i32, %arg3: memref<32x16xbf16, #tpu.memory_space<vmem>>, %arg4: memref<1x16x128xbf16, #tpu.memory_space<vmem>>, %arg5: memref<1x32x128xf32, #tpu.memory_space<vmem>>, %arg6: memref<32x128xf32, #tpu.memory_space<vmem>>) attributes {dimension_semantics = [#tpu.dimension_semantics<parallel>, #tpu.dimension_semantics<parallel>, #tpu.dimension_semantics<arbitrary>], iteration_bounds = array<i64: 1, 1, 1>, scalar_prefetch = 0 : i64, scratch_operands = 1 : i64, tpu.core_type = #tpu.core_type<tc>, window_params = [{transform_indices = @transform_0, window_bounds = array<i64: 32, 16>}, {transform_indices = @transform_1, window_bounds = array<i64: 1, 16, 128>}, {transform_indices = @transform_2, window_bounds = array<i64: 1, 32, 128>}]} {
    %c0_i32 = arith.constant 0 : i32
    %0 = arith.cmpi eq, %arg2, %c0_i32 : i32
    %1 = arith.extui %0 : i1 to i32
    %c0_i32_0 = arith.constant 0 : i32
    %2 = arith.cmpi ne, %1, %c0_i32_0 : i32
    scf.if %2 {
      %cst_11 = arith.constant 0.000000e+00 : f32
      %13 = vector.broadcast %cst_11 : f32 to vector<32x128xf32>
      %c0_12 = arith.constant 0 : index
      %c0_13 = arith.constant 0 : index
      %14 = vector.load %arg6[%c0_12, %c0_13] : memref<32x128xf32, #tpu.memory_space<vmem>>, vector<32x128xf32>
      tpu.vector_store %arg6[%c0_12, %c0_13], %13 {strides = array<i32>} : memref<32x128xf32, #tpu.memory_space<vmem>>, vector<32x128xf32>,
    } else {
    }
    %c0 = arith.constant 0 : index
    %c0_1 = arith.constant 0 : index
    %3 = vector.load %arg6[%c0, %c0_1] : memref<32x128xf32, #tpu.memory_space<vmem>>, vector<32x128xf32>
    %c0_2 = arith.constant 0 : index
    %c0_3 = arith.constant 0 : index
    %4 = vector.load %arg3[%c0_2, %c0_3] : memref<32x16xbf16, #tpu.memory_space<vmem>>, vector<32x16xbf16>
    %c0_4 = arith.constant 0 : index
    %c0_5 = arith.constant 0 : index
    %c0_6 = arith.constant 0 : index
    %5 = vector.load %arg4[%c0_4, %c0_5, %c0_6] : memref<1x16x128xbf16, #tpu.memory_space<vmem>>, vector<1x16x128xbf16>
    %6 = vector.shape_cast %5 : vector<1x16x128xbf16> to vector<16x128xbf16>
    %cst = arith.constant dense<0.000000e+00> : vector<32x128xf32>
    %7 = tpu.matmul %4, %6, %cst {dimension_numbers = #tpu.dot_dimension_numbers<[1], [0], [0], [1], [0, 0, 1, 1], [], []>} : vector<32x16xbf16>, vector<16x128xbf16>, vector<32x128xf32> -> vector<32x128xf32>
    %8 = arith.addf %3, %7 : vector<32x128xf32>
    %c0_7 = arith.constant 0 : index
    %c0_8 = arith.constant 0 : index
    %9 = vector.load %arg6[%c0_7, %c0_8] : memref<32x128xf32, #tpu.memory_space<vmem>>, vector<32x128xf32>
    tpu.vector_store %arg6[%c0_7, %c0_8], %8 {strides = array<i32>} : memref<32x128xf32, #tpu.memory_space<vmem>>, vector<32x128xf32>,
    %c0_i32_9 = arith.constant 0 : i32
    %10 = arith.cmpi eq, %arg2, %c0_i32_9 : i32
    %11 = arith.extui %10 : i1 to i32
    %c0_i32_10 = arith.constant 0 : i32
    %12 = arith.cmpi ne, %11, %c0_i32_10 : i32
    scf.if %12 {
      %c0_11 = arith.constant 0 : index
      %c0_12 = arith.constant 0 : index
      %13 = vector.load %arg6[%c0_11, %c0_12] : memref<32x128xf32, #tpu.memory_space<vmem>>, vector<32x128xf32>
      %c0_13 = arith.constant 0 : index
      %c0_14 = arith.constant 0 : index
      %c0_15 = arith.constant 0 : index
      %14 = vector.load %arg5[%c0_13, %c0_14, %c0_15] : memref<1x32x128xf32, #tpu.memory_space<vmem>>, vector<1x32x128xf32>
      %15 = vector.shape_cast %14 : vector<1x32x128xf32> to vector<32x128xf32>
      %16 = vector.shape_cast %13 : vector<32x128xf32> to vector<1x32x128xf32>
      tpu.vector_store %arg5[%c0_13, %c0_14, %c0_15], %16 {strides = array<i32>} : memref<1x32x128xf32, #tpu.memory_space<vmem>>, vector<1x32x128xf32>,
    } else {
    }
    return
  }
  func.func @transform_0(%arg0: i32, %arg1: i32, %arg2: i32) -> (i32, i32) {
    %c0_i32 = arith.constant 0 : i32
    %c0_i32_0 = arith.constant 0 : i32
    return %c0_i32, %arg2 : i32, i32
  }
  func.func @transform_1(%arg0: i32, %arg1: i32, %arg2: i32) -> (i32, i32, i32) {
    %c0_i32 = arith.constant 0 : i32
    return %arg0, %arg2, %arg1 : i32, i32, i32
  }
  func.func @transform_2(%arg0: i32, %arg1: i32, %arg2: i32) -> (i32, i32, i32) {
    %c0_i32 = arith.constant 0 : i32
    %c0_i32_0 = arith.constant 0 : i32
    return %arg0, %c0_i32, %arg1 : i32, i32, i32
  }
}

module attributes {stable_mosaic.version = 11 : i64} {
  func.func @_mm_kernel(%arg0: i32, %arg1: i32, %arg2: i32, %arg3: memref<32x16xbf16, #tpu.memory_space<vmem>>, %arg4: memref<1x16x256xbf16, #tpu.memory_space<vmem>>, %arg5: memref<1x32x256xf32, #tpu.memory_space<vmem>>, %arg6: memref<32x256xf32, #tpu.memory_space<vmem>>) attributes {dimension_semantics = [#tpu.dimension_semantics<parallel>, #tpu.dimension_semantics<parallel>, #tpu.dimension_semantics<arbitrary>], iteration_bounds = array<i64: 1, 1, 1>, scalar_prefetch = 0 : i64, scratch_operands = 1 : i64, tpu.core_type = #tpu.core_type<tc>, window_params = [{transform_indices = @transform_0, window_bounds = array<i64: 32, 16>}, {transform_indices = @transform_1, window_bounds = array<i64: 1, 16, 256>}, {transform_indices = @transform_2, window_bounds = array<i64: 1, 32, 256>}]} {
    %c0_i32 = arith.constant 0 : i32
    %0 = arith.cmpi eq, %arg2, %c0_i32 : i32
    %1 = arith.extui %0 : i1 to i32
    %c0_i32_0 = arith.constant 0 : i32
    %2 = arith.cmpi ne, %1, %c0_i32_0 : i32
    scf.if %2 {
      %cst_11 = arith.constant 0.000000e+00 : f32
      %13 = vector.broadcast %cst_11 : f32 to vector<32x256xf32>
      %c0_12 = arith.constant 0 : index
      %c0_13 = arith.constant 0 : index
      %14 = vector.load %arg6[%c0_12, %c0_13] : memref<32x256xf32, #tpu.memory_space<vmem>>, vector<32x256xf32>
      tpu.vector_store %arg6[%c0_12, %c0_13], %13 {strides = array<i32>} : memref<32x256xf32, #tpu.memory_space<vmem>>, vector<32x256xf32>,
    } else {
    }
    %c0 = arith.constant 0 : index
    %c0_1 = arith.constant 0 : index
    %3 = vector.load %arg6[%c0, %c0_1] : memref<32x256xf32, #tpu.memory_space<vmem>>, vector<32x256xf32>
    %c0_2 = arith.constant 0 : index
    %c0_3 = arith.constant 0 : index
    %4 = vector.load %arg3[%c0_2, %c0_3] : memref<32x16xbf16, #tpu.memory_space<vmem>>, vector<32x16xbf16>
    %c0_4 = arith.constant 0 : index
    %c0_5 = arith.constant 0 : index
    %c0_6 = arith.constant 0 : index
    %5 = vector.load %arg4[%c0_4, %c0_5, %c0_6] : memref<1x16x256xbf16, #tpu.memory_space<vmem>>, vector<1x16x256xbf16>
    %6 = vector.shape_cast %5 : vector<1x16x256xbf16> to vector<16x256xbf16>
    %cst = arith.constant dense<0.000000e+00> : vector<32x256xf32>
    %7 = tpu.matmul %4, %6, %cst {dimension_numbers = #tpu.dot_dimension_numbers<[1], [0], [0], [1], [0, 0, 1, 1], [], []>} : vector<32x16xbf16>, vector<16x256xbf16>, vector<32x256xf32> -> vector<32x256xf32>
    %8 = arith.addf %3, %7 : vector<32x256xf32>
    %c0_7 = arith.constant 0 : index
    %c0_8 = arith.constant 0 : index
    %9 = vector.load %arg6[%c0_7, %c0_8] : memref<32x256xf32, #tpu.memory_space<vmem>>, vector<32x256xf32>
    tpu.vector_store %arg6[%c0_7, %c0_8], %8 {strides = array<i32>} : memref<32x256xf32, #tpu.memory_space<vmem>>, vector<32x256xf32>,
    %c0_i32_9 = arith.constant 0 : i32
    %10 = arith.cmpi eq, %arg2, %c0_i32_9 : i32
    %11 = arith.extui %10 : i1 to i32
    %c0_i32_10 = arith.constant 0 : i32
    %12 = arith.cmpi ne, %11, %c0_i32_10 : i32
    scf.if %12 {
      %c0_11 = arith.constant 0 : index
      %c0_12 = arith.constant 0 : index
      %13 = vector.load %arg6[%c0_11, %c0_12] : memref<32x256xf32, #tpu.memory_space<vmem>>, vector<32x256xf32>
      %c0_13 = arith.constant 0 : index
      %c0_14 = arith.constant 0 : index
      %c0_15 = arith.constant 0 : index
      %14 = vector.load %arg5[%c0_13, %c0_14, %c0_15] : memref<1x32x256xf32, #tpu.memory_space<vmem>>, vector<1x32x256xf32>
      %15 = vector.shape_cast %14 : vector<1x32x256xf32> to vector<32x256xf32>
      %16 = vector.shape_cast %13 : vector<32x256xf32> to vector<1x32x256xf32>
      tpu.vector_store %arg5[%c0_13, %c0_14, %c0_15], %16 {strides = array<i32>} : memref<1x32x256xf32, #tpu.memory_space<vmem>>, vector<1x32x256xf32>,
    } else {
    }
    return
  }
  func.func @transform_0(%arg0: i32, %arg1: i32, %arg2: i32) -> (i32, i32) {
    %c0_i32 = arith.constant 0 : i32
    %c0_i32_0 = arith.constant 0 : i32
    return %c0_i32, %arg2 : i32, i32
  }
  func.func @transform_1(%arg0: i32, %arg1: i32, %arg2: i32) -> (i32, i32, i32) {
    %c0_i32 = arith.constant 0 : i32
    return %arg0, %arg2, %arg1 : i32, i32, i32
  }
  func.func @transform_2(%arg0: i32, %arg1: i32, %arg2: i32) -> (i32, i32, i32) {
    %c0_i32 = arith.constant 0 : i32
    %c0_i32_0 = arith.constant 0 : i32
    return %arg0, %c0_i32, %arg1 : i32, i32, i32
  }
}

module attributes {stable_mosaic.version = 11 : i64} {
  func.func @_mm_kernel(%arg0: i32, %arg1: i32, %arg2: i32, %arg3: memref<3x144xbf16, #tpu.memory_space<vmem>>, %arg4: memref<1x144x512xbf16, #tpu.memory_space<vmem>>, %arg5: memref<3x1xf32, #tpu.memory_space<vmem>>, %arg6: memref<1x3x512xf32, #tpu.memory_space<vmem>>, %arg7: memref<1x3x512xf32, #tpu.memory_space<vmem>>, %arg8: memref<3x512xf32, #tpu.memory_space<vmem>>) attributes {dimension_semantics = [#tpu.dimension_semantics<parallel>, #tpu.dimension_semantics<parallel>, #tpu.dimension_semantics<arbitrary>], iteration_bounds = array<i64: 2, 2, 1>, scalar_prefetch = 0 : i64, scratch_operands = 1 : i64, tpu.core_type = #tpu.core_type<tc>, window_params = [{transform_indices = @transform_0, window_bounds = array<i64: 3, 144>}, {transform_indices = @transform_1, window_bounds = array<i64: 1, 144, 512>}, {pipeline_mode = #tpu.pipeline_mode<synchronous>, transform_indices = @transform_2, window_bounds = array<i64: 3, 1>}, {transform_indices = @transform_3, window_bounds = array<i64: 1, 3, 512>}, {transform_indices = @transform_4, window_bounds = array<i64: 1, 3, 512>}]} {
    %c0_i32 = arith.constant 0 : i32
    %0 = arith.cmpi eq, %arg2, %c0_i32 : i32
    %1 = arith.extui %0 : i1 to i32
    %c0_i32_0 = arith.constant 0 : i32
    %2 = arith.cmpi ne, %1, %c0_i32_0 : i32
    scf.if %2 {
      %cst_11 = arith.constant 0.000000e+00 : f32
      %13 = vector.broadcast %cst_11 : f32 to vector<3x512xf32>
      %c0_12 = arith.constant 0 : index
      %c0_13 = arith.constant 0 : index
      %14 = vector.load %arg8[%c0_12, %c0_13] : memref<3x512xf32, #tpu.memory_space<vmem>>, vector<3x512xf32>
      tpu.vector_store %arg8[%c0_12, %c0_13], %13 {strides = array<i32>} : memref<3x512xf32, #tpu.memory_space<vmem>>, vector<3x512xf32>,
    } else {
    }
    %c0 = arith.constant 0 : index
    %c0_1 = arith.constant 0 : index
    %3 = vector.load %arg8[%c0, %c0_1] : memref<3x512xf32, #tpu.memory_space<vmem>>, vector<3x512xf32>
    %c0_2 = arith.constant 0 : index
    %c0_3 = arith.constant 0 : index
    %4 = vector.load %arg3[%c0_2, %c0_3] : memref<3x144xbf16, #tpu.memory_space<vmem>>, vector<3x144xbf16>
    %c0_4 = arith.constant 0 : index
    %c0_5 = arith.constant 0 : index
    %c0_6 = arith.constant 0 : index
    %5 = vector.load %arg4[%c0_4, %c0_5, %c0_6] : memref<1x144x512xbf16, #tpu.memory_space<vmem>>, vector<1x144x512xbf16>
    %6 = vector.shape_cast %5 : vector<1x144x512xbf16> to vector<144x512xbf16>
    %cst = arith.constant dense<0.000000e+00> : vector<3x512xf32>
    %7 = tpu.matmul %4, %6, %cst {dimension_numbers = #tpu.dot_dimension_numbers<[1], [0], [0], [1], [0, 0, 1, 1], [], []>} : vector<3x144xbf16>, vector<144x512xbf16>, vector<3x512xf32> -> vector<3x512xf32>
    %8 = arith.addf %3, %7 : vector<3x512xf32>
    %c0_7 = arith.constant 0 : index
    %c0_8 = arith.constant 0 : index
    %9 = vector.load %arg8[%c0_7, %c0_8] : memref<3x512xf32, #tpu.memory_space<vmem>>, vector<3x512xf32>
    tpu.vector_store %arg8[%c0_7, %c0_8], %8 {strides = array<i32>} : memref<3x512xf32, #tpu.memory_space<vmem>>, vector<3x512xf32>,
    %c0_i32_9 = arith.constant 0 : i32
    %10 = arith.cmpi eq, %arg2, %c0_i32_9 : i32
    %11 = arith.extui %10 : i1 to i32
    %c0_i32_10 = arith.constant 0 : i32
    %12 = arith.cmpi ne, %11, %c0_i32_10 : i32
    scf.if %12 {
      %c0_11 = arith.constant 0 : index
      %c0_12 = arith.constant 0 : index
      %13 = vector.load %arg8[%c0_11, %c0_12] : memref<3x512xf32, #tpu.memory_space<vmem>>, vector<3x512xf32>
      %c0_13 = arith.constant 0 : index
      %c0_14 = arith.constant 0 : index
      %14 = vector.load %arg5[%c0_13, %c0_14] : memref<3x1xf32, #tpu.memory_space<vmem>>, vector<3x1xf32>
      %15 = vector.broadcast %14 : vector<3x1xf32> to vector<3x512xf32>
      %16 = arith.addf %13, %15 : vector<3x512xf32>
      %c0_15 = arith.constant 0 : index
      %c0_16 = arith.constant 0 : index
      %c0_17 = arith.constant 0 : index
      %17 = vector.load %arg6[%c0_15, %c0_16, %c0_17] : memref<1x3x512xf32, #tpu.memory_space<vmem>>, vector<1x3x512xf32>
      %18 = vector.shape_cast %17 : vector<1x3x512xf32> to vector<3x512xf32>
      %19 = arith.addf %16, %18 : vector<3x512xf32>
      %c0_18 = arith.constant 0 : index
      %c0_19 = arith.constant 0 : index
      %c0_20 = arith.constant 0 : index
      %20 = vector.load %arg7[%c0_18, %c0_19, %c0_20] : memref<1x3x512xf32, #tpu.memory_space<vmem>>, vector<1x3x512xf32>
      %21 = vector.shape_cast %20 : vector<1x3x512xf32> to vector<3x512xf32>
      %22 = vector.shape_cast %19 : vector<3x512xf32> to vector<1x3x512xf32>
      tpu.vector_store %arg7[%c0_18, %c0_19, %c0_20], %22 {strides = array<i32>} : memref<1x3x512xf32, #tpu.memory_space<vmem>>, vector<1x3x512xf32>,
    } else {
    }
    return
  }
  func.func @transform_0(%arg0: i32, %arg1: i32, %arg2: i32) -> (i32, i32) {
    %c0_i32 = arith.constant 0 : i32
    %c0_i32_0 = arith.constant 0 : i32
    return %c0_i32, %arg2 : i32, i32
  }
  func.func @transform_1(%arg0: i32, %arg1: i32, %arg2: i32) -> (i32, i32, i32) {
    %c0_i32 = arith.constant 0 : i32
    return %arg0, %arg2, %arg1 : i32, i32, i32
  }
  func.func @transform_2(%arg0: i32, %arg1: i32, %arg2: i32) -> (i32, i32) {
    %c0_i32 = arith.constant 0 : i32
    %c0_i32_0 = arith.constant 0 : i32
    %c0_i32_1 = arith.constant 0 : i32
    return %c0_i32, %c0_i32_0 : i32, i32
  }
  func.func @transform_3(%arg0: i32, %arg1: i32, %arg2: i32) -> (i32, i32, i32) {
    %c0_i32 = arith.constant 0 : i32
    %c0_i32_0 = arith.constant 0 : i32
    return %arg0, %c0_i32, %arg1 : i32, i32, i32
  }
  func.func @transform_4(%arg0: i32, %arg1: i32, %arg2: i32) -> (i32, i32, i32) {
    %c0_i32 = arith.constant 0 : i32
    %c0_i32_0 = arith.constant 0 : i32
    return %arg0, %c0_i32, %arg1 : i32, i32, i32
  }
}

</mosaic_0001>

<llo_original>
// kernel: pan_forward.24
$region0: #{pan_forward.24}
  #allocation0 [shape = 'u32[]', space=smem, size = 0x4, offset = 0x4, fixed_abs, tag = 'smem constant byte address 0x4 - core index']
  #allocation1 [shape = 'u32[72,128]{1,0:T(1,128)}', space=vmem, size = 0x9000, scoped, tag = 'internal scratch']
  #allocation2 [shape = 'f32[16,256]{1,0:T(8,128)}', space=vmem, size = 0x4000, scoped, tag = 'scratch operand']
  %s0 = inlined_call_operand.vmem [shape: bf16[16,16], index: 0, kind: input, shape index: {}]
  %s1 = inlined_call_operand.vmem [shape: bf16[2,16,256], index: 1, kind: input, shape index: {}]
  %s2 = inlined_call_operand.vmem [shape: bf16[2,16,256], index: 2, kind: output, shape index: {}]
  %s3 = sld [smem:[#allocation0]]
  $region49: #{pan_forward.24} parent=0
    _
  %s5 = ssub.s32 1, %s3
  %s6 = scalar_select 0, %s5, %s3
  loop: start=0, step=1, limit=4
  $region2: #{pan_forward.24} parent=0 // loop_pre_header
    _
  $region3: #{pan_forward.24} parent=0 // loop_header
    %s8 = sphi 0, %s12
    %p9 = scmp.ge.s32.totalorder %s8, 4
    %s15 = sphi 0, %s34
    %s16 = sphi 0, %s30
    %s17 = sphi 0, %s26
    %s18 = sphi 0, %s15
    %s19 = sphi 0, %s16
    %s20 = sphi 0, %s17
    %s21 = sphi 0, %s18
    %s22 = sphi 0, %s19
    %s23 = sphi 0, %s20
    %s37 = sphi 0, %s39
    %s40 = sphi 0, %s37
    %s41 = sphi 0, %s40
    %s57 = sphi 0, %s41
    %s67 = sphi 0, %s69
    %s70 = sphi 0, %s67
    %s71 = sphi 0, %s70
    %s87 = sphi 0, %s71
    %s95 = sphi 0, %s97
    %s98 = sphi 0, %s95
    %s99 = sphi 0, %s98
    %s115 = sphi 0, %s99
  $region4: #{pan_forward.24} parent=0 // loop_header_branch
    %11 = sbr.rel (%p9) target = $region8
  $region5: #{pan_forward.24} parent=0 // loop_body
    %s13 = ssub.s32 %s8, 1
    %s14 = ssub.s32 %s8, 2
    %s24 = sadd.s32 1, %s17
    %p25 = scmp.ge.s32.totalorder %s24, 1
    %s26 = scalar_select %p25, 0, %s24
    %s27 = sadd.s32 1, %s16
    %s28 = scalar_select %p25, %s27, %s16
    %p29 = scmp.ge.s32.totalorder %s28, 1
    %s30 = scalar_select %p29, 0, %s28
    %s31 = sadd.s32 1, %s15
    %s32 = scalar_select %p29, %s31, %s15
    %p33 = scmp.ge.s32.totalorder %s32, 2
    %s34 = scalar_select %p33, 0, %s32
    %s35 = ssub.s32 %s17, %s26
    %p36 = scmp.eq.s32.totalorder %s35, 0
    %s38 = sadd.s32 %s37, 1
    %s39 = scalar_select %p36, %s37, %s38
    %p42 = pneg %p36
    %p43 = scmp.eq.s32.totalorder %s8, 1
    %p44 = por %p42, %p43
    %p45 = scmp.ne.s32.totalorder %s37, %s40
    %p46 = scmp.eq.s32.totalorder %s8, 0
    %p47 = por %p45, %p46
    %p48 = scmp.ne.s32.totalorder %s37, %s40
    %p49 = scmp.eq.s32.totalorder %s13, 1
    %p50 = por %p48, %p49
    %p51 = scmp.ne.s32.totalorder %s40, %s41
    %p52 = scmp.eq.s32.totalorder %s13, 0
    %p53 = por %p51, %p52
    %p54 = scmp.ne.s32.totalorder %s40, %s41
    %p55 = scmp.eq.s32.totalorder %s14, 1
    %p56 = por %p54, %p55
    %p58 = scmp.ne.s32.totalorder %s41, %s57
    %p59 = scmp.eq.s32.totalorder %s14, 0
    %p60 = por %p58, %p59
    %s61 = ssub.s32 %s15, %s34
    %s62 = ssub.s32 %s17, %s26
    %s63 = sor.u32 %s61, %s62
    %s64 = ssub.s32 %s16, %s30
    %s65 = sor.u32 %s63, %s64
    %p66 = scmp.eq.s32.totalorder %s65, 0
    %s68 = sadd.s32 %s67, 1
    %s69 = scalar_select %p66, %s67, %s68
    %p72 = pneg %p66
    %p73 = scmp.eq.s32.totalorder %s8, 1
    %p74 = por %p72, %p73
    %p75 = scmp.ne.s32.totalorder %s67, %s70
    %p76 = scmp.eq.s32.totalorder %s8, 0
    %p77 = por %p75, %p76
    %p78 = scmp.ne.s32.totalorder %s67, %s70
    %p79 = scmp.eq.s32.totalorder %s13, 1
    %p80 = por %p78, %p79
    %p81 = scmp.ne.s32.totalorder %s70, %s71
    %p82 = scmp.eq.s32.totalorder %s13, 0
    %p83 = por %p81, %p82
    %p84 = scmp.ne.s32.totalorder %s70, %s71
    %p85 = scmp.eq.s32.totalorder %s14, 1
    %p86 = por %p84, %p85
    %p88 = scmp.ne.s32.totalorder %s71, %s87
    %p89 = scmp.eq.s32.totalorder %s14, 0
    %p90 = por %p88, %p89
    %s91 = ssub.s32 %s15, %s34
    %s92 = ssub.s32 %s16, %s30
    %s93 = sor.u32 %s91, %s92
    %p94 = scmp.eq.s32.totalorder %s93, 0
    %s96 = sadd.s32 %s95, 1
    %s97 = scalar_select %p94, %s95, %s96
    %p100 = pneg %p94
    %p101 = scmp.eq.s32.totalorder %s8, 1
    %p102 = por %p100, %p101
    %p103 = scmp.ne.s32.totalorder %s95, %s98
    %p104 = scmp.eq.s32.totalorder %s8, 0
    %p105 = por %p103, %p104
    %p106 = scmp.ne.s32.totalorder %s95, %s98
    %p107 = scmp.eq.s32.totalorder %s13, 1
    %p108 = por %p106, %p107
    %p109 = scmp.ne.s32.totalorder %s98, %s99
    %p110 = scmp.eq.s32.totalorder %s13, 0
    %p111 = por %p109, %p110
    %p112 = scmp.ne.s32.totalorder %s98, %s99
    %p113 = scmp.eq.s32.totalorder %s14, 1
    %p114 = por %p112, %p113
    %p116 = scmp.ne.s32.totalorder %s99, %s115
    %p117 = scmp.eq.s32.totalorder %s14, 0
    %p118 = por %p116, %p117
    %p119 = scmp.le.s32.totalorder 1, %s8
    %p120 = scmp.lt.s32.totalorder %s8, 3
    %p121 = pnand %p119, %p120
    %p122 = pneg %p121
    // Predicated region
    $region9: #{pan_forward.24} parent=5 // pred_check
      _
    $region10: #{pan_forward.24} parent=5 // pred_check_branch
      %124 = sbr.rel (%p121) target = $region12
    $region11: #{pan_forward.24} parent=5 // pred_region
      %s125 = ssub.s32 %s8, 1
      // Predicated region
      $region13: #{pan_forward.24} parent=11 // pred_check
        %p126 = pneg %p53
      $region14: #{pan_forward.24} parent=11 // pred_check_branch
        %128 = sbr.rel (%p126) target = $region16
      $region15: #{pan_forward.24} parent=11 // pred_region
        %p129 = scmp.lt.s32.totalorder %s20, 0
        %s130 = scalar_select %p129, %s20, 0
        %s131 = smul.addr %s130, 4
        %s132 = scalar_lea.vmem %s0, %s131
      $region16: #{pan_forward.24} parent=11 // pred_fallthru
        _
    $region12: #{pan_forward.24} parent=5 // pred_fallthru
      _
    %p133 = scmp.lt.s32.totalorder %s8, 2
    // Predicated region
    $region17: #{pan_forward.24} parent=5 // pred_check
      %p134 = pneg %p133
    $region18: #{pan_forward.24} parent=5 // pred_check_branch
      %136 = sbr.rel (%p134) target = $region20
    $region19: #{pan_forward.24} parent=5 // pred_region
      // Predicated region
      $region21: #{pan_forward.24} parent=19 // pred_check
        %p137 = pneg %p77
      $region22: #{pan_forward.24} parent=19 // pred_check_branch
        %139 = sbr.rel (%p137) target = $region24
      $region23: #{pan_forward.24} parent=19 // pred_region
        %s140 = smul.u32 2, %s17
        %s141 = smul.u32 2, %s16
        %p142 = scmp.lt.s32.totalorder %s15, 1
        %s143 = scalar_select %p142, %s15, 1
        %p144 = scmp.lt.s32.totalorder %s140, 1
        %s145 = scalar_select %p144, %s140, 1
        %p146 = scmp.lt.s32.totalorder %s141, 1
        %s147 = scalar_select %p146, %s141, 1
        %s148 = smul.addr %s145, 2
        %s149 = sadd.s32 %s147, %s148
        %s150 = smul.addr %s143, 4
        %s151 = sadd.s32 %s149, %s150
        %s152 = smul.addr %s151, 4
        %s153 = scalar_lea.vmem %s1, %s152
        %s154 = smul.u32 2, %s17
        %s155 = smul.u32 2, %s16
      $region24: #{pan_forward.24} parent=19 // pred_fallthru
        _
    $region20: #{pan_forward.24} parent=5 // pred_fallthru
      _
    %p156 = scmp.le.s32.totalorder 1, %s8
    %p157 = scmp.lt.s32.totalorder %s8, 3
    %p158 = pnand %p156, %p157
    %p159 = pneg %p158
    // Predicated region
    $region25: #{pan_forward.24} parent=5 // pred_check
      _
    $region26: #{pan_forward.24} parent=5 // pred_check_branch
      %161 = sbr.rel (%p158) target = $region28
    $region27: #{pan_forward.24} parent=5 // pred_region
      %s162 = ssub.s32 %s8, 1
      %p163 = scmp.lt.s32.totalorder %s20, 0
      %s164 = scalar_select %p163, %s20, 0
      %s165 = smul.addr %s164, 4
      %s166 = scalar_lea.vmem %s0, %s165
      %p167 = pneg %p53
      %p168 = pneg %p50
      %s169 = smul.u32 2, %s20
      %s170 = smul.u32 2, %s19
      %p171 = scmp.lt.s32.totalorder %s18, 1
      %s172 = scalar_select %p171, %s18, 1
      %p173 = scmp.lt.s32.totalorder %s169, 1
      %s174 = scalar_select %p173, %s169, 1
      %p175 = scmp.lt.s32.totalorder %s170, 1
      %s176 = scalar_select %p175, %s170, 1
      %s177 = smul.addr %s174, 2
      %s178 = sadd.s32 %s176, %s177
      %s179 = smul.addr %s172, 4
      %s180 = sadd.s32 %s178, %s179
      %s181 = smul.addr %s180, 4
      %s182 = scalar_lea.vmem %s1, %s181
      %p183 = pneg %p83
      %p184 = pneg %p80
      %p185 = pneg %p111
      %p186 = pneg %p108
      %s187 = smul.u32 2, %s19
      %p188 = scmp.lt.s32.totalorder %s18, 1
      %s189 = scalar_select %p188, %s18, 1
      %p190 = scmp.lt.s32.totalorder %s187, 1
      %s191 = scalar_select %p190, %s187, 1
      %s192 = smul.addr %s189, 4
      %s193 = sadd.s32 %s191, %s192
      %s194 = smul.addr %s193, 4
      %s195 = scalar_lea.vmem %s2, %s194
      %p196 = scmp.lt.s32.totalorder %s20, 0
      %s197 = scalar_select %p196, %s20, 0
      %s198 = smul.addr %s197, 4
      %s199 = scalar_lea.vmem %s0, %s198
      %s200 = smul.u32 2, %s20
      %s201 = smul.u32 2, %s19
      %p202 = scmp.lt.s32.totalorder %s18, 1
      %s203 = scalar_select %p202, %s18, 1
      %p204 = scmp.lt.s32.totalorder %s200, 1
      %s205 = scalar_select %p204, %s200, 1
      %p206 = scmp.lt.s32.totalorder %s201, 1
      %s207 = scalar_select %p206, %s201, 1
      %s208 = smul.addr %s205, 2
      %s209 = sadd.s32 %s207, %s208
      %s210 = smul.addr %s203, 4
      %s211 = sadd.s32 %s209, %s210
      %s212 = smul.addr %s211, 4
      %s213 = scalar_lea.vmem %s1, %s212
      %s214 = smul.u32 2, %s20
      %s215 = smul.u32 2, %s19
      %s216 = smul.u32 2, %s19
      %p217 = scmp.lt.s32.totalorder %s18, 1
      %s218 = scalar_select %p217, %s18, 1
      %p219 = scmp.lt.s32.totalorder %s216, 1
      %s220 = scalar_select %p219, %s216, 1
      %s221 = smul.addr %s218, 4
      %s222 = sadd.s32 %s220, %s221
      %s223 = smul.addr %s222, 4
      %s224 = scalar_lea.vmem %s2, %s223
      %s225 = smul.u32 2, %s19
      %p227 = scmp.eq.s32.totalorder %s20, 0
      // Predicated region
      $region29: #{pan_forward.24} parent=27 // pred_check
        %p228 = pneg %p227
      $region30: #{pan_forward.24} parent=27 // pred_check_branch
        %230 = sbr.rel (%p228) target = $region32
      $region31: #{pan_forward.24} parent=27 // pred_region
        %231 = vst [vmem:[#allocation2] sm:$0xff] 0.0
        %232 = vst [vmem:[#allocation2 + $0x8] sm:$0xff] 0.0
        %233 = vst [vmem:[#allocation2 + $0x10] sm:$0xff] 0.0
        %234 = vst [vmem:[#allocation2 + $0x18] sm:$0xff] 0.0
      $region32: #{pan_forward.24} parent=27 // pred_fallthru
        _
      %v235 = vld [vmem:[#allocation2] sm:$0xff]
      %v236 = vld [vmem:[#allocation2 + $0x8] sm:$0xff]
      %v237 = vld [vmem:[#allocation2 + $0x10] sm:$0xff]
      %v238 = vld [vmem:[#allocation2 + $0x18] sm:$0xff]
      %v239 = vld [vmem:[%s199] sm:$0xf]
      %v240 = vld [vmem:[%s199 + $0x4] sm:$0xf]
      %v241 = vld [vmem:[%s213] sm:$0xff]
      %v242 = vld [vmem:[%s213 + $0x8] sm:$0xff]
      %v245 = vunpack.c.l.b16 %v239
      %v246 = vunpack.c.l.b16 %v240
      %v247 = vpack.c.b16 %v246, %v245
      %v250 = vunpack.c.l.b16 %v241
      %v251 = vunpack.c.h.b16 %v241
      %v252 = vunpack.c.l.b16 %v242
      %v253 = vunpack.c.h.b16 %v242
      %v254 = vpack.c.b16 %v252, %v250
      %v255 = vpack.c.b16 %v253, %v251
      %vm258 = vcmask 130048
      %v260 = vsel %vm258, %v247, 0
      %262 = vmatpush.bf16.msra.mxu0 0
      %263 = vmatpush.bf16.msra.mxu0 0
      %264 = vmatpush.bf16.msra.mxu0 0
      %265 = vmatpush.bf16.msra.mxu0 0
      %266 = vmatpush.bf16.msra.mxu0 0
      %267 = vmatpush.bf16.msra.mxu0 0
      %268 = vmatpush.bf16.msra.mxu0 0
      %269 = vmatpush.bf16.msra.mxu0 %v254
      %270 = vmatmul.bf16.gmra.mxu0 %v260
      %v271 = vpop.f32.mrf.mxu0
      %v272 = vadd.f32 0.0, %v271
      %v273 = vpop.f32.mrf.mxu0
      %v274 = vadd.f32 0.0, %v273
      %275 = vdwg.mxu0
      %276 = vmatpush.bf16.msra.mxu0 0
      %277 = vmatpush.bf16.msra.mxu0 0
      %278 = vmatpush.bf16.msra.mxu0 0
      %279 = vmatpush.bf16.msra.mxu0 0
      %280 = vmatpush.bf16.msra.mxu0 0
      %281 = vmatpush.bf16.msra.mxu0 0
      %282 = vmatpush.bf16.msra.mxu0 0
      %283 = vmatpush.bf16.msra.mxu0 %v255
      %284 = vmatmul.bf16.gmra.mxu0 %v260
      %v285 = vpop.f32.mrf.mxu0
      %v286 = vadd.f32 0.0, %v285
      %v287 = vpop.f32.mrf.mxu0
      %v288 = vadd.f32 0.0, %v287
      %289 = vdwg.mxu0
      %v290 = vadd.f32 %v235, %v272
      %v291 = vadd.f32 %v236, %v286
      %v292 = vadd.f32 %v237, %v274
      %v293 = vadd.f32 %v238, %v288
      %294 = vst [vmem:[#allocation2] sm:$0xff] %v290
      %295 = vst [vmem:[#allocation2 + $0x8] sm:$0xff] %v291
      %296 = vst [vmem:[#allocation2 + $0x10] sm:$0xff] %v292
      %297 = vst [vmem:[#allocation2 + $0x18] sm:$0xff] %v293
      // Predicated region
      $region33: #{pan_forward.24} parent=27 // pred_check
        %p298 = pneg %p227
      $region34: #{pan_forward.24} parent=27 // pred_check_branch
        %300 = sbr.rel (%p298) target = $region36
      $region35: #{pan_forward.24} parent=27 // pred_region
        %v301 = vld [vmem:[#allocation2] sm:$0xff]
        %v302 = vld [vmem:[#allocation2 + $0x8] sm:$0xff]
        %v303 = vld [vmem:[#allocation2 + $0x10] sm:$0xff]
        %v304 = vld [vmem:[#allocation2 + $0x18] sm:$0xff]
        %vm305 = vcmp.ge.f32.partialorder %v301, 0.0
        %vm306 = vcmp.ge.f32.partialorder %v302, 0.0
        %vm307 = vcmp.ge.f32.partialorder %v303, 0.0
        %vm308 = vcmp.ge.f32.partialorder %v304, 0.0
        %v309 = vmul.f32 %v301, 0.2
        %v310 = vmul.f32 %v302, 0.2
        %v311 = vmul.f32 %v303, 0.2
        %v312 = vmul.f32 %v304, 0.2
        %v313 = vsel %vm305, %v301, %v309
        %v314 = vsel %vm306, %v302, %v310
        %v315 = vsel %vm307, %v303, %v311
        %v316 = vsel %vm308, %v304, %v312
        %v317 = vpack.c.bf16 %v314, %v313
        %v318 = vpack.c.bf16 %v316, %v315
        %319 = vst [vmem:[%s224] sm:$0xff] %v317
        %320 = vst [vmem:[%s224 + $0x8] sm:$0xff] %v318
      $region36: #{pan_forward.24} parent=27 // pred_fallthru
        _
      %s321 = smul.u32 2, %s19
      %p322 = scmp.lt.s32.totalorder %s18, 1
      %s323 = scalar_select %p322, %s18, 1
      %p324 = scmp.lt.s32.totalorder %s321, 1
      %s325 = scalar_select %p324, %s321, 1
      %s326 = smul.addr %s323, 4
      %s327 = sadd.s32 %s325, %s326
      %s328 = smul.addr %s327, 4
      %s329 = scalar_lea.vmem %s2, %s328
      // Predicated region
      $region37: #{pan_forward.24} parent=27 // pred_check
        %p330 = pneg %p108
      $region38: #{pan_forward.24} parent=27 // pred_check_branch
        %332 = sbr.rel (%p330) target = $region40
      $region39: #{pan_forward.24} parent=27 // pred_region
        %s333 = smul.u32 2, %s19
      $region40: #{pan_forward.24} parent=27 // pred_fallthru
        _
    $region28: #{pan_forward.24} parent=5 // pred_fallthru
      _
    %p334 = scmp.le.s32.totalorder 2, %s8
    // Predicated region
    $region41: #{pan_forward.24} parent=5 // pred_check
      %p335 = pneg %p334
    $region42: #{pan_forward.24} parent=5 // pred_check_branch
      %337 = sbr.rel (%p335) target = $region44
    $region43: #{pan_forward.24} parent=5 // pred_region
      %s338 = ssub.s32 %s8, 2
      // Predicated region
      $region45: #{pan_forward.24} parent=43 // pred_check
        %p339 = pneg %p114
      $region46: #{pan_forward.24} parent=43 // pred_check_branch
        %341 = sbr.rel (%p339) target = $region48
      $region47: #{pan_forward.24} parent=43 // pred_region
        %s342 = smul.u32 2, %s22
        %p343 = scmp.lt.s32.totalorder %s21, 1
        %s344 = scalar_select %p343, %s21, 1
        %p345 = scmp.lt.s32.totalorder %s342, 1
        %s346 = scalar_select %p345, %s342, 1
        %s347 = smul.addr %s344, 4
        %s348 = sadd.s32 %s346, %s347
        %s349 = smul.addr %s348, 4
        %s350 = scalar_lea.vmem %s2, %s349
      $region48: #{pan_forward.24} parent=43 // pred_fallthru
        _
    $region44: #{pan_forward.24} parent=5 // pred_fallthru
      _
  $region6: #{pan_forward.24} parent=0 // loop_footer
    %s12 = sadd.s32 1, %s8
  $region7: #{pan_forward.24} parent=0 // loop_footer_branch
    %7 = sbr.rel target = $region3
  $region8: #{pan_forward.24} parent=0 // loop_exit
    _

// kernel: pan_forward.23
$region0: #{pan_forward.23}
  #allocation0 [shape = 'u32[]', space=smem, size = 0x4, offset = 0x4, fixed_abs, tag = 'smem constant byte address 0x4 - core index']
  #allocation1 [shape = 'u32[72,128]{1,0:T(1,128)}', space=vmem, size = 0x9000, scoped, tag = 'internal scratch']
  #allocation2 [shape = 'f32[16,256]{1,0:T(8,128)}', space=vmem, size = 0x4000, scoped, tag = 'scratch operand']
  %s0 = inlined_call_operand.vmem [shape: bf16[16,27], index: 0, kind: input, shape index: {}]
  %s1 = inlined_call_operand.vmem [shape: bf16[2,27,256], index: 1, kind: input, shape index: {}]
  %s2 = inlined_call_operand.vmem [shape: f32[16,1], index: 2, kind: input, shape index: {}]
  %s3 = inlined_call_operand.vmem [shape: bf16[2,16,256], index: 3, kind: output, shape index: {}]
  %s4 = sld [smem:[#allocation0]]
  $region53: #{pan_forward.23} parent=0
    _
  %s6 = ssub.s32 1, %s4
  %s7 = scalar_select 0, %s6, %s4
  loop: start=0, step=1, limit=4
  $region2: #{pan_forward.23} parent=0 // loop_pre_header
    _
  $region3: #{pan_forward.23} parent=0 // loop_header
    %s9 = sphi 0, %s13
    %p10 = scmp.ge.s32.totalorder %s9, 4
    %s16 = sphi 0, %s35
    %s17 = sphi 0, %s31
    %s18 = sphi 0, %s27
    %s19 = sphi 0, %s16
    %s20 = sphi 0, %s17
    %s21 = sphi 0, %s18
    %s22 = sphi 0, %s19
    %s23 = sphi 0, %s20
    %s24 = sphi 0, %s21
    %s38 = sphi 0, %s40
    %s41 = sphi 0, %s38
    %s42 = sphi 0, %s41
    %s58 = sphi 0, %s42
    %s68 = sphi 0, %s70
    %s71 = sphi 0, %s68
    %s72 = sphi 0, %s71
    %s88 = sphi 0, %s72
    %s92 = sphi 0, %s92
    %s94 = sphi 0, %s92
    %s95 = sphi 0, %s94
    %s109 = sphi 0, %s95
    %s117 = sphi 0, %s119
    %s120 = sphi 0, %s117
    %s121 = sphi 0, %s120
    %s137 = sphi 0, %s121
  $region4: #{pan_forward.23} parent=0 // loop_header_branch
    %12 = sbr.rel (%p10) target = $region8
  $region5: #{pan_forward.23} parent=0 // loop_body
    %s14 = ssub.s32 %s9, 1
    %s15 = ssub.s32 %s9, 2
    %s25 = sadd.s32 1, %s18
    %p26 = scmp.ge.s32.totalorder %s25, 1
    %s27 = scalar_select %p26, 0, %s25
    %s28 = sadd.s32 1, %s17
    %s29 = scalar_select %p26, %s28, %s17
    %p30 = scmp.ge.s32.totalorder %s29, 1
    %s31 = scalar_select %p30, 0, %s29
    %s32 = sadd.s32 1, %s16
    %s33 = scalar_select %p30, %s32, %s16
    %p34 = scmp.ge.s32.totalorder %s33, 2
    %s35 = scalar_select %p34, 0, %s33
    %s36 = ssub.s32 %s18, %s27
    %p37 = scmp.eq.s32.totalorder %s36, 0
    %s39 = sadd.s32 %s38, 1
    %s40 = scalar_select %p37, %s38, %s39
    %p43 = pneg %p37
    %p44 = scmp.eq.s32.totalorder %s9, 1
    %p45 = por %p43, %p44
    %p46 = scmp.ne.s32.totalorder %s38, %s41
    %p47 = scmp.eq.s32.totalorder %s9, 0
    %p48 = por %p46, %p47
    %p49 = scmp.ne.s32.totalorder %s38, %s41
    %p50 = scmp.eq.s32.totalorder %s14, 1
    %p51 = por %p49, %p50
    %p52 = scmp.ne.s32.totalorder %s41, %s42
    %p53 = scmp.eq.s32.totalorder %s14, 0
    %p54 = por %p52, %p53
    %p55 = scmp.ne.s32.totalorder %s41, %s42
    %p56 = scmp.eq.s32.totalorder %s15, 1
    %p57 = por %p55, %p56
    %p59 = scmp.ne.s32.totalorder %s42, %s58
    %p60 = scmp.eq.s32.totalorder %s15, 0
    %p61 = por %p59, %p60
    %s62 = ssub.s32 %s16, %s35
    %s63 = ssub.s32 %s18, %s27
    %s64 = sor.u32 %s62, %s63
    %s65 = ssub.s32 %s17, %s31
    %s66 = sor.u32 %s64, %s65
    %p67 = scmp.eq.s32.totalorder %s66, 0
    %s69 = sadd.s32 %s68, 1
    %s70 = scalar_select %p67, %s68, %s69
    %p73 = pneg %p67
    %p74 = scmp.eq.s32.totalorder %s9, 1
    %p75 = por %p73, %p74
    %p76 = scmp.ne.s32.totalorder %s68, %s71
    %p77 = scmp.eq.s32.totalorder %s9, 0
    %p78 = por %p76, %p77
    %p79 = scmp.ne.s32.totalorder %s68, %s71
    %p80 = scmp.eq.s32.totalorder %s14, 1
    %p81 = por %p79, %p80
    %p82 = scmp.ne.s32.totalorder %s71, %s72
    %p83 = scmp.eq.s32.totalorder %s14, 0
    %p84 = por %p82, %p83
    %p85 = scmp.ne.s32.totalorder %s71, %s72
    %p86 = scmp.eq.s32.totalorder %s15, 1
    %p87 = por %p85, %p86
    %p89 = scmp.ne.s32.totalorder %s72, %s88
    %p90 = scmp.eq.s32.totalorder %s15, 0
    %p91 = por %p89, %p90
    %s93 = sadd.s32 %s92, 1
    %p96 = scmp.eq.s32.totalorder %s9, 1
    %p97 = scmp.ne.s32.totalorder %s92, %s94
    %p98 = scmp.eq.s32.totalorder %s9, 0
    %p99 = por %p97, %p98
    %p100 = scmp.ne.s32.totalorder %s92, %s94
    %p101 = scmp.eq.s32.totalorder %s14, 1
    %p102 = por %p100, %p101
    %p103 = scmp.ne.s32.totalorder %s94, %s95
    %p104 = scmp.eq.s32.totalorder %s14, 0
    %p105 = por %p103, %p104
    %p106 = scmp.ne.s32.totalorder %s94, %s95
    %p107 = scmp.eq.s32.totalorder %s15, 1
    %p108 = por %p106, %p107
    %p110 = scmp.ne.s32.totalorder %s95, %s109
    %p111 = scmp.eq.s32.totalorder %s15, 0
    %p112 = por %p110, %p111
    %s113 = ssub.s32 %s16, %s35
    %s114 = ssub.s32 %s17, %s31
    %s115 = sor.u32 %s113, %s114
    %p116 = scmp.eq.s32.totalorder %s115, 0
    %s118 = sadd.s32 %s117, 1
    %s119 = scalar_select %p116, %s117, %s118
    %p122 = pneg %p116
    %p123 = scmp.eq.s32.totalorder %s9, 1
    %p124 = por %p122, %p123
    %p125 = scmp.ne.s32.totalorder %s117, %s120
    %p126 = scmp.eq.s32.totalorder %s9, 0
    %p127 = por %p125, %p126
    %p128 = scmp.ne.s32.totalorder %s117, %s120
    %p129 = scmp.eq.s32.totalorder %s14, 1
    %p130 = por %p128, %p129
    %p131 = scmp.ne.s32.totalorder %s120, %s121
    %p132 = scmp.eq.s32.totalorder %s14, 0
    %p133 = por %p131, %p132
    %p134 = scmp.ne.s32.totalorder %s120, %s121
    %p135 = scmp.eq.s32.totalorder %s15, 1
    %p136 = por %p134, %p135
    %p138 = scmp.ne.s32.totalorder %s121, %s137
    %p139 = scmp.eq.s32.totalorder %s15, 0
    %p140 = por %p138, %p139
    %p141 = scmp.le.s32.totalorder 1, %s9
    %p142 = scmp.lt.s32.totalorder %s9, 3
    %p143 = pnand %p141, %p142
    %p144 = pneg %p143
    // Predicated region
    $region9: #{pan_forward.23} parent=5 // pred_check
      _
    $region10: #{pan_forward.23} parent=5 // pred_check_branch
      %146 = sbr.rel (%p143) target = $region12
    $region11: #{pan_forward.23} parent=5 // pred_region
      %s147 = ssub.s32 %s9, 1
      // Predicated region
      $region13: #{pan_forward.23} parent=11 // pred_check
        %p148 = pneg %p54
      $region14: #{pan_forward.23} parent=11 // pred_check_branch
        %150 = sbr.rel (%p148) target = $region16
      $region15: #{pan_forward.23} parent=11 // pred_region
        %p151 = scmp.lt.s32.totalorder %s21, 0
        %s152 = scalar_select %p151, %s21, 0
        %s153 = smul.addr %s152, 4
        %s154 = scalar_lea.vmem %s0, %s153
      $region16: #{pan_forward.23} parent=11 // pred_fallthru
        _
      // Predicated region
      $region17: #{pan_forward.23} parent=11 // pred_check
        %p155 = pneg %p105
      $region18: #{pan_forward.23} parent=11 // pred_check_branch
        %157 = sbr.rel (%p155) target = $region20
      $region19: #{pan_forward.23} parent=11 // pred_region
        _
      $region20: #{pan_forward.23} parent=11 // pred_fallthru
        _
    $region12: #{pan_forward.23} parent=5 // pred_fallthru
      _
    %p158 = scmp.lt.s32.totalorder %s9, 2
    // Predicated region
    $region21: #{pan_forward.23} parent=5 // pred_check
      %p159 = pneg %p158
    $region22: #{pan_forward.23} parent=5 // pred_check_branch
      %161 = sbr.rel (%p159) target = $region24
    $region23: #{pan_forward.23} parent=5 // pred_region
      // Predicated region
      $region25: #{pan_forward.23} parent=23 // pred_check
        %p162 = pneg %p78
      $region26: #{pan_forward.23} parent=23 // pred_check_branch
        %164 = sbr.rel (%p162) target = $region28
      $region27: #{pan_forward.23} parent=23 // pred_region
        %s165 = smul.u32 4, %s18
        %s166 = smul.u32 2, %s17
        %p167 = scmp.lt.s32.totalorder %s16, 1
        %s168 = scalar_select %p167, %s16, 1
        %p169 = scmp.lt.s32.totalorder %s165, 3
        %s170 = scalar_select %p169, %s165, 3
        %p171 = scmp.lt.s32.totalorder %s166, 1
        %s172 = scalar_select %p171, %s166, 1
        %s173 = smul.addr %s170, 2
        %s174 = sadd.s32 %s172, %s173
        %s175 = smul.addr %s168, 8
        %s176 = sadd.s32 %s174, %s175
        %s177 = smul.addr %s176, 4
        %s178 = scalar_lea.vmem %s1, %s177
        %s179 = smul.u32 4, %s18
        %s180 = smul.u32 2, %s17
      $region28: #{pan_forward.23} parent=23 // pred_fallthru
        _
    $region24: #{pan_forward.23} parent=5 // pred_fallthru
      _
    %p181 = scmp.le.s32.totalorder 1, %s9
    %p182 = scmp.lt.s32.totalorder %s9, 3
    %p183 = pnand %p181, %p182
    %p184 = pneg %p183
    // Predicated region
    $region29: #{pan_forward.23} parent=5 // pred_check
      _
    $region30: #{pan_forward.23} parent=5 // pred_check_branch
      %186 = sbr.rel (%p183) target = $region32
    $region31: #{pan_forward.23} parent=5 // pred_region
      %s187 = ssub.s32 %s9, 1
      %p188 = scmp.lt.s32.totalorder %s21, 0
      %s189 = scalar_select %p188, %s21, 0
      %s190 = smul.addr %s189, 4
      %s191 = scalar_lea.vmem %s0, %s190
      %p192 = pneg %p54
      %p193 = pneg %p51
      %s194 = smul.u32 4, %s21
      %s195 = smul.u32 2, %s20
      %p196 = scmp.lt.s32.totalorder %s19, 1
      %s197 = scalar_select %p196, %s19, 1
      %p198 = scmp.lt.s32.totalorder %s194, 3
      %s199 = scalar_select %p198, %s194, 3
      %p200 = scmp.lt.s32.totalorder %s195, 1
      %s201 = scalar_select %p200, %s195, 1
      %s202 = smul.addr %s199, 2
      %s203 = sadd.s32 %s201, %s202
      %s204 = smul.addr %s197, 8
      %s205 = sadd.s32 %s203, %s204
      %s206 = smul.addr %s205, 4
      %s207 = scalar_lea.vmem %s1, %s206
      %p208 = pneg %p84
      %p209 = pneg %p81
      %p210 = pneg %p105
      %p211 = pneg %p102
      %p212 = pneg %p133
      %p213 = pneg %p130
      %s214 = smul.u32 2, %s20
      %p215 = scmp.lt.s32.totalorder %s19, 1
      %s216 = scalar_select %p215, %s19, 1
      %p217 = scmp.lt.s32.totalorder %s214, 1
      %s218 = scalar_select %p217, %s214, 1
      %s219 = smul.addr %s216, 4
      %s220 = sadd.s32 %s218, %s219
      %s221 = smul.addr %s220, 4
      %s222 = scalar_lea.vmem %s3, %s221
      %p223 = scmp.lt.s32.totalorder %s21, 0
      %s224 = scalar_select %p223, %s21, 0
      %s225 = smul.addr %s224, 4
      %s226 = scalar_lea.vmem %s0, %s225
      %s227 = smul.u32 4, %s21
      %s228 = smul.u32 2, %s20
      %p229 = scmp.lt.s32.totalorder %s19, 1
      %s230 = scalar_select %p229, %s19, 1
      %p231 = scmp.lt.s32.totalorder %s227, 3
      %s232 = scalar_select %p231, %s227, 3
      %p233 = scmp.lt.s32.totalorder %s228, 1
      %s234 = scalar_select %p233, %s228, 1
      %s235 = smul.addr %s232, 2
      %s236 = sadd.s32 %s234, %s235
      %s237 = smul.addr %s230, 8
      %s238 = sadd.s32 %s236, %s237
      %s239 = smul.addr %s238, 4
      %s240 = scalar_lea.vmem %s1, %s239
      %s241 = smul.u32 4, %s21
      %s242 = smul.u32 2, %s20
      %s243 = smul.u32 2, %s20
      %p244 = scmp.lt.s32.totalorder %s19, 1
      %s245 = scalar_select %p244, %s19, 1
      %p246 = scmp.lt.s32.totalorder %s243, 1
      %s247 = scalar_select %p246, %s243, 1
      %s248 = smul.addr %s245, 4
      %s249 = sadd.s32 %s247, %s248
      %s250 = smul.addr %s249, 4
      %s251 = scalar_lea.vmem %s3, %s250
      %s252 = smul.u32 2, %s20
      %p254 = scmp.eq.s32.totalorder %s21, 0
      // Predicated region
      $region33: #{pan_forward.23} parent=31 // pred_check
        %p255 = pneg %p254
      $region34: #{pan_forward.23} parent=31 // pred_check_branch
        %257 = sbr.rel (%p255) target = $region36
      $region35: #{pan_forward.23} parent=31 // pred_region
        %258 = vst [vmem:[#allocation2] sm:$0xff] 0.0
        %259 = vst [vmem:[#allocation2 + $0x8] sm:$0xff] 0.0
        %260 = vst [vmem:[#allocation2 + $0x10] sm:$0xff] 0.0
        %261 = vst [vmem:[#allocation2 + $0x18] sm:$0xff] 0.0
      $region36: #{pan_forward.23} parent=31 // pred_fallthru
        _
      %v262 = vld [vmem:[#allocation2] sm:$0xff]
      %v263 = vld [vmem:[#allocation2 + $0x8] sm:$0xff]
      %v264 = vld [vmem:[#allocation2 + $0x10] sm:$0xff]
      %v265 = vld [vmem:[#allocation2 + $0x18] sm:$0xff]
      %v266 = vld [vmem:[%s226] sm:$0xf]
      %v267 = vld [vmem:[%s226 + $0x4] sm:$0xf]
      %v268 = vld [vmem:[%s240] sm:$0xff]
      %v269 = vld [vmem:[%s240 + $0x8] sm:$0xff]
      %v270 = vld [vmem:[%s240 + $0x10] sm:$0xff]
      %v271 = vld [vmem:[%s240 + $0x18] sm:$0x33]
      %v274 = vunpack.c.l.b16 %v266
      %v275 = vunpack.c.l.b16 %v267
      %v276 = vpack.c.b16 %v275, %v274
      %v281 = vunpack.c.l.b16 %v268
      %v282 = vunpack.c.h.b16 %v268
      %v283 = vunpack.c.l.b16 %v269
      %v284 = vunpack.c.h.b16 %v269
      %v285 = vunpack.c.l.b16 %v270
      %v286 = vunpack.c.h.b16 %v270
      %v287 = vunpack.c.l.b16 %v271
      %v288 = vunpack.c.h.b16 %v271
      %v289 = vpack.c.b16 %v283, %v281
      %v290 = vpack.c.b16 %v284, %v282
      %v291 = vpack.c.b16 %v287, %v285
      %v292 = vpack.c.b16 %v288, %v286
      %vm295 = vcmask 220160
      %v297 = vsel %vm295, %v276, 0
      %vm299 = vcmask 1044480
      %vm300 = vcmask 1045504
      %v301 = vsel %vm299, 4294967295, 65535
      %v302 = vsel %vm300, %v301, 0
      %v304 = vand.u32 %v291, %v302
      %v307 = vand.u32 %v292, %v302
      %309 = vmatpush.bf16.msra.mxu0 0
      %310 = vmatpush.bf16.msra.mxu0 0
      %311 = vmatpush.bf16.msra.mxu0 0
      %312 = vmatpush.bf16.msra.mxu0 0
      %313 = vmatpush.bf16.msra.mxu0 0
      %314 = vmatpush.bf16.msra.mxu0 0
      %315 = vmatpush.bf16.msra.mxu0 %v304
      %316 = vmatpush.bf16.msra.mxu0 %v289
      %317 = vmatmul.bf16.gmra.mxu0 %v297
      %v318 = vpop.f32.mrf.mxu0
      %v319 = vadd.f32 0.0, %v318
      %v320 = vpop.f32.mrf.mxu0
      %v321 = vadd.f32 0.0, %v320
      %322 = vdwg.mxu0
      %323 = vmatpush.bf16.msra.mxu0 0
      %324 = vmatpush.bf16.msra.mxu0 0
      %325 = vmatpush.bf16.msra.mxu0 0
      %326 = vmatpush.bf16.msra.mxu0 0
      %327 = vmatpush.bf16.msra.mxu0 0
      %328 = vmatpush.bf16.msra.mxu0 0
      %329 = vmatpush.bf16.msra.mxu0 %v307
      %330 = vmatpush.bf16.msra.mxu0 %v290
      %331 = vmatmul.bf16.gmra.mxu0 %v297
      %v332 = vpop.f32.mrf.mxu0
      %v333 = vadd.f32 0.0, %v332
      %v334 = vpop.f32.mrf.mxu0
      %v335 = vadd.f32 0.0, %v334
      %336 = vdwg.mxu0
      %v337 = vadd.f32 %v262, %v319
      %v338 = vadd.f32 %v263, %v333
      %v339 = vadd.f32 %v264, %v321
      %v340 = vadd.f32 %v265, %v335
      %341 = vst [vmem:[#allocation2] sm:$0xff] %v337
      %342 = vst [vmem:[#allocation2 + $0x8] sm:$0xff] %v338
      %343 = vst [vmem:[#allocation2 + $0x10] sm:$0xff] %v339
      %344 = vst [vmem:[#allocation2 + $0x18] sm:$0xff] %v340
      // Predicated region
      $region37: #{pan_forward.23} parent=31 // pred_check
        %p345 = pneg %p254
      $region38: #{pan_forward.23} parent=31 // pred_check_branch
        %347 = sbr.rel (%p345) target = $region40
      $region39: #{pan_forward.23} parent=31 // pred_region
        %v348 = vld [vmem:[#allocation2] sm:$0xff]
        %v349 = vld [vmem:[#allocation2 + $0x8] sm:$0xff]
        %v350 = vld [vmem:[#allocation2 + $0x10] sm:$0xff]
        %v351 = vld [vmem:[#allocation2 + $0x18] sm:$0xff]
        %v352 = vld [vmem:[%s2] sm:$0xff]
        %v353 = vld [vmem:[%s2 + $0x8] sm:$0xff]
        %355 = vset.pattern.permute.xlu0 0
        %356 = vperm.xlu0 %355, %v352
        %v357 = vpop.permute.xlu0 %356
        %360 = vset.pattern.permute.xlu0 0
        %361 = vperm.xlu0 %360, %v353
        %v362 = vpop.permute.xlu0 %361
        %v364 = vadd.f32 %v348, %v357
        %v365 = vadd.f32 %v349, %v357
        %v366 = vadd.f32 %v350, %v362
        %v367 = vadd.f32 %v351, %v362
        %v368 = vpack.c.bf16 %v365, %v364
        %v369 = vpack.c.bf16 %v367, %v366
        %370 = vst [vmem:[%s251] sm:$0xff] %v368
        %371 = vst [vmem:[%s251 + $0x8] sm:$0xff] %v369
      $region40: #{pan_forward.23} parent=31 // pred_fallthru
        _
      %s372 = smul.u32 2, %s20
      %p373 = scmp.lt.s32.totalorder %s19, 1
      %s374 = scalar_select %p373, %s19, 1
      %p375 = scmp.lt.s32.totalorder %s372, 1
      %s376 = scalar_select %p375, %s372, 1
      %s377 = smul.addr %s374, 4
      %s378 = sadd.s32 %s376, %s377
      %s379 = smul.addr %s378, 4
      %s380 = scalar_lea.vmem %s3, %s379
      // Predicated region
      $region41: #{pan_forward.23} parent=31 // pred_check
        %p381 = pneg %p130
      $region42: #{pan_forward.23} parent=31 // pred_check_branch
        %383 = sbr.rel (%p381) target = $region44
      $region43: #{pan_forward.23} parent=31 // pred_region
        %s384 = smul.u32 2, %s20
      $region44: #{pan_forward.23} parent=31 // pred_fallthru
        _
    $region32: #{pan_forward.23} parent=5 // pred_fallthru
      _
    %p385 = scmp.le.s32.totalorder 2, %s9
    // Predicated region
    $region45: #{pan_forward.23} parent=5 // pred_check
      %p386 = pneg %p385
    $region46: #{pan_forward.23} parent=5 // pred_check_branch
      %388 = sbr.rel (%p386) target = $region48
    $region47: #{pan_forward.23} parent=5 // pred_region
      %s389 = ssub.s32 %s9, 2
      // Predicated region
      $region49: #{pan_forward.23} parent=47 // pred_check
        %p390 = pneg %p136
      $region50: #{pan_forward.23} parent=47 // pred_check_branch
        %392 = sbr.rel (%p390) target = $region52
      $region51: #{pan_forward.23} parent=47 // pred_region
        %s393 = smul.u32 2, %s23
        %p394 = scmp.lt.s32.totalorder %s22, 1
        %s395 = scalar_select %p394, %s22, 1
        %p396 = scmp.lt.s32.totalorder %s393, 1
        %s397 = scalar_select %p396, %s393, 1
        %s398 = smul.addr %s395, 4
        %s399 = sadd.s32 %s397, %s398
        %s400 = smul.addr %s399, 4
        %s401 = scalar_lea.vmem %s3, %s400
      $region52: #{pan_forward.23} parent=47 // pred_fallthru
        _
    $region48: #{pan_forward.23} parent=5 // pred_fallthru
      _
  $region6: #{pan_forward.23} parent=0 // loop_footer
    %s13 = sadd.s32 1, %s9
  $region7: #{pan_forward.23} parent=0 // loop_footer_branch
    %8 = sbr.rel target = $region3
  $region8: #{pan_forward.23} parent=0 // loop_exit
    _

// kernel: pan_forward.25
$region0: #{pan_forward.25}
  #allocation0 [shape = 'u32[]', space=smem, size = 0x4, offset = 0x4, fixed_abs, tag = 'smem constant byte address 0x4 - core index']
  #allocation1 [shape = 'u32[72,128]{1,0:T(1,128)}', space=vmem, size = 0x9000, scoped, tag = 'internal scratch']
  #allocation2 [shape = 'f32[8,256]{1,0:T(8,128)}', space=vmem, size = 0x2000, scoped, tag = 'scratch operand']
  %s0 = inlined_call_operand.vmem [shape: bf16[8,72], index: 0, kind: input, shape index: {}]
  %s1 = inlined_call_operand.vmem [shape: bf16[2,72,256], index: 1, kind: input, shape index: {}]
  %s2 = inlined_call_operand.vmem [shape: bf16[2,8,256], index: 2, kind: output, shape index: {}]
  %s3 = sld [smem:[#allocation0]]
  $region49: #{pan_forward.25} parent=0
    _
  %s5 = ssub.s32 1, %s3
  %s6 = scalar_select 0, %s5, %s3
  loop: start=0, step=1, limit=4
  $region2: #{pan_forward.25} parent=0 // loop_pre_header
    _
  $region3: #{pan_forward.25} parent=0 // loop_header
    %s8 = sphi 0, %s12
    %p9 = scmp.ge.s32.totalorder %s8, 4
    %s15 = sphi 0, %s34
    %s16 = sphi 0, %s30
    %s17 = sphi 0, %s26
    %s18 = sphi 0, %s15
    %s19 = sphi 0, %s16
    %s20 = sphi 0, %s17
    %s21 = sphi 0, %s18
    %s22 = sphi 0, %s19
    %s23 = sphi 0, %s20
    %s37 = sphi 0, %s39
    %s40 = sphi 0, %s37
    %s41 = sphi 0, %s40
    %s57 = sphi 0, %s41
    %s67 = sphi 0, %s69
    %s70 = sphi 0, %s67
    %s71 = sphi 0, %s70
    %s87 = sphi 0, %s71
    %s95 = sphi 0, %s97
    %s98 = sphi 0, %s95
    %s99 = sphi 0, %s98
    %s115 = sphi 0, %s99
  $region4: #{pan_forward.25} parent=0 // loop_header_branch
    %11 = sbr.rel (%p9) target = $region8
  $region5: #{pan_forward.25} parent=0 // loop_body
    %s13 = ssub.s32 %s8, 1
    %s14 = ssub.s32 %s8, 2
    %s24 = sadd.s32 1, %s17
    %p25 = scmp.ge.s32.totalorder %s24, 1
    %s26 = scalar_select %p25, 0, %s24
    %s27 = sadd.s32 1, %s16
    %s28 = scalar_select %p25, %s27, %s16
    %p29 = scmp.ge.s32.totalorder %s28, 1
    %s30 = scalar_select %p29, 0, %s28
    %s31 = sadd.s32 1, %s15
    %s32 = scalar_select %p29, %s31, %s15
    %p33 = scmp.ge.s32.totalorder %s32, 2
    %s34 = scalar_select %p33, 0, %s32
    %s35 = ssub.s32 %s17, %s26
    %p36 = scmp.eq.s32.totalorder %s35, 0
    %s38 = sadd.s32 %s37, 1
    %s39 = scalar_select %p36, %s37, %s38
    %p42 = pneg %p36
    %p43 = scmp.eq.s32.totalorder %s8, 1
    %p44 = por %p42, %p43
    %p45 = scmp.ne.s32.totalorder %s37, %s40
    %p46 = scmp.eq.s32.totalorder %s8, 0
    %p47 = por %p45, %p46
    %p48 = scmp.ne.s32.totalorder %s37, %s40
    %p49 = scmp.eq.s32.totalorder %s13, 1
    %p50 = por %p48, %p49
    %p51 = scmp.ne.s32.totalorder %s40, %s41
    %p52 = scmp.eq.s32.totalorder %s13, 0
    %p53 = por %p51, %p52
    %p54 = scmp.ne.s32.totalorder %s40, %s41
    %p55 = scmp.eq.s32.totalorder %s14, 1
    %p56 = por %p54, %p55
    %p58 = scmp.ne.s32.totalorder %s41, %s57
    %p59 = scmp.eq.s32.totalorder %s14, 0
    %p60 = por %p58, %p59
    %s61 = ssub.s32 %s15, %s34
    %s62 = ssub.s32 %s17, %s26
    %s63 = sor.u32 %s61, %s62
    %s64 = ssub.s32 %s16, %s30
    %s65 = sor.u32 %s63, %s64
    %p66 = scmp.eq.s32.totalorder %s65, 0
    %s68 = sadd.s32 %s67, 1
    %s69 = scalar_select %p66, %s67, %s68
    %p72 = pneg %p66
    %p73 = scmp.eq.s32.totalorder %s8, 1
    %p74 = por %p72, %p73
    %p75 = scmp.ne.s32.totalorder %s67, %s70
    %p76 = scmp.eq.s32.totalorder %s8, 0
    %p77 = por %p75, %p76
    %p78 = scmp.ne.s32.totalorder %s67, %s70
    %p79 = scmp.eq.s32.totalorder %s13, 1
    %p80 = por %p78, %p79
    %p81 = scmp.ne.s32.totalorder %s70, %s71
    %p82 = scmp.eq.s32.totalorder %s13, 0
    %p83 = por %p81, %p82
    %p84 = scmp.ne.s32.totalorder %s70, %s71
    %p85 = scmp.eq.s32.totalorder %s14, 1
    %p86 = por %p84, %p85
    %p88 = scmp.ne.s32.totalorder %s71, %s87
    %p89 = scmp.eq.s32.totalorder %s14, 0
    %p90 = por %p88, %p89
    %s91 = ssub.s32 %s15, %s34
    %s92 = ssub.s32 %s16, %s30
    %s93 = sor.u32 %s91, %s92
    %p94 = scmp.eq.s32.totalorder %s93, 0
    %s96 = sadd.s32 %s95, 1
    %s97 = scalar_select %p94, %s95, %s96
    %p100 = pneg %p94
    %p101 = scmp.eq.s32.totalorder %s8, 1
    %p102 = por %p100, %p101
    %p103 = scmp.ne.s32.totalorder %s95, %s98
    %p104 = scmp.eq.s32.totalorder %s8, 0
    %p105 = por %p103, %p104
    %p106 = scmp.ne.s32.totalorder %s95, %s98
    %p107 = scmp.eq.s32.totalorder %s13, 1
    %p108 = por %p106, %p107
    %p109 = scmp.ne.s32.totalorder %s98, %s99
    %p110 = scmp.eq.s32.totalorder %s13, 0
    %p111 = por %p109, %p110
    %p112 = scmp.ne.s32.totalorder %s98, %s99
    %p113 = scmp.eq.s32.totalorder %s14, 1
    %p114 = por %p112, %p113
    %p116 = scmp.ne.s32.totalorder %s99, %s115
    %p117 = scmp.eq.s32.totalorder %s14, 0
    %p118 = por %p116, %p117
    %p119 = scmp.le.s32.totalorder 1, %s8
    %p120 = scmp.lt.s32.totalorder %s8, 3
    %p121 = pnand %p119, %p120
    %p122 = pneg %p121
    // Predicated region
    $region9: #{pan_forward.25} parent=5 // pred_check
      _
    $region10: #{pan_forward.25} parent=5 // pred_check_branch
      %124 = sbr.rel (%p121) target = $region12
    $region11: #{pan_forward.25} parent=5 // pred_region
      %s125 = ssub.s32 %s8, 1
      // Predicated region
      $region13: #{pan_forward.25} parent=11 // pred_check
        %p126 = pneg %p53
      $region14: #{pan_forward.25} parent=11 // pred_check_branch
        %128 = sbr.rel (%p126) target = $region16
      $region15: #{pan_forward.25} parent=11 // pred_region
        %p129 = scmp.lt.s32.totalorder %s20, 0
        %s130 = scalar_select %p129, %s20, 0
        %s131 = smul.addr %s130, 4
        %s132 = scalar_lea.vmem %s0, %s131
      $region16: #{pan_forward.25} parent=11 // pred_fallthru
        _
    $region12: #{pan_forward.25} parent=5 // pred_fallthru
      _
    %p133 = scmp.lt.s32.totalorder %s8, 2
    // Predicated region
    $region17: #{pan_forward.25} parent=5 // pred_check
      %p134 = pneg %p133
    $region18: #{pan_forward.25} parent=5 // pred_check_branch
      %136 = sbr.rel (%p134) target = $region20
    $region19: #{pan_forward.25} parent=5 // pred_region
      // Predicated region
      $region21: #{pan_forward.25} parent=19 // pred_check
        %p137 = pneg %p77
      $region22: #{pan_forward.25} parent=19 // pred_check_branch
        %139 = sbr.rel (%p137) target = $region24
      $region23: #{pan_forward.25} parent=19 // pred_region
        %s140 = smul.u32 9, %s17
        %s141 = smul.u32 2, %s16
        %p142 = scmp.lt.s32.totalorder %s15, 1
        %s143 = scalar_select %p142, %s15, 1
        %p144 = scmp.lt.s32.totalorder %s140, 8
        %s145 = scalar_select %p144, %s140, 8
        %p146 = scmp.lt.s32.totalorder %s141, 1
        %s147 = scalar_select %p146, %s141, 1
        %s148 = smul.addr %s145, 2
        %s149 = sadd.s32 %s147, %s148
        %s150 = smul.addr %s143, 18
        %s151 = sadd.s32 %s149, %s150
        %s152 = smul.addr %s151, 4
        %s153 = scalar_lea.vmem %s1, %s152
        %s154 = smul.u32 9, %s17
        %s155 = smul.u32 2, %s16
      $region24: #{pan_forward.25} parent=19 // pred_fallthru
        _
    $region20: #{pan_forward.25} parent=5 // pred_fallthru
      _
    %p156 = scmp.le.s32.totalorder 1, %s8
    %p157 = scmp.lt.s32.totalorder %s8, 3
    %p158 = pnand %p156, %p157
    %p159 = pneg %p158
    // Predicated region
    $region25: #{pan_forward.25} parent=5 // pred_check
      _
    $region26: #{pan_forward.25} parent=5 // pred_check_branch
      %161 = sbr.rel (%p158) target = $region28
    $region27: #{pan_forward.25} parent=5 // pred_region
      %s162 = ssub.s32 %s8, 1
      %p163 = scmp.lt.s32.totalorder %s20, 0
      %s164 = scalar_select %p163, %s20, 0
      %s165 = smul.addr %s164, 4
      %s166 = scalar_lea.vmem %s0, %s165
      %p167 = pneg %p53
      %p168 = pneg %p50
      %s169 = smul.u32 9, %s20
      %s170 = smul.u32 2, %s19
      %p171 = scmp.lt.s32.totalorder %s18, 1
      %s172 = scalar_select %p171, %s18, 1
      %p173 = scmp.lt.s32.totalorder %s169, 8
      %s174 = scalar_select %p173, %s169, 8
      %p175 = scmp.lt.s32.totalorder %s170, 1
      %s176 = scalar_select %p175, %s170, 1
      %s177 = smul.addr %s174, 2
      %s178 = sadd.s32 %s176, %s177
      %s179 = smul.addr %s172, 18
      %s180 = sadd.s32 %s178, %s179
      %s181 = smul.addr %s180, 4
      %s182 = scalar_lea.vmem %s1, %s181
      %p183 = pneg %p83
      %p184 = pneg %p80
      %p185 = pneg %p111
      %p186 = pneg %p108
      %s187 = smul.u32 2, %s19
      %p188 = scmp.lt.s32.totalorder %s18, 1
      %s189 = scalar_select %p188, %s18, 1
      %p190 = scmp.lt.s32.totalorder %s187, 1
      %s191 = scalar_select %p190, %s187, 1
      %s192 = smul.addr %s189, 2
      %s193 = sadd.s32 %s191, %s192
      %s194 = smul.addr %s193, 4
      %s195 = scalar_lea.vmem %s2, %s194
      %p196 = scmp.lt.s32.totalorder %s20, 0
      %s197 = scalar_select %p196, %s20, 0
      %s198 = smul.addr %s197, 4
      %s199 = scalar_lea.vmem %s0, %s198
      %s200 = smul.u32 9, %s20
      %s201 = smul.u32 2, %s19
      %p202 = scmp.lt.s32.totalorder %s18, 1
      %s203 = scalar_select %p202, %s18, 1
      %p204 = scmp.lt.s32.totalorder %s200, 8
      %s205 = scalar_select %p204, %s200, 8
      %p206 = scmp.lt.s32.totalorder %s201, 1
      %s207 = scalar_select %p206, %s201, 1
      %s208 = smul.addr %s205, 2
      %s209 = sadd.s32 %s207, %s208
      %s210 = smul.addr %s203, 18
      %s211 = sadd.s32 %s209, %s210
      %s212 = smul.addr %s211, 4
      %s213 = scalar_lea.vmem %s1, %s212
      %s214 = smul.u32 9, %s20
      %s215 = smul.u32 2, %s19
      %s216 = smul.u32 2, %s19
      %p217 = scmp.lt.s32.totalorder %s18, 1
      %s218 = scalar_select %p217, %s18, 1
      %p219 = scmp.lt.s32.totalorder %s216, 1
      %s220 = scalar_select %p219, %s216, 1
      %s221 = smul.addr %s218, 2
      %s222 = sadd.s32 %s220, %s221
      %s223 = smul.addr %s222, 4
      %s224 = scalar_lea.vmem %s2, %s223
      %s225 = smul.u32 2, %s19
      %p227 = scmp.eq.s32.totalorder %s20, 0
      // Predicated region
      $region29: #{pan_forward.25} parent=27 // pred_check
        %p228 = pneg %p227
      $region30: #{pan_forward.25} parent=27 // pred_check_branch
        %230 = sbr.rel (%p228) target = $region32
      $region31: #{pan_forward.25} parent=27 // pred_region
        %231 = vst [vmem:[#allocation2] sm:$0xff] 0.0
        %232 = vst [vmem:[#allocation2 + $0x8] sm:$0xff] 0.0
      $region32: #{pan_forward.25} parent=27 // pred_fallthru
        _
      %v233 = vld [vmem:[#allocation2] sm:$0xff]
      %v234 = vld [vmem:[#allocation2 + $0x8] sm:$0xff]
      %v235 = vld [vmem:[%s199] sm:$0xf]
      %v236 = vld [vmem:[%s213] sm:$0xff]
      %v237 = vld [vmem:[%s213 + $0x8] sm:$0xff]
      %v238 = vld [vmem:[%s213 + $0x10] sm:$0xff]
      %v239 = vld [vmem:[%s213 + $0x18] sm:$0xff]
      %v240 = vld [vmem:[%s213 + $0x20] sm:$0xff]
      %v241 = vld [vmem:[%s213 + $0x28] sm:$0xff]
      %v242 = vld [vmem:[%s213 + $0x30] sm:$0xff]
      %v243 = vld [vmem:[%s213 + $0x38] sm:$0xff]
      %v244 = vld [vmem:[%s213 + $0x40] sm:$0xff]
      %v254 = vunpack.c.l.b16 %v236
      %v255 = vunpack.c.h.b16 %v236
      %v256 = vunpack.c.l.b16 %v237
      %v257 = vunpack.c.h.b16 %v237
      %v258 = vunpack.c.l.b16 %v238
      %v259 = vunpack.c.h.b16 %v238
      %v260 = vunpack.c.l.b16 %v239
      %v261 = vunpack.c.h.b16 %v239
      %v262 = vunpack.c.l.b16 %v240
      %v263 = vunpack.c.h.b16 %v240
      %v264 = vunpack.c.l.b16 %v241
      %v265 = vunpack.c.h.b16 %v241
      %v266 = vunpack.c.l.b16 %v242
      %v267 = vunpack.c.h.b16 %v242
      %v268 = vunpack.c.l.b16 %v243
      %v269 = vunpack.c.h.b16 %v243
      %v270 = vunpack.c.l.b16 %v244
      %v271 = vunpack.c.h.b16 %v244
      %v272 = vpack.c.b16 %v256, %v254
      %v273 = vpack.c.b16 %v257, %v255
      %v274 = vpack.c.b16 %v260, %v258
      %v275 = vpack.c.b16 %v261, %v259
      %v276 = vpack.c.b16 %v264, %v262
      %v277 = vpack.c.b16 %v265, %v263
      %v278 = vpack.c.b16 %v268, %v266
      %v279 = vpack.c.b16 %v269, %v267
      %v280 = vpack.c.b16 %v270, %v270
      %v281 = vpack.c.b16 %v271, %v271
      %vm290 = vcmask 588800
      %v292 = vsel %vm290, %v235, 0
      %vm294 = vcmask 1043456
      %v296 = vsel %vm294, %v280, 0
      %v299 = vsel %vm294, %v281, 0
      %301 = vmatpush.bf16.msra.mxu0 0
      %302 = vmatpush.bf16.msra.mxu0 0
      %303 = vmatpush.bf16.msra.mxu0 0
      %304 = vmatpush.bf16.msra.mxu0 %v296
      %305 = vmatpush.bf16.msra.mxu0 %v278
      %306 = vmatpush.bf16.msra.mxu0 %v276
      %307 = vmatpush.bf16.msra.mxu0 %v274
      %308 = vmatpush.bf16.msra.mxu0 %v272
      %309 = vmatmul.bf16.gmra.mxu0 %v292
      %v310 = vpop.f32.mrf.mxu0
      %v311 = vadd.f32 0.0, %v310
      %v312 = vpop.f32.mrf.mxu0
      %313 = vdwg.mxu0
      %314 = vmatpush.bf16.msra.mxu0 0
      %315 = vmatpush.bf16.msra.mxu0 0
      %316 = vmatpush.bf16.msra.mxu0 0
      %317 = vmatpush.bf16.msra.mxu0 %v299
      %318 = vmatpush.bf16.msra.mxu0 %v279
      %319 = vmatpush.bf16.msra.mxu0 %v277
      %320 = vmatpush.bf16.msra.mxu0 %v275
      %321 = vmatpush.bf16.msra.mxu0 %v273
      %322 = vmatmul.bf16.gmra.mxu0 %v292
      %v323 = vpop.f32.mrf.mxu0
      %v324 = vadd.f32 0.0, %v323
      %v325 = vpop.f32.mrf.mxu0
      %326 = vdwg.mxu0
      %v327 = vadd.f32 %v233, %v311
      %v328 = vadd.f32 %v234, %v324
      %329 = vst [vmem:[#allocation2] sm:$0xff] %v327
      %330 = vst [vmem:[#allocation2 + $0x8] sm:$0xff] %v328
      // Predicated region
      $region33: #{pan_forward.25} parent=27 // pred_check
        %p331 = pneg %p227
      $region34: #{pan_forward.25} parent=27 // pred_check_branch
        %333 = sbr.rel (%p331) target = $region36
      $region35: #{pan_forward.25} parent=27 // pred_region
        %v334 = vld [vmem:[#allocation2] sm:$0xff]
        %v335 = vld [vmem:[#allocation2 + $0x8] sm:$0xff]
        %vm336 = vcmp.ge.f32.partialorder %v334, 0.0
        %vm337 = vcmp.ge.f32.partialorder %v335, 0.0
        %v338 = vmul.f32 %v334, 0.2
        %v339 = vmul.f32 %v335, 0.2
        %v340 = vsel %vm336, %v334, %v338
        %v341 = vsel %vm337, %v335, %v339
        %v342 = vpack.c.bf16 %v341, %v340
        %343 = vst [vmem:[%s224] sm:$0xff] %v342
      $region36: #{pan_forward.25} parent=27 // pred_fallthru
        _
      %s344 = smul.u32 2, %s19
      %p345 = scmp.lt.s32.totalorder %s18, 1
      %s346 = scalar_select %p345, %s18, 1
      %p347 = scmp.lt.s32.totalorder %s344, 1
      %s348 = scalar_select %p347, %s344, 1
      %s349 = smul.addr %s346, 2
      %s350 = sadd.s32 %s348, %s349
      %s351 = smul.addr %s350, 4
      %s352 = scalar_lea.vmem %s2, %s351
      // Predicated region
      $region37: #{pan_forward.25} parent=27 // pred_check
        %p353 = pneg %p108
      $region38: #{pan_forward.25} parent=27 // pred_check_branch
        %355 = sbr.rel (%p353) target = $region40
      $region39: #{pan_forward.25} parent=27 // pred_region
        %s356 = smul.u32 2, %s19
      $region40: #{pan_forward.25} parent=27 // pred_fallthru
        _
    $region28: #{pan_forward.25} parent=5 // pred_fallthru
      _
    %p357 = scmp.le.s32.totalorder 2, %s8
    // Predicated region
    $region41: #{pan_forward.25} parent=5 // pred_check
      %p358 = pneg %p357
    $region42: #{pan_forward.25} parent=5 // pred_check_branch
      %360 = sbr.rel (%p358) target = $region44
    $region43: #{pan_forward.25} parent=5 // pred_region
      %s361 = ssub.s32 %s8, 2
      // Predicated region
      $region45: #{pan_forward.25} parent=43 // pred_check
        %p362 = pneg %p114
      $region46: #{pan_forward.25} parent=43 // pred_check_branch
        %364 = sbr.rel (%p362) target = $region48
      $region47: #{pan_forward.25} parent=43 // pred_region
        %s365 = smul.u32 2, %s22
        %p366 = scmp.lt.s32.totalorder %s21, 1
        %s367 = scalar_select %p366, %s21, 1
        %p368 = scmp.lt.s32.totalorder %s365, 1
        %s369 = scalar_select %p368, %s365, 1
        %s370 = smul.addr %s367, 2
        %s371 = sadd.s32 %s369, %s370
        %s372 = smul.addr %s371, 4
        %s373 = scalar_lea.vmem %s2, %s372
      $region48: #{pan_forward.25} parent=43 // pred_fallthru
        _
    $region44: #{pan_forward.25} parent=5 // pred_fallthru
      _
  $region6: #{pan_forward.25} parent=0 // loop_footer
    %s12 = sadd.s32 1, %s8
  $region7: #{pan_forward.25} parent=0 // loop_footer_branch
    %7 = sbr.rel target = $region3
  $region8: #{pan_forward.25} parent=0 // loop_exit
    _

// kernel: pan_forward.26
$region0: #{pan_forward.26}
  #allocation0 [shape = 'u32[]', space=smem, size = 0x4, offset = 0x4, fixed_abs, tag = 'smem constant byte address 0x4 - core index']
  #allocation1 [shape = 'u32[72,128]{1,0:T(1,128)}', space=vmem, size = 0x9000, scoped, tag = 'internal scratch']
  #allocation2 [shape = 'f32[16,256]{1,0:T(8,128)}', space=vmem, size = 0x4000, scoped, tag = 'scratch operand']
  %s0 = inlined_call_operand.vmem [shape: bf16[16,72], index: 0, kind: input, shape index: {}]
  %s1 = inlined_call_operand.vmem [shape: bf16[2,72,256], index: 1, kind: input, shape index: {}]
  %s2 = inlined_call_operand.vmem [shape: f32[16,1], index: 2, kind: input, shape index: {}]
  %s3 = inlined_call_operand.vmem [shape: bf16[2,8,256], index: 3, kind: output, shape index: {}]
  %s4 = sld [smem:[#allocation0]]
  $region53: #{pan_forward.26} parent=0
    _
  %s6 = ssub.s32 1, %s4
  %s7 = scalar_select 0, %s6, %s4
  loop: start=0, step=1, limit=4
  $region2: #{pan_forward.26} parent=0 // loop_pre_header
    _
  $region3: #{pan_forward.26} parent=0 // loop_header
    %s9 = sphi 0, %s13
    %p10 = scmp.ge.s32.totalorder %s9, 4
    %s16 = sphi 0, %s35
    %s17 = sphi 0, %s31
    %s18 = sphi 0, %s27
    %s19 = sphi 0, %s16
    %s20 = sphi 0, %s17
    %s21 = sphi 0, %s18
    %s22 = sphi 0, %s19
    %s23 = sphi 0, %s20
    %s24 = sphi 0, %s21
    %s38 = sphi 0, %s40
    %s41 = sphi 0, %s38
    %s42 = sphi 0, %s41
    %s58 = sphi 0, %s42
    %s68 = sphi 0, %s70
    %s71 = sphi 0, %s68
    %s72 = sphi 0, %s71
    %s88 = sphi 0, %s72
    %s92 = sphi 0, %s92
    %s94 = sphi 0, %s92
    %s95 = sphi 0, %s94
    %s109 = sphi 0, %s95
    %s117 = sphi 0, %s119
    %s120 = sphi 0, %s117
    %s121 = sphi 0, %s120
    %s137 = sphi 0, %s121
  $region4: #{pan_forward.26} parent=0 // loop_header_branch
    %12 = sbr.rel (%p10) target = $region8
  $region5: #{pan_forward.26} parent=0 // loop_body
    %s14 = ssub.s32 %s9, 1
    %s15 = ssub.s32 %s9, 2
    %s25 = sadd.s32 1, %s18
    %p26 = scmp.ge.s32.totalorder %s25, 1
    %s27 = scalar_select %p26, 0, %s25
    %s28 = sadd.s32 1, %s17
    %s29 = scalar_select %p26, %s28, %s17
    %p30 = scmp.ge.s32.totalorder %s29, 1
    %s31 = scalar_select %p30, 0, %s29
    %s32 = sadd.s32 1, %s16
    %s33 = scalar_select %p30, %s32, %s16
    %p34 = scmp.ge.s32.totalorder %s33, 2
    %s35 = scalar_select %p34, 0, %s33
    %s36 = ssub.s32 %s18, %s27
    %p37 = scmp.eq.s32.totalorder %s36, 0
    %s39 = sadd.s32 %s38, 1
    %s40 = scalar_select %p37, %s38, %s39
    %p43 = pneg %p37
    %p44 = scmp.eq.s32.totalorder %s9, 1
    %p45 = por %p43, %p44
    %p46 = scmp.ne.s32.totalorder %s38, %s41
    %p47 = scmp.eq.s32.totalorder %s9, 0
    %p48 = por %p46, %p47
    %p49 = scmp.ne.s32.totalorder %s38, %s41
    %p50 = scmp.eq.s32.totalorder %s14, 1
    %p51 = por %p49, %p50
    %p52 = scmp.ne.s32.totalorder %s41, %s42
    %p53 = scmp.eq.s32.totalorder %s14, 0
    %p54 = por %p52, %p53
    %p55 = scmp.ne.s32.totalorder %s41, %s42
    %p56 = scmp.eq.s32.totalorder %s15, 1
    %p57 = por %p55, %p56
    %p59 = scmp.ne.s32.totalorder %s42, %s58
    %p60 = scmp.eq.s32.totalorder %s15, 0
    %p61 = por %p59, %p60
    %s62 = ssub.s32 %s16, %s35
    %s63 = ssub.s32 %s18, %s27
    %s64 = sor.u32 %s62, %s63
    %s65 = ssub.s32 %s17, %s31
    %s66 = sor.u32 %s64, %s65
    %p67 = scmp.eq.s32.totalorder %s66, 0
    %s69 = sadd.s32 %s68, 1
    %s70 = scalar_select %p67, %s68, %s69
    %p73 = pneg %p67
    %p74 = scmp.eq.s32.totalorder %s9, 1
    %p75 = por %p73, %p74
    %p76 = scmp.ne.s32.totalorder %s68, %s71
    %p77 = scmp.eq.s32.totalorder %s9, 0
    %p78 = por %p76, %p77
    %p79 = scmp.ne.s32.totalorder %s68, %s71
    %p80 = scmp.eq.s32.totalorder %s14, 1
    %p81 = por %p79, %p80
    %p82 = scmp.ne.s32.totalorder %s71, %s72
    %p83 = scmp.eq.s32.totalorder %s14, 0
    %p84 = por %p82, %p83
    %p85 = scmp.ne.s32.totalorder %s71, %s72
    %p86 = scmp.eq.s32.totalorder %s15, 1
    %p87 = por %p85, %p86
    %p89 = scmp.ne.s32.totalorder %s72, %s88
    %p90 = scmp.eq.s32.totalorder %s15, 0
    %p91 = por %p89, %p90
    %s93 = sadd.s32 %s92, 1
    %p96 = scmp.eq.s32.totalorder %s9, 1
    %p97 = scmp.ne.s32.totalorder %s92, %s94
    %p98 = scmp.eq.s32.totalorder %s9, 0
    %p99 = por %p97, %p98
    %p100 = scmp.ne.s32.totalorder %s92, %s94
    %p101 = scmp.eq.s32.totalorder %s14, 1
    %p102 = por %p100, %p101
    %p103 = scmp.ne.s32.totalorder %s94, %s95
    %p104 = scmp.eq.s32.totalorder %s14, 0
    %p105 = por %p103, %p104
    %p106 = scmp.ne.s32.totalorder %s94, %s95
    %p107 = scmp.eq.s32.totalorder %s15, 1
    %p108 = por %p106, %p107
    %p110 = scmp.ne.s32.totalorder %s95, %s109
    %p111 = scmp.eq.s32.totalorder %s15, 0
    %p112 = por %p110, %p111
    %s113 = ssub.s32 %s16, %s35
    %s114 = ssub.s32 %s17, %s31
    %s115 = sor.u32 %s113, %s114
    %p116 = scmp.eq.s32.totalorder %s115, 0
    %s118 = sadd.s32 %s117, 1
    %s119 = scalar_select %p116, %s117, %s118
    %p122 = pneg %p116
    %p123 = scmp.eq.s32.totalorder %s9, 1
    %p124 = por %p122, %p123
    %p125 = scmp.ne.s32.totalorder %s117, %s120
    %p126 = scmp.eq.s32.totalorder %s9, 0
    %p127 = por %p125, %p126
    %p128 = scmp.ne.s32.totalorder %s117, %s120
    %p129 = scmp.eq.s32.totalorder %s14, 1
    %p130 = por %p128, %p129
    %p131 = scmp.ne.s32.totalorder %s120, %s121
    %p132 = scmp.eq.s32.totalorder %s14, 0
    %p133 = por %p131, %p132
    %p134 = scmp.ne.s32.totalorder %s120, %s121
    %p135 = scmp.eq.s32.totalorder %s15, 1
    %p136 = por %p134, %p135
    %p138 = scmp.ne.s32.totalorder %s121, %s137
    %p139 = scmp.eq.s32.totalorder %s15, 0
    %p140 = por %p138, %p139
    %p141 = scmp.le.s32.totalorder 1, %s9
    %p142 = scmp.lt.s32.totalorder %s9, 3
    %p143 = pnand %p141, %p142
    %p144 = pneg %p143
    // Predicated region
    $region9: #{pan_forward.26} parent=5 // pred_check
      _
    $region10: #{pan_forward.26} parent=5 // pred_check_branch
      %146 = sbr.rel (%p143) target = $region12
    $region11: #{pan_forward.26} parent=5 // pred_region
      %s147 = ssub.s32 %s9, 1
      // Predicated region
      $region13: #{pan_forward.26} parent=11 // pred_check
        %p148 = pneg %p54
      $region14: #{pan_forward.26} parent=11 // pred_check_branch
        %150 = sbr.rel (%p148) target = $region16
      $region15: #{pan_forward.26} parent=11 // pred_region
        %p151 = scmp.lt.s32.totalorder %s21, 0
        %s152 = scalar_select %p151, %s21, 0
        %s153 = smul.addr %s152, 4
        %s154 = scalar_lea.vmem %s0, %s153
      $region16: #{pan_forward.26} parent=11 // pred_fallthru
        _
      // Predicated region
      $region17: #{pan_forward.26} parent=11 // pred_check
        %p155 = pneg %p105
      $region18: #{pan_forward.26} parent=11 // pred_check_branch
        %157 = sbr.rel (%p155) target = $region20
      $region19: #{pan_forward.26} parent=11 // pred_region
        _
      $region20: #{pan_forward.26} parent=11 // pred_fallthru
        _
    $region12: #{pan_forward.26} parent=5 // pred_fallthru
      _
    %p158 = scmp.lt.s32.totalorder %s9, 2
    // Predicated region
    $region21: #{pan_forward.26} parent=5 // pred_check
      %p159 = pneg %p158
    $region22: #{pan_forward.26} parent=5 // pred_check_branch
      %161 = sbr.rel (%p159) target = $region24
    $region23: #{pan_forward.26} parent=5 // pred_region
      // Predicated region
      $region25: #{pan_forward.26} parent=23 // pred_check
        %p162 = pneg %p78
      $region26: #{pan_forward.26} parent=23 // pred_check_branch
        %164 = sbr.rel (%p162) target = $region28
      $region27: #{pan_forward.26} parent=23 // pred_region
        %s165 = smul.u32 9, %s18
        %s166 = smul.u32 2, %s17
        %p167 = scmp.lt.s32.totalorder %s16, 1
        %s168 = scalar_select %p167, %s16, 1
        %p169 = scmp.lt.s32.totalorder %s165, 8
        %s170 = scalar_select %p169, %s165, 8
        %p171 = scmp.lt.s32.totalorder %s166, 1
        %s172 = scalar_select %p171, %s166, 1
        %s173 = smul.addr %s170, 2
        %s174 = sadd.s32 %s172, %s173
        %s175 = smul.addr %s168, 18
        %s176 = sadd.s32 %s174, %s175
        %s177 = smul.addr %s176, 4
        %s178 = scalar_lea.vmem %s1, %s177
        %s179 = smul.u32 9, %s18
        %s180 = smul.u32 2, %s17
      $region28: #{pan_forward.26} parent=23 // pred_fallthru
        _
    $region24: #{pan_forward.26} parent=5 // pred_fallthru
      _
    %p181 = scmp.le.s32.totalorder 1, %s9
    %p182 = scmp.lt.s32.totalorder %s9, 3
    %p183 = pnand %p181, %p182
    %p184 = pneg %p183
    // Predicated region
    $region29: #{pan_forward.26} parent=5 // pred_check
      _
    $region30: #{pan_forward.26} parent=5 // pred_check_branch
      %186 = sbr.rel (%p183) target = $region32
    $region31: #{pan_forward.26} parent=5 // pred_region
      %s187 = ssub.s32 %s9, 1
      %p188 = scmp.lt.s32.totalorder %s21, 0
      %s189 = scalar_select %p188, %s21, 0
      %s190 = smul.addr %s189, 4
      %s191 = scalar_lea.vmem %s0, %s190
      %p192 = pneg %p54
      %p193 = pneg %p51
      %s194 = smul.u32 9, %s21
      %s195 = smul.u32 2, %s20
      %p196 = scmp.lt.s32.totalorder %s19, 1
      %s197 = scalar_select %p196, %s19, 1
      %p198 = scmp.lt.s32.totalorder %s194, 8
      %s199 = scalar_select %p198, %s194, 8
      %p200 = scmp.lt.s32.totalorder %s195, 1
      %s201 = scalar_select %p200, %s195, 1
      %s202 = smul.addr %s199, 2
      %s203 = sadd.s32 %s201, %s202
      %s204 = smul.addr %s197, 18
      %s205 = sadd.s32 %s203, %s204
      %s206 = smul.addr %s205, 4
      %s207 = scalar_lea.vmem %s1, %s206
      %p208 = pneg %p84
      %p209 = pneg %p81
      %p210 = pneg %p105
      %p211 = pneg %p102
      %p212 = pneg %p133
      %p213 = pneg %p130
      %s214 = smul.u32 2, %s20
      %p215 = scmp.lt.s32.totalorder %s19, 1
      %s216 = scalar_select %p215, %s19, 1
      %p217 = scmp.lt.s32.totalorder %s214, 1
      %s218 = scalar_select %p217, %s214, 1
      %s219 = smul.addr %s216, 2
      %s220 = sadd.s32 %s218, %s219
      %s221 = smul.addr %s220, 4
      %s222 = scalar_lea.vmem %s3, %s221
      %p223 = scmp.lt.s32.totalorder %s21, 0
      %s224 = scalar_select %p223, %s21, 0
      %s225 = smul.addr %s224, 4
      %s226 = scalar_lea.vmem %s0, %s225
      %s227 = smul.u32 9, %s21
      %s228 = smul.u32 2, %s20
      %p229 = scmp.lt.s32.totalorder %s19, 1
      %s230 = scalar_select %p229, %s19, 1
      %p231 = scmp.lt.s32.totalorder %s227, 8
      %s232 = scalar_select %p231, %s227, 8
      %p233 = scmp.lt.s32.totalorder %s228, 1
      %s234 = scalar_select %p233, %s228, 1
      %s235 = smul.addr %s232, 2
      %s236 = sadd.s32 %s234, %s235
      %s237 = smul.addr %s230, 18
      %s238 = sadd.s32 %s236, %s237
      %s239 = smul.addr %s238, 4
      %s240 = scalar_lea.vmem %s1, %s239
      %s241 = smul.u32 9, %s21
      %s242 = smul.u32 2, %s20
      %s243 = smul.u32 2, %s20
      %p244 = scmp.lt.s32.totalorder %s19, 1
      %s245 = scalar_select %p244, %s19, 1
      %p246 = scmp.lt.s32.totalorder %s243, 1
      %s247 = scalar_select %p246, %s243, 1
      %s248 = smul.addr %s245, 2
      %s249 = sadd.s32 %s247, %s248
      %s250 = smul.addr %s249, 4
      %s251 = scalar_lea.vmem %s3, %s250
      %s252 = smul.u32 2, %s20
      %p254 = scmp.eq.s32.totalorder %s21, 0
      // Predicated region
      $region33: #{pan_forward.26} parent=31 // pred_check
        %p255 = pneg %p254
      $region34: #{pan_forward.26} parent=31 // pred_check_branch
        %257 = sbr.rel (%p255) target = $region36
      $region35: #{pan_forward.26} parent=31 // pred_region
        %258 = vst [vmem:[#allocation2] sm:$0xff] 0.0
        %259 = vst [vmem:[#allocation2 + $0x8] sm:$0xff] 0.0
        %260 = vst [vmem:[#allocation2 + $0x10] sm:$0xff] 0.0
        %261 = vst [vmem:[#allocation2 + $0x18] sm:$0xff] 0.0
      $region36: #{pan_forward.26} parent=31 // pred_fallthru
        _
      %v262 = vld [vmem:[#allocation2] sm:$0xff]
      %v263 = vld [vmem:[#allocation2 + $0x8] sm:$0xff]
      %v264 = vld [vmem:[#allocation2 + $0x10] sm:$0xff]
      %v265 = vld [vmem:[#allocation2 + $0x18] sm:$0xff]
      %v266 = vld [vmem:[%s226] sm:$0xf]
      %v267 = vld [vmem:[%s226 + $0x4] sm:$0xf]
      %v268 = vld [vmem:[%s240] sm:$0xff]
      %v269 = vld [vmem:[%s240 + $0x8] sm:$0xff]
      %v270 = vld [vmem:[%s240 + $0x10] sm:$0xff]
      %v271 = vld [vmem:[%s240 + $0x18] sm:$0xff]
      %v272 = vld [vmem:[%s240 + $0x20] sm:$0xff]
      %v273 = vld [vmem:[%s240 + $0x28] sm:$0xff]
      %v274 = vld [vmem:[%s240 + $0x30] sm:$0xff]
      %v275 = vld [vmem:[%s240 + $0x38] sm:$0xff]
      %v276 = vld [vmem:[%s240 + $0x40] sm:$0xff]
      %v279 = vunpack.c.l.b16 %v266
      %v280 = vunpack.c.l.b16 %v267
      %v281 = vpack.c.b16 %v280, %v279
      %v291 = vunpack.c.l.b16 %v268
      %v292 = vunpack.c.h.b16 %v268
      %v293 = vunpack.c.l.b16 %v269
      %v294 = vunpack.c.h.b16 %v269
      %v295 = vunpack.c.l.b16 %v270
      %v296 = vunpack.c.h.b16 %v270
      %v297 = vunpack.c.l.b16 %v271
      %v298 = vunpack.c.h.b16 %v271
      %v299 = vunpack.c.l.b16 %v272
      %v300 = vunpack.c.h.b16 %v272
      %v301 = vunpack.c.l.b16 %v273
      %v302 = vunpack.c.h.b16 %v273
      %v303 = vunpack.c.l.b16 %v274
      %v304 = vunpack.c.h.b16 %v274
      %v305 = vunpack.c.l.b16 %v275
      %v306 = vunpack.c.h.b16 %v275
      %v307 = vunpack.c.l.b16 %v276
      %v308 = vunpack.c.h.b16 %v276
      %v309 = vpack.c.b16 %v293, %v291
      %v310 = vpack.c.b16 %v294, %v292
      %v311 = vpack.c.b16 %v297, %v295
      %v312 = vpack.c.b16 %v298, %v296
      %v313 = vpack.c.b16 %v301, %v299
      %v314 = vpack.c.b16 %v302, %v300
      %v315 = vpack.c.b16 %v305, %v303
      %v316 = vpack.c.b16 %v306, %v304
      %v317 = vpack.c.b16 %v307, %v307
      %v318 = vpack.c.b16 %v308, %v308
      %vm327 = vcmask 588800
      %v329 = vsel %vm327, %v281, 0
      %vm331 = vcmask 1043456
      %v333 = vsel %vm331, %v317, 0
      %v336 = vsel %vm331, %v318, 0
      %338 = vmatpush.bf16.msra.mxu0 0
      %339 = vmatpush.bf16.msra.mxu0 0
      %340 = vmatpush.bf16.msra.mxu0 0
      %341 = vmatpush.bf16.msra.mxu0 %v333
      %342 = vmatpush.bf16.msra.mxu0 %v315
      %343 = vmatpush.bf16.msra.mxu0 %v313
      %344 = vmatpush.bf16.msra.mxu0 %v311
      %345 = vmatpush.bf16.msra.mxu0 %v309
      %346 = vmatmul.bf16.gmra.mxu0 %v329
      %v347 = vpop.f32.mrf.mxu0
      %v348 = vadd.f32 0.0, %v347
      %v349 = vpop.f32.mrf.mxu0
      %v350 = vadd.f32 0.0, %v349
      %351 = vdwg.mxu0
      %352 = vmatpush.bf16.msra.mxu0 0
      %353 = vmatpush.bf16.msra.mxu0 0
      %354 = vmatpush.bf16.msra.mxu0 0
      %355 = vmatpush.bf16.msra.mxu0 %v336
      %356 = vmatpush.bf16.msra.mxu0 %v316
      %357 = vmatpush.bf16.msra.mxu0 %v314
      %358 = vmatpush.bf16.msra.mxu0 %v312
      %359 = vmatpush.bf16.msra.mxu0 %v310
      %360 = vmatmul.bf16.gmra.mxu0 %v329
      %v361 = vpop.f32.mrf.mxu0
      %v362 = vadd.f32 0.0, %v361
      %v363 = vpop.f32.mrf.mxu0
      %v364 = vadd.f32 0.0, %v363
      %365 = vdwg.mxu0
      %v366 = vadd.f32 %v262, %v348
      %v367 = vadd.f32 %v263, %v362
      %v368 = vadd.f32 %v264, %v350
      %v369 = vadd.f32 %v265, %v364
      %370 = vst [vmem:[#allocation2] sm:$0xff] %v366
      %371 = vst [vmem:[#allocation2 + $0x8] sm:$0xff] %v367
      %372 = vst [vmem:[#allocation2 + $0x10] sm:$0xff] %v368
      %373 = vst [vmem:[#allocation2 + $0x18] sm:$0xff] %v369
      // Predicated region
      $region37: #{pan_forward.26} parent=31 // pred_check
        %p374 = pneg %p254
      $region38: #{pan_forward.26} parent=31 // pred_check_branch
        %376 = sbr.rel (%p374) target = $region40
      $region39: #{pan_forward.26} parent=31 // pred_region
        %v377 = vld [vmem:[#allocation2] sm:$0xff]
        %v378 = vld [vmem:[#allocation2 + $0x8] sm:$0xff]
        %v379 = vld [vmem:[#allocation2 + $0x10] sm:$0xff]
        %v380 = vld [vmem:[#allocation2 + $0x18] sm:$0xff]
        %v381 = vld [vmem:[%s2] sm:$0xff]
        %v382 = vld [vmem:[%s2 + $0x8] sm:$0xff]
        %384 = vset.pattern.permute.xlu0 0
        %385 = vperm.xlu0 %384, %v381
        %v386 = vpop.permute.xlu0 %385
        %389 = vset.pattern.permute.xlu0 0
        %390 = vperm.xlu0 %389, %v382
        %v391 = vpop.permute.xlu0 %390
        %v393 = vadd.f32 %v377, %v386
        %v394 = vadd.f32 %v378, %v386
        %v395 = vadd.f32 %v379, %v391
        %v396 = vadd.f32 %v380, %v391
        %v397 = vand.u32 2147483647, %v395
        %v398 = vand.u32 2147483647, %v396
        %v399 = vsub.f32 0.0, %v397
        %v400 = vsub.f32 0.0, %v398
        %v401 = vmul.f32 %v399, 1.442695
        %v402 = vpow.pop %v401
        %v403 = vmul.f32 %v400, 1.442695
        %v404 = vpow.pop %v403
        %vm405 = vcmp.ge.f32.partialorder %v395, 0.0
        %vm406 = vcmp.ge.f32.partialorder %v396, 0.0
        %v407 = vadd.f32 %v402, 1.0
        %v408 = vadd.f32 %v404, 1.0
        %v409 = vrcp.pop %v407
        %v410 = vmul.f32 %v407, %v409
        %v411 = vsub.f32 1.0, %v410
        %v412 = vmul.f32 %v409, %v411
        %v413 = vadd.f32 %v409, %v412
        %vm414 = vweird.f32 %v407
        %vm415 = vweird.f32 %v409
        %vm416 = vmor %vm414, %vm415
        %v417 = vsel %vm416, %v409, %v413
        %v418 = vand.u32 2147483647, %v407
        %vm419 = vcmp.eq.f32.partialorder %v418, 8.507059e+37
        %v420 = vand.u32 %v407, 2147483648
        %v421 = vor.u32 1.1754944e-38, %v420
        %v422 = vsel %vm419, %v421, %v417
        %v423 = vmul.f32 1.0, %v422
        %v424 = vrcp.pop %v408
        %v425 = vmul.f32 %v408, %v424
        %v426 = vsub.f32 1.0, %v425
        %v427 = vmul.f32 %v424, %v426
        %v428 = vadd.f32 %v424, %v427
        %vm429 = vweird.f32 %v408
        %vm430 = vweird.f32 %v424
        %vm431 = vmor %vm429, %vm430
        %v432 = vsel %vm431, %v424, %v428
        %v433 = vand.u32 2147483647, %v408
        %vm434 = vcmp.eq.f32.partialorder %v433, 8.507059e+37
        %v435 = vand.u32 %v408, 2147483648
        %v436 = vor.u32 1.1754944e-38, %v435
        %v437 = vsel %vm434, %v436, %v432
        %v438 = vmul.f32 1.0, %v437
        %v439 = vmul.f32 %v402, %v422
        %v440 = vmul.f32 %v404, %v437
        %v441 = vsel %vm405, %v423, %v439
        %v442 = vsel %vm406, %v438, %v440
        %v443 = vmul.f32 %v393, %v441
        %v444 = vmul.f32 %v394, %v442
        %v445 = vpack.c.bf16 %v444, %v443
        %446 = vst [vmem:[%s251] sm:$0xff] %v445
      $region40: #{pan_forward.26} parent=31 // pred_fallthru
        _
      %s447 = smul.u32 2, %s20
      %p448 = scmp.lt.s32.totalorder %s19, 1
      %s449 = scalar_select %p448, %s19, 1
      %p450 = scmp.lt.s32.totalorder %s447, 1
      %s451 = scalar_select %p450, %s447, 1
      %s452 = smul.addr %s449, 2
      %s453 = sadd.s32 %s451, %s452
      %s454 = smul.addr %s453, 4
      %s455 = scalar_lea.vmem %s3, %s454
      // Predicated region
      $region41: #{pan_forward.26} parent=31 // pred_check
        %p456 = pneg %p130
      $region42: #{pan_forward.26} parent=31 // pred_check_branch
        %458 = sbr.rel (%p456) target = $region44
      $region43: #{pan_forward.26} parent=31 // pred_region
        %s459 = smul.u32 2, %s20
      $region44: #{pan_forward.26} parent=31 // pred_fallthru
        _
    $region32: #{pan_forward.26} parent=5 // pred_fallthru
      _
    %p460 = scmp.le.s32.totalorder 2, %s9
    // Predicated region
    $region45: #{pan_forward.26} parent=5 // pred_check
      %p461 = pneg %p460
    $region46: #{pan_forward.26} parent=5 // pred_check_branch
      %463 = sbr.rel (%p461) target = $region48
    $region47: #{pan_forward.26} parent=5 // pred_region
      %s464 = ssub.s32 %s9, 2
      // Predicated region
      $region49: #{pan_forward.26} parent=47 // pred_check
        %p465 = pneg %p136
      $region50: #{pan_forward.26} parent=47 // pred_check_branch
        %467 = sbr.rel (%p465) target = $region52
      $region51: #{pan_forward.26} parent=47 // pred_region
        %s468 = smul.u32 2, %s23
        %p469 = scmp.lt.s32.totalorder %s22, 1
        %s470 = scalar_select %p469, %s22, 1
        %p471 = scmp.lt.s32.totalorder %s468, 1
        %s472 = scalar_select %p471, %s468, 1
        %s473 = smul.addr %s470, 2
        %s474 = sadd.s32 %s472, %s473
        %s475 = smul.addr %s474, 4
        %s476 = scalar_lea.vmem %s3, %s475
      $region52: #{pan_forward.26} parent=47 // pred_fallthru
        _
    $region48: #{pan_forward.26} parent=5 // pred_fallthru
      _
  $region6: #{pan_forward.26} parent=0 // loop_footer
    %s13 = sadd.s32 1, %s9
  $region7: #{pan_forward.26} parent=0 // loop_footer_branch
    %8 = sbr.rel target = $region3
  $region8: #{pan_forward.26} parent=0 // loop_exit
    _

// kernel: pan_forward.28
$region0: #{pan_forward.28}
  #allocation0 [shape = 'u32[]', space=smem, size = 0x4, offset = 0x4, fixed_abs, tag = 'smem constant byte address 0x4 - core index']
  #allocation1 [shape = 'u32[72,128]{1,0:T(1,128)}', space=vmem, size = 0x9000, scoped, tag = 'internal scratch']
  #allocation2 [shape = 'f32[16,256]{1,0:T(8,128)}', space=vmem, size = 0x4000, scoped, tag = 'scratch operand']
  %s0 = inlined_call_operand.vmem [shape: bf16[16,16], index: 0, kind: input, shape index: {}]
  %s1 = inlined_call_operand.vmem [shape: bf16[2,16,256], index: 1, kind: input, shape index: {}]
  %s2 = inlined_call_operand.vmem [shape: bf16[2,16,256], index: 2, kind: input, shape index: {}]
  %s3 = inlined_call_operand.vmem [shape: bf16[2,16,256], index: 3, kind: output, shape index: {}]
  %s4 = sld [smem:[#allocation0]]
  $region53: #{pan_forward.28} parent=0
    _
  %s6 = ssub.s32 1, %s4
  %s7 = scalar_select 0, %s6, %s4
  loop: start=0, step=1, limit=4
  $region2: #{pan_forward.28} parent=0 // loop_pre_header
    _
  $region3: #{pan_forward.28} parent=0 // loop_header
    %s9 = sphi 0, %s13
    %p10 = scmp.ge.s32.totalorder %s9, 4
    %s16 = sphi 0, %s35
    %s17 = sphi 0, %s31
    %s18 = sphi 0, %s27
    %s19 = sphi 0, %s16
    %s20 = sphi 0, %s17
    %s21 = sphi 0, %s18
    %s22 = sphi 0, %s19
    %s23 = sphi 0, %s20
    %s24 = sphi 0, %s21
    %s38 = sphi 0, %s40
    %s41 = sphi 0, %s38
    %s42 = sphi 0, %s41
    %s58 = sphi 0, %s42
    %s68 = sphi 0, %s70
    %s71 = sphi 0, %s68
    %s72 = sphi 0, %s71
    %s88 = sphi 0, %s72
    %s96 = sphi 0, %s98
    %s99 = sphi 0, %s96
    %s100 = sphi 0, %s99
    %s116 = sphi 0, %s100
    %s124 = sphi 0, %s126
    %s127 = sphi 0, %s124
    %s128 = sphi 0, %s127
    %s144 = sphi 0, %s128
  $region4: #{pan_forward.28} parent=0 // loop_header_branch
    %12 = sbr.rel (%p10) target = $region8
  $region5: #{pan_forward.28} parent=0 // loop_body
    %s14 = ssub.s32 %s9, 1
    %s15 = ssub.s32 %s9, 2
    %s25 = sadd.s32 1, %s18
    %p26 = scmp.ge.s32.totalorder %s25, 1
    %s27 = scalar_select %p26, 0, %s25
    %s28 = sadd.s32 1, %s17
    %s29 = scalar_select %p26, %s28, %s17
    %p30 = scmp.ge.s32.totalorder %s29, 1
    %s31 = scalar_select %p30, 0, %s29
    %s32 = sadd.s32 1, %s16
    %s33 = scalar_select %p30, %s32, %s16
    %p34 = scmp.ge.s32.totalorder %s33, 2
    %s35 = scalar_select %p34, 0, %s33
    %s36 = ssub.s32 %s18, %s27
    %p37 = scmp.eq.s32.totalorder %s36, 0
    %s39 = sadd.s32 %s38, 1
    %s40 = scalar_select %p37, %s38, %s39
    %p43 = pneg %p37
    %p44 = scmp.eq.s32.totalorder %s9, 1
    %p45 = por %p43, %p44
    %p46 = scmp.ne.s32.totalorder %s38, %s41
    %p47 = scmp.eq.s32.totalorder %s9, 0
    %p48 = por %p46, %p47
    %p49 = scmp.ne.s32.totalorder %s38, %s41
    %p50 = scmp.eq.s32.totalorder %s14, 1
    %p51 = por %p49, %p50
    %p52 = scmp.ne.s32.totalorder %s41, %s42
    %p53 = scmp.eq.s32.totalorder %s14, 0
    %p54 = por %p52, %p53
    %p55 = scmp.ne.s32.totalorder %s41, %s42
    %p56 = scmp.eq.s32.totalorder %s15, 1
    %p57 = por %p55, %p56
    %p59 = scmp.ne.s32.totalorder %s42, %s58
    %p60 = scmp.eq.s32.totalorder %s15, 0
    %p61 = por %p59, %p60
    %s62 = ssub.s32 %s16, %s35
    %s63 = ssub.s32 %s18, %s27
    %s64 = sor.u32 %s62, %s63
    %s65 = ssub.s32 %s17, %s31
    %s66 = sor.u32 %s64, %s65
    %p67 = scmp.eq.s32.totalorder %s66, 0
    %s69 = sadd.s32 %s68, 1
    %s70 = scalar_select %p67, %s68, %s69
    %p73 = pneg %p67
    %p74 = scmp.eq.s32.totalorder %s9, 1
    %p75 = por %p73, %p74
    %p76 = scmp.ne.s32.totalorder %s68, %s71
    %p77 = scmp.eq.s32.totalorder %s9, 0
    %p78 = por %p76, %p77
    %p79 = scmp.ne.s32.totalorder %s68, %s71
    %p80 = scmp.eq.s32.totalorder %s14, 1
    %p81 = por %p79, %p80
    %p82 = scmp.ne.s32.totalorder %s71, %s72
    %p83 = scmp.eq.s32.totalorder %s14, 0
    %p84 = por %p82, %p83
    %p85 = scmp.ne.s32.totalorder %s71, %s72
    %p86 = scmp.eq.s32.totalorder %s15, 1
    %p87 = por %p85, %p86
    %p89 = scmp.ne.s32.totalorder %s72, %s88
    %p90 = scmp.eq.s32.totalorder %s15, 0
    %p91 = por %p89, %p90
    %s92 = ssub.s32 %s16, %s35
    %s93 = ssub.s32 %s17, %s31
    %s94 = sor.u32 %s92, %s93
    %p95 = scmp.eq.s32.totalorder %s94, 0
    %s97 = sadd.s32 %s96, 1
    %s98 = scalar_select %p95, %s96, %s97
    %p101 = pneg %p95
    %p102 = scmp.eq.s32.totalorder %s9, 1
    %p103 = por %p101, %p102
    %p104 = scmp.ne.s32.totalorder %s96, %s99
    %p105 = scmp.eq.s32.totalorder %s9, 0
    %p106 = por %p104, %p105
    %p107 = scmp.ne.s32.totalorder %s96, %s99
    %p108 = scmp.eq.s32.totalorder %s14, 1
    %p109 = por %p107, %p108
    %p110 = scmp.ne.s32.totalorder %s99, %s100
    %p111 = scmp.eq.s32.totalorder %s14, 0
    %p112 = por %p110, %p111
    %p113 = scmp.ne.s32.totalorder %s99, %s100
    %p114 = scmp.eq.s32.totalorder %s15, 1
    %p115 = por %p113, %p114
    %p117 = scmp.ne.s32.totalorder %s100, %s116
    %p118 = scmp.eq.s32.totalorder %s15, 0
    %p119 = por %p117, %p118
    %s120 = ssub.s32 %s16, %s35
    %s121 = ssub.s32 %s17, %s31
    %s122 = sor.u32 %s120, %s121
    %p123 = scmp.eq.s32.totalorder %s122, 0
    %s125 = sadd.s32 %s124, 1
    %s126 = scalar_select %p123, %s124, %s125
    %p129 = pneg %p123
    %p130 = scmp.eq.s32.totalorder %s9, 1
    %p131 = por %p129, %p130
    %p132 = scmp.ne.s32.totalorder %s124, %s127
    %p133 = scmp.eq.s32.totalorder %s9, 0
    %p134 = por %p132, %p133
    %p135 = scmp.ne.s32.totalorder %s124, %s127
    %p136 = scmp.eq.s32.totalorder %s14, 1
    %p137 = por %p135, %p136
    %p138 = scmp.ne.s32.totalorder %s127, %s128
    %p139 = scmp.eq.s32.totalorder %s14, 0
    %p140 = por %p138, %p139
    %p141 = scmp.ne.s32.totalorder %s127, %s128
    %p142 = scmp.eq.s32.totalorder %s15, 1
    %p143 = por %p141, %p142
    %p145 = scmp.ne.s32.totalorder %s128, %s144
    %p146 = scmp.eq.s32.totalorder %s15, 0
    %p147 = por %p145, %p146
    %p148 = scmp.le.s32.totalorder 1, %s9
    %p149 = scmp.lt.s32.totalorder %s9, 3
    %p150 = pnand %p148, %p149
    %p151 = pneg %p150
    // Predicated region
    $region9: #{pan_forward.28} parent=5 // pred_check
      _
    $region10: #{pan_forward.28} parent=5 // pred_check_branch
      %153 = sbr.rel (%p150) target = $region12
    $region11: #{pan_forward.28} parent=5 // pred_region
      %s154 = ssub.s32 %s9, 1
      // Predicated region
      $region13: #{pan_forward.28} parent=11 // pred_check
        %p155 = pneg %p54
      $region14: #{pan_forward.28} parent=11 // pred_check_branch
        %157 = sbr.rel (%p155) target = $region16
      $region15: #{pan_forward.28} parent=11 // pred_region
        %p158 = scmp.lt.s32.totalorder %s21, 0
        %s159 = scalar_select %p158, %s21, 0
        %s160 = smul.addr %s159, 4
        %s161 = scalar_lea.vmem %s0, %s160
      $region16: #{pan_forward.28} parent=11 // pred_fallthru
        _
    $region12: #{pan_forward.28} parent=5 // pred_fallthru
      _
    %p162 = scmp.lt.s32.totalorder %s9, 2
    // Predicated region
    $region17: #{pan_forward.28} parent=5 // pred_check
      %p163 = pneg %p162
    $region18: #{pan_forward.28} parent=5 // pred_check_branch
      %165 = sbr.rel (%p163) target = $region20
    $region19: #{pan_forward.28} parent=5 // pred_region
      // Predicated region
      $region21: #{pan_forward.28} parent=19 // pred_check
        %p166 = pneg %p78
      $region22: #{pan_forward.28} parent=19 // pred_check_branch
        %168 = sbr.rel (%p166) target = $region24
      $region23: #{pan_forward.28} parent=19 // pred_region
        %s169 = smul.u32 2, %s18
        %s170 = smul.u32 2, %s17
        %p171 = scmp.lt.s32.totalorder %s16, 1
        %s172 = scalar_select %p171, %s16, 1
        %p173 = scmp.lt.s32.totalorder %s169, 1
        %s174 = scalar_select %p173, %s169, 1
        %p175 = scmp.lt.s32.totalorder %s170, 1
        %s176 = scalar_select %p175, %s170, 1
        %s177 = smul.addr %s174, 2
        %s178 = sadd.s32 %s176, %s177
        %s179 = smul.addr %s172, 4
        %s180 = sadd.s32 %s178, %s179
        %s181 = smul.addr %s180, 4
        %s182 = scalar_lea.vmem %s1, %s181
        %s183 = smul.u32 2, %s18
        %s184 = smul.u32 2, %s17
      $region24: #{pan_forward.28} parent=19 // pred_fallthru
        _
      // Predicated region
      $region25: #{pan_forward.28} parent=19 // pred_check
        %p185 = pneg %p106
      $region26: #{pan_forward.28} parent=19 // pred_check_branch
        %187 = sbr.rel (%p185) target = $region28
      $region27: #{pan_forward.28} parent=19 // pred_region
        %s188 = smul.u32 2, %s17
        %p189 = scmp.lt.s32.totalorder %s16, 1
        %s190 = scalar_select %p189, %s16, 1
        %p191 = scmp.lt.s32.totalorder %s188, 1
        %s192 = scalar_select %p191, %s188, 1
        %s193 = smul.addr %s190, 4
        %s194 = sadd.s32 %s192, %s193
        %s195 = smul.addr %s194, 4
        %s196 = scalar_lea.vmem %s2, %s195
        %s197 = smul.u32 2, %s17
      $region28: #{pan_forward.28} parent=19 // pred_fallthru
        _
    $region20: #{pan_forward.28} parent=5 // pred_fallthru
      _
    %p198 = scmp.le.s32.totalorder 1, %s9
    %p199 = scmp.lt.s32.totalorder %s9, 3
    %p200 = pnand %p198, %p199
    %p201 = pneg %p200
    // Predicated region
    $region29: #{pan_forward.28} parent=5 // pred_check
      _
    $region30: #{pan_forward.28} parent=5 // pred_check_branch
      %203 = sbr.rel (%p200) target = $region32
    $region31: #{pan_forward.28} parent=5 // pred_region
      %s204 = ssub.s32 %s9, 1
      %p205 = scmp.lt.s32.totalorder %s21, 0
      %s206 = scalar_select %p205, %s21, 0
      %s207 = smul.addr %s206, 4
      %s208 = scalar_lea.vmem %s0, %s207
      %p209 = pneg %p54
      %p210 = pneg %p51
      %s211 = smul.u32 2, %s21
      %s212 = smul.u32 2, %s20
      %p213 = scmp.lt.s32.totalorder %s19, 1
      %s214 = scalar_select %p213, %s19, 1
      %p215 = scmp.lt.s32.totalorder %s211, 1
      %s216 = scalar_select %p215, %s211, 1
      %p217 = scmp.lt.s32.totalorder %s212, 1
      %s218 = scalar_select %p217, %s212, 1
      %s219 = smul.addr %s216, 2
      %s220 = sadd.s32 %s218, %s219
      %s221 = smul.addr %s214, 4
      %s222 = sadd.s32 %s220, %s221
      %s223 = smul.addr %s222, 4
      %s224 = scalar_lea.vmem %s1, %s223
      %p225 = pneg %p84
      %p226 = pneg %p81
      %s227 = smul.u32 2, %s20
      %p228 = scmp.lt.s32.totalorder %s19, 1
      %s229 = scalar_select %p228, %s19, 1
      %p230 = scmp.lt.s32.totalorder %s227, 1
      %s231 = scalar_select %p230, %s227, 1
      %s232 = smul.addr %s229, 4
      %s233 = sadd.s32 %s231, %s232
      %s234 = smul.addr %s233, 4
      %s235 = scalar_lea.vmem %s2, %s234
      %p236 = pneg %p112
      %p237 = pneg %p109
      %p238 = pneg %p140
      %p239 = pneg %p137
      %s240 = smul.u32 2, %s20
      %p241 = scmp.lt.s32.totalorder %s19, 1
      %s242 = scalar_select %p241, %s19, 1
      %p243 = scmp.lt.s32.totalorder %s240, 1
      %s244 = scalar_select %p243, %s240, 1
      %s245 = smul.addr %s242, 4
      %s246 = sadd.s32 %s244, %s245
      %s247 = smul.addr %s246, 4
      %s248 = scalar_lea.vmem %s3, %s247
      %p249 = scmp.lt.s32.totalorder %s21, 0
      %s250 = scalar_select %p249, %s21, 0
      %s251 = smul.addr %s250, 4
      %s252 = scalar_lea.vmem %s0, %s251
      %s253 = smul.u32 2, %s21
      %s254 = smul.u32 2, %s20
      %p255 = scmp.lt.s32.totalorder %s19, 1
      %s256 = scalar_select %p255, %s19, 1
      %p257 = scmp.lt.s32.totalorder %s253, 1
      %s258 = scalar_select %p257, %s253, 1
      %p259 = scmp.lt.s32.totalorder %s254, 1
      %s260 = scalar_select %p259, %s254, 1
      %s261 = smul.addr %s258, 2
      %s262 = sadd.s32 %s260, %s261
      %s263 = smul.addr %s256, 4
      %s264 = sadd.s32 %s262, %s263
      %s265 = smul.addr %s264, 4
      %s266 = scalar_lea.vmem %s1, %s265
      %s267 = smul.u32 2, %s21
      %s268 = smul.u32 2, %s20
      %s269 = smul.u32 2, %s20
      %p270 = scmp.lt.s32.totalorder %s19, 1
      %s271 = scalar_select %p270, %s19, 1
      %p272 = scmp.lt.s32.totalorder %s269, 1
      %s273 = scalar_select %p272, %s269, 1
      %s274 = smul.addr %s271, 4
      %s275 = sadd.s32 %s273, %s274
      %s276 = smul.addr %s275, 4
      %s277 = scalar_lea.vmem %s2, %s276
      %s278 = smul.u32 2, %s20
      %s279 = smul.u32 2, %s20
      %p280 = scmp.lt.s32.totalorder %s19, 1
      %s281 = scalar_select %p280, %s19, 1
      %p282 = scmp.lt.s32.totalorder %s279, 1
      %s283 = scalar_select %p282, %s279, 1
      %s284 = smul.addr %s281, 4
      %s285 = sadd.s32 %s283, %s284
      %s286 = smul.addr %s285, 4
      %s287 = scalar_lea.vmem %s3, %s286
      %s288 = smul.u32 2, %s20
      %p290 = scmp.eq.s32.totalorder %s21, 0
      // Predicated region
      $region33: #{pan_forward.28} parent=31 // pred_check
        %p291 = pneg %p290
      $region34: #{pan_forward.28} parent=31 // pred_check_branch
        %293 = sbr.rel (%p291) target = $region36
      $region35: #{pan_forward.28} parent=31 // pred_region
        %294 = vst [vmem:[#allocation2] sm:$0xff] 0.0
        %295 = vst [vmem:[#allocation2 + $0x8] sm:$0xff] 0.0
        %296 = vst [vmem:[#allocation2 + $0x10] sm:$0xff] 0.0
        %297 = vst [vmem:[#allocation2 + $0x18] sm:$0xff] 0.0
      $region36: #{pan_forward.28} parent=31 // pred_fallthru
        _
      %v298 = vld [vmem:[#allocation2] sm:$0xff]
      %v299 = vld [vmem:[#allocation2 + $0x8] sm:$0xff]
      %v300 = vld [vmem:[#allocation2 + $0x10] sm:$0xff]
      %v301 = vld [vmem:[#allocation2 + $0x18] sm:$0xff]
      %v302 = vld [vmem:[%s252] sm:$0xf]
      %v303 = vld [vmem:[%s252 + $0x4] sm:$0xf]
      %v304 = vld [vmem:[%s266] sm:$0xff]
      %v305 = vld [vmem:[%s266 + $0x8] sm:$0xff]
      %v308 = vunpack.c.l.b16 %v302
      %v309 = vunpack.c.l.b16 %v303
      %v310 = vpack.c.b16 %v309, %v308
      %v313 = vunpack.c.l.b16 %v304
      %v314 = vunpack.c.h.b16 %v304
      %v315 = vunpack.c.l.b16 %v305
      %v316 = vunpack.c.h.b16 %v305
      %v317 = vpack.c.b16 %v315, %v313
      %v318 = vpack.c.b16 %v316, %v314
      %vm321 = vcmask 130048
      %v323 = vsel %vm321, %v310, 0
      %325 = vmatpush.bf16.msra.mxu0 0
      %326 = vmatpush.bf16.msra.mxu0 0
      %327 = vmatpush.bf16.msra.mxu0 0
      %328 = vmatpush.bf16.msra.mxu0 0
      %329 = vmatpush.bf16.msra.mxu0 0
      %330 = vmatpush.bf16.msra.mxu0 0
      %331 = vmatpush.bf16.msra.mxu0 0
      %332 = vmatpush.bf16.msra.mxu0 %v317
      %333 = vmatmul.bf16.gmra.mxu0 %v323
      %v334 = vpop.f32.mrf.mxu0
      %v335 = vadd.f32 0.0, %v334
      %v336 = vpop.f32.mrf.mxu0
      %v337 = vadd.f32 0.0, %v336
      %338 = vdwg.mxu0
      %339 = vmatpush.bf16.msra.mxu0 0
      %340 = vmatpush.bf16.msra.mxu0 0
      %341 = vmatpush.bf16.msra.mxu0 0
      %342 = vmatpush.bf16.msra.mxu0 0
      %343 = vmatpush.bf16.msra.mxu0 0
      %344 = vmatpush.bf16.msra.mxu0 0
      %345 = vmatpush.bf16.msra.mxu0 0
      %346 = vmatpush.bf16.msra.mxu0 %v318
      %347 = vmatmul.bf16.gmra.mxu0 %v323
      %v348 = vpop.f32.mrf.mxu0
      %v349 = vadd.f32 0.0, %v348
      %v350 = vpop.f32.mrf.mxu0
      %v351 = vadd.f32 0.0, %v350
      %352 = vdwg.mxu0
      %v353 = vadd.f32 %v298, %v335
      %v354 = vadd.f32 %v299, %v349
      %v355 = vadd.f32 %v300, %v337
      %v356 = vadd.f32 %v301, %v351
      %357 = vst [vmem:[#allocation2] sm:$0xff] %v353
      %358 = vst [vmem:[#allocation2 + $0x8] sm:$0xff] %v354
      %359 = vst [vmem:[#allocation2 + $0x10] sm:$0xff] %v355
      %360 = vst [vmem:[#allocation2 + $0x18] sm:$0xff] %v356
      // Predicated region
      $region37: #{pan_forward.28} parent=31 // pred_check
        %p361 = pneg %p290
      $region38: #{pan_forward.28} parent=31 // pred_check_branch
        %363 = sbr.rel (%p361) target = $region40
      $region39: #{pan_forward.28} parent=31 // pred_region
        %v364 = vld [vmem:[#allocation2] sm:$0xff]
        %v365 = vld [vmem:[#allocation2 + $0x8] sm:$0xff]
        %v366 = vld [vmem:[#allocation2 + $0x10] sm:$0xff]
        %v367 = vld [vmem:[#allocation2 + $0x18] sm:$0xff]
        %v368 = vld [vmem:[%s277] sm:$0xff]
        %v369 = vld [vmem:[%s277 + $0x8] sm:$0xff]
        %v370 = vunpack.c.l.bf16 %v368
        %v371 = vunpack.c.h.bf16 %v368
        %v372 = vunpack.c.l.bf16 %v369
        %v373 = vunpack.c.h.bf16 %v369
        %v374 = vadd.f32 %v364, %v370
        %v375 = vadd.f32 %v365, %v371
        %v376 = vadd.f32 %v366, %v372
        %v377 = vadd.f32 %v367, %v373
        %v378 = vpack.c.bf16 %v375, %v374
        %v379 = vpack.c.bf16 %v377, %v376
        %380 = vst [vmem:[%s287] sm:$0xff] %v378
        %381 = vst [vmem:[%s287 + $0x8] sm:$0xff] %v379
      $region40: #{pan_forward.28} parent=31 // pred_fallthru
        _
      %s382 = smul.u32 2, %s20
      %p383 = scmp.lt.s32.totalorder %s19, 1
      %s384 = scalar_select %p383, %s19, 1
      %p385 = scmp.lt.s32.totalorder %s382, 1
      %s386 = scalar_select %p385, %s382, 1
      %s387 = smul.addr %s384, 4
      %s388 = sadd.s32 %s386, %s387
      %s389 = smul.addr %s388, 4
      %s390 = scalar_lea.vmem %s3, %s389
      // Predicated region
      $region41: #{pan_forward.28} parent=31 // pred_check
        %p391 = pneg %p137
      $region42: #{pan_forward.28} parent=31 // pred_check_branch
        %393 = sbr.rel (%p391) target = $region44
      $region43: #{pan_forward.28} parent=31 // pred_region
        %s394 = smul.u32 2, %s20
      $region44: #{pan_forward.28} parent=31 // pred_fallthru
        _
    $region32: #{pan_forward.28} parent=5 // pred_fallthru
      _
    %p395 = scmp.le.s32.totalorder 2, %s9
    // Predicated region
    $region45: #{pan_forward.28} parent=5 // pred_check
      %p396 = pneg %p395
    $region46: #{pan_forward.28} parent=5 // pred_check_branch
      %398 = sbr.rel (%p396) target = $region48
    $region47: #{pan_forward.28} parent=5 // pred_region
      %s399 = ssub.s32 %s9, 2
      // Predicated region
      $region49: #{pan_forward.28} parent=47 // pred_check
        %p400 = pneg %p143
      $region50: #{pan_forward.28} parent=47 // pred_check_branch
        %402 = sbr.rel (%p400) target = $region52
      $region51: #{pan_forward.28} parent=47 // pred_region
        %s403 = smul.u32 2, %s23
        %p404 = scmp.lt.s32.totalorder %s22, 1
        %s405 = scalar_select %p404, %s22, 1
        %p406 = scmp.lt.s32.totalorder %s403, 1
        %s407 = scalar_select %p406, %s403, 1
        %s408 = smul.addr %s405, 4
        %s409 = sadd.s32 %s407, %s408
        %s410 = smul.addr %s409, 4
        %s411 = scalar_lea.vmem %s3, %s410
      $region52: #{pan_forward.28} parent=47 // pred_fallthru
        _
    $region48: #{pan_forward.28} parent=5 // pred_fallthru
      _
  $region6: #{pan_forward.28} parent=0 // loop_footer
    %s13 = sadd.s32 1, %s9
  $region7: #{pan_forward.28} parent=0 // loop_footer_branch
    %8 = sbr.rel target = $region3
  $region8: #{pan_forward.28} parent=0 // loop_exit
    _

// kernel: pan_forward.34
$region0: #{pan_forward.34}
  #allocation0 [shape = 'u32[]', space=smem, size = 0x4, offset = 0x4, fixed_abs, tag = 'smem constant byte address 0x4 - core index']
  #allocation1 [shape = 'u32[72,128]{1,0:T(1,128)}', space=vmem, size = 0x9000, scoped, tag = 'internal scratch']
  #allocation2 [shape = 'f32[16,256]{1,0:T(8,128)}', space=vmem, size = 0x4000, scoped, tag = 'scratch operand']
  %s0 = inlined_call_operand.vmem [shape: bf16[16,144], index: 0, kind: input, shape index: {}]
  %s1 = inlined_call_operand.vmem [shape: bf16[2,144,256], index: 1, kind: input, shape index: {}]
  %s2 = inlined_call_operand.vmem [shape: f32[16,1], index: 2, kind: input, shape index: {}]
  %s3 = inlined_call_operand.vmem [shape: bf16[2,16,256], index: 3, kind: input, shape index: {}]
  %s4 = inlined_call_operand.vmem [shape: bf16[2,16,256], index: 4, kind: output, shape index: {}]
  %s5 = sld [smem:[#allocation0]]
  $region57: #{pan_forward.34} parent=0
    _
  %s7 = ssub.s32 1, %s5
  %s8 = scalar_select 0, %s7, %s5
  loop: start=0, step=1, limit=4
  $region2: #{pan_forward.34} parent=0 // loop_pre_header
    _
  $region3: #{pan_forward.34} parent=0 // loop_header
    %s10 = sphi 0, %s14
    %p11 = scmp.ge.s32.totalorder %s10, 4
    %s17 = sphi 0, %s36
    %s18 = sphi 0, %s32
    %s19 = sphi 0, %s28
    %s20 = sphi 0, %s17
    %s21 = sphi 0, %s18
    %s22 = sphi 0, %s19
    %s23 = sphi 0, %s20
    %s24 = sphi 0, %s21
    %s25 = sphi 0, %s22
    %s39 = sphi 0, %s41
    %s42 = sphi 0, %s39
    %s43 = sphi 0, %s42
    %s59 = sphi 0, %s43
    %s69 = sphi 0, %s71
    %s72 = sphi 0, %s69
    %s73 = sphi 0, %s72
    %s89 = sphi 0, %s73
    %s93 = sphi 0, %s93
    %s95 = sphi 0, %s93
    %s96 = sphi 0, %s95
    %s110 = sphi 0, %s96
    %s118 = sphi 0, %s120
    %s121 = sphi 0, %s118
    %s122 = sphi 0, %s121
    %s138 = sphi 0, %s122
    %s146 = sphi 0, %s148
    %s149 = sphi 0, %s146
    %s150 = sphi 0, %s149
    %s166 = sphi 0, %s150
  $region4: #{pan_forward.34} parent=0 // loop_header_branch
    %13 = sbr.rel (%p11) target = $region8
  $region5: #{pan_forward.34} parent=0 // loop_body
    %s15 = ssub.s32 %s10, 1
    %s16 = ssub.s32 %s10, 2
    %s26 = sadd.s32 1, %s19
    %p27 = scmp.ge.s32.totalorder %s26, 1
    %s28 = scalar_select %p27, 0, %s26
    %s29 = sadd.s32 1, %s18
    %s30 = scalar_select %p27, %s29, %s18
    %p31 = scmp.ge.s32.totalorder %s30, 1
    %s32 = scalar_select %p31, 0, %s30
    %s33 = sadd.s32 1, %s17
    %s34 = scalar_select %p31, %s33, %s17
    %p35 = scmp.ge.s32.totalorder %s34, 2
    %s36 = scalar_select %p35, 0, %s34
    %s37 = ssub.s32 %s19, %s28
    %p38 = scmp.eq.s32.totalorder %s37, 0
    %s40 = sadd.s32 %s39, 1
    %s41 = scalar_select %p38, %s39, %s40
    %p44 = pneg %p38
    %p45 = scmp.eq.s32.totalorder %s10, 1
    %p46 = por %p44, %p45
    %p47 = scmp.ne.s32.totalorder %s39, %s42
    %p48 = scmp.eq.s32.totalorder %s10, 0
    %p49 = por %p47, %p48
    %p50 = scmp.ne.s32.totalorder %s39, %s42
    %p51 = scmp.eq.s32.totalorder %s15, 1
    %p52 = por %p50, %p51
    %p53 = scmp.ne.s32.totalorder %s42, %s43
    %p54 = scmp.eq.s32.totalorder %s15, 0
    %p55 = por %p53, %p54
    %p56 = scmp.ne.s32.totalorder %s42, %s43
    %p57 = scmp.eq.s32.totalorder %s16, 1
    %p58 = por %p56, %p57
    %p60 = scmp.ne.s32.totalorder %s43, %s59
    %p61 = scmp.eq.s32.totalorder %s16, 0
    %p62 = por %p60, %p61
    %s63 = ssub.s32 %s17, %s36
    %s64 = ssub.s32 %s19, %s28
    %s65 = sor.u32 %s63, %s64
    %s66 = ssub.s32 %s18, %s32
    %s67 = sor.u32 %s65, %s66
    %p68 = scmp.eq.s32.totalorder %s67, 0
    %s70 = sadd.s32 %s69, 1
    %s71 = scalar_select %p68, %s69, %s70
    %p74 = pneg %p68
    %p75 = scmp.eq.s32.totalorder %s10, 1
    %p76 = por %p74, %p75
    %p77 = scmp.ne.s32.totalorder %s69, %s72
    %p78 = scmp.eq.s32.totalorder %s10, 0
    %p79 = por %p77, %p78
    %p80 = scmp.ne.s32.totalorder %s69, %s72
    %p81 = scmp.eq.s32.totalorder %s15, 1
    %p82 = por %p80, %p81
    %p83 = scmp.ne.s32.totalorder %s72, %s73
    %p84 = scmp.eq.s32.totalorder %s15, 0
    %p85 = por %p83, %p84
    %p86 = scmp.ne.s32.totalorder %s72, %s73
    %p87 = scmp.eq.s32.totalorder %s16, 1
    %p88 = por %p86, %p87
    %p90 = scmp.ne.s32.totalorder %s73, %s89
    %p91 = scmp.eq.s32.totalorder %s16, 0
    %p92 = por %p90, %p91
    %s94 = sadd.s32 %s93, 1
    %p97 = scmp.eq.s32.totalorder %s10, 1
    %p98 = scmp.ne.s32.totalorder %s93, %s95
    %p99 = scmp.eq.s32.totalorder %s10, 0
    %p100 = por %p98, %p99
    %p101 = scmp.ne.s32.totalorder %s93, %s95
    %p102 = scmp.eq.s32.totalorder %s15, 1
    %p103 = por %p101, %p102
    %p104 = scmp.ne.s32.totalorder %s95, %s96
    %p105 = scmp.eq.s32.totalorder %s15, 0
    %p106 = por %p104, %p105
    %p107 = scmp.ne.s32.totalorder %s95, %s96
    %p108 = scmp.eq.s32.totalorder %s16, 1
    %p109 = por %p107, %p108
    %p111 = scmp.ne.s32.totalorder %s96, %s110
    %p112 = scmp.eq.s32.totalorder %s16, 0
    %p113 = por %p111, %p112
    %s114 = ssub.s32 %s17, %s36
    %s115 = ssub.s32 %s18, %s32
    %s116 = sor.u32 %s114, %s115
    %p117 = scmp.eq.s32.totalorder %s116, 0
    %s119 = sadd.s32 %s118, 1
    %s120 = scalar_select %p117, %s118, %s119
    %p123 = pneg %p117
    %p124 = scmp.eq.s32.totalorder %s10, 1
    %p125 = por %p123, %p124
    %p126 = scmp.ne.s32.totalorder %s118, %s121
    %p127 = scmp.eq.s32.totalorder %s10, 0
    %p128 = por %p126, %p127
    %p129 = scmp.ne.s32.totalorder %s118, %s121
    %p130 = scmp.eq.s32.totalorder %s15, 1
    %p131 = por %p129, %p130
    %p132 = scmp.ne.s32.totalorder %s121, %s122
    %p133 = scmp.eq.s32.totalorder %s15, 0
    %p134 = por %p132, %p133
    %p135 = scmp.ne.s32.totalorder %s121, %s122
    %p136 = scmp.eq.s32.totalorder %s16, 1
    %p137 = por %p135, %p136
    %p139 = scmp.ne.s32.totalorder %s122, %s138
    %p140 = scmp.eq.s32.totalorder %s16, 0
    %p141 = por %p139, %p140
    %s142 = ssub.s32 %s17, %s36
    %s143 = ssub.s32 %s18, %s32
    %s144 = sor.u32 %s142, %s143
    %p145 = scmp.eq.s32.totalorder %s144, 0
    %s147 = sadd.s32 %s146, 1
    %s148 = scalar_select %p145, %s146, %s147
    %p151 = pneg %p145
    %p152 = scmp.eq.s32.totalorder %s10, 1
    %p153 = por %p151, %p152
    %p154 = scmp.ne.s32.totalorder %s146, %s149
    %p155 = scmp.eq.s32.totalorder %s10, 0
    %p156 = por %p154, %p155
    %p157 = scmp.ne.s32.totalorder %s146, %s149
    %p158 = scmp.eq.s32.totalorder %s15, 1
    %p159 = por %p157, %p158
    %p160 = scmp.ne.s32.totalorder %s149, %s150
    %p161 = scmp.eq.s32.totalorder %s15, 0
    %p162 = por %p160, %p161
    %p163 = scmp.ne.s32.totalorder %s149, %s150
    %p164 = scmp.eq.s32.totalorder %s16, 1
    %p165 = por %p163, %p164
    %p167 = scmp.ne.s32.totalorder %s150, %s166
    %p168 = scmp.eq.s32.totalorder %s16, 0
    %p169 = por %p167, %p168
    %p170 = scmp.le.s32.totalorder 1, %s10
    %p171 = scmp.lt.s32.totalorder %s10, 3
    %p172 = pnand %p170, %p171
    %p173 = pneg %p172
    // Predicated region
    $region9: #{pan_forward.34} parent=5 // pred_check
      _
    $region10: #{pan_forward.34} parent=5 // pred_check_branch
      %175 = sbr.rel (%p172) target = $region12
    $region11: #{pan_forward.34} parent=5 // pred_region
      %s176 = ssub.s32 %s10, 1
      // Predicated region
      $region13: #{pan_forward.34} parent=11 // pred_check
        %p177 = pneg %p55
      $region14: #{pan_forward.34} parent=11 // pred_check_branch
        %179 = sbr.rel (%p177) target = $region16
      $region15: #{pan_forward.34} parent=11 // pred_region
        %s180 = smul.u32 2, %s22
        %p181 = scmp.lt.s32.totalorder %s180, 1
        %s182 = scalar_select %p181, %s180, 1
        %s183 = smul.addr %s182, 4
        %s184 = scalar_lea.vmem %s0, %s183
        %s185 = smul.u32 2, %s22
      $region16: #{pan_forward.34} parent=11 // pred_fallthru
        _
      // Predicated region
      $region17: #{pan_forward.34} parent=11 // pred_check
        %p186 = pneg %p106
      $region18: #{pan_forward.34} parent=11 // pred_check_branch
        %188 = sbr.rel (%p186) target = $region20
      $region19: #{pan_forward.34} parent=11 // pred_region
        _
      $region20: #{pan_forward.34} parent=11 // pred_fallthru
        _
    $region12: #{pan_forward.34} parent=5 // pred_fallthru
      _
    %p189 = scmp.lt.s32.totalorder %s10, 2
    // Predicated region
    $region21: #{pan_forward.34} parent=5 // pred_check
      %p190 = pneg %p189
    $region22: #{pan_forward.34} parent=5 // pred_check_branch
      %192 = sbr.rel (%p190) target = $region24
    $region23: #{pan_forward.34} parent=5 // pred_region
      // Predicated region
      $region25: #{pan_forward.34} parent=23 // pred_check
        %p193 = pneg %p79
      $region26: #{pan_forward.34} parent=23 // pred_check_branch
        %195 = sbr.rel (%p193) target = $region28
      $region27: #{pan_forward.34} parent=23 // pred_region
        %s196 = smul.u32 18, %s19
        %s197 = smul.u32 2, %s18
        %p198 = scmp.lt.s32.totalorder %s17, 1
        %s199 = scalar_select %p198, %s17, 1
        %p200 = scmp.lt.s32.totalorder %s196, 17
        %s201 = scalar_select %p200, %s196, 17
        %p202 = scmp.lt.s32.totalorder %s197, 1
        %s203 = scalar_select %p202, %s197, 1
        %s204 = smul.addr %s201, 2
        %s205 = sadd.s32 %s203, %s204
        %s206 = smul.addr %s199, 36
        %s207 = sadd.s32 %s205, %s206
        %s208 = smul.addr %s207, 4
        %s209 = scalar_lea.vmem %s1, %s208
        %s210 = smul.u32 18, %s19
        %s211 = smul.u32 2, %s18
      $region28: #{pan_forward.34} parent=23 // pred_fallthru
        _
      // Predicated region
      $region29: #{pan_forward.34} parent=23 // pred_check
        %p212 = pneg %p128
      $region30: #{pan_forward.34} parent=23 // pred_check_branch
        %214 = sbr.rel (%p212) target = $region32
      $region31: #{pan_forward.34} parent=23 // pred_region
        %s215 = smul.u32 2, %s18
        %p216 = scmp.lt.s32.totalorder %s17, 1
        %s217 = scalar_select %p216, %s17, 1
        %p218 = scmp.lt.s32.totalorder %s215, 1
        %s219 = scalar_select %p218, %s215, 1
        %s220 = smul.addr %s217, 4
        %s221 = sadd.s32 %s219, %s220
        %s222 = smul.addr %s221, 4
        %s223 = scalar_lea.vmem %s3, %s222
        %s224 = smul.u32 2, %s18
      $region32: #{pan_forward.34} parent=23 // pred_fallthru
        _
    $region24: #{pan_forward.34} parent=5 // pred_fallthru
      _
    %p225 = scmp.le.s32.totalorder 1, %s10
    %p226 = scmp.lt.s32.totalorder %s10, 3
    %p227 = pnand %p225, %p226
    %p228 = pneg %p227
    // Predicated region
    $region33: #{pan_forward.34} parent=5 // pred_check
      _
    $region34: #{pan_forward.34} parent=5 // pred_check_branch
      %230 = sbr.rel (%p227) target = $region36
    $region35: #{pan_forward.34} parent=5 // pred_region
      %s231 = ssub.s32 %s10, 1
      %s232 = smul.u32 2, %s22
      %p233 = scmp.lt.s32.totalorder %s232, 1
      %s234 = scalar_select %p233, %s232, 1
      %s235 = smul.addr %s234, 4
      %s236 = scalar_lea.vmem %s0, %s235
      %p237 = pneg %p55
      %p238 = pneg %p52
      %s239 = smul.u32 18, %s22
      %s240 = smul.u32 2, %s21
      %p241 = scmp.lt.s32.totalorder %s20, 1
      %s242 = scalar_select %p241, %s20, 1
      %p243 = scmp.lt.s32.totalorder %s239, 17
      %s244 = scalar_select %p243, %s239, 17
      %p245 = scmp.lt.s32.totalorder %s240, 1
      %s246 = scalar_select %p245, %s240, 1
      %s247 = smul.addr %s244, 2
      %s248 = sadd.s32 %s246, %s247
      %s249 = smul.addr %s242, 36
      %s250 = sadd.s32 %s248, %s249
      %s251 = smul.addr %s250, 4
      %s252 = scalar_lea.vmem %s1, %s251
      %p253 = pneg %p85
      %p254 = pneg %p82
      %p255 = pneg %p106
      %p256 = pneg %p103
      %s257 = smul.u32 2, %s21
      %p258 = scmp.lt.s32.totalorder %s20, 1
      %s259 = scalar_select %p258, %s20, 1
      %p260 = scmp.lt.s32.totalorder %s257, 1
      %s261 = scalar_select %p260, %s257, 1
      %s262 = smul.addr %s259, 4
      %s263 = sadd.s32 %s261, %s262
      %s264 = smul.addr %s263, 4
      %s265 = scalar_lea.vmem %s3, %s264
      %p266 = pneg %p134
      %p267 = pneg %p131
      %p268 = pneg %p162
      %p269 = pneg %p159
      %s270 = smul.u32 2, %s21
      %p271 = scmp.lt.s32.totalorder %s20, 1
      %s272 = scalar_select %p271, %s20, 1
      %p273 = scmp.lt.s32.totalorder %s270, 1
      %s274 = scalar_select %p273, %s270, 1
      %s275 = smul.addr %s272, 4
      %s276 = sadd.s32 %s274, %s275
      %s277 = smul.addr %s276, 4
      %s278 = scalar_lea.vmem %s4, %s277
      %s279 = smul.u32 2, %s22
      %p280 = scmp.lt.s32.totalorder %s279, 1
      %s281 = scalar_select %p280, %s279, 1
      %s282 = smul.addr %s281, 4
      %s283 = scalar_lea.vmem %s0, %s282
      %s284 = smul.u32 2, %s22
      %s285 = smul.u32 18, %s22
      %s286 = smul.u32 2, %s21
      %p287 = scmp.lt.s32.totalorder %s20, 1
      %s288 = scalar_select %p287, %s20, 1
      %p289 = scmp.lt.s32.totalorder %s285, 17
      %s290 = scalar_select %p289, %s285, 17
      %p291 = scmp.lt.s32.totalorder %s286, 1
      %s292 = scalar_select %p291, %s286, 1
      %s293 = smul.addr %s290, 2
      %s294 = sadd.s32 %s292, %s293
      %s295 = smul.addr %s288, 36
      %s296 = sadd.s32 %s294, %s295
      %s297 = smul.addr %s296, 4
      %s298 = scalar_lea.vmem %s1, %s297
      %s299 = smul.u32 18, %s22
      %s300 = smul.u32 2, %s21
      %s301 = smul.u32 2, %s21
      %p302 = scmp.lt.s32.totalorder %s20, 1
      %s303 = scalar_select %p302, %s20, 1
      %p304 = scmp.lt.s32.totalorder %s301, 1
      %s305 = scalar_select %p304, %s301, 1
      %s306 = smul.addr %s303, 4
      %s307 = sadd.s32 %s305, %s306
      %s308 = smul.addr %s307, 4
      %s309 = scalar_lea.vmem %s3, %s308
      %s310 = smul.u32 2, %s21
      %s311 = smul.u32 2, %s21
      %p312 = scmp.lt.s32.totalorder %s20, 1
      %s313 = scalar_select %p312, %s20, 1
      %p314 = scmp.lt.s32.totalorder %s311, 1
      %s315 = scalar_select %p314, %s311, 1
      %s316 = smul.addr %s313, 4
      %s317 = sadd.s32 %s315, %s316
      %s318 = smul.addr %s317, 4
      %s319 = scalar_lea.vmem %s4, %s318
      %s320 = smul.u32 2, %s21
      %p322 = scmp.eq.s32.totalorder %s22, 0
      // Predicated region
      $region37: #{pan_forward.34} parent=35 // pred_check
        %p323 = pneg %p322
      $region38: #{pan_forward.34} parent=35 // pred_check_branch
        %325 = sbr.rel (%p323) target = $region40
      $region39: #{pan_forward.34} parent=35 // pred_region
        %326 = vst [vmem:[#allocation2] sm:$0xff] 0.0
        %327 = vst [vmem:[#allocation2 + $0x8] sm:$0xff] 0.0
        %328 = vst [vmem:[#allocation2 + $0x10] sm:$0xff] 0.0
        %329 = vst [vmem:[#allocation2 + $0x18] sm:$0xff] 0.0
      $region40: #{pan_forward.34} parent=35 // pred_fallthru
        _
      %v330 = vld [vmem:[#allocation2] sm:$0xff]
      %v331 = vld [vmem:[#allocation2 + $0x8] sm:$0xff]
      %v332 = vld [vmem:[#allocation2 + $0x10] sm:$0xff]
      %v333 = vld [vmem:[#allocation2 + $0x18] sm:$0xff]
      %v334 = vld [vmem:[%s283] sm:$0xff]
      %v335 = vld [vmem:[%s283 + $0x8] sm:$0xff]
      %v336 = vld [vmem:[%s298] sm:$0xff]
      %v337 = vld [vmem:[%s298 + $0x8] sm:$0xff]
      %v338 = vld [vmem:[%s298 + $0x10] sm:$0xff]
      %v339 = vld [vmem:[%s298 + $0x18] sm:$0xff]
      %v340 = vld [vmem:[%s298 + $0x20] sm:$0xff]
      %v341 = vld [vmem:[%s298 + $0x28] sm:$0xff]
      %v342 = vld [vmem:[%s298 + $0x30] sm:$0xff]
      %v343 = vld [vmem:[%s298 + $0x38] sm:$0xff]
      %v344 = vld [vmem:[%s298 + $0x40] sm:$0xff]
      %v345 = vld [vmem:[%s298 + $0x48] sm:$0xff]
      %v346 = vld [vmem:[%s298 + $0x50] sm:$0xff]
      %v347 = vld [vmem:[%s298 + $0x58] sm:$0xff]
      %v348 = vld [vmem:[%s298 + $0x60] sm:$0xff]
      %v349 = vld [vmem:[%s298 + $0x68] sm:$0xff]
      %v350 = vld [vmem:[%s298 + $0x70] sm:$0xff]
      %v351 = vld [vmem:[%s298 + $0x78] sm:$0xff]
      %v352 = vld [vmem:[%s298 + $0x80] sm:$0xff]
      %v353 = vld [vmem:[%s298 + $0x88] sm:$0xff]
      %v356 = vunpack.c.l.b16 %v334
      %v357 = vunpack.c.h.b16 %v334
      %v358 = vunpack.c.l.b16 %v335
      %v359 = vunpack.c.h.b16 %v335
      %v360 = vpack.c.b16 %v358, %v356
      %v361 = vpack.c.b16 %v359, %v357
      %v381 = vunpack.c.l.b16 %v336
      %v382 = vunpack.c.h.b16 %v336
      %v383 = vunpack.c.l.b16 %v337
      %v384 = vunpack.c.h.b16 %v337
      %v385 = vunpack.c.l.b16 %v338
      %v386 = vunpack.c.h.b16 %v338
      %v387 = vunpack.c.l.b16 %v339
      %v388 = vunpack.c.h.b16 %v339
      %v389 = vunpack.c.l.b16 %v340
      %v390 = vunpack.c.h.b16 %v340
      %v391 = vunpack.c.l.b16 %v341
      %v392 = vunpack.c.h.b16 %v341
      %v393 = vunpack.c.l.b16 %v342
      %v394 = vunpack.c.h.b16 %v342
      %v395 = vunpack.c.l.b16 %v343
      %v396 = vunpack.c.h.b16 %v343
      %v397 = vunpack.c.l.b16 %v344
      %v398 = vunpack.c.h.b16 %v344
      %v399 = vunpack.c.l.b16 %v345
      %v400 = vunpack.c.h.b16 %v345
      %v401 = vunpack.c.l.b16 %v346
      %v402 = vunpack.c.h.b16 %v346
      %v403 = vunpack.c.l.b16 %v347
      %v404 = vunpack.c.h.b16 %v347
      %v405 = vunpack.c.l.b16 %v348
      %v406 = vunpack.c.h.b16 %v348
      %v407 = vunpack.c.l.b16 %v349
      %v408 = vunpack.c.h.b16 %v349
      %v409 = vunpack.c.l.b16 %v350
      %v410 = vunpack.c.h.b16 %v350
      %v411 = vunpack.c.l.b16 %v351
      %v412 = vunpack.c.h.b16 %v351
      %v413 = vunpack.c.l.b16 %v352
      %v414 = vunpack.c.h.b16 %v352
      %v415 = vunpack.c.l.b16 %v353
      %v416 = vunpack.c.h.b16 %v353
      %v417 = vpack.c.b16 %v383, %v381
      %v418 = vpack.c.b16 %v384, %v382
      %v419 = vpack.c.b16 %v387, %v385
      %v420 = vpack.c.b16 %v388, %v386
      %v421 = vpack.c.b16 %v391, %v389
      %v422 = vpack.c.b16 %v392, %v390
      %v423 = vpack.c.b16 %v395, %v393
      %v424 = vpack.c.b16 %v396, %v394
      %v425 = vpack.c.b16 %v399, %v397
      %v426 = vpack.c.b16 %v400, %v398
      %v427 = vpack.c.b16 %v403, %v401
      %v428 = vpack.c.b16 %v404, %v402
      %v429 = vpack.c.b16 %v407, %v405
      %v430 = vpack.c.b16 %v408, %v406
      %v431 = vpack.c.b16 %v411, %v409
      %v432 = vpack.c.b16 %v412, %v410
      %v433 = vpack.c.b16 %v415, %v413
      %v434 = vpack.c.b16 %v416, %v414
      %vm453 = vcmask 130048
      %v455 = vsel %vm453, %v361, 0
      %457 = vmatpush.bf16.msra.mxu0 %v431
      %458 = vmatpush.bf16.msra.mxu0 %v429
      %459 = vmatpush.bf16.msra.mxu0 %v427
      %460 = vmatpush.bf16.msra.mxu0 %v425
      %461 = vmatpush.bf16.msra.mxu0 %v423
      %462 = vmatpush.bf16.msra.mxu0 %v421
      %463 = vmatpush.bf16.msra.mxu0 %v419
      %464 = vmatpush.bf16.msra.mxu0 %v417
      %465 = vmatmul.bf16.gmra.mxu0 %v360
      %v466 = vpop.f32.mrf.mxu0
      %v467 = vadd.f32 0.0, %v466
      %v468 = vpop.f32.mrf.mxu0
      %v469 = vadd.f32 0.0, %v468
      %470 = vdwg.mxu0
      %471 = vmatpush.bf16.msra.mxu0 0
      %472 = vmatpush.bf16.msra.mxu0 0
      %473 = vmatpush.bf16.msra.mxu0 0
      %474 = vmatpush.bf16.msra.mxu0 0
      %475 = vmatpush.bf16.msra.mxu0 0
      %476 = vmatpush.bf16.msra.mxu0 0
      %477 = vmatpush.bf16.msra.mxu0 0
      %478 = vmatpush.bf16.msra.mxu0 %v433
      %479 = vmatmul.bf16.gmra.mxu0 %v455
      %v480 = vpop.f32.mrf.mxu0
      %v481 = vadd.f32 %v467, %v480
      %v482 = vpop.f32.mrf.mxu0
      %v483 = vadd.f32 %v469, %v482
      %484 = vdwg.mxu0
      %485 = vmatpush.bf16.msra.mxu0 %v432
      %486 = vmatpush.bf16.msra.mxu0 %v430
      %487 = vmatpush.bf16.msra.mxu0 %v428
      %488 = vmatpush.bf16.msra.mxu0 %v426
      %489 = vmatpush.bf16.msra.mxu0 %v424
      %490 = vmatpush.bf16.msra.mxu0 %v422
      %491 = vmatpush.bf16.msra.mxu0 %v420
      %492 = vmatpush.bf16.msra.mxu0 %v418
      %493 = vmatmul.bf16.gmra.mxu0 %v360
      %v494 = vpop.f32.mrf.mxu0
      %v495 = vadd.f32 0.0, %v494
      %v496 = vpop.f32.mrf.mxu0
      %v497 = vadd.f32 0.0, %v496
      %498 = vdwg.mxu0
      %499 = vmatpush.bf16.msra.mxu0 0
      %500 = vmatpush.bf16.msra.mxu0 0
      %501 = vmatpush.bf16.msra.mxu0 0
      %502 = vmatpush.bf16.msra.mxu0 0
      %503 = vmatpush.bf16.msra.mxu0 0
      %504 = vmatpush.bf16.msra.mxu0 0
      %505 = vmatpush.bf16.msra.mxu0 0
      %506 = vmatpush.bf16.msra.mxu0 %v434
      %507 = vmatmul.bf16.gmra.mxu0 %v455
      %v508 = vpop.f32.mrf.mxu0
      %v509 = vadd.f32 %v495, %v508
      %v510 = vpop.f32.mrf.mxu0
      %v511 = vadd.f32 %v497, %v510
      %512 = vdwg.mxu0
      %v513 = vadd.f32 %v330, %v481
      %v514 = vadd.f32 %v331, %v509
      %v515 = vadd.f32 %v332, %v483
      %v516 = vadd.f32 %v333, %v511
      %517 = vst [vmem:[#allocation2] sm:$0xff] %v513
      %518 = vst [vmem:[#allocation2 + $0x8] sm:$0xff] %v514
      %519 = vst [vmem:[#allocation2 + $0x10] sm:$0xff] %v515
      %520 = vst [vmem:[#allocation2 + $0x18] sm:$0xff] %v516
      // Predicated region
      $region41: #{pan_forward.34} parent=35 // pred_check
        %p521 = pneg %p322
      $region42: #{pan_forward.34} parent=35 // pred_check_branch
        %523 = sbr.rel (%p521) target = $region44
      $region43: #{pan_forward.34} parent=35 // pred_region
        %v524 = vld [vmem:[#allocation2] sm:$0xff]
        %v525 = vld [vmem:[#allocation2 + $0x8] sm:$0xff]
        %v526 = vld [vmem:[#allocation2 + $0x10] sm:$0xff]
        %v527 = vld [vmem:[#allocation2 + $0x18] sm:$0xff]
        %v528 = vld [vmem:[%s2] sm:$0xff]
        %v529 = vld [vmem:[%s2 + $0x8] sm:$0xff]
        %531 = vset.pattern.permute.xlu0 0
        %532 = vperm.xlu0 %531, %v528
        %v533 = vpop.permute.xlu0 %532
        %536 = vset.pattern.permute.xlu0 0
        %537 = vperm.xlu0 %536, %v529
        %v538 = vpop.permute.xlu0 %537
        %v540 = vadd.f32 %v524, %v533
        %v541 = vadd.f32 %v525, %v533
        %v542 = vadd.f32 %v526, %v538
        %v543 = vadd.f32 %v527, %v538
        %v544 = vld [vmem:[%s309] sm:$0xff]
        %v545 = vld [vmem:[%s309 + $0x8] sm:$0xff]
        %v546 = vunpack.c.l.bf16 %v544
        %v547 = vunpack.c.h.bf16 %v544
        %v548 = vunpack.c.l.bf16 %v545
        %v549 = vunpack.c.h.bf16 %v545
        %v550 = vadd.f32 %v540, %v546
        %v551 = vadd.f32 %v541, %v547
        %v552 = vadd.f32 %v542, %v548
        %v553 = vadd.f32 %v543, %v549
        %v554 = vpack.c.bf16 %v551, %v550
        %v555 = vpack.c.bf16 %v553, %v552
        %556 = vst [vmem:[%s319] sm:$0xff] %v554
        %557 = vst [vmem:[%s319 + $0x8] sm:$0xff] %v555
      $region44: #{pan_forward.34} parent=35 // pred_fallthru
        _
      %s558 = smul.u32 2, %s21
      %p559 = scmp.lt.s32.totalorder %s20, 1
      %s560 = scalar_select %p559, %s20, 1
      %p561 = scmp.lt.s32.totalorder %s558, 1
      %s562 = scalar_select %p561, %s558, 1
      %s563 = smul.addr %s560, 4
      %s564 = sadd.s32 %s562, %s563
      %s565 = smul.addr %s564, 4
      %s566 = scalar_lea.vmem %s4, %s565
      // Predicated region
      $region45: #{pan_forward.34} parent=35 // pred_check
        %p567 = pneg %p159
      $region46: #{pan_forward.34} parent=35 // pred_check_branch
        %569 = sbr.rel (%p567) target = $region48
      $region47: #{pan_forward.34} parent=35 // pred_region
        %s570 = smul.u32 2, %s21
      $region48: #{pan_forward.34} parent=35 // pred_fallthru
        _
    $region36: #{pan_forward.34} parent=5 // pred_fallthru
      _
    %p571 = scmp.le.s32.totalorder 2, %s10
    // Predicated region
    $region49: #{pan_forward.34} parent=5 // pred_check
      %p572 = pneg %p571
    $region50: #{pan_forward.34} parent=5 // pred_check_branch
      %574 = sbr.rel (%p572) target = $region52
    $region51: #{pan_forward.34} parent=5 // pred_region
      %s575 = ssub.s32 %s10, 2
      // Predicated region
      $region53: #{pan_forward.34} parent=51 // pred_check
        %p576 = pneg %p165
      $region54: #{pan_forward.34} parent=51 // pred_check_branch
        %578 = sbr.rel (%p576) target = $region56
      $region55: #{pan_forward.34} parent=51 // pred_region
        %s579 = smul.u32 2, %s24
        %p580 = scmp.lt.s32.totalorder %s23, 1
        %s581 = scalar_select %p580, %s23, 1
        %p582 = scmp.lt.s32.totalorder %s579, 1
        %s583 = scalar_select %p582, %s579, 1
        %s584 = smul.addr %s581, 4
        %s585 = sadd.s32 %s583, %s584
        %s586 = smul.addr %s585, 4
        %s587 = scalar_lea.vmem %s4, %s586
      $region56: #{pan_forward.34} parent=51 // pred_fallthru
        _
    $region52: #{pan_forward.34} parent=5 // pred_fallthru
      _
  $region6: #{pan_forward.34} parent=0 // loop_footer
    %s14 = sadd.s32 1, %s10
  $region7: #{pan_forward.34} parent=0 // loop_footer_branch
    %9 = sbr.rel target = $region3
  $region8: #{pan_forward.34} parent=0 // loop_exit
    _

// kernel: pan_forward.35
$region0: #{pan_forward.35}
  #allocation0 [shape = 'u32[]', space=smem, size = 0x4, offset = 0x4, fixed_abs, tag = 'smem constant byte address 0x4 - core index']
  #allocation1 [shape = 'u32[72,128]{1,0:T(1,128)}', space=vmem, size = 0x9000, scoped, tag = 'internal scratch']
  #allocation2 [shape = 'f32[20,128]{1,0:T(8,128)}', space=vmem, size = 0x3000, scoped, tag = 'scratch operand']
  %s0 = inlined_call_operand.vmem [shape: bf16[20,16], index: 0, kind: input, shape index: {}]
  %s1 = inlined_call_operand.vmem [shape: bf16[2,16,128], index: 1, kind: input, shape index: {}]
  %s2 = inlined_call_operand.vmem [shape: f32[20,1], index: 2, kind: input, shape index: {}]
  %s3 = inlined_call_operand.vmem [shape: f32[2,20,128], index: 3, kind: output, shape index: {}]
  %s4 = sld [smem:[#allocation0]]
  $region53: #{pan_forward.35} parent=0
    _
  %s6 = ssub.s32 1, %s4
  %s7 = scalar_select 0, %s6, %s4
  loop: start=0, step=1, limit=4
  $region2: #{pan_forward.35} parent=0 // loop_pre_header
    _
  $region3: #{pan_forward.35} parent=0 // loop_header
    %s9 = sphi 0, %s13
    %p10 = scmp.ge.s32.totalorder %s9, 4
    %s16 = sphi 0, %s35
    %s17 = sphi 0, %s31
    %s18 = sphi 0, %s27
    %s19 = sphi 0, %s16
    %s20 = sphi 0, %s17
    %s21 = sphi 0, %s18
    %s22 = sphi 0, %s19
    %s23 = sphi 0, %s20
    %s24 = sphi 0, %s21
    %s38 = sphi 0, %s40
    %s41 = sphi 0, %s38
    %s42 = sphi 0, %s41
    %s58 = sphi 0, %s42
    %s68 = sphi 0, %s70
    %s71 = sphi 0, %s68
    %s72 = sphi 0, %s71
    %s88 = sphi 0, %s72
    %s92 = sphi 0, %s92
    %s94 = sphi 0, %s92
    %s95 = sphi 0, %s94
    %s109 = sphi 0, %s95
    %s117 = sphi 0, %s119
    %s120 = sphi 0, %s117
    %s121 = sphi 0, %s120
    %s137 = sphi 0, %s121
  $region4: #{pan_forward.35} parent=0 // loop_header_branch
    %12 = sbr.rel (%p10) target = $region8
  $region5: #{pan_forward.35} parent=0 // loop_body
    %s14 = ssub.s32 %s9, 1
    %s15 = ssub.s32 %s9, 2
    %s25 = sadd.s32 1, %s18
    %p26 = scmp.ge.s32.totalorder %s25, 1
    %s27 = scalar_select %p26, 0, %s25
    %s28 = sadd.s32 1, %s17
    %s29 = scalar_select %p26, %s28, %s17
    %p30 = scmp.ge.s32.totalorder %s29, 1
    %s31 = scalar_select %p30, 0, %s29
    %s32 = sadd.s32 1, %s16
    %s33 = scalar_select %p30, %s32, %s16
    %p34 = scmp.ge.s32.totalorder %s33, 2
    %s35 = scalar_select %p34, 0, %s33
    %s36 = ssub.s32 %s18, %s27
    %p37 = scmp.eq.s32.totalorder %s36, 0
    %s39 = sadd.s32 %s38, 1
    %s40 = scalar_select %p37, %s38, %s39
    %p43 = pneg %p37
    %p44 = scmp.eq.s32.totalorder %s9, 1
    %p45 = por %p43, %p44
    %p46 = scmp.ne.s32.totalorder %s38, %s41
    %p47 = scmp.eq.s32.totalorder %s9, 0
    %p48 = por %p46, %p47
    %p49 = scmp.ne.s32.totalorder %s38, %s41
    %p50 = scmp.eq.s32.totalorder %s14, 1
    %p51 = por %p49, %p50
    %p52 = scmp.ne.s32.totalorder %s41, %s42
    %p53 = scmp.eq.s32.totalorder %s14, 0
    %p54 = por %p52, %p53
    %p55 = scmp.ne.s32.totalorder %s41, %s42
    %p56 = scmp.eq.s32.totalorder %s15, 1
    %p57 = por %p55, %p56
    %p59 = scmp.ne.s32.totalorder %s42, %s58
    %p60 = scmp.eq.s32.totalorder %s15, 0
    %p61 = por %p59, %p60
    %s62 = ssub.s32 %s16, %s35
    %s63 = ssub.s32 %s18, %s27
    %s64 = sor.u32 %s62, %s63
    %s65 = ssub.s32 %s17, %s31
    %s66 = sor.u32 %s64, %s65
    %p67 = scmp.eq.s32.totalorder %s66, 0
    %s69 = sadd.s32 %s68, 1
    %s70 = scalar_select %p67, %s68, %s69
    %p73 = pneg %p67
    %p74 = scmp.eq.s32.totalorder %s9, 1
    %p75 = por %p73, %p74
    %p76 = scmp.ne.s32.totalorder %s68, %s71
    %p77 = scmp.eq.s32.totalorder %s9, 0
    %p78 = por %p76, %p77
    %p79 = scmp.ne.s32.totalorder %s68, %s71
    %p80 = scmp.eq.s32.totalorder %s14, 1
    %p81 = por %p79, %p80
    %p82 = scmp.ne.s32.totalorder %s71, %s72
    %p83 = scmp.eq.s32.totalorder %s14, 0
    %p84 = por %p82, %p83
    %p85 = scmp.ne.s32.totalorder %s71, %s72
    %p86 = scmp.eq.s32.totalorder %s15, 1
    %p87 = por %p85, %p86
    %p89 = scmp.ne.s32.totalorder %s72, %s88
    %p90 = scmp.eq.s32.totalorder %s15, 0
    %p91 = por %p89, %p90
    %s93 = sadd.s32 %s92, 1
    %p96 = scmp.eq.s32.totalorder %s9, 1
    %p97 = scmp.ne.s32.totalorder %s92, %s94
    %p98 = scmp.eq.s32.totalorder %s9, 0
    %p99 = por %p97, %p98
    %p100 = scmp.ne.s32.totalorder %s92, %s94
    %p101 = scmp.eq.s32.totalorder %s14, 1
    %p102 = por %p100, %p101
    %p103 = scmp.ne.s32.totalorder %s94, %s95
    %p104 = scmp.eq.s32.totalorder %s14, 0
    %p105 = por %p103, %p104
    %p106 = scmp.ne.s32.totalorder %s94, %s95
    %p107 = scmp.eq.s32.totalorder %s15, 1
    %p108 = por %p106, %p107
    %p110 = scmp.ne.s32.totalorder %s95, %s109
    %p111 = scmp.eq.s32.totalorder %s15, 0
    %p112 = por %p110, %p111
    %s113 = ssub.s32 %s16, %s35
    %s114 = ssub.s32 %s17, %s31
    %s115 = sor.u32 %s113, %s114
    %p116 = scmp.eq.s32.totalorder %s115, 0
    %s118 = sadd.s32 %s117, 1
    %s119 = scalar_select %p116, %s117, %s118
    %p122 = pneg %p116
    %p123 = scmp.eq.s32.totalorder %s9, 1
    %p124 = por %p122, %p123
    %p125 = scmp.ne.s32.totalorder %s117, %s120
    %p126 = scmp.eq.s32.totalorder %s9, 0
    %p127 = por %p125, %p126
    %p128 = scmp.ne.s32.totalorder %s117, %s120
    %p129 = scmp.eq.s32.totalorder %s14, 1
    %p130 = por %p128, %p129
    %p131 = scmp.ne.s32.totalorder %s120, %s121
    %p132 = scmp.eq.s32.totalorder %s14, 0
    %p133 = por %p131, %p132
    %p134 = scmp.ne.s32.totalorder %s120, %s121
    %p135 = scmp.eq.s32.totalorder %s15, 1
    %p136 = por %p134, %p135
    %p138 = scmp.ne.s32.totalorder %s121, %s137
    %p139 = scmp.eq.s32.totalorder %s15, 0
    %p140 = por %p138, %p139
    %p141 = scmp.le.s32.totalorder 1, %s9
    %p142 = scmp.lt.s32.totalorder %s9, 3
    %p143 = pnand %p141, %p142
    %p144 = pneg %p143
    // Predicated region
    $region9: #{pan_forward.35} parent=5 // pred_check
      _
    $region10: #{pan_forward.35} parent=5 // pred_check_branch
      %146 = sbr.rel (%p143) target = $region12
    $region11: #{pan_forward.35} parent=5 // pred_region
      %s147 = ssub.s32 %s9, 1
      // Predicated region
      $region13: #{pan_forward.35} parent=11 // pred_check
        %p148 = pneg %p54
      $region14: #{pan_forward.35} parent=11 // pred_check_branch
        %150 = sbr.rel (%p148) target = $region16
      $region15: #{pan_forward.35} parent=11 // pred_region
        %p151 = scmp.lt.s32.totalorder %s21, 0
        %s152 = scalar_select %p151, %s21, 0
        %s153 = smul.addr %s152, 4
        %s154 = scalar_lea.vmem %s0, %s153
      $region16: #{pan_forward.35} parent=11 // pred_fallthru
        _
      // Predicated region
      $region17: #{pan_forward.35} parent=11 // pred_check
        %p155 = pneg %p105
      $region18: #{pan_forward.35} parent=11 // pred_check_branch
        %157 = sbr.rel (%p155) target = $region20
      $region19: #{pan_forward.35} parent=11 // pred_region
        _
      $region20: #{pan_forward.35} parent=11 // pred_fallthru
        _
    $region12: #{pan_forward.35} parent=5 // pred_fallthru
      _
    %p158 = scmp.lt.s32.totalorder %s9, 2
    // Predicated region
    $region21: #{pan_forward.35} parent=5 // pred_check
      %p159 = pneg %p158
    $region22: #{pan_forward.35} parent=5 // pred_check_branch
      %161 = sbr.rel (%p159) target = $region24
    $region23: #{pan_forward.35} parent=5 // pred_region
      // Predicated region
      $region25: #{pan_forward.35} parent=23 // pred_check
        %p162 = pneg %p78
      $region26: #{pan_forward.35} parent=23 // pred_check_branch
        %164 = sbr.rel (%p162) target = $region28
      $region27: #{pan_forward.35} parent=23 // pred_region
        %s165 = smul.u32 2, %s18
        %p166 = scmp.lt.s32.totalorder %s16, 1
        %s167 = scalar_select %p166, %s16, 1
        %p168 = scmp.lt.s32.totalorder %s165, 1
        %s169 = scalar_select %p168, %s165, 1
        %p170 = scmp.lt.s32.totalorder %s17, 0
        %s171 = scalar_select %p170, %s17, 0
        %s172 = sadd.s32 %s171, %s169
        %s173 = smul.addr %s167, 2
        %s174 = sadd.s32 %s172, %s173
        %s175 = smul.addr %s174, 4
        %s176 = scalar_lea.vmem %s1, %s175
        %s177 = smul.u32 2, %s18
      $region28: #{pan_forward.35} parent=23 // pred_fallthru
        _
    $region24: #{pan_forward.35} parent=5 // pred_fallthru
      _
    %p178 = scmp.le.s32.totalorder 1, %s9
    %p179 = scmp.lt.s32.totalorder %s9, 3
    %p180 = pnand %p178, %p179
    %p181 = pneg %p180
    // Predicated region
    $region29: #{pan_forward.35} parent=5 // pred_check
      _
    $region30: #{pan_forward.35} parent=5 // pred_check_branch
      %183 = sbr.rel (%p180) target = $region32
    $region31: #{pan_forward.35} parent=5 // pred_region
      %s184 = ssub.s32 %s9, 1
      %p185 = scmp.lt.s32.totalorder %s21, 0
      %s186 = scalar_select %p185, %s21, 0
      %s187 = smul.addr %s186, 4
      %s188 = scalar_lea.vmem %s0, %s187
      %p189 = pneg %p54
      %p190 = pneg %p51
      %s191 = smul.u32 2, %s21
      %p192 = scmp.lt.s32.totalorder %s19, 1
      %s193 = scalar_select %p192, %s19, 1
      %p194 = scmp.lt.s32.totalorder %s191, 1
      %s195 = scalar_select %p194, %s191, 1
      %p196 = scmp.lt.s32.totalorder %s20, 0
      %s197 = scalar_select %p196, %s20, 0
      %s198 = sadd.s32 %s197, %s195
      %s199 = smul.addr %s193, 2
      %s200 = sadd.s32 %s198, %s199
      %s201 = smul.addr %s200, 4
      %s202 = scalar_lea.vmem %s1, %s201
      %p203 = pneg %p84
      %p204 = pneg %p81
      %p205 = pneg %p105
      %p206 = pneg %p102
      %p207 = pneg %p133
      %p208 = pneg %p130
      %p209 = scmp.lt.s32.totalorder %s19, 1
      %s210 = scalar_select %p209, %s19, 1
      %p211 = scmp.lt.s32.totalorder %s20, 0
      %s212 = scalar_select %p211, %s20, 0
      %s213 = smul.addr %s210, 3
      %s214 = sadd.s32 %s212, %s213
      %s215 = smul.addr %s214, 8
      %s216 = scalar_lea.vmem %s3, %s215
      %p217 = scmp.lt.s32.totalorder %s21, 0
      %s218 = scalar_select %p217, %s21, 0
      %s219 = smul.addr %s218, 4
      %s220 = scalar_lea.vmem %s0, %s219
      %s221 = smul.u32 2, %s21
      %p222 = scmp.lt.s32.totalorder %s19, 1
      %s223 = scalar_select %p222, %s19, 1
      %p224 = scmp.lt.s32.totalorder %s221, 1
      %s225 = scalar_select %p224, %s221, 1
      %p226 = scmp.lt.s32.totalorder %s20, 0
      %s227 = scalar_select %p226, %s20, 0
      %s228 = sadd.s32 %s227, %s225
      %s229 = smul.addr %s223, 2
      %s230 = sadd.s32 %s228, %s229
      %s231 = smul.addr %s230, 4
      %s232 = scalar_lea.vmem %s1, %s231
      %s233 = smul.u32 2, %s21
      %p234 = scmp.lt.s32.totalorder %s19, 1
      %s235 = scalar_select %p234, %s19, 1
      %p236 = scmp.lt.s32.totalorder %s20, 0
      %s237 = scalar_select %p236, %s20, 0
      %s238 = smul.addr %s235, 3
      %s239 = sadd.s32 %s237, %s238
      %s240 = smul.addr %s239, 8
      %s241 = scalar_lea.vmem %s3, %s240
      %p243 = scmp.eq.s32.totalorder %s21, 0
      // Predicated region
      $region33: #{pan_forward.35} parent=31 // pred_check
        %p244 = pneg %p243
      $region34: #{pan_forward.35} parent=31 // pred_check_branch
        %246 = sbr.rel (%p244) target = $region36
      $region35: #{pan_forward.35} parent=31 // pred_region
        %247 = vst [vmem:[#allocation2] sm:$0xff] 0.0
        %248 = vst [vmem:[#allocation2 + $0x8] sm:$0xff] 0.0
        %249 = vst [vmem:[#allocation2 + $0x10] sm:$0xf] 0.0
      $region36: #{pan_forward.35} parent=31 // pred_fallthru
        _
      %v250 = vld [vmem:[#allocation2] sm:$0xff]
      %v251 = vld [vmem:[#allocation2 + $0x8] sm:$0xff]
      %v252 = vld [vmem:[#allocation2 + $0x10] sm:$0xf]
      %v253 = vld [vmem:[%s220] sm:$0xf]
      %v254 = vld [vmem:[%s220 + $0x4] sm:$0xf]
      %v255 = vld [vmem:[%s220 + $0x8] sm:$0x3]
      %v256 = vld [vmem:[%s232] sm:$0xf]
      %v257 = vld [vmem:[%s232 + $0x4] sm:$0xf]
      %v261 = vunpack.c.l.b16 %v253
      %v262 = vunpack.c.l.b16 %v254
      %v263 = vunpack.c.l.b16 %v255
      %v264 = vpack.c.b16 %v262, %v261
      %v265 = vpack.c.b16 %v263, %v263
      %v268 = vunpack.c.l.b16 %v256
      %v269 = vunpack.c.l.b16 %v257
      %v270 = vpack.c.b16 %v269, %v268
      %vm272 = vcmask 130048
      %v274 = vsel %vm272, %v264, 0
      %v277 = vsel %vm272, %v265, 0
      %279 = vmatpush.bf16.msra.mxu0 0
      %280 = vmatpush.bf16.msra.mxu0 0
      %281 = vmatpush.bf16.msra.mxu0 0
      %282 = vmatpush.bf16.msra.mxu0 0
      %283 = vmatpush.bf16.msra.mxu0 0
      %284 = vmatpush.bf16.msra.mxu0 0
      %285 = vmatpush.bf16.msra.mxu0 0
      %286 = vmatpush.bf16.msra.mxu0 %v270
      %287 = vmatmul.bf16.gmra.mxu0 %v274
      %v288 = vpop.f32.mrf.mxu0
      %v289 = vadd.f32 0.0, %v288
      %v290 = vpop.f32.mrf.mxu0
      %v291 = vadd.f32 0.0, %v290
      %292 = vmatmul.bf16.gmra.mxu0 %v277
      %v293 = vpop.f32.mrf.mxu0
      %v294 = vadd.f32 0.0, %v293
      %v295 = vpop.f32.mrf.mxu0
      %296 = vdwg.mxu0
      %v297 = vadd.f32 %v250, %v289
      %v298 = vadd.f32 %v251, %v291
      %v299 = vadd.f32 %v252, %v294
      %300 = vst [vmem:[#allocation2] sm:$0xff] %v297
      %301 = vst [vmem:[#allocation2 + $0x8] sm:$0xff] %v298
      %302 = vst [vmem:[#allocation2 + $0x10] sm:$0xf] %v299
      // Predicated region
      $region37: #{pan_forward.35} parent=31 // pred_check
        %p303 = pneg %p243
      $region38: #{pan_forward.35} parent=31 // pred_check_branch
        %305 = sbr.rel (%p303) target = $region40
      $region39: #{pan_forward.35} parent=31 // pred_region
        %v306 = vld [vmem:[#allocation2] sm:$0xff]
        %v307 = vld [vmem:[#allocation2 + $0x8] sm:$0xff]
        %v308 = vld [vmem:[#allocation2 + $0x10] sm:$0xf]
        %v309 = vld [vmem:[%s2] sm:$0xff]
        %v310 = vld [vmem:[%s2 + $0x8] sm:$0xff]
        %v311 = vld [vmem:[%s2 + $0x10] sm:$0xf]
        %313 = vset.pattern.permute.xlu0 0
        %314 = vperm.xlu0 %313, %v309
        %v315 = vpop.permute.xlu0 %314
        %318 = vset.pattern.permute.xlu0 0
        %319 = vperm.xlu0 %318, %v310
        %v320 = vpop.permute.xlu0 %319
        %323 = vset.pattern.permute.xlu0 0
        %324 = vperm.xlu0 %323, %v311
        %v325 = vpop.permute.xlu0 %324
        %v327 = vadd.f32 %v306, %v315
        %v328 = vadd.f32 %v307, %v320
        %v329 = vadd.f32 %v308, %v325
        %330 = vst [vmem:[%s241] sm:$0xff] %v327
        %331 = vst [vmem:[%s241 + $0x8] sm:$0xff] %v328
        %332 = vst [vmem:[%s241 + $0x10] sm:$0xf] %v329
      $region40: #{pan_forward.35} parent=31 // pred_fallthru
        _
      %p333 = scmp.lt.s32.totalorder %s19, 1
      %s334 = scalar_select %p333, %s19, 1
      %p335 = scmp.lt.s32.totalorder %s20, 0
      %s336 = scalar_select %p335, %s20, 0
      %s337 = smul.addr %s334, 3
      %s338 = sadd.s32 %s336, %s337
      %s339 = smul.addr %s338, 8
      %s340 = scalar_lea.vmem %s3, %s339
      // Predicated region
      $region41: #{pan_forward.35} parent=31 // pred_check
        %p341 = pneg %p130
      $region42: #{pan_forward.35} parent=31 // pred_check_branch
        %343 = sbr.rel (%p341) target = $region44
      $region43: #{pan_forward.35} parent=31 // pred_region
        _
      $region44: #{pan_forward.35} parent=31 // pred_fallthru
        _
    $region32: #{pan_forward.35} parent=5 // pred_fallthru
      _
    %p344 = scmp.le.s32.totalorder 2, %s9
    // Predicated region
    $region45: #{pan_forward.35} parent=5 // pred_check
      %p345 = pneg %p344
    $region46: #{pan_forward.35} parent=5 // pred_check_branch
      %347 = sbr.rel (%p345) target = $region48
    $region47: #{pan_forward.35} parent=5 // pred_region
      %s348 = ssub.s32 %s9, 2
      // Predicated region
      $region49: #{pan_forward.35} parent=47 // pred_check
        %p349 = pneg %p136
      $region50: #{pan_forward.35} parent=47 // pred_check_branch
        %351 = sbr.rel (%p349) target = $region52
      $region51: #{pan_forward.35} parent=47 // pred_region
        %p352 = scmp.lt.s32.totalorder %s22, 1
        %s353 = scalar_select %p352, %s22, 1
        %p354 = scmp.lt.s32.totalorder %s23, 0
        %s355 = scalar_select %p354, %s23, 0
        %s356 = smul.addr %s353, 3
        %s357 = sadd.s32 %s355, %s356
        %s358 = smul.addr %s357, 8
        %s359 = scalar_lea.vmem %s3, %s358
      $region52: #{pan_forward.35} parent=47 // pred_fallthru
        _
    $region48: #{pan_forward.35} parent=5 // pred_fallthru
      _
  $region6: #{pan_forward.35} parent=0 // loop_footer
    %s13 = sadd.s32 1, %s9
  $region7: #{pan_forward.35} parent=0 // loop_footer_branch
    %8 = sbr.rel target = $region3
  $region8: #{pan_forward.35} parent=0 // loop_exit
    _

// kernel: pan_forward.36
$region0: #{pan_forward.36}
  #allocation0 [shape = 'u32[]', space=smem, size = 0x4, offset = 0x4, fixed_abs, tag = 'smem constant byte address 0x4 - core index']
  #allocation1 [shape = 'u32[72,128]{1,0:T(1,128)}', space=vmem, size = 0x9000, scoped, tag = 'internal scratch']
  #allocation2 [shape = 'f32[1,16]{1,0:T(1,128)}', space=vmem, size = 0x200, scoped, tag = 'scratch operand']
  #allocation3 [shape = 'f32[1,16]{1,0:T(1,128)}', space=vmem, size = 0x200, scoped, tag = 'scratch operand']
  #allocation4 [shape = 'f32[16,16]{1,0:T(8,128)}', space=vmem, size = 0x2000, scoped, tag = 'scratch operand']
  %s0 = inlined_call_operand.vmem [shape: f32[2,2,16], index: 0, kind: input, shape index: {}]
  %s1 = inlined_call_operand.vmem [shape: f32[2,2,16], index: 1, kind: input, shape index: {}]
  %s2 = inlined_call_operand.vmem [shape: f32[2,16,16], index: 2, kind: input, shape index: {}]
  %s3 = inlined_call_operand.vmem [shape: f32[2,16,16], index: 3, kind: output, shape index: {}]
  %s4 = sld [smem:[#allocation0]]
  $region53: #{pan_forward.36} parent=0
    _
  %s6 = ssub.s32 1, %s4
  %s7 = scalar_select 0, %s6, %s4
  loop: start=0, step=1, limit=4
  $region2: #{pan_forward.36} parent=0 // loop_pre_header
    _
  $region3: #{pan_forward.36} parent=0 // loop_header
    %s9 = sphi 0, %s13
    %p10 = scmp.ge.s32.totalorder %s9, 4
    %s16 = sphi 0, %s35
    %s17 = sphi 0, %s31
    %s18 = sphi 0, %s27
    %s19 = sphi 0, %s16
    %s20 = sphi 0, %s17
    %s21 = sphi 0, %s18
    %s22 = sphi 0, %s19
    %s23 = sphi 0, %s20
    %s24 = sphi 0, %s21
    %s40 = sphi 0, %s42
    %s43 = sphi 0, %s40
    %s44 = sphi 0, %s43
    %s60 = sphi 0, %s44
    %s68 = sphi 0, %s70
    %s71 = sphi 0, %s68
    %s72 = sphi 0, %s71
    %s88 = sphi 0, %s72
    %s96 = sphi 0, %s98
    %s99 = sphi 0, %s96
    %s100 = sphi 0, %s99
    %s116 = sphi 0, %s100
    %s124 = sphi 0, %s126
    %s127 = sphi 0, %s124
    %s128 = sphi 0, %s127
    %s144 = sphi 0, %s128
  $region4: #{pan_forward.36} parent=0 // loop_header_branch
    %12 = sbr.rel (%p10) target = $region8
  $region5: #{pan_forward.36} parent=0 // loop_body
    %s14 = ssub.s32 %s9, 1
    %s15 = ssub.s32 %s9, 2
    %s25 = sadd.s32 1, %s18
    %p26 = scmp.ge.s32.totalorder %s25, 1
    %s27 = scalar_select %p26, 0, %s25
    %s28 = sadd.s32 1, %s17
    %s29 = scalar_select %p26, %s28, %s17
    %p30 = scmp.ge.s32.totalorder %s29, 1
    %s31 = scalar_select %p30, 0, %s29
    %s32 = sadd.s32 1, %s16
    %s33 = scalar_select %p30, %s32, %s16
    %p34 = scmp.ge.s32.totalorder %s33, 2
    %s35 = scalar_select %p34, 0, %s33
    %s36 = ssub.s32 %s16, %s35
    %s37 = ssub.s32 %s17, %s31
    %s38 = sor.u32 %s36, %s37
    %p39 = scmp.eq.s32.totalorder %s38, 0
    %s41 = sadd.s32 %s40, 1
    %s42 = scalar_select %p39, %s40, %s41
    %p45 = pneg %p39
    %p46 = scmp.eq.s32.totalorder %s9, 1
    %p47 = por %p45, %p46
    %p48 = scmp.ne.s32.totalorder %s40, %s43
    %p49 = scmp.eq.s32.totalorder %s9, 0
    %p50 = por %p48, %p49
    %p51 = scmp.ne.s32.totalorder %s40, %s43
    %p52 = scmp.eq.s32.totalorder %s14, 1
    %p53 = por %p51, %p52
    %p54 = scmp.ne.s32.totalorder %s43, %s44
    %p55 = scmp.eq.s32.totalorder %s14, 0
    %p56 = por %p54, %p55
    %p57 = scmp.ne.s32.totalorder %s43, %s44
    %p58 = scmp.eq.s32.totalorder %s15, 1
    %p59 = por %p57, %p58
    %p61 = scmp.ne.s32.totalorder %s44, %s60
    %p62 = scmp.eq.s32.totalorder %s15, 0
    %p63 = por %p61, %p62
    %s64 = ssub.s32 %s16, %s35
    %s65 = ssub.s32 %s18, %s27
    %s66 = sor.u32 %s64, %s65
    %p67 = scmp.eq.s32.totalorder %s66, 0
    %s69 = sadd.s32 %s68, 1
    %s70 = scalar_select %p67, %s68, %s69
    %p73 = pneg %p67
    %p74 = scmp.eq.s32.totalorder %s9, 1
    %p75 = por %p73, %p74
    %p76 = scmp.ne.s32.totalorder %s68, %s71
    %p77 = scmp.eq.s32.totalorder %s9, 0
    %p78 = por %p76, %p77
    %p79 = scmp.ne.s32.totalorder %s68, %s71
    %p80 = scmp.eq.s32.totalorder %s14, 1
    %p81 = por %p79, %p80
    %p82 = scmp.ne.s32.totalorder %s71, %s72
    %p83 = scmp.eq.s32.totalorder %s14, 0
    %p84 = por %p82, %p83
    %p85 = scmp.ne.s32.totalorder %s71, %s72
    %p86 = scmp.eq.s32.totalorder %s15, 1
    %p87 = por %p85, %p86
    %p89 = scmp.ne.s32.totalorder %s72, %s88
    %p90 = scmp.eq.s32.totalorder %s15, 0
    %p91 = por %p89, %p90
    %s92 = ssub.s32 %s16, %s35
    %s93 = ssub.s32 %s18, %s27
    %s94 = sor.u32 %s92, %s93
    %p95 = scmp.eq.s32.totalorder %s94, 0
    %s97 = sadd.s32 %s96, 1
    %s98 = scalar_select %p95, %s96, %s97
    %p101 = pneg %p95
    %p102 = scmp.eq.s32.totalorder %s9, 1
    %p103 = por %p101, %p102
    %p104 = scmp.ne.s32.totalorder %s96, %s99
    %p105 = scmp.eq.s32.totalorder %s9, 0
    %p106 = por %p104, %p105
    %p107 = scmp.ne.s32.totalorder %s96, %s99
    %p108 = scmp.eq.s32.totalorder %s14, 1
    %p109 = por %p107, %p108
    %p110 = scmp.ne.s32.totalorder %s99, %s100
    %p111 = scmp.eq.s32.totalorder %s14, 0
    %p112 = por %p110, %p111
    %p113 = scmp.ne.s32.totalorder %s99, %s100
    %p114 = scmp.eq.s32.totalorder %s15, 1
    %p115 = por %p113, %p114
    %p117 = scmp.ne.s32.totalorder %s100, %s116
    %p118 = scmp.eq.s32.totalorder %s15, 0
    %p119 = por %p117, %p118
    %s120 = ssub.s32 %s16, %s35
    %s121 = ssub.s32 %s17, %s31
    %s122 = sor.u32 %s120, %s121
    %p123 = scmp.eq.s32.totalorder %s122, 0
    %s125 = sadd.s32 %s124, 1
    %s126 = scalar_select %p123, %s124, %s125
    %p129 = pneg %p123
    %p130 = scmp.eq.s32.totalorder %s9, 1
    %p131 = por %p129, %p130
    %p132 = scmp.ne.s32.totalorder %s124, %s127
    %p133 = scmp.eq.s32.totalorder %s9, 0
    %p134 = por %p132, %p133
    %p135 = scmp.ne.s32.totalorder %s124, %s127
    %p136 = scmp.eq.s32.totalorder %s14, 1
    %p137 = por %p135, %p136
    %p138 = scmp.ne.s32.totalorder %s127, %s128
    %p139 = scmp.eq.s32.totalorder %s14, 0
    %p140 = por %p138, %p139
    %p141 = scmp.ne.s32.totalorder %s127, %s128
    %p142 = scmp.eq.s32.totalorder %s15, 1
    %p143 = por %p141, %p142
    %p145 = scmp.ne.s32.totalorder %s128, %s144
    %p146 = scmp.eq.s32.totalorder %s15, 0
    %p147 = por %p145, %p146
    %p148 = scmp.le.s32.totalorder 1, %s9
    %p149 = scmp.lt.s32.totalorder %s9, 3
    %p150 = pnand %p148, %p149
    %p151 = pneg %p150
    // Predicated region
    $region9: #{pan_forward.36} parent=5 // pred_check
      _
    $region10: #{pan_forward.36} parent=5 // pred_check_branch
      %153 = sbr.rel (%p150) target = $region12
    $region11: #{pan_forward.36} parent=5 // pred_region
      %s154 = ssub.s32 %s9, 1
    $region12: #{pan_forward.36} parent=5 // pred_fallthru
      _
    %p155 = scmp.lt.s32.totalorder %s9, 2
    // Predicated region
    $region13: #{pan_forward.36} parent=5 // pred_check
      %p156 = pneg %p155
    $region14: #{pan_forward.36} parent=5 // pred_check_branch
      %158 = sbr.rel (%p156) target = $region16
    $region15: #{pan_forward.36} parent=5 // pred_region
      // Predicated region
      $region17: #{pan_forward.36} parent=15 // pred_check
        %p159 = pneg %p50
      $region18: #{pan_forward.36} parent=15 // pred_check_branch
        %161 = sbr.rel (%p159) target = $region20
      $region19: #{pan_forward.36} parent=15 // pred_region
        %p162 = scmp.lt.s32.totalorder %s16, 1
        %s163 = scalar_select %p162, %s16, 1
        %p164 = scmp.lt.s32.totalorder %s17, 0
        %s165 = scalar_select %p164, %s17, 0
        %s166 = sadd.s32 %s165, %s163
        %s167 = smul.addr %s166, 2
        %s168 = scalar_lea.vmem %s0, %s167
      $region20: #{pan_forward.36} parent=15 // pred_fallthru
        _
      // Predicated region
      $region21: #{pan_forward.36} parent=15 // pred_check
        %p169 = pneg %p78
      $region22: #{pan_forward.36} parent=15 // pred_check_branch
        %171 = sbr.rel (%p169) target = $region24
      $region23: #{pan_forward.36} parent=15 // pred_region
        %p172 = scmp.lt.s32.totalorder %s16, 1
        %s173 = scalar_select %p172, %s16, 1
        %p174 = scmp.lt.s32.totalorder %s18, 0
        %s175 = scalar_select %p174, %s18, 0
        %s176 = sadd.s32 %s175, %s173
        %s177 = smul.addr %s176, 2
        %s178 = scalar_lea.vmem %s1, %s177
      $region24: #{pan_forward.36} parent=15 // pred_fallthru
        _
      // Predicated region
      $region25: #{pan_forward.36} parent=15 // pred_check
        %p179 = pneg %p106
      $region26: #{pan_forward.36} parent=15 // pred_check_branch
        %181 = sbr.rel (%p179) target = $region28
      $region27: #{pan_forward.36} parent=15 // pred_region
        %p182 = scmp.lt.s32.totalorder %s16, 1
        %s183 = scalar_select %p182, %s16, 1
        %p184 = scmp.lt.s32.totalorder %s18, 0
        %s185 = scalar_select %p184, %s18, 0
        %s186 = smul.addr %s183, 2
        %s187 = sadd.s32 %s185, %s186
        %s188 = smul.addr %s187, 8
        %s189 = scalar_lea.vmem %s2, %s188
      $region28: #{pan_forward.36} parent=15 // pred_fallthru
        _
    $region16: #{pan_forward.36} parent=5 // pred_fallthru
      _
    %p190 = scmp.le.s32.totalorder 1, %s9
    %p191 = scmp.lt.s32.totalorder %s9, 3
    %p192 = pnand %p190, %p191
    %p193 = pneg %p192
    // Predicated region
    $region29: #{pan_forward.36} parent=5 // pred_check
      _
    $region30: #{pan_forward.36} parent=5 // pred_check_branch
      %195 = sbr.rel (%p192) target = $region32
    $region31: #{pan_forward.36} parent=5 // pred_region
      %s196 = ssub.s32 %s9, 1
      %p197 = scmp.lt.s32.totalorder %s19, 1
      %s198 = scalar_select %p197, %s19, 1
      %p199 = scmp.lt.s32.totalorder %s20, 0
      %s200 = scalar_select %p199, %s20, 0
      %s201 = sadd.s32 %s200, %s198
      %s202 = smul.addr %s201, 2
      %s203 = scalar_lea.vmem %s0, %s202
      %p204 = pneg %p56
      %p205 = pneg %p53
      %p206 = scmp.lt.s32.totalorder %s19, 1
      %s207 = scalar_select %p206, %s19, 1
      %p208 = scmp.lt.s32.totalorder %s21, 0
      %s209 = scalar_select %p208, %s21, 0
      %s210 = sadd.s32 %s209, %s207
      %s211 = smul.addr %s210, 2
      %s212 = scalar_lea.vmem %s1, %s211
      %p213 = pneg %p84
      %p214 = pneg %p81
      %p215 = scmp.lt.s32.totalorder %s19, 1
      %s216 = scalar_select %p215, %s19, 1
      %p217 = scmp.lt.s32.totalorder %s21, 0
      %s218 = scalar_select %p217, %s21, 0
      %s219 = smul.addr %s216, 2
      %s220 = sadd.s32 %s218, %s219
      %s221 = smul.addr %s220, 8
      %s222 = scalar_lea.vmem %s2, %s221
      %p223 = pneg %p112
      %p224 = pneg %p109
      %p225 = pneg %p140
      %p226 = pneg %p137
      %p227 = scmp.lt.s32.totalorder %s19, 1
      %s228 = scalar_select %p227, %s19, 1
      %p229 = scmp.lt.s32.totalorder %s20, 0
      %s230 = scalar_select %p229, %s20, 0
      %s231 = smul.addr %s228, 2
      %s232 = sadd.s32 %s230, %s231
      %s233 = smul.addr %s232, 8
      %s234 = scalar_lea.vmem %s3, %s233
      %p235 = scmp.lt.s32.totalorder %s19, 1
      %s236 = scalar_select %p235, %s19, 1
      %p237 = scmp.lt.s32.totalorder %s20, 0
      %s238 = scalar_select %p237, %s20, 0
      %s239 = sadd.s32 %s238, %s236
      %s240 = smul.addr %s239, 2
      %s241 = scalar_lea.vmem %s0, %s240
      %p242 = scmp.lt.s32.totalorder %s19, 1
      %s243 = scalar_select %p242, %s19, 1
      %p244 = scmp.lt.s32.totalorder %s21, 0
      %s245 = scalar_select %p244, %s21, 0
      %s246 = sadd.s32 %s245, %s243
      %s247 = smul.addr %s246, 2
      %s248 = scalar_lea.vmem %s1, %s247
      %p249 = scmp.lt.s32.totalorder %s19, 1
      %s250 = scalar_select %p249, %s19, 1
      %p251 = scmp.lt.s32.totalorder %s21, 0
      %s252 = scalar_select %p251, %s21, 0
      %s253 = smul.addr %s250, 2
      %s254 = sadd.s32 %s252, %s253
      %s255 = smul.addr %s254, 8
      %s256 = scalar_lea.vmem %s2, %s255
      %p257 = scmp.lt.s32.totalorder %s19, 1
      %s258 = scalar_select %p257, %s19, 1
      %p259 = scmp.lt.s32.totalorder %s20, 0
      %s260 = scalar_select %p259, %s20, 0
      %s261 = smul.addr %s258, 2
      %s262 = sadd.s32 %s260, %s261
      %s263 = smul.addr %s262, 8
      %s264 = scalar_lea.vmem %s3, %s263
      %p265 = scmp.eq.s32.totalorder %s21, 0
      // Predicated region
      $region33: #{pan_forward.36} parent=31 // pred_check
        %p266 = pneg %p265
      $region34: #{pan_forward.36} parent=31 // pred_check_branch
        %268 = sbr.rel (%p266) target = $region36
      $region35: #{pan_forward.36} parent=31 // pred_region
        %vm269 = vcmask 122880
        %270 = vst.msk [vmem:[#allocation2] sm:$0x1] %vm269, -1e+30
        %271 = vst.msk [vmem:[#allocation3] sm:$0x1] %vm269, 0.0
        %vm272 = vcmask 130048
        %273 = vst.msk [vmem:[#allocation4] sm:$0xff] %vm272, 0.0
        %274 = vst.msk [vmem:[#allocation4 + $0x8] sm:$0xff] %vm272, 0.0
      $region36: #{pan_forward.36} parent=31 // pred_fallthru
        _
      %v275 = vld [vmem:[%s241] sm:$0x3]
      %v276 = vld [vmem:[%s248] sm:$0x3]
      %v277 = vld [vmem:[%s256] sm:$0xff]
      %v278 = vld [vmem:[%s256 + $0x8] sm:$0xff]
      %279 = vxpose.xlu0.b32.start [1/16] %v276, 128
      %280 = vxpose.xlu0.b32.cont [2/16] 0.0, 128
      %281 = vxpose.xlu0.b32.cont [3/16] 0.0, 128
      %282 = vxpose.xlu0.b32.cont [4/16] 0.0, 128
      %283 = vxpose.xlu0.b32.cont [5/16] 0.0, 128
      %284 = vxpose.xlu0.b32.cont [6/16] 0.0, 128
      %285 = vxpose.xlu0.b32.cont [7/16] 0.0, 128
      %286 = vxpose.xlu0.b32.cont [8/16] 0.0, 128
      %287 = vxpose.xlu0.b32.cont [9/16] 0.0, 128
      %288 = vxpose.xlu0.b32.cont [10/16] 0.0, 128
      %289 = vxpose.xlu0.b32.cont [11/16] 0.0, 128
      %290 = vxpose.xlu0.b32.cont [12/16] 0.0, 128
      %291 = vxpose.xlu0.b32.cont [13/16] 0.0, 128
      %292 = vxpose.xlu0.b32.cont [14/16] 0.0, 128
      %293 = vxpose.xlu0.b32.cont [15/16] 0.0, 128
      %294 = vxpose.xlu0.b32.end [16/16] 0.0, 128
      %v295 = vpop.trf.xlu0
      %v296 = vpop.trf.xlu0
      %v297 = vpop.trf.xlu0
      %v298 = vpop.trf.xlu0
      %v299 = vpop.trf.xlu0
      %v300 = vpop.trf.xlu0
      %v301 = vpop.trf.xlu0
      %v302 = vpop.trf.xlu0
      %v303 = vpop.trf.xlu0
      %v304 = vpop.trf.xlu0
      %v305 = vpop.trf.xlu0
      %v306 = vpop.trf.xlu0
      %v307 = vpop.trf.xlu0
      %v308 = vpop.trf.xlu0
      %v309 = vpop.trf.xlu0
      %v310 = vpop.trf.xlu0
      %vm311 = vcmask 15360
      %v313 = vsel %vm311, %v295, 0
      %v316 = vsel %vm311, %v296, 0
      %vm318 = vcmask 1041408
      %v320 = vsel %vm318, %v275, 0
      %322 = vmatpush.msra.mxu0 0.0
      %323 = vmatpush.msra.mxu0 0.0
      %324 = vmatpush.msra.mxu0 0.0
      %325 = vmatpush.msra.mxu0 0.0
      %326 = vmatpush.msra.mxu0 0.0
      %327 = vmatpush.msra.mxu0 0.0
      %328 = vmatpush.msra.mxu0 0.0
      %329 = vmatpush.msra.mxu0 0.0
      %330 = vmatpush.msra.mxu0 0.0
      %331 = vmatpush.msra.mxu0 0.0
      %332 = vmatpush.msra.mxu0 0.0
      %333 = vmatpush.msra.mxu0 0.0
      %334 = vmatpush.msra.mxu0 0.0
      %335 = vmatpush.msra.mxu0 0.0
      %336 = vmatpush.msra.mxu0 0.0
      %337 = vmatpush.msra.mxu0 %v320
      %338 = vmatmul.f32.gmra.mxu0 %v313
      %v339 = vpop.f32.mrf.mxu0
      %v340 = vadd.f32 0.0, %v339
      %341 = vmatmul.f32.gmra.mxu0 %v316
      %v342 = vpop.f32.mrf.mxu0
      %v343 = vadd.f32 0.0, %v342
      %344 = vdwg.mxu0
      %s345 = smul.u32 %s21, 16
      %v346 = vlaneseq
      %v347 = vshrl.u32 %v346, 7
      %v348 = vadd.s32 %v347, 8
      %v349 = vstv %s345
      %v350 = vadd.s32 %v349, %v347
      %v351 = vadd.s32 %v349, %v348
      %vm352 = vcmp.lt.s32.totalorder %v350, 16
      %vm353 = vcmp.lt.s32.totalorder %v351, 16
      %v354 = vsel %vm352, %v340, -1e+30
      %v355 = vsel %vm353, %v343, -1e+30
      %v356 = vld [vmem:[#allocation2] sm:$0x1]
      %vm357 = vcmask 130048
      %v358 = vsel %vm357, %v354, -inf
      %v359 = vsel %vm357, %v355, -inf
      %v360 = vmax.f32 %v358, %v359
      %v361 = vrot.slane %v360, 4
      %v362 = vmax.f32 %v360, %v361
      %v363 = vrot.slane %v362, 2
      %v364 = vmax.f32 %v362, %v363
      %v365 = vrot.slane %v364, 1
      %v366 = vmax.f32 %v364, %v365
      %v367 = vmax.f32 %v356, %v366
      %v368 = vsub.f32 %v356, %v367
      %v369 = vmul.f32 %v368, 1.442695
      %v370 = vpow.pop %v369
      %v372 = vperm.slane %v367, 0
      %v374 = vsub.f32 %v354, %v372
      %v375 = vsub.f32 %v355, %v372
      %v376 = vmul.f32 %v374, 1.442695
      %v377 = vpow.pop %v376
      %v378 = vmul.f32 %v375, 1.442695
      %v379 = vpow.pop %v378
      %v380 = vld [vmem:[#allocation3] sm:$0x1]
      %v381 = vmul.f32 %v370, %v380
      %v382 = vsel %vm357, %v377, 0.0
      %v383 = vsel %vm357, %v379, 0.0
      %v384 = vadd.f32 %v382, %v383
      %v385 = vrot.slane %v384, 4
      %v386 = vadd.f32 %v384, %v385
      %v387 = vrot.slane %v386, 2
      %v388 = vadd.f32 %v386, %v387
      %v389 = vrot.slane %v388, 1
      %v390 = vadd.f32 %v388, %v389
      %v391 = vadd.f32 %v381, %v390
      %vm392 = vcmask 122880
      %393 = vst.msk [vmem:[#allocation3] sm:$0x1] %vm392, %v391
      %v394 = vld [vmem:[#allocation4] sm:$0xff]
      %v395 = vld [vmem:[#allocation4 + $0x8] sm:$0xff]
      %v397 = vperm.slane %v370, 0
      %v399 = vmul.f32 %v397, %v394
      %v400 = vmul.f32 %v397, %v395
      %v402 = vsel %vm357, %v277, 0
      %v405 = vsel %vm357, %v278, 0
      %407 = vmatpush.msra.mxu0 0.0
      %408 = vmatpush.msra.mxu0 0.0
      %409 = vmatpush.msra.mxu0 0.0
      %410 = vmatpush.msra.mxu0 0.0
      %411 = vmatpush.msra.mxu0 0.0
      %412 = vmatpush.msra.mxu0 0.0
      %413 = vmatpush.msra.mxu0 0.0
      %414 = vmatpush.msra.mxu0 0.0
      %415 = vmatpush.msra.mxu0 0.0
      %416 = vmatpush.msra.mxu0 0.0
      %417 = vmatpush.msra.mxu0 0.0
      %418 = vmatpush.msra.mxu0 0.0
      %419 = vmatpush.msra.mxu0 0.0
      %420 = vmatpush.msra.mxu0 0.0
      %421 = vmatpush.msra.mxu0 %v379
      %422 = vmatpush.msra.mxu0 %v377
      %423 = vmatmul.f32.gmra.mxu0 %v402
      %v424 = vpop.f32.mrf.mxu0
      %v425 = vadd.f32 0.0, %v424
      %426 = vmatmul.f32.gmra.mxu0 %v405
      %v427 = vpop.f32.mrf.mxu0
      %v428 = vadd.f32 0.0, %v427
      %429 = vdwg.mxu0
      %v430 = vadd.f32 %v399, %v425
      %v431 = vadd.f32 %v400, %v428
      %432 = vst.msk [vmem:[#allocation4] sm:$0xff] %vm357, %v430
      %433 = vst.msk [vmem:[#allocation4 + $0x8] sm:$0xff] %vm357, %v431
      %434 = vst.msk [vmem:[#allocation2] sm:$0x1] %vm392, %v367
      // Predicated region
      $region37: #{pan_forward.36} parent=31 // pred_check
        %p435 = pneg %p265
      $region38: #{pan_forward.36} parent=31 // pred_check_branch
        %437 = sbr.rel (%p435) target = $region40
      $region39: #{pan_forward.36} parent=31 // pred_region
        %v438 = vld [vmem:[#allocation4] sm:$0xff]
        %v439 = vld [vmem:[#allocation4 + $0x8] sm:$0xff]
        %v440 = vld [vmem:[#allocation3] sm:$0x1]
        %v441 = vrcp.pop %v440
        %v443 = vperm.slane %v441, 0
        %v445 = vmul.f32 %v438, %v443
        %v446 = vmul.f32 %v439, %v443
        %447 = vst.msk [vmem:[%s264] sm:$0xff] %vm357, %v445
        %448 = vst.msk [vmem:[%s264 + $0x8] sm:$0xff] %vm357, %v446
      $region40: #{pan_forward.36} parent=31 // pred_fallthru
        _
      %p449 = scmp.lt.s32.totalorder %s19, 1
      %s450 = scalar_select %p449, %s19, 1
      %p451 = scmp.lt.s32.totalorder %s20, 0
      %s452 = scalar_select %p451, %s20, 0
      %s453 = smul.addr %s450, 2
      %s454 = sadd.s32 %s452, %s453
      %s455 = smul.addr %s454, 8
      %s456 = scalar_lea.vmem %s3, %s455
      // Predicated region
      $region41: #{pan_forward.36} parent=31 // pred_check
        %p457 = pneg %p137
      $region42: #{pan_forward.36} parent=31 // pred_check_branch
        %459 = sbr.rel (%p457) target = $region44
      $region43: #{pan_forward.36} parent=31 // pred_region
        _
      $region44: #{pan_forward.36} parent=31 // pred_fallthru
        _
    $region32: #{pan_forward.36} parent=5 // pred_fallthru
      _
    %p460 = scmp.le.s32.totalorder 2, %s9
    // Predicated region
    $region45: #{pan_forward.36} parent=5 // pred_check
      %p461 = pneg %p460
    $region46: #{pan_forward.36} parent=5 // pred_check_branch
      %463 = sbr.rel (%p461) target = $region48
    $region47: #{pan_forward.36} parent=5 // pred_region
      %s464 = ssub.s32 %s9, 2
      // Predicated region
      $region49: #{pan_forward.36} parent=47 // pred_check
        %p465 = pneg %p143
      $region50: #{pan_forward.36} parent=47 // pred_check_branch
        %467 = sbr.rel (%p465) target = $region52
      $region51: #{pan_forward.36} parent=47 // pred_region
        %p468 = scmp.lt.s32.totalorder %s22, 1
        %s469 = scalar_select %p468, %s22, 1
        %p470 = scmp.lt.s32.totalorder %s23, 0
        %s471 = scalar_select %p470, %s23, 0
        %s472 = smul.addr %s469, 2
        %s473 = sadd.s32 %s471, %s472
        %s474 = smul.addr %s473, 8
        %s475 = scalar_lea.vmem %s3, %s474
      $region52: #{pan_forward.36} parent=47 // pred_fallthru
        _
    $region48: #{pan_forward.36} parent=5 // pred_fallthru
      _
  $region6: #{pan_forward.36} parent=0 // loop_footer
    %s13 = sadd.s32 1, %s9
  $region7: #{pan_forward.36} parent=0 // loop_footer_branch
    %8 = sbr.rel target = $region3
  $region8: #{pan_forward.36} parent=0 // loop_exit
    _

// kernel: pan_forward.37
$region0: #{pan_forward.37}
  #allocation0 [shape = 'u32[]', space=smem, size = 0x4, offset = 0x4, fixed_abs, tag = 'smem constant byte address 0x4 - core index']
  #allocation1 [shape = 'u32[72,128]{1,0:T(1,128)}', space=vmem, size = 0x9000, scoped, tag = 'internal scratch']
  #allocation2 [shape = 'f32[16,128]{1,0:T(8,128)}', space=vmem, size = 0x2000, scoped, tag = 'scratch operand']
  %s0 = inlined_call_operand.vmem [shape: bf16[16,4], index: 0, kind: input, shape index: {}]
  %s1 = inlined_call_operand.vmem [shape: bf16[1,4,128], index: 1, kind: input, shape index: {}]
  %s2 = inlined_call_operand.vmem [shape: f32[1,16,128], index: 2, kind: output, shape index: {}]
  %s3 = sld [smem:[#allocation0]]
  $region26: #{pan_forward.37} parent=0
    _
  %s5 = ssub.s32 1, %s3
  %s6 = scalar_select 0, %s5, %s3
  // Predicated region
  $region2: #{pan_forward.37} parent=0 // pred_check
    _
  $region3: #{pan_forward.37} parent=0 // pred_check_branch
    %8 = sbr.rel (0) target = $region5
  $region4: #{pan_forward.37} parent=0 // pred_region
    _
  $region5: #{pan_forward.37} parent=0 // pred_fallthru
    _
  // Predicated region
  $region6: #{pan_forward.37} parent=0 // pred_check
    _
  $region7: #{pan_forward.37} parent=0 // pred_check_branch
    %10 = sbr.rel (0) target = $region9
  $region8: #{pan_forward.37} parent=0 // pred_region
    _
  $region9: #{pan_forward.37} parent=0 // pred_fallthru
    _
  %p12 = scmp.eq.s32.totalorder 0, 0
  // Predicated region
  $region10: #{pan_forward.37} parent=0 // pred_check
    %p13 = pneg %p12
  $region11: #{pan_forward.37} parent=0 // pred_check_branch
    %15 = sbr.rel (%p13) target = $region13
  $region12: #{pan_forward.37} parent=0 // pred_region
    %16 = vst [vmem:[#allocation2] sm:$0xff] 0.0
    %17 = vst [vmem:[#allocation2 + $0x8] sm:$0xff] 0.0
  $region13: #{pan_forward.37} parent=0 // pred_fallthru
    _
  %v18 = vld [vmem:[#allocation2] sm:$0xff]
  %v19 = vld [vmem:[#allocation2 + $0x8] sm:$0xff]
  %v20 = vld [vmem:[%s0] sm:$0xf]
  %v21 = vld [vmem:[%s0 + $0x4] sm:$0xf]
  %v22 = vld [vmem:[%s1] sm:$0x3]
  %v25 = vunpack.c.l.b16 %v20
  %v26 = vunpack.c.l.b16 %v21
  %v27 = vpack.c.b16 %v26, %v25
  %vm28 = vcmask 31744
  %v30 = vsel %vm28, %v27, 0
  %vm32 = vcmask 1041408
  %v34 = vsel %vm32, %v22, 0
  %36 = vmatpush.bf16.msra.mxu0 0
  %37 = vmatpush.bf16.msra.mxu0 0
  %38 = vmatpush.bf16.msra.mxu0 0
  %39 = vmatpush.bf16.msra.mxu0 0
  %40 = vmatpush.bf16.msra.mxu0 0
  %41 = vmatpush.bf16.msra.mxu0 0
  %42 = vmatpush.bf16.msra.mxu0 0
  %43 = vmatpush.bf16.msra.mxu0 %v34
  %44 = vmatmul.bf16.gmra.mxu0 %v30
  %v45 = vpop.f32.mrf.mxu0
  %v46 = vadd.f32 0.0, %v45
  %v47 = vpop.f32.mrf.mxu0
  %v48 = vadd.f32 0.0, %v47
  %49 = vdwg.mxu0
  %v50 = vadd.f32 %v18, %v46
  %v51 = vadd.f32 %v19, %v48
  %52 = vst [vmem:[#allocation2] sm:$0xff] %v50
  %53 = vst [vmem:[#allocation2 + $0x8] sm:$0xff] %v51
  // Predicated region
  $region14: #{pan_forward.37} parent=0 // pred_check
    %p54 = pneg %p12
  $region15: #{pan_forward.37} parent=0 // pred_check_branch
    %56 = sbr.rel (%p54) target = $region17
  $region16: #{pan_forward.37} parent=0 // pred_region
    %v57 = vld [vmem:[#allocation2] sm:$0xff]
    %v58 = vld [vmem:[#allocation2 + $0x8] sm:$0xff]
    %59 = vst [vmem:[%s2] sm:$0xff] %v57
    %60 = vst [vmem:[%s2 + $0x8] sm:$0xff] %v58
  $region17: #{pan_forward.37} parent=0 // pred_fallthru
    _
  // Predicated region
  $region18: #{pan_forward.37} parent=0 // pred_check
    _
  $region19: #{pan_forward.37} parent=0 // pred_check_branch
    %62 = sbr.rel (0) target = $region21
  $region20: #{pan_forward.37} parent=0 // pred_region
    _
  $region21: #{pan_forward.37} parent=0 // pred_fallthru
    _
  // Predicated region
  $region22: #{pan_forward.37} parent=0 // pred_check
    _
  $region23: #{pan_forward.37} parent=0 // pred_check_branch
    %64 = sbr.rel (0) target = $region25
  $region24: #{pan_forward.37} parent=0 // pred_region
    _
  $region25: #{pan_forward.37} parent=0 // pred_fallthru
    _

// kernel: pan_forward.38
$region0: #{pan_forward.38}
  #allocation0 [shape = 'u32[]', space=smem, size = 0x4, offset = 0x4, fixed_abs, tag = 'smem constant byte address 0x4 - core index']
  #allocation1 [shape = 'u32[72,128]{1,0:T(1,128)}', space=vmem, size = 0x9000, scoped, tag = 'internal scratch']
  #allocation2 [shape = 'f32[16,512]{1,0:T(8,128)}', space=vmem, size = 0x8000, scoped, tag = 'scratch operand']
  %s0 = inlined_call_operand.vmem [shape: bf16[16,4], index: 0, kind: input, shape index: {}]
  %s1 = inlined_call_operand.vmem [shape: bf16[1,4,512], index: 1, kind: input, shape index: {}]
  %s2 = inlined_call_operand.vmem [shape: f32[1,16,512], index: 2, kind: output, shape index: {}]
  %s3 = sld [smem:[#allocation0]]
  $region26: #{pan_forward.38} parent=0
    _
  %s5 = ssub.s32 1, %s3
  %s6 = scalar_select 0, %s5, %s3
  // Predicated region
  $region2: #{pan_forward.38} parent=0 // pred_check
    _
  $region3: #{pan_forward.38} parent=0 // pred_check_branch
    %8 = sbr.rel (0) target = $region5
  $region4: #{pan_forward.38} parent=0 // pred_region
    _
  $region5: #{pan_forward.38} parent=0 // pred_fallthru
    _
  // Predicated region
  $region6: #{pan_forward.38} parent=0 // pred_check
    _
  $region7: #{pan_forward.38} parent=0 // pred_check_branch
    %10 = sbr.rel (0) target = $region9
  $region8: #{pan_forward.38} parent=0 // pred_region
    _
  $region9: #{pan_forward.38} parent=0 // pred_fallthru
    _
  %p12 = scmp.eq.s32.totalorder 0, 0
  // Predicated region
  $region10: #{pan_forward.38} parent=0 // pred_check
    %p13 = pneg %p12
  $region11: #{pan_forward.38} parent=0 // pred_check_branch
    %15 = sbr.rel (%p13) target = $region13
  $region12: #{pan_forward.38} parent=0 // pred_region
    %16 = vst [vmem:[#allocation2] sm:$0xff] 0.0
    %17 = vst [vmem:[#allocation2 + $0x8] sm:$0xff] 0.0
    %18 = vst [vmem:[#allocation2 + $0x10] sm:$0xff] 0.0
    %19 = vst [vmem:[#allocation2 + $0x18] sm:$0xff] 0.0
    %20 = vst [vmem:[#allocation2 + $0x20] sm:$0xff] 0.0
    %21 = vst [vmem:[#allocation2 + $0x28] sm:$0xff] 0.0
    %22 = vst [vmem:[#allocation2 + $0x30] sm:$0xff] 0.0
    %23 = vst [vmem:[#allocation2 + $0x38] sm:$0xff] 0.0
  $region13: #{pan_forward.38} parent=0 // pred_fallthru
    _
  %v24 = vld [vmem:[#allocation2] sm:$0xff]
  %v25 = vld [vmem:[#allocation2 + $0x8] sm:$0xff]
  %v26 = vld [vmem:[#allocation2 + $0x10] sm:$0xff]
  %v27 = vld [vmem:[#allocation2 + $0x18] sm:$0xff]
  %v28 = vld [vmem:[#allocation2 + $0x20] sm:$0xff]
  %v29 = vld [vmem:[#allocation2 + $0x28] sm:$0xff]
  %v30 = vld [vmem:[#allocation2 + $0x30] sm:$0xff]
  %v31 = vld [vmem:[#allocation2 + $0x38] sm:$0xff]
  %v32 = vld [vmem:[%s0] sm:$0xf]
  %v33 = vld [vmem:[%s0 + $0x4] sm:$0xf]
  %v34 = vld [vmem:[%s1] sm:$0xff]
  %v37 = vunpack.c.l.b16 %v32
  %v38 = vunpack.c.l.b16 %v33
  %v39 = vpack.c.b16 %v38, %v37
  %41 = vst [vmem:[#allocation1] ss:$4 sm:$0xff] %v34
  %v42 = vld.sshfl [vmem:[#allocation1] sm:$0xff pattern:$0x73625140]
  %v43 = vld.sshfl [vmem:[#allocation1 + $0x8] sm:$0xff pattern:$0x73625140]
  %v44 = vld.sshfl [vmem:[#allocation1 + $0x10] sm:$0xff pattern:$0x73625140]
  %v45 = vld.sshfl [vmem:[#allocation1 + $0x18] sm:$0xff pattern:$0x73625140]
  %vm46 = vcmask 31744
  %v48 = vsel %vm46, %v39, 0
  %vm50 = vcmask 1041408
  %v51 = vsel %vm50, %v42, 0
  %v53 = vsel %vm50, %v43, 0
  %v55 = vsel %vm50, %v44, 0
  %v57 = vsel %vm50, %v45, 0
  %59 = vmatpush.bf16.msra.mxu0 0
  %60 = vmatpush.bf16.msra.mxu0 0
  %61 = vmatpush.bf16.msra.mxu0 0
  %62 = vmatpush.bf16.msra.mxu0 0
  %63 = vmatpush.bf16.msra.mxu0 0
  %64 = vmatpush.bf16.msra.mxu0 0
  %65 = vmatpush.bf16.msra.mxu0 0
  %66 = vmatpush.bf16.msra.mxu0 %v51
  %67 = vmatmul.bf16.gmra.mxu0 %v48
  %v68 = vpop.f32.mrf.mxu0
  %v69 = vadd.f32 0.0, %v68
  %v70 = vpop.f32.mrf.mxu0
  %v71 = vadd.f32 0.0, %v70
  %72 = vdwg.mxu0
  %73 = vmatpush.bf16.msra.mxu0 0
  %74 = vmatpush.bf16.msra.mxu0 0
  %75 = vmatpush.bf16.msra.mxu0 0
  %76 = vmatpush.bf16.msra.mxu0 0
  %77 = vmatpush.bf16.msra.mxu0 0
  %78 = vmatpush.bf16.msra.mxu0 0
  %79 = vmatpush.bf16.msra.mxu0 0
  %80 = vmatpush.bf16.msra.mxu0 %v53
  %81 = vmatmul.bf16.gmra.mxu0 %v48
  %v82 = vpop.f32.mrf.mxu0
  %v83 = vadd.f32 0.0, %v82
  %v84 = vpop.f32.mrf.mxu0
  %v85 = vadd.f32 0.0, %v84
  %86 = vdwg.mxu0
  %87 = vmatpush.bf16.msra.mxu0 0
  %88 = vmatpush.bf16.msra.mxu0 0
  %89 = vmatpush.bf16.msra.mxu0 0
  %90 = vmatpush.bf16.msra.mxu0 0
  %91 = vmatpush.bf16.msra.mxu0 0
  %92 = vmatpush.bf16.msra.mxu0 0
  %93 = vmatpush.bf16.msra.mxu0 0
  %94 = vmatpush.bf16.msra.mxu0 %v55
  %95 = vmatmul.bf16.gmra.mxu0 %v48
  %v96 = vpop.f32.mrf.mxu0
  %v97 = vadd.f32 0.0, %v96
  %v98 = vpop.f32.mrf.mxu0
  %v99 = vadd.f32 0.0, %v98
  %100 = vdwg.mxu0
  %101 = vmatpush.bf16.msra.mxu0 0
  %102 = vmatpush.bf16.msra.mxu0 0
  %103 = vmatpush.bf16.msra.mxu0 0
  %104 = vmatpush.bf16.msra.mxu0 0
  %105 = vmatpush.bf16.msra.mxu0 0
  %106 = vmatpush.bf16.msra.mxu0 0
  %107 = vmatpush.bf16.msra.mxu0 0
  %108 = vmatpush.bf16.msra.mxu0 %v57
  %109 = vmatmul.bf16.gmra.mxu0 %v48
  %v110 = vpop.f32.mrf.mxu0
  %v111 = vadd.f32 0.0, %v110
  %v112 = vpop.f32.mrf.mxu0
  %v113 = vadd.f32 0.0, %v112
  %114 = vdwg.mxu0
  %v115 = vadd.f32 %v24, %v69
  %v116 = vadd.f32 %v25, %v83
  %v117 = vadd.f32 %v26, %v97
  %v118 = vadd.f32 %v27, %v111
  %v119 = vadd.f32 %v28, %v71
  %v120 = vadd.f32 %v29, %v85
  %v121 = vadd.f32 %v30, %v99
  %v122 = vadd.f32 %v31, %v113
  %123 = vst [vmem:[#allocation2] sm:$0xff] %v115
  %124 = vst [vmem:[#allocation2 + $0x8] sm:$0xff] %v116
  %125 = vst [vmem:[#allocation2 + $0x10] sm:$0xff] %v117
  %126 = vst [vmem:[#allocation2 + $0x18] sm:$0xff] %v118
  %127 = vst [vmem:[#allocation2 + $0x20] sm:$0xff] %v119
  %128 = vst [vmem:[#allocation2 + $0x28] sm:$0xff] %v120
  %129 = vst [vmem:[#allocation2 + $0x30] sm:$0xff] %v121
  %130 = vst [vmem:[#allocation2 + $0x38] sm:$0xff] %v122
  // Predicated region
  $region14: #{pan_forward.38} parent=0 // pred_check
    %p131 = pneg %p12
  $region15: #{pan_forward.38} parent=0 // pred_check_branch
    %133 = sbr.rel (%p131) target = $region17
  $region16: #{pan_forward.38} parent=0 // pred_region
    %v134 = vld [vmem:[#allocation2] sm:$0xff]
    %v135 = vld [vmem:[#allocation2 + $0x8] sm:$0xff]
    %v136 = vld [vmem:[#allocation2 + $0x10] sm:$0xff]
    %v137 = vld [vmem:[#allocation2 + $0x18] sm:$0xff]
    %v138 = vld [vmem:[#allocation2 + $0x20] sm:$0xff]
    %v139 = vld [vmem:[#allocation2 + $0x28] sm:$0xff]
    %v140 = vld [vmem:[#allocation2 + $0x30] sm:$0xff]
    %v141 = vld [vmem:[#allocation2 + $0x38] sm:$0xff]
    %142 = vst [vmem:[%s2] sm:$0xff] %v134
    %143 = vst [vmem:[%s2 + $0x8] sm:$0xff] %v135
    %144 = vst [vmem:[%s2 + $0x10] sm:$0xff] %v136
    %145 = vst [vmem:[%s2 + $0x18] sm:$0xff] %v137
    %146 = vst [vmem:[%s2 + $0x20] sm:$0xff] %v138
    %147 = vst [vmem:[%s2 + $0x28] sm:$0xff] %v139
    %148 = vst [vmem:[%s2 + $0x30] sm:$0xff] %v140
    %149 = vst [vmem:[%s2 + $0x38] sm:$0xff] %v141
  $region17: #{pan_forward.38} parent=0 // pred_fallthru
    _
  // Predicated region
  $region18: #{pan_forward.38} parent=0 // pred_check
    _
  $region19: #{pan_forward.38} parent=0 // pred_check_branch
    %151 = sbr.rel (0) target = $region21
  $region20: #{pan_forward.38} parent=0 // pred_region
    _
  $region21: #{pan_forward.38} parent=0 // pred_fallthru
    _
  // Predicated region
  $region22: #{pan_forward.38} parent=0 // pred_check
    _
  $region23: #{pan_forward.38} parent=0 // pred_check_branch
    %153 = sbr.rel (0) target = $region25
  $region24: #{pan_forward.38} parent=0 // pred_region
    _
  $region25: #{pan_forward.38} parent=0 // pred_fallthru
    _

// kernel: pan_forward.39
$region0: #{pan_forward.39}
  #allocation0 [shape = 'u32[]', space=smem, size = 0x4, offset = 0x4, fixed_abs, tag = 'smem constant byte address 0x4 - core index']
  #allocation1 [shape = 'u32[72,128]{1,0:T(1,128)}', space=vmem, size = 0x9000, scoped, tag = 'internal scratch']
  %s0 = inlined_call_operand.vmem [shape: f32[32,256], index: 0, kind: input, shape index: {}]
  %s1 = inlined_call_operand.vmem [shape: bf16[32,256], index: 1, kind: input, shape index: {}]
  %s2 = inlined_call_operand.vmem [shape: bf16[32,256], index: 2, kind: output, shape index: {}]
  %s3 = sld [smem:[#allocation0]]
  $region18: #{pan_forward.39} parent=0
    _
  %s5 = ssub.s32 1, %s3
  %s6 = scalar_select 0, %s5, %s3
  // Predicated region
  $region2: #{pan_forward.39} parent=0 // pred_check
    _
  $region3: #{pan_forward.39} parent=0 // pred_check_branch
    %8 = sbr.rel (0) target = $region5
  $region4: #{pan_forward.39} parent=0 // pred_region
    _
  $region5: #{pan_forward.39} parent=0 // pred_fallthru
    _
  // Predicated region
  $region6: #{pan_forward.39} parent=0 // pred_check
    _
  $region7: #{pan_forward.39} parent=0 // pred_check_branch
    %10 = sbr.rel (0) target = $region9
  $region8: #{pan_forward.39} parent=0 // pred_region
    _
  $region9: #{pan_forward.39} parent=0 // pred_fallthru
    _
  %v11 = vld [vmem:[%s0] sm:$0xff]
  %v12 = vld [vmem:[%s0 + $0x8] sm:$0xff]
  %v13 = vld [vmem:[%s0 + $0x10] sm:$0xff]
  %v14 = vld [vmem:[%s0 + $0x18] sm:$0xff]
  %v15 = vld [vmem:[%s0 + $0x20] sm:$0xff]
  %v16 = vld [vmem:[%s0 + $0x28] sm:$0xff]
  %v17 = vld [vmem:[%s0 + $0x30] sm:$0xff]
  %v18 = vld [vmem:[%s0 + $0x38] sm:$0xff]
  %v19 = vld [vmem:[%s1] sm:$0xff]
  %v20 = vld [vmem:[%s1 + $0x8] sm:$0xff]
  %v21 = vld [vmem:[%s1 + $0x10] sm:$0xff]
  %v22 = vld [vmem:[%s1 + $0x18] sm:$0xff]
  %v23 = vunpack.c.l.bf16 %v19
  %v24 = vunpack.c.h.bf16 %v19
  %v25 = vunpack.c.l.bf16 %v20
  %v26 = vunpack.c.h.bf16 %v20
  %v27 = vunpack.c.l.bf16 %v21
  %v28 = vunpack.c.h.bf16 %v21
  %v29 = vunpack.c.l.bf16 %v22
  %v30 = vunpack.c.h.bf16 %v22
  %v31 = vadd.f32 %v11, %v23
  %v32 = vadd.f32 %v12, %v24
  %v33 = vadd.f32 %v13, %v25
  %v34 = vadd.f32 %v14, %v26
  %v35 = vadd.f32 %v15, %v27
  %v36 = vadd.f32 %v16, %v28
  %v37 = vadd.f32 %v17, %v29
  %v38 = vadd.f32 %v18, %v30
  %v39 = vpack.c.bf16 %v32, %v31
  %v40 = vpack.c.bf16 %v34, %v33
  %v41 = vpack.c.bf16 %v36, %v35
  %v42 = vpack.c.bf16 %v38, %v37
  %43 = vst [vmem:[%s2] sm:$0xff] %v39
  %44 = vst [vmem:[%s2 + $0x8] sm:$0xff] %v40
  %45 = vst [vmem:[%s2 + $0x10] sm:$0xff] %v41
  %46 = vst [vmem:[%s2 + $0x18] sm:$0xff] %v42
  // Predicated region
  $region10: #{pan_forward.39} parent=0 // pred_check
    _
  $region11: #{pan_forward.39} parent=0 // pred_check_branch
    %48 = sbr.rel (0) target = $region13
  $region12: #{pan_forward.39} parent=0 // pred_region
    _
  $region13: #{pan_forward.39} parent=0 // pred_fallthru
    _
  // Predicated region
  $region14: #{pan_forward.39} parent=0 // pred_check
    _
  $region15: #{pan_forward.39} parent=0 // pred_check_branch
    %50 = sbr.rel (0) target = $region17
  $region16: #{pan_forward.39} parent=0 // pred_region
    _
  $region17: #{pan_forward.39} parent=0 // pred_fallthru
    _

// kernel: pan_forward.40
$region0: #{pan_forward.40}
  #allocation0 [shape = 'u32[]', space=smem, size = 0x4, offset = 0x4, fixed_abs, tag = 'smem constant byte address 0x4 - core index']
  #allocation1 [shape = 'u32[72,128]{1,0:T(1,128)}', space=vmem, size = 0x9000, scoped, tag = 'internal scratch']
  #allocation2 [shape = 'f32[16,512]{1,0:T(8,128)}', space=vmem, size = 0x8000, scoped, tag = 'scratch operand']
  %s0 = inlined_call_operand.vmem [shape: bf16[16,144], index: 0, kind: input, shape index: {}]
  %s1 = inlined_call_operand.vmem [shape: bf16[2,144,1024], index: 1, kind: input, shape index: {}]
  %s2 = inlined_call_operand.vmem [shape: f32[16,1], index: 2, kind: input, shape index: {}]
  %s3 = inlined_call_operand.vmem [shape: bf16[2,16,1024], index: 3, kind: output, shape index: {}]
  %s4 = sld [smem:[#allocation0]]
  $region95: #{pan_forward.40} parent=0
    _
  %s6 = ssub.s32 1, %s4
  %s7 = scalar_select 0, %s6, %s4
  $region1: #{pan_forward.40} parent=0
    #allocation3 [shape = 'u8[294912]{0}', space=vmem, size = 0x48000, scoped, tag = 'input window, operand 1']
    #allocation4 [shape = 'u8[32768]{0}', space=vmem, size = 0x8000, scoped, tag = 'output window, operand 0']
    loop: start=0, step=1, limit=6
    $region2: #{pan_forward.40} parent=1 // loop_pre_header
      _
    $region3: #{pan_forward.40} parent=1 // loop_header
      %s9 = sphi 0, %s13
      %p10 = scmp.ge.s32.totalorder %s9, 6
      %s16 = sphi 0, %s35
      %s17 = sphi 0, %s31
      %s18 = sphi 0, %s27
      %s19 = sphi 0, %s16
      %s20 = sphi 0, %s17
      %s21 = sphi 0, %s18
      %s22 = sphi 0, %s19
      %s23 = sphi 0, %s20
      %s24 = sphi 0, %s21
      %s38 = sphi 0, %s40
      %s41 = sphi 0, %s38
      %s42 = sphi 0, %s41
      %s58 = sphi 0, %s42
      %s68 = sphi 0, %s70
      %s71 = sphi 0, %s68
      %s72 = sphi 0, %s71
      %s88 = sphi 0, %s72
      %s92 = sphi 0, %s92
      %s94 = sphi 0, %s92
      %s95 = sphi 0, %s94
      %s109 = sphi 0, %s95
      %s117 = sphi 0, %s119
      %s120 = sphi 0, %s117
      %s121 = sphi 0, %s120
      %s137 = sphi 0, %s121
    $region4: #{pan_forward.40} parent=1 // loop_header_branch
      %12 = sbr.rel (%p10) target = $region8
    $region5: #{pan_forward.40} parent=1 // loop_body
      %s14 = ssub.s32 %s9, 1
      %s15 = ssub.s32 %s9, 2
      %s25 = sadd.s32 1, %s18
      %p26 = scmp.ge.s32.totalorder %s25, 1
      %s27 = scalar_select %p26, 0, %s25
      %s28 = sadd.s32 1, %s17
      %s29 = scalar_select %p26, %s28, %s17
      %p30 = scmp.ge.s32.totalorder %s29, 2
      %s31 = scalar_select %p30, 0, %s29
      %s32 = sadd.s32 1, %s16
      %s33 = scalar_select %p30, %s32, %s16
      %p34 = scmp.ge.s32.totalorder %s33, 2
      %s35 = scalar_select %p34, 0, %s33
      %s36 = ssub.s32 %s18, %s27
      %p37 = scmp.eq.s32.totalorder %s36, 0
      %s39 = sadd.s32 %s38, 1
      %s40 = scalar_select %p37, %s38, %s39
      %p43 = pneg %p37
      %p44 = scmp.eq.s32.totalorder %s9, 3
      %p45 = por %p43, %p44
      %p46 = scmp.ne.s32.totalorder %s38, %s41
      %p47 = scmp.eq.s32.totalorder %s9, 0
      %p48 = por %p46, %p47
      %p49 = scmp.ne.s32.totalorder %s38, %s41
      %p50 = scmp.eq.s32.totalorder %s14, 3
      %p51 = por %p49, %p50
      %p52 = scmp.ne.s32.totalorder %s41, %s42
      %p53 = scmp.eq.s32.totalorder %s14, 0
      %p54 = por %p52, %p53
      %p55 = scmp.ne.s32.totalorder %s41, %s42
      %p56 = scmp.eq.s32.totalorder %s15, 3
      %p57 = por %p55, %p56
      %p59 = scmp.ne.s32.totalorder %s42, %s58
      %p60 = scmp.eq.s32.totalorder %s15, 0
      %p61 = por %p59, %p60
      %s62 = ssub.s32 %s16, %s35
      %s63 = ssub.s32 %s18, %s27
      %s64 = sor.u32 %s62, %s63
      %s65 = ssub.s32 %s17, %s31
      %s66 = sor.u32 %s64, %s65
      %p67 = scmp.eq.s32.totalorder %s66, 0
      %s69 = sadd.s32 %s68, 1
      %s70 = scalar_select %p67, %s68, %s69
      %p73 = pneg %p67
      %p74 = scmp.eq.s32.totalorder %s9, 3
      %p75 = por %p73, %p74
      %p76 = scmp.ne.s32.totalorder %s68, %s71
      %p77 = scmp.eq.s32.totalorder %s9, 0
      %p78 = por %p76, %p77
      %p79 = scmp.ne.s32.totalorder %s68, %s71
      %p80 = scmp.eq.s32.totalorder %s14, 3
      %p81 = por %p79, %p80
      %p82 = scmp.ne.s32.totalorder %s71, %s72
      %p83 = scmp.eq.s32.totalorder %s14, 0
      %p84 = por %p82, %p83
      %p85 = scmp.ne.s32.totalorder %s71, %s72
      %p86 = scmp.eq.s32.totalorder %s15, 3
      %p87 = por %p85, %p86
      %p89 = scmp.ne.s32.totalorder %s72, %s88
      %p90 = scmp.eq.s32.totalorder %s15, 0
      %p91 = por %p89, %p90
      %s93 = sadd.s32 %s92, 1
      %p96 = scmp.eq.s32.totalorder %s9, 3
      %p97 = scmp.ne.s32.totalorder %s92, %s94
      %p98 = scmp.eq.s32.totalorder %s9, 0
      %p99 = por %p97, %p98
      %p100 = scmp.ne.s32.totalorder %s92, %s94
      %p101 = scmp.eq.s32.totalorder %s14, 3
      %p102 = por %p100, %p101
      %p103 = scmp.ne.s32.totalorder %s94, %s95
      %p104 = scmp.eq.s32.totalorder %s14, 0
      %p105 = por %p103, %p104
      %p106 = scmp.ne.s32.totalorder %s94, %s95
      %p107 = scmp.eq.s32.totalorder %s15, 3
      %p108 = por %p106, %p107
      %p110 = scmp.ne.s32.totalorder %s95, %s109
      %p111 = scmp.eq.s32.totalorder %s15, 0
      %p112 = por %p110, %p111
      %s113 = ssub.s32 %s16, %s35
      %s114 = ssub.s32 %s17, %s31
      %s115 = sor.u32 %s113, %s114
      %p116 = scmp.eq.s32.totalorder %s115, 0
      %s118 = sadd.s32 %s117, 1
      %s119 = scalar_select %p116, %s117, %s118
      %p122 = pneg %p116
      %p123 = scmp.eq.s32.totalorder %s9, 3
      %p124 = por %p122, %p123
      %p125 = scmp.ne.s32.totalorder %s117, %s120
      %p126 = scmp.eq.s32.totalorder %s9, 0
      %p127 = por %p125, %p126
      %p128 = scmp.ne.s32.totalorder %s117, %s120
      %p129 = scmp.eq.s32.totalorder %s14, 3
      %p130 = por %p128, %p129
      %p131 = scmp.ne.s32.totalorder %s120, %s121
      %p132 = scmp.eq.s32.totalorder %s14, 0
      %p133 = por %p131, %p132
      %p134 = scmp.ne.s32.totalorder %s120, %s121
      %p135 = scmp.eq.s32.totalorder %s15, 3
      %p136 = por %p134, %p135
      %p138 = scmp.ne.s32.totalorder %s121, %s137
      %p139 = scmp.eq.s32.totalorder %s15, 0
      %p140 = por %p138, %p139
      %p141 = scmp.le.s32.totalorder 1, %s9
      %p142 = scmp.lt.s32.totalorder %s9, 5
      %p143 = pnand %p141, %p142
      %p144 = pneg %p143
      // Predicated region
      $region9: #{pan_forward.40} parent=5 // pred_check
        _
      $region10: #{pan_forward.40} parent=5 // pred_check_branch
        %146 = sbr.rel (%p143) target = $region12
      $region11: #{pan_forward.40} parent=5 // pred_region
        %s147 = ssub.s32 %s9, 1
        // Predicated region
        $region13: #{pan_forward.40} parent=11 // pred_check
          %p148 = pneg %p54
        $region14: #{pan_forward.40} parent=11 // pred_check_branch
          %150 = sbr.rel (%p148) target = $region16
        $region15: #{pan_forward.40} parent=11 // pred_region
          %s151 = smul.u32 2, %s21
          %p152 = scmp.lt.s32.totalorder %s151, 1
          %s153 = scalar_select %p152, %s151, 1
          %s154 = smul.addr %s153, 4
          %s155 = scalar_lea.vmem %s0, %s154
          %s156 = smul.u32 2, %s21
        $region16: #{pan_forward.40} parent=11 // pred_fallthru
          _
        // Predicated region
        $region17: #{pan_forward.40} parent=11 // pred_check
          %p157 = pneg %p105
        $region18: #{pan_forward.40} parent=11 // pred_check_branch
          %159 = sbr.rel (%p157) target = $region20
        $region19: #{pan_forward.40} parent=11 // pred_region
          _
        $region20: #{pan_forward.40} parent=11 // pred_fallthru
          _
      $region12: #{pan_forward.40} parent=5 // pred_fallthru
        _
      %p160 = scmp.lt.s32.totalorder %s9, 4
      // Predicated region
      $region21: #{pan_forward.40} parent=5 // pred_check
        %p161 = pneg %p160
      $region22: #{pan_forward.40} parent=5 // pred_check_branch
        %163 = sbr.rel (%p161) target = $region24
      $region23: #{pan_forward.40} parent=5 // pred_region
        // Predicated region
        $region25: #{pan_forward.40} parent=23 // pred_check
          %p164 = pneg %p78
        $region26: #{pan_forward.40} parent=23 // pred_check_branch
          %166 = sbr.rel (%p164) target = $region28
        $region27: #{pan_forward.40} parent=23 // pred_region
          %s167 = sand.u32 %s68, 1
          %s168 = sand.u32 %s68, 1
          %s169 = smul.addr %s168, 288
          %s170 = scalar_lea.vmem [#allocation3], %s169
          %s171 = smul.u32 18, %s18
          %s172 = smul.u32 4, %s17
          %s173 = smul.addr %s171, 8
          %s174 = sadd.s32 %s172, %s173
          %s175 = smul.addr %s16, 144
          %s176 = sadd.s32 %s174, %s175
          %s177 = smul.addr %s176, 4
          %s178 = scalar_lea.vmem %s1, %s177
          // Predicated region
          $region29: #{pan_forward.40} parent=27 // pred_check
            _
          $region30: #{pan_forward.40} parent=27 // pred_check_branch
            %180 = sbr.rel (0) target = $region32
          $region31: #{pan_forward.40} parent=27 // pred_region
            // Predicated region
            $region33: #{pan_forward.40} parent=31 // pred_check
              _
            $region34: #{pan_forward.40} parent=31 // pred_check_branch
              %182 = sbr.rel (0) target = $region36
            $region35: #{pan_forward.40} parent=31 // pred_region
              loop: start=0, step=1, limit=1
              $region37: #{pan_forward.40} parent=35 // loop_pre_header
                _
              $region38: #{pan_forward.40} parent=35 // loop_header
                %s184 = sphi 0, %s188
                %p185 = scmp.ge.s32.totalorder %s184, 1
                %s189 = sphi %s178, %s178
                %s190 = sphi %s170, %s170
              $region39: #{pan_forward.40} parent=35 // loop_header_branch
                %187 = sbr.rel (%p185) target = $region43
              $region40: #{pan_forward.40} parent=35 // loop_body
                %v191 = vld [vmem:[%s189] sm:$0xff]
                %192 = vst [vmem:[%s190] sm:$0xff] %v191
                %v193 = vld [vmem:[%s189 + $0x8] sm:$0xff]
                %194 = vst [vmem:[%s190 + $0x8] sm:$0xff] %v193
                %v195 = vld [vmem:[%s189 + $0x20] sm:$0xff]
                %196 = vst [vmem:[%s190 + $0x10] sm:$0xff] %v195
                %v197 = vld [vmem:[%s189 + $0x28] sm:$0xff]
                %198 = vst [vmem:[%s190 + $0x18] sm:$0xff] %v197
                %v199 = vld [vmem:[%s189 + $0x40] sm:$0xff]
                %200 = vst [vmem:[%s190 + $0x20] sm:$0xff] %v199
                %v201 = vld [vmem:[%s189 + $0x48] sm:$0xff]
                %202 = vst [vmem:[%s190 + $0x28] sm:$0xff] %v201
                %v203 = vld [vmem:[%s189 + $0x60] sm:$0xff]
                %204 = vst [vmem:[%s190 + $0x30] sm:$0xff] %v203
                %v205 = vld [vmem:[%s189 + $0x68] sm:$0xff]
                %206 = vst [vmem:[%s190 + $0x38] sm:$0xff] %v205
                %v207 = vld [vmem:[%s189 + $0x80] sm:$0xff]
                %208 = vst [vmem:[%s190 + $0x40] sm:$0xff] %v207
                %v209 = vld [vmem:[%s189 + $0x88] sm:$0xff]
                %210 = vst [vmem:[%s190 + $0x48] sm:$0xff] %v209
                %v211 = vld [vmem:[%s189 + $0xa0] sm:$0xff]
                %212 = vst [vmem:[%s190 + $0x50] sm:$0xff] %v211
                %v213 = vld [vmem:[%s189 + $0xa8] sm:$0xff]
                %214 = vst [vmem:[%s190 + $0x58] sm:$0xff] %v213
                %v215 = vld [vmem:[%s189 + $0xc0] sm:$0xff]
                %216 = vst [vmem:[%s190 + $0x60] sm:$0xff] %v215
                %v217 = vld [vmem:[%s189 + $0xc8] sm:$0xff]
                %218 = vst [vmem:[%s190 + $0x68] sm:$0xff] %v217
                %v219 = vld [vmem:[%s189 + $0xe0] sm:$0xff]
                %220 = vst [vmem:[%s190 + $0x70] sm:$0xff] %v219
                %v221 = vld [vmem:[%s189 + $0xe8] sm:$0xff]
                %222 = vst [vmem:[%s190 + $0x78] sm:$0xff] %v221
                %v223 = vld [vmem:[%s189 + $0x100] sm:$0xff]
                %224 = vst [vmem:[%s190 + $0x80] sm:$0xff] %v223
                %v225 = vld [vmem:[%s189 + $0x108] sm:$0xff]
                %226 = vst [vmem:[%s190 + $0x88] sm:$0xff] %v225
                %v227 = vld [vmem:[%s189 + $0x120] sm:$0xff]
                %228 = vst [vmem:[%s190 + $0x90] sm:$0xff] %v227
                %v229 = vld [vmem:[%s189 + $0x128] sm:$0xff]
                %230 = vst [vmem:[%s190 + $0x98] sm:$0xff] %v229
                %v231 = vld [vmem:[%s189 + $0x140] sm:$0xff]
                %232 = vst [vmem:[%s190 + $0xa0] sm:$0xff] %v231
                %v233 = vld [vmem:[%s189 + $0x148] sm:$0xff]
                %234 = vst [vmem:[%s190 + $0xa8] sm:$0xff] %v233
                %v235 = vld [vmem:[%s189 + $0x160] sm:$0xff]
                %236 = vst [vmem:[%s190 + $0xb0] sm:$0xff] %v235
                %v237 = vld [vmem:[%s189 + $0x168] sm:$0xff]
                %238 = vst [vmem:[%s190 + $0xb8] sm:$0xff] %v237
                %v239 = vld [vmem:[%s189 + $0x180] sm:$0xff]
                %240 = vst [vmem:[%s190 + $0xc0] sm:$0xff] %v239
                %v241 = vld [vmem:[%s189 + $0x188] sm:$0xff]
                %242 = vst [vmem:[%s190 + $0xc8] sm:$0xff] %v241
                %v243 = vld [vmem:[%s189 + $0x1a0] sm:$0xff]
                %244 = vst [vmem:[%s190 + $0xd0] sm:$0xff] %v243
                %v245 = vld [vmem:[%s189 + $0x1a8] sm:$0xff]
                %246 = vst [vmem:[%s190 + $0xd8] sm:$0xff] %v245
                %v247 = vld [vmem:[%s189 + $0x1c0] sm:$0xff]
                %248 = vst [vmem:[%s190 + $0xe0] sm:$0xff] %v247
                %v249 = vld [vmem:[%s189 + $0x1c8] sm:$0xff]
                %250 = vst [vmem:[%s190 + $0xe8] sm:$0xff] %v249
                %v251 = vld [vmem:[%s189 + $0x1e0] sm:$0xff]
                %252 = vst [vmem:[%s190 + $0xf0] sm:$0xff] %v251
                %v253 = vld [vmem:[%s189 + $0x1e8] sm:$0xff]
                %254 = vst [vmem:[%s190 + $0xf8] sm:$0xff] %v253
                %v255 = vld [vmem:[%s189 + $0x200] sm:$0xff]
                %256 = vst [vmem:[%s190 + $0x100] sm:$0xff] %v255
                %v257 = vld [vmem:[%s189 + $0x208] sm:$0xff]
                %258 = vst [vmem:[%s190 + $0x108] sm:$0xff] %v257
                %v259 = vld [vmem:[%s189 + $0x220] sm:$0xff]
                %260 = vst [vmem:[%s190 + $0x110] sm:$0xff] %v259
                %v261 = vld [vmem:[%s189 + $0x228] sm:$0xff]
                %262 = vst [vmem:[%s190 + $0x118] sm:$0xff] %v261
              $region41: #{pan_forward.40} parent=35 // loop_footer
                %s188 = sadd.s32 1, %s184
              $region42: #{pan_forward.40} parent=35 // loop_footer_branch
                %183 = sbr.rel target = $region38
              $region43: #{pan_forward.40} parent=35 // loop_exit
                _
            $region36: #{pan_forward.40} parent=31 // pred_fallthru
              _
            // Predicated region
            $region44: #{pan_forward.40} parent=31 // pred_check
              _
            $region45: #{pan_forward.40} parent=31 // pred_check_branch
              %264 = sbr.rel target = $region47
            $region46: #{pan_forward.40} parent=31 // pred_region
              _
            $region47: #{pan_forward.40} parent=31 // pred_fallthru
              _
          $region32: #{pan_forward.40} parent=27 // pred_fallthru
            _
          %265 = vnop
        $region28: #{pan_forward.40} parent=23 // pred_fallthru
          _
      $region24: #{pan_forward.40} parent=5 // pred_fallthru
        _
      %p266 = scmp.le.s32.totalorder 1, %s9
      %p267 = scmp.lt.s32.totalorder %s9, 5
      %p268 = pnand %p266, %p267
      %p269 = pneg %p268
      // Predicated region
      $region48: #{pan_forward.40} parent=5 // pred_check
        _
      $region49: #{pan_forward.40} parent=5 // pred_check_branch
        %271 = sbr.rel (%p268) target = $region51
      $region50: #{pan_forward.40} parent=5 // pred_region
        %s272 = ssub.s32 %s9, 1
        %s273 = sand.u32 %s71, 1
        %s274 = sand.u32 %s71, 1
        %s275 = smul.addr %s274, 288
        %s276 = scalar_lea.vmem [#allocation3], %s275
        // Predicated region
        $region52: #{pan_forward.40} parent=50 // pred_check
          %p277 = pneg %p84
        $region53: #{pan_forward.40} parent=50 // pred_check_branch
          %279 = sbr.rel (%p277) target = $region55
        $region54: #{pan_forward.40} parent=50 // pred_region
          _
        $region55: #{pan_forward.40} parent=50 // pred_fallthru
          _
        %s280 = smul.u32 2, %s21
        %p281 = scmp.lt.s32.totalorder %s280, 1
        %s282 = scalar_select %p281, %s280, 1
        %s283 = smul.addr %s282, 4
        %s284 = scalar_lea.vmem %s0, %s283
        %p285 = pneg %p54
        %p286 = pneg %p51
        %s287 = sand.u32 %s71, 1
        %s288 = sand.u32 %s71, 1
        %s289 = smul.addr %s288, 288
        %s290 = scalar_lea.vmem [#allocation3], %s289
        %p291 = pneg %p84
        %p292 = pneg %p81
        %p293 = pneg %p105
        %p294 = pneg %p102
        %p295 = pneg %p133
        %p296 = pneg %p130
        %s297 = sand.u32 %s120, 1
        %s298 = sand.u32 %s120, 1
        %s299 = smul.addr %s298, 32
        %s300 = scalar_lea.vmem [#allocation4], %s299
        %s301 = smul.u32 2, %s21
        %p302 = scmp.lt.s32.totalorder %s301, 1
        %s303 = scalar_select %p302, %s301, 1
        %s304 = smul.addr %s303, 4
        %s305 = scalar_lea.vmem %s0, %s304
        %s306 = smul.u32 2, %s21
        %s307 = smul.u32 18, %s21
        %s308 = smul.u32 4, %s20
        %s309 = smul.u32 4, %s20
        %p311 = scmp.eq.s32.totalorder %s21, 0
        // Predicated region
        $region56: #{pan_forward.40} parent=50 // pred_check
          %p312 = pneg %p311
        $region57: #{pan_forward.40} parent=50 // pred_check_branch
          %314 = sbr.rel (%p312) target = $region59
        $region58: #{pan_forward.40} parent=50 // pred_region
          %315 = vst [vmem:[#allocation2] sm:$0xff] 0.0
          %316 = vst [vmem:[#allocation2 + $0x8] sm:$0xff] 0.0
          %317 = vst [vmem:[#allocation2 + $0x10] sm:$0xff] 0.0
          %318 = vst [vmem:[#allocation2 + $0x18] sm:$0xff] 0.0
          %319 = vst [vmem:[#allocation2 + $0x20] sm:$0xff] 0.0
          %320 = vst [vmem:[#allocation2 + $0x28] sm:$0xff] 0.0
          %321 = vst [vmem:[#allocation2 + $0x30] sm:$0xff] 0.0
          %322 = vst [vmem:[#allocation2 + $0x38] sm:$0xff] 0.0
        $region59: #{pan_forward.40} parent=50 // pred_fallthru
          _
        %v323 = vld [vmem:[#allocation2] sm:$0xff]
        %v324 = vld [vmem:[#allocation2 + $0x8] sm:$0xff]
        %v325 = vld [vmem:[#allocation2 + $0x10] sm:$0xff]
        %v326 = vld [vmem:[#allocation2 + $0x18] sm:$0xff]
        %v327 = vld [vmem:[#allocation2 + $0x20] sm:$0xff]
        %v328 = vld [vmem:[#allocation2 + $0x28] sm:$0xff]
        %v329 = vld [vmem:[#allocation2 + $0x30] sm:$0xff]
        %v330 = vld [vmem:[#allocation2 + $0x38] sm:$0xff]
        %v331 = vld [vmem:[%s305] sm:$0xff]
        %v332 = vld [vmem:[%s305 + $0x8] sm:$0xff]
        %v333 = vld [vmem:[%s276] sm:$0xff]
        %v334 = vld [vmem:[%s276 + $0x8] sm:$0xff]
        %v335 = vld [vmem:[%s276 + $0x10] sm:$0xff]
        %v336 = vld [vmem:[%s276 + $0x18] sm:$0xff]
        %v337 = vld [vmem:[%s276 + $0x20] sm:$0xff]
        %v338 = vld [vmem:[%s276 + $0x28] sm:$0xff]
        %v339 = vld [vmem:[%s276 + $0x30] sm:$0xff]
        %v340 = vld [vmem:[%s276 + $0x38] sm:$0xff]
        %v341 = vld [vmem:[%s276 + $0x40] sm:$0xff]
        %v342 = vld [vmem:[%s276 + $0x48] sm:$0xff]
        %v343 = vld [vmem:[%s276 + $0x50] sm:$0xff]
        %v344 = vld [vmem:[%s276 + $0x58] sm:$0xff]
        %v345 = vld [vmem:[%s276 + $0x60] sm:$0xff]
        %v346 = vld [vmem:[%s276 + $0x68] sm:$0xff]
        %v347 = vld [vmem:[%s276 + $0x70] sm:$0xff]
        %v348 = vld [vmem:[%s276 + $0x78] sm:$0xff]
        %v349 = vld [vmem:[%s276 + $0x80] sm:$0xff]
        %v350 = vld [vmem:[%s276 + $0x88] sm:$0xff]
        %v351 = vld [vmem:[%s276 + $0x90] sm:$0xff]
        %v352 = vld [vmem:[%s276 + $0x98] sm:$0xff]
        %v353 = vld [vmem:[%s276 + $0xa0] sm:$0xff]
        %v354 = vld [vmem:[%s276 + $0xa8] sm:$0xff]
        %v355 = vld [vmem:[%s276 + $0xb0] sm:$0xff]
        %v356 = vld [vmem:[%s276 + $0xb8] sm:$0xff]
        %v357 = vld [vmem:[%s276 + $0xc0] sm:$0xff]
        %v358 = vld [vmem:[%s276 + $0xc8] sm:$0xff]
        %v359 = vld [vmem:[%s276 + $0xd0] sm:$0xff]
        %v360 = vld [vmem:[%s276 + $0xd8] sm:$0xff]
        %v361 = vld [vmem:[%s276 + $0xe0] sm:$0xff]
        %v362 = vld [vmem:[%s276 + $0xe8] sm:$0xff]
        %v363 = vld [vmem:[%s276 + $0xf0] sm:$0xff]
        %v364 = vld [vmem:[%s276 + $0xf8] sm:$0xff]
        %v365 = vld [vmem:[%s276 + $0x100] sm:$0xff]
        %v366 = vld [vmem:[%s276 + $0x108] sm:$0xff]
        %v367 = vld [vmem:[%s276 + $0x110] sm:$0xff]
        %v368 = vld [vmem:[%s276 + $0x118] sm:$0xff]
        %v371 = vunpack.c.l.b16 %v331
        %v372 = vunpack.c.h.b16 %v331
        %v373 = vunpack.c.l.b16 %v332
        %v374 = vunpack.c.h.b16 %v332
        %v375 = vpack.c.b16 %v373, %v371
        %v376 = vpack.c.b16 %v374, %v372
        %v414 = vunpack.c.l.b16 %v333
        %v415 = vunpack.c.h.b16 %v333
        %v416 = vunpack.c.l.b16 %v334
        %v417 = vunpack.c.h.b16 %v334
        %v418 = vunpack.c.l.b16 %v335
        %v419 = vunpack.c.h.b16 %v335
        %v420 = vunpack.c.l.b16 %v336
        %v421 = vunpack.c.h.b16 %v336
        %v422 = vunpack.c.l.b16 %v337
        %v423 = vunpack.c.h.b16 %v337
        %v424 = vunpack.c.l.b16 %v338
        %v425 = vunpack.c.h.b16 %v338
        %v426 = vunpack.c.l.b16 %v339
        %v427 = vunpack.c.h.b16 %v339
        %v428 = vunpack.c.l.b16 %v340
        %v429 = vunpack.c.h.b16 %v340
        %v430 = vunpack.c.l.b16 %v341
        %v431 = vunpack.c.h.b16 %v341
        %v432 = vunpack.c.l.b16 %v342
        %v433 = vunpack.c.h.b16 %v342
        %v434 = vunpack.c.l.b16 %v343
        %v435 = vunpack.c.h.b16 %v343
        %v436 = vunpack.c.l.b16 %v344
        %v437 = vunpack.c.h.b16 %v344
        %v438 = vunpack.c.l.b16 %v345
        %v439 = vunpack.c.h.b16 %v345
        %v440 = vunpack.c.l.b16 %v346
        %v441 = vunpack.c.h.b16 %v346
        %v442 = vunpack.c.l.b16 %v347
        %v443 = vunpack.c.h.b16 %v347
        %v444 = vunpack.c.l.b16 %v348
        %v445 = vunpack.c.h.b16 %v348
        %v446 = vunpack.c.l.b16 %v349
        %v447 = vunpack.c.h.b16 %v349
        %v448 = vunpack.c.l.b16 %v350
        %v449 = vunpack.c.h.b16 %v350
        %v450 = vunpack.c.l.b16 %v351
        %v451 = vunpack.c.h.b16 %v351
        %v452 = vunpack.c.l.b16 %v352
        %v453 = vunpack.c.h.b16 %v352
        %v454 = vunpack.c.l.b16 %v353
        %v455 = vunpack.c.h.b16 %v353
        %v456 = vunpack.c.l.b16 %v354
        %v457 = vunpack.c.h.b16 %v354
        %v458 = vunpack.c.l.b16 %v355
        %v459 = vunpack.c.h.b16 %v355
        %v460 = vunpack.c.l.b16 %v356
        %v461 = vunpack.c.h.b16 %v356
        %v462 = vunpack.c.l.b16 %v357
        %v463 = vunpack.c.h.b16 %v357
        %v464 = vunpack.c.l.b16 %v358
        %v465 = vunpack.c.h.b16 %v358
        %v466 = vunpack.c.l.b16 %v359
        %v467 = vunpack.c.h.b16 %v359
        %v468 = vunpack.c.l.b16 %v360
        %v469 = vunpack.c.h.b16 %v360
        %v470 = vunpack.c.l.b16 %v361
        %v471 = vunpack.c.h.b16 %v361
        %v472 = vunpack.c.l.b16 %v362
        %v473 = vunpack.c.h.b16 %v362
        %v474 = vunpack.c.l.b16 %v363
        %v475 = vunpack.c.h.b16 %v363
        %v476 = vunpack.c.l.b16 %v364
        %v477 = vunpack.c.h.b16 %v364
        %v478 = vunpack.c.l.b16 %v365
        %v479 = vunpack.c.h.b16 %v365
        %v480 = vunpack.c.l.b16 %v366
        %v481 = vunpack.c.h.b16 %v366
        %v482 = vunpack.c.l.b16 %v367
        %v483 = vunpack.c.h.b16 %v367
        %v484 = vunpack.c.l.b16 %v368
        %v485 = vunpack.c.h.b16 %v368
        %v486 = vpack.c.b16 %v418, %v414
        %v487 = vpack.c.b16 %v419, %v415
        %v488 = vpack.c.b16 %v420, %v416
        %v489 = vpack.c.b16 %v421, %v417
        %v490 = vpack.c.b16 %v426, %v422
        %v491 = vpack.c.b16 %v427, %v423
        %v492 = vpack.c.b16 %v428, %v424
        %v493 = vpack.c.b16 %v429, %v425
        %v494 = vpack.c.b16 %v434, %v430
        %v495 = vpack.c.b16 %v435, %v431
        %v496 = vpack.c.b16 %v436, %v432
        %v497 = vpack.c.b16 %v437, %v433
        %v498 = vpack.c.b16 %v442, %v438
        %v499 = vpack.c.b16 %v443, %v439
        %v500 = vpack.c.b16 %v444, %v440
        %v501 = vpack.c.b16 %v445, %v441
        %v502 = vpack.c.b16 %v450, %v446
        %v503 = vpack.c.b16 %v451, %v447
        %v504 = vpack.c.b16 %v452, %v448
        %v505 = vpack.c.b16 %v453, %v449
        %v506 = vpack.c.b16 %v458, %v454
        %v507 = vpack.c.b16 %v459, %v455
        %v508 = vpack.c.b16 %v460, %v456
        %v509 = vpack.c.b16 %v461, %v457
        %v510 = vpack.c.b16 %v466, %v462
        %v511 = vpack.c.b16 %v467, %v463
        %v512 = vpack.c.b16 %v468, %v464
        %v513 = vpack.c.b16 %v469, %v465
        %v514 = vpack.c.b16 %v474, %v470
        %v515 = vpack.c.b16 %v475, %v471
        %v516 = vpack.c.b16 %v476, %v472
        %v517 = vpack.c.b16 %v477, %v473
        %v518 = vpack.c.b16 %v482, %v478
        %v519 = vpack.c.b16 %v483, %v479
        %v520 = vpack.c.b16 %v484, %v480
        %v521 = vpack.c.b16 %v485, %v481
        %vm558 = vcmask 130048
        %v560 = vsel %vm558, %v376, 0
        %562 = vmatpush.bf16.msra.mxu0 %v514
        %563 = vmatpush.bf16.msra.mxu0 %v510
        %564 = vmatpush.bf16.msra.mxu0 %v506
        %565 = vmatpush.bf16.msra.mxu0 %v502
        %566 = vmatpush.bf16.msra.mxu0 %v498
        %567 = vmatpush.bf16.msra.mxu0 %v494
        %568 = vmatpush.bf16.msra.mxu0 %v490
        %569 = vmatpush.bf16.msra.mxu0 %v486
        %570 = vmatmul.bf16.gmra.mxu0 %v375
        %v571 = vpop.f32.mrf.mxu0
        %v572 = vadd.f32 0.0, %v571
        %v573 = vpop.f32.mrf.mxu0
        %v574 = vadd.f32 0.0, %v573
        %575 = vdwg.mxu0
        %576 = vmatpush.bf16.msra.mxu0 0
        %577 = vmatpush.bf16.msra.mxu0 0
        %578 = vmatpush.bf16.msra.mxu0 0
        %579 = vmatpush.bf16.msra.mxu0 0
        %580 = vmatpush.bf16.msra.mxu0 0
        %581 = vmatpush.bf16.msra.mxu0 0
        %582 = vmatpush.bf16.msra.mxu0 0
        %583 = vmatpush.bf16.msra.mxu0 %v518
        %584 = vmatmul.bf16.gmra.mxu0 %v560
        %v585 = vpop.f32.mrf.mxu0
        %v586 = vadd.f32 %v572, %v585
        %v587 = vpop.f32.mrf.mxu0
        %v588 = vadd.f32 %v574, %v587
        %589 = vdwg.mxu0
        %590 = vmatpush.bf16.msra.mxu0 %v515
        %591 = vmatpush.bf16.msra.mxu0 %v511
        %592 = vmatpush.bf16.msra.mxu0 %v507
        %593 = vmatpush.bf16.msra.mxu0 %v503
        %594 = vmatpush.bf16.msra.mxu0 %v499
        %595 = vmatpush.bf16.msra.mxu0 %v495
        %596 = vmatpush.bf16.msra.mxu0 %v491
        %597 = vmatpush.bf16.msra.mxu0 %v487
        %598 = vmatmul.bf16.gmra.mxu0 %v375
        %v599 = vpop.f32.mrf.mxu0
        %v600 = vadd.f32 0.0, %v599
        %v601 = vpop.f32.mrf.mxu0
        %v602 = vadd.f32 0.0, %v601
        %603 = vdwg.mxu0
        %604 = vmatpush.bf16.msra.mxu0 0
        %605 = vmatpush.bf16.msra.mxu0 0
        %606 = vmatpush.bf16.msra.mxu0 0
        %607 = vmatpush.bf16.msra.mxu0 0
        %608 = vmatpush.bf16.msra.mxu0 0
        %609 = vmatpush.bf16.msra.mxu0 0
        %610 = vmatpush.bf16.msra.mxu0 0
        %611 = vmatpush.bf16.msra.mxu0 %v519
        %612 = vmatmul.bf16.gmra.mxu0 %v560
        %v613 = vpop.f32.mrf.mxu0
        %v614 = vadd.f32 %v600, %v613
        %v615 = vpop.f32.mrf.mxu0
        %v616 = vadd.f32 %v602, %v615
        %617 = vdwg.mxu0
        %618 = vmatpush.bf16.msra.mxu0 %v516
        %619 = vmatpush.bf16.msra.mxu0 %v512
        %620 = vmatpush.bf16.msra.mxu0 %v508
        %621 = vmatpush.bf16.msra.mxu0 %v504
        %622 = vmatpush.bf16.msra.mxu0 %v500
        %623 = vmatpush.bf16.msra.mxu0 %v496
        %624 = vmatpush.bf16.msra.mxu0 %v492
        %625 = vmatpush.bf16.msra.mxu0 %v488
        %626 = vmatmul.bf16.gmra.mxu0 %v375
        %v627 = vpop.f32.mrf.mxu0
        %v628 = vadd.f32 0.0, %v627
        %v629 = vpop.f32.mrf.mxu0
        %v630 = vadd.f32 0.0, %v629
        %631 = vdwg.mxu0
        %632 = vmatpush.bf16.msra.mxu0 0
        %633 = vmatpush.bf16.msra.mxu0 0
        %634 = vmatpush.bf16.msra.mxu0 0
        %635 = vmatpush.bf16.msra.mxu0 0
        %636 = vmatpush.bf16.msra.mxu0 0
        %637 = vmatpush.bf16.msra.mxu0 0
        %638 = vmatpush.bf16.msra.mxu0 0
        %639 = vmatpush.bf16.msra.mxu0 %v520
        %640 = vmatmul.bf16.gmra.mxu0 %v560
        %v641 = vpop.f32.mrf.mxu0
        %v642 = vadd.f32 %v628, %v641
        %v643 = vpop.f32.mrf.mxu0
        %v644 = vadd.f32 %v630, %v643
        %645 = vdwg.mxu0
        %646 = vmatpush.bf16.msra.mxu0 %v517
        %647 = vmatpush.bf16.msra.mxu0 %v513
        %648 = vmatpush.bf16.msra.mxu0 %v509
        %649 = vmatpush.bf16.msra.mxu0 %v505
        %650 = vmatpush.bf16.msra.mxu0 %v501
        %651 = vmatpush.bf16.msra.mxu0 %v497
        %652 = vmatpush.bf16.msra.mxu0 %v493
        %653 = vmatpush.bf16.msra.mxu0 %v489
        %654 = vmatmul.bf16.gmra.mxu0 %v375
        %v655 = vpop.f32.mrf.mxu0
        %v656 = vadd.f32 0.0, %v655
        %v657 = vpop.f32.mrf.mxu0
        %v658 = vadd.f32 0.0, %v657
        %659 = vdwg.mxu0
        %660 = vmatpush.bf16.msra.mxu0 0
        %661 = vmatpush.bf16.msra.mxu0 0
        %662 = vmatpush.bf16.msra.mxu0 0
        %663 = vmatpush.bf16.msra.mxu0 0
        %664 = vmatpush.bf16.msra.mxu0 0
        %665 = vmatpush.bf16.msra.mxu0 0
        %666 = vmatpush.bf16.msra.mxu0 0
        %667 = vmatpush.bf16.msra.mxu0 %v521
        %668 = vmatmul.bf16.gmra.mxu0 %v560
        %v669 = vpop.f32.mrf.mxu0
        %v670 = vadd.f32 %v656, %v669
        %v671 = vpop.f32.mrf.mxu0
        %v672 = vadd.f32 %v658, %v671
        %673 = vdwg.mxu0
        %v674 = vadd.f32 %v323, %v586
        %v675 = vadd.f32 %v324, %v614
        %v676 = vadd.f32 %v325, %v642
        %v677 = vadd.f32 %v326, %v670
        %v678 = vadd.f32 %v327, %v588
        %v679 = vadd.f32 %v328, %v616
        %v680 = vadd.f32 %v329, %v644
        %v681 = vadd.f32 %v330, %v672
        %682 = vst [vmem:[#allocation2] sm:$0xff] %v674
        %683 = vst [vmem:[#allocation2 + $0x8] sm:$0xff] %v675
        %684 = vst [vmem:[#allocation2 + $0x10] sm:$0xff] %v676
        %685 = vst [vmem:[#allocation2 + $0x18] sm:$0xff] %v677
        %686 = vst [vmem:[#allocation2 + $0x20] sm:$0xff] %v678
        %687 = vst [vmem:[#allocation2 + $0x28] sm:$0xff] %v679
        %688 = vst [vmem:[#allocation2 + $0x30] sm:$0xff] %v680
        %689 = vst [vmem:[#allocation2 + $0x38] sm:$0xff] %v681
        // Predicated region
        $region60: #{pan_forward.40} parent=50 // pred_check
          %p690 = pneg %p311
        $region61: #{pan_forward.40} parent=50 // pred_check_branch
          %692 = sbr.rel (%p690) target = $region63
        $region62: #{pan_forward.40} parent=50 // pred_region
          %v693 = vld [vmem:[#allocation2] sm:$0xff]
          %v694 = vld [vmem:[#allocation2 + $0x8] sm:$0xff]
          %v695 = vld [vmem:[#allocation2 + $0x10] sm:$0xff]
          %v696 = vld [vmem:[#allocation2 + $0x18] sm:$0xff]
          %v697 = vld [vmem:[#allocation2 + $0x20] sm:$0xff]
          %v698 = vld [vmem:[#allocation2 + $0x28] sm:$0xff]
          %v699 = vld [vmem:[#allocation2 + $0x30] sm:$0xff]
          %v700 = vld [vmem:[#allocation2 + $0x38] sm:$0xff]
          %v701 = vld [vmem:[%s2] sm:$0xff]
          %v702 = vld [vmem:[%s2 + $0x8] sm:$0xff]
          %704 = vset.pattern.permute.xlu0 0
          %705 = vperm.xlu0 %704, %v701
          %v706 = vpop.permute.xlu0 %705
          %709 = vset.pattern.permute.xlu0 0
          %710 = vperm.xlu0 %709, %v702
          %v711 = vpop.permute.xlu0 %710
          %v713 = vadd.f32 %v693, %v706
          %v714 = vadd.f32 %v694, %v706
          %v715 = vadd.f32 %v695, %v706
          %v716 = vadd.f32 %v696, %v706
          %v717 = vadd.f32 %v697, %v711
          %v718 = vadd.f32 %v698, %v711
          %v719 = vadd.f32 %v699, %v711
          %v720 = vadd.f32 %v700, %v711
          %v721 = vpack.c.bf16 %v714, %v713
          %v722 = vpack.c.bf16 %v716, %v715
          %v723 = vpack.c.bf16 %v718, %v717
          %v724 = vpack.c.bf16 %v720, %v719
          %725 = vst [vmem:[%s300] sm:$0xff] %v721
          %726 = vst [vmem:[%s300 + $0x8] sm:$0xff] %v722
          %727 = vst [vmem:[%s300 + $0x10] sm:$0xff] %v723
          %728 = vst [vmem:[%s300 + $0x18] sm:$0xff] %v724
        $region63: #{pan_forward.40} parent=50 // pred_fallthru
          _
        %s729 = sand.u32 %s120, 1
        %s730 = sand.u32 %s120, 1
        %s731 = smul.addr %s730, 32
        %s732 = scalar_lea.vmem [#allocation4], %s731
        // Predicated region
        $region64: #{pan_forward.40} parent=50 // pred_check
          %p733 = pneg %p130
        $region65: #{pan_forward.40} parent=50 // pred_check_branch
          %735 = sbr.rel (%p733) target = $region67
        $region66: #{pan_forward.40} parent=50 // pred_region
          %s736 = smul.u32 4, %s20
          %s737 = smul.addr %s19, 16
          %s738 = sadd.s32 %s736, %s737
          %s739 = smul.addr %s738, 4
          %s740 = scalar_lea.vmem %s3, %s739
          // Predicated region
          $region68: #{pan_forward.40} parent=66 // pred_check
            _
          $region69: #{pan_forward.40} parent=66 // pred_check_branch
            %742 = sbr.rel (0) target = $region71
          $region70: #{pan_forward.40} parent=66 // pred_region
            // Predicated region
            $region72: #{pan_forward.40} parent=70 // pred_check
              _
            $region73: #{pan_forward.40} parent=70 // pred_check_branch
              %744 = sbr.rel (0) target = $region75
            $region74: #{pan_forward.40} parent=70 // pred_region
              loop: start=0, step=1, limit=1
              $region76: #{pan_forward.40} parent=74 // loop_pre_header
                _
              $region77: #{pan_forward.40} parent=74 // loop_header
                %s746 = sphi 0, %s750
                %p747 = scmp.ge.s32.totalorder %s746, 1
                %s751 = sphi %s732, %s732
                %s752 = sphi %s740, %s740
              $region78: #{pan_forward.40} parent=74 // loop_header_branch
                %749 = sbr.rel (%p747) target = $region82
              $region79: #{pan_forward.40} parent=74 // loop_body
                %v753 = vld [vmem:[%s751] sm:$0xff]
                %754 = vst [vmem:[%s752] sm:$0xff] %v753
                %v755 = vld [vmem:[%s751 + $0x8] sm:$0xff]
                %756 = vst [vmem:[%s752 + $0x8] sm:$0xff] %v755
                %v757 = vld [vmem:[%s751 + $0x10] sm:$0xff]
                %758 = vst [vmem:[%s752 + $0x20] sm:$0xff] %v757
                %v759 = vld [vmem:[%s751 + $0x18] sm:$0xff]
                %760 = vst [vmem:[%s752 + $0x28] sm:$0xff] %v759
              $region80: #{pan_forward.40} parent=74 // loop_footer
                %s750 = sadd.s32 1, %s746
              $region81: #{pan_forward.40} parent=74 // loop_footer_branch
                %745 = sbr.rel target = $region77
              $region82: #{pan_forward.40} parent=74 // loop_exit
                _
            $region75: #{pan_forward.40} parent=70 // pred_fallthru
              _
            // Predicated region
            $region83: #{pan_forward.40} parent=70 // pred_check
              _
            $region84: #{pan_forward.40} parent=70 // pred_check_branch
              %762 = sbr.rel target = $region86
            $region85: #{pan_forward.40} parent=70 // pred_region
              _
            $region86: #{pan_forward.40} parent=70 // pred_fallthru
              _
          $region71: #{pan_forward.40} parent=66 // pred_fallthru
            _
          %763 = vnop
        $region67: #{pan_forward.40} parent=50 // pred_fallthru
          _
      $region51: #{pan_forward.40} parent=5 // pred_fallthru
        _
      %p764 = scmp.le.s32.totalorder 2, %s9
      // Predicated region
      $region87: #{pan_forward.40} parent=5 // pred_check
        %p765 = pneg %p764
      $region88: #{pan_forward.40} parent=5 // pred_check_branch
        %767 = sbr.rel (%p765) target = $region90
      $region89: #{pan_forward.40} parent=5 // pred_region
        %s768 = ssub.s32 %s9, 2
        // Predicated region
        $region91: #{pan_forward.40} parent=89 // pred_check
          %p769 = pneg %p136
        $region92: #{pan_forward.40} parent=89 // pred_check_branch
          %771 = sbr.rel (%p769) target = $region94
        $region93: #{pan_forward.40} parent=89 // pred_region
          %s772 = sand.u32 %s121, 1
          %s773 = sand.u32 %s121, 1
          %s774 = smul.addr %s773, 32
          %s775 = scalar_lea.vmem [#allocation4], %s774
        $region94: #{pan_forward.40} parent=89 // pred_fallthru
          _
      $region90: #{pan_forward.40} parent=5 // pred_fallthru
        _
    $region6: #{pan_forward.40} parent=1 // loop_footer
      %s13 = sadd.s32 1, %s9
    $region7: #{pan_forward.40} parent=1 // loop_footer_branch
      %8 = sbr.rel target = $region3
    $region8: #{pan_forward.40} parent=1 // loop_exit
      _

// kernel: pan_forward.41
$region0: #{pan_forward.41}
  #allocation0 [shape = 'u32[]', space=smem, size = 0x4, offset = 0x4, fixed_abs, tag = 'smem constant byte address 0x4 - core index']
  #allocation1 [shape = 'u32[72,128]{1,0:T(1,128)}', space=vmem, size = 0x9000, scoped, tag = 'internal scratch']
  #allocation2 [shape = 'f32[16,512]{1,0:T(8,128)}', space=vmem, size = 0x8000, scoped, tag = 'scratch operand']
  %s0 = inlined_call_operand.vmem [shape: bf16[16,16], index: 0, kind: input, shape index: {}]
  %s1 = inlined_call_operand.vmem [shape: bf16[2,16,1024], index: 1, kind: input, shape index: {}, may-alias: {1,3}]
  %s2 = inlined_call_operand.vmem [shape: f32[16,1], index: 2, kind: input, shape index: {}]
  %s3 = inlined_call_operand.vmem [shape: bf16[2,16,1024], index: 3, kind: input, shape index: {}, may-alias: {1,3}]
  %s4 = inlined_call_operand.vmem [shape: bf16[2,16,1024], index: 4, kind: output, shape index: {}]
  %s5 = sld [smem:[#allocation0]]
  $region122: #{pan_forward.41} parent=0
    _
  %s7 = ssub.s32 1, %s5
  %s8 = scalar_select 0, %s7, %s5
  $region1: #{pan_forward.41} parent=0
    #allocation3 [shape = 'u8[32768]{0}', space=vmem, size = 0x8000, scoped, tag = 'input window, operand 1']
    #allocation4 [shape = 'u8[32768]{0}', space=vmem, size = 0x8000, scoped, tag = 'input window, operand 3']
    #allocation5 [shape = 'u8[32768]{0}', space=vmem, size = 0x8000, scoped, tag = 'output window, operand 0']
    loop: start=0, step=1, limit=6
    $region2: #{pan_forward.41} parent=1 // loop_pre_header
      _
    $region3: #{pan_forward.41} parent=1 // loop_header
      %s10 = sphi 0, %s14
      %p11 = scmp.ge.s32.totalorder %s10, 6
      %s17 = sphi 0, %s36
      %s18 = sphi 0, %s32
      %s19 = sphi 0, %s28
      %s20 = sphi 0, %s17
      %s21 = sphi 0, %s18
      %s22 = sphi 0, %s19
      %s23 = sphi 0, %s20
      %s24 = sphi 0, %s21
      %s25 = sphi 0, %s22
      %s39 = sphi 0, %s41
      %s42 = sphi 0, %s39
      %s43 = sphi 0, %s42
      %s59 = sphi 0, %s43
      %s69 = sphi 0, %s71
      %s72 = sphi 0, %s69
      %s73 = sphi 0, %s72
      %s89 = sphi 0, %s73
      %s93 = sphi 0, %s93
      %s95 = sphi 0, %s93
      %s96 = sphi 0, %s95
      %s110 = sphi 0, %s96
      %s118 = sphi 0, %s120
      %s121 = sphi 0, %s118
      %s122 = sphi 0, %s121
      %s138 = sphi 0, %s122
      %s146 = sphi 0, %s148
      %s149 = sphi 0, %s146
      %s150 = sphi 0, %s149
      %s166 = sphi 0, %s150
    $region4: #{pan_forward.41} parent=1 // loop_header_branch
      %13 = sbr.rel (%p11) target = $region8
    $region5: #{pan_forward.41} parent=1 // loop_body
      %s15 = ssub.s32 %s10, 1
      %s16 = ssub.s32 %s10, 2
      %s26 = sadd.s32 1, %s19
      %p27 = scmp.ge.s32.totalorder %s26, 1
      %s28 = scalar_select %p27, 0, %s26
      %s29 = sadd.s32 1, %s18
      %s30 = scalar_select %p27, %s29, %s18
      %p31 = scmp.ge.s32.totalorder %s30, 2
      %s32 = scalar_select %p31, 0, %s30
      %s33 = sadd.s32 1, %s17
      %s34 = scalar_select %p31, %s33, %s17
      %p35 = scmp.ge.s32.totalorder %s34, 2
      %s36 = scalar_select %p35, 0, %s34
      %s37 = ssub.s32 %s19, %s28
      %p38 = scmp.eq.s32.totalorder %s37, 0
      %s40 = sadd.s32 %s39, 1
      %s41 = scalar_select %p38, %s39, %s40
      %p44 = pneg %p38
      %p45 = scmp.eq.s32.totalorder %s10, 3
      %p46 = por %p44, %p45
      %p47 = scmp.ne.s32.totalorder %s39, %s42
      %p48 = scmp.eq.s32.totalorder %s10, 0
      %p49 = por %p47, %p48
      %p50 = scmp.ne.s32.totalorder %s39, %s42
      %p51 = scmp.eq.s32.totalorder %s15, 3
      %p52 = por %p50, %p51
      %p53 = scmp.ne.s32.totalorder %s42, %s43
      %p54 = scmp.eq.s32.totalorder %s15, 0
      %p55 = por %p53, %p54
      %p56 = scmp.ne.s32.totalorder %s42, %s43
      %p57 = scmp.eq.s32.totalorder %s16, 3
      %p58 = por %p56, %p57
      %p60 = scmp.ne.s32.totalorder %s43, %s59
      %p61 = scmp.eq.s32.totalorder %s16, 0
      %p62 = por %p60, %p61
      %s63 = ssub.s32 %s17, %s36
      %s64 = ssub.s32 %s19, %s28
      %s65 = sor.u32 %s63, %s64
      %s66 = ssub.s32 %s18, %s32
      %s67 = sor.u32 %s65, %s66
      %p68 = scmp.eq.s32.totalorder %s67, 0
      %s70 = sadd.s32 %s69, 1
      %s71 = scalar_select %p68, %s69, %s70
      %p74 = pneg %p68
      %p75 = scmp.eq.s32.totalorder %s10, 3
      %p76 = por %p74, %p75
      %p77 = scmp.ne.s32.totalorder %s69, %s72
      %p78 = scmp.eq.s32.totalorder %s10, 0
      %p79 = por %p77, %p78
      %p80 = scmp.ne.s32.totalorder %s69, %s72
      %p81 = scmp.eq.s32.totalorder %s15, 3
      %p82 = por %p80, %p81
      %p83 = scmp.ne.s32.totalorder %s72, %s73
      %p84 = scmp.eq.s32.totalorder %s15, 0
      %p85 = por %p83, %p84
      %p86 = scmp.ne.s32.totalorder %s72, %s73
      %p87 = scmp.eq.s32.totalorder %s16, 3
      %p88 = por %p86, %p87
      %p90 = scmp.ne.s32.totalorder %s73, %s89
      %p91 = scmp.eq.s32.totalorder %s16, 0
      %p92 = por %p90, %p91
      %s94 = sadd.s32 %s93, 1
      %p97 = scmp.eq.s32.totalorder %s10, 3
      %p98 = scmp.ne.s32.totalorder %s93, %s95
      %p99 = scmp.eq.s32.totalorder %s10, 0
      %p100 = por %p98, %p99
      %p101 = scmp.ne.s32.totalorder %s93, %s95
      %p102 = scmp.eq.s32.totalorder %s15, 3
      %p103 = por %p101, %p102
      %p104 = scmp.ne.s32.totalorder %s95, %s96
      %p105 = scmp.eq.s32.totalorder %s15, 0
      %p106 = por %p104, %p105
      %p107 = scmp.ne.s32.totalorder %s95, %s96
      %p108 = scmp.eq.s32.totalorder %s16, 3
      %p109 = por %p107, %p108
      %p111 = scmp.ne.s32.totalorder %s96, %s110
      %p112 = scmp.eq.s32.totalorder %s16, 0
      %p113 = por %p111, %p112
      %s114 = ssub.s32 %s17, %s36
      %s115 = ssub.s32 %s18, %s32
      %s116 = sor.u32 %s114, %s115
      %p117 = scmp.eq.s32.totalorder %s116, 0
      %s119 = sadd.s32 %s118, 1
      %s120 = scalar_select %p117, %s118, %s119
      %p123 = pneg %p117
      %p124 = scmp.eq.s32.totalorder %s10, 3
      %p125 = por %p123, %p124
      %p126 = scmp.ne.s32.totalorder %s118, %s121
      %p127 = scmp.eq.s32.totalorder %s10, 0
      %p128 = por %p126, %p127
      %p129 = scmp.ne.s32.totalorder %s118, %s121
      %p130 = scmp.eq.s32.totalorder %s15, 3
      %p131 = por %p129, %p130
      %p132 = scmp.ne.s32.totalorder %s121, %s122
      %p133 = scmp.eq.s32.totalorder %s15, 0
      %p134 = por %p132, %p133
      %p135 = scmp.ne.s32.totalorder %s121, %s122
      %p136 = scmp.eq.s32.totalorder %s16, 3
      %p137 = por %p135, %p136
      %p139 = scmp.ne.s32.totalorder %s122, %s138
      %p140 = scmp.eq.s32.totalorder %s16, 0
      %p141 = por %p139, %p140
      %s142 = ssub.s32 %s17, %s36
      %s143 = ssub.s32 %s18, %s32
      %s144 = sor.u32 %s142, %s143
      %p145 = scmp.eq.s32.totalorder %s144, 0
      %s147 = sadd.s32 %s146, 1
      %s148 = scalar_select %p145, %s146, %s147
      %p151 = pneg %p145
      %p152 = scmp.eq.s32.totalorder %s10, 3
      %p153 = por %p151, %p152
      %p154 = scmp.ne.s32.totalorder %s146, %s149
      %p155 = scmp.eq.s32.totalorder %s10, 0
      %p156 = por %p154, %p155
      %p157 = scmp.ne.s32.totalorder %s146, %s149
      %p158 = scmp.eq.s32.totalorder %s15, 3
      %p159 = por %p157, %p158
      %p160 = scmp.ne.s32.totalorder %s149, %s150
      %p161 = scmp.eq.s32.totalorder %s15, 0
      %p162 = por %p160, %p161
      %p163 = scmp.ne.s32.totalorder %s149, %s150
      %p164 = scmp.eq.s32.totalorder %s16, 3
      %p165 = por %p163, %p164
      %p167 = scmp.ne.s32.totalorder %s150, %s166
      %p168 = scmp.eq.s32.totalorder %s16, 0
      %p169 = por %p167, %p168
      %p170 = scmp.le.s32.totalorder 1, %s10
      %p171 = scmp.lt.s32.totalorder %s10, 5
      %p172 = pnand %p170, %p171
      %p173 = pneg %p172
      // Predicated region
      $region9: #{pan_forward.41} parent=5 // pred_check
        _
      $region10: #{pan_forward.41} parent=5 // pred_check_branch
        %175 = sbr.rel (%p172) target = $region12
      $region11: #{pan_forward.41} parent=5 // pred_region
        %s176 = ssub.s32 %s10, 1
        // Predicated region
        $region13: #{pan_forward.41} parent=11 // pred_check
          %p177 = pneg %p55
        $region14: #{pan_forward.41} parent=11 // pred_check_branch
          %179 = sbr.rel (%p177) target = $region16
        $region15: #{pan_forward.41} parent=11 // pred_region
          %p180 = scmp.lt.s32.totalorder %s22, 0
          %s181 = scalar_select %p180, %s22, 0
          %s182 = smul.addr %s181, 4
          %s183 = scalar_lea.vmem %s0, %s182
        $region16: #{pan_forward.41} parent=11 // pred_fallthru
          _
        // Predicated region
        $region17: #{pan_forward.41} parent=11 // pred_check
          %p184 = pneg %p106
        $region18: #{pan_forward.41} parent=11 // pred_check_branch
          %186 = sbr.rel (%p184) target = $region20
        $region19: #{pan_forward.41} parent=11 // pred_region
          _
        $region20: #{pan_forward.41} parent=11 // pred_fallthru
          _
      $region12: #{pan_forward.41} parent=5 // pred_fallthru
        _
      %p187 = scmp.lt.s32.totalorder %s10, 4
      // Predicated region
      $region21: #{pan_forward.41} parent=5 // pred_check
        %p188 = pneg %p187
      $region22: #{pan_forward.41} parent=5 // pred_check_branch
        %190 = sbr.rel (%p188) target = $region24
      $region23: #{pan_forward.41} parent=5 // pred_region
        // Predicated region
        $region25: #{pan_forward.41} parent=23 // pred_check
          %p191 = pneg %p79
        $region26: #{pan_forward.41} parent=23 // pred_check_branch
          %193 = sbr.rel (%p191) target = $region28
        $region27: #{pan_forward.41} parent=23 // pred_region
          %s194 = sand.u32 %s69, 1
          %s195 = sand.u32 %s69, 1
          %s196 = smul.addr %s195, 32
          %s197 = scalar_lea.vmem [#allocation3], %s196
          %s198 = smul.u32 2, %s19
          %s199 = smul.u32 4, %s18
          %s200 = smul.addr %s198, 8
          %s201 = sadd.s32 %s199, %s200
          %s202 = smul.addr %s17, 16
          %s203 = sadd.s32 %s201, %s202
          %s204 = smul.addr %s203, 4
          %s205 = scalar_lea.vmem %s1, %s204
          // Predicated region
          $region29: #{pan_forward.41} parent=27 // pred_check
            _
          $region30: #{pan_forward.41} parent=27 // pred_check_branch
            %207 = sbr.rel (0) target = $region32
          $region31: #{pan_forward.41} parent=27 // pred_region
            // Predicated region
            $region33: #{pan_forward.41} parent=31 // pred_check
              _
            $region34: #{pan_forward.41} parent=31 // pred_check_branch
              %209 = sbr.rel (0) target = $region36
            $region35: #{pan_forward.41} parent=31 // pred_region
              loop: start=0, step=1, limit=1
              $region37: #{pan_forward.41} parent=35 // loop_pre_header
                _
              $region38: #{pan_forward.41} parent=35 // loop_header
                %s211 = sphi 0, %s215
                %p212 = scmp.ge.s32.totalorder %s211, 1
                %s216 = sphi %s205, %s205
                %s217 = sphi %s197, %s197
              $region39: #{pan_forward.41} parent=35 // loop_header_branch
                %214 = sbr.rel (%p212) target = $region43
              $region40: #{pan_forward.41} parent=35 // loop_body
                %v218 = vld [vmem:[%s216] sm:$0xff]
                %219 = vst [vmem:[%s217] sm:$0xff] %v218
                %v220 = vld [vmem:[%s216 + $0x8] sm:$0xff]
                %221 = vst [vmem:[%s217 + $0x8] sm:$0xff] %v220
                %v222 = vld [vmem:[%s216 + $0x20] sm:$0xff]
                %223 = vst [vmem:[%s217 + $0x10] sm:$0xff] %v222
                %v224 = vld [vmem:[%s216 + $0x28] sm:$0xff]
                %225 = vst [vmem:[%s217 + $0x18] sm:$0xff] %v224
              $region41: #{pan_forward.41} parent=35 // loop_footer
                %s215 = sadd.s32 1, %s211
              $region42: #{pan_forward.41} parent=35 // loop_footer_branch
                %210 = sbr.rel target = $region38
              $region43: #{pan_forward.41} parent=35 // loop_exit
                _
            $region36: #{pan_forward.41} parent=31 // pred_fallthru
              _
            // Predicated region
            $region44: #{pan_forward.41} parent=31 // pred_check
              _
            $region45: #{pan_forward.41} parent=31 // pred_check_branch
              %227 = sbr.rel target = $region47
            $region46: #{pan_forward.41} parent=31 // pred_region
              _
            $region47: #{pan_forward.41} parent=31 // pred_fallthru
              _
          $region32: #{pan_forward.41} parent=27 // pred_fallthru
            _
          %228 = vnop
        $region28: #{pan_forward.41} parent=23 // pred_fallthru
          _
        // Predicated region
        $region48: #{pan_forward.41} parent=23 // pred_check
          %p229 = pneg %p128
        $region49: #{pan_forward.41} parent=23 // pred_check_branch
          %231 = sbr.rel (%p229) target = $region51
        $region50: #{pan_forward.41} parent=23 // pred_region
          %s232 = sand.u32 %s118, 1
          %s233 = sand.u32 %s118, 1
          %s234 = smul.addr %s233, 32
          %s235 = scalar_lea.vmem [#allocation4], %s234
          %s236 = smul.u32 4, %s18
          %s237 = smul.addr %s17, 16
          %s238 = sadd.s32 %s236, %s237
          %s239 = smul.addr %s238, 4
          %s240 = scalar_lea.vmem %s3, %s239
          // Predicated region
          $region52: #{pan_forward.41} parent=50 // pred_check
            _
          $region53: #{pan_forward.41} parent=50 // pred_check_branch
            %242 = sbr.rel (0) target = $region55
          $region54: #{pan_forward.41} parent=50 // pred_region
            // Predicated region
            $region56: #{pan_forward.41} parent=54 // pred_check
              _
            $region57: #{pan_forward.41} parent=54 // pred_check_branch
              %244 = sbr.rel (0) target = $region59
            $region58: #{pan_forward.41} parent=54 // pred_region
              loop: start=0, step=1, limit=1
              $region60: #{pan_forward.41} parent=58 // loop_pre_header
                _
              $region61: #{pan_forward.41} parent=58 // loop_header
                %s246 = sphi 0, %s250
                %p247 = scmp.ge.s32.totalorder %s246, 1
                %s251 = sphi %s240, %s240
                %s252 = sphi %s235, %s235
              $region62: #{pan_forward.41} parent=58 // loop_header_branch
                %249 = sbr.rel (%p247) target = $region66
              $region63: #{pan_forward.41} parent=58 // loop_body
                %v253 = vld [vmem:[%s251] sm:$0xff]
                %254 = vst [vmem:[%s252] sm:$0xff] %v253
                %v255 = vld [vmem:[%s251 + $0x8] sm:$0xff]
                %256 = vst [vmem:[%s252 + $0x8] sm:$0xff] %v255
                %v257 = vld [vmem:[%s251 + $0x20] sm:$0xff]
                %258 = vst [vmem:[%s252 + $0x10] sm:$0xff] %v257
                %v259 = vld [vmem:[%s251 + $0x28] sm:$0xff]
                %260 = vst [vmem:[%s252 + $0x18] sm:$0xff] %v259
              $region64: #{pan_forward.41} parent=58 // loop_footer
                %s250 = sadd.s32 1, %s246
              $region65: #{pan_forward.41} parent=58 // loop_footer_branch
                %245 = sbr.rel target = $region61
              $region66: #{pan_forward.41} parent=58 // loop_exit
                _
            $region59: #{pan_forward.41} parent=54 // pred_fallthru
              _
            // Predicated region
            $region67: #{pan_forward.41} parent=54 // pred_check
              _
            $region68: #{pan_forward.41} parent=54 // pred_check_branch
              %262 = sbr.rel target = $region70
            $region69: #{pan_forward.41} parent=54 // pred_region
              _
            $region70: #{pan_forward.41} parent=54 // pred_fallthru
              _
          $region55: #{pan_forward.41} parent=50 // pred_fallthru
            _
          %263 = vnop
        $region51: #{pan_forward.41} parent=23 // pred_fallthru
          _
      $region24: #{pan_forward.41} parent=5 // pred_fallthru
        _
      %p264 = scmp.le.s32.totalorder 1, %s10
      %p265 = scmp.lt.s32.totalorder %s10, 5
      %p266 = pnand %p264, %p265
      %p267 = pneg %p266
      // Predicated region
      $region71: #{pan_forward.41} parent=5 // pred_check
        _
      $region72: #{pan_forward.41} parent=5 // pred_check_branch
        %269 = sbr.rel (%p266) target = $region74
      $region73: #{pan_forward.41} parent=5 // pred_region
        %s270 = ssub.s32 %s10, 1
        %s271 = sand.u32 %s72, 1
        %s272 = sand.u32 %s72, 1
        %s273 = smul.addr %s272, 32
        %s274 = scalar_lea.vmem [#allocation3], %s273
        // Predicated region
        $region75: #{pan_forward.41} parent=73 // pred_check
          %p275 = pneg %p85
        $region76: #{pan_forward.41} parent=73 // pred_check_branch
          %277 = sbr.rel (%p275) target = $region78
        $region77: #{pan_forward.41} parent=73 // pred_region
          _
        $region78: #{pan_forward.41} parent=73 // pred_fallthru
          _
        %s278 = sand.u32 %s121, 1
        %s279 = sand.u32 %s121, 1
        %s280 = smul.addr %s279, 32
        %s281 = scalar_lea.vmem [#allocation4], %s280
        // Predicated region
        $region79: #{pan_forward.41} parent=73 // pred_check
          %p282 = pneg %p134
        $region80: #{pan_forward.41} parent=73 // pred_check_branch
          %284 = sbr.rel (%p282) target = $region82
        $region81: #{pan_forward.41} parent=73 // pred_region
          _
        $region82: #{pan_forward.41} parent=73 // pred_fallthru
          _
        %p285 = scmp.lt.s32.totalorder %s22, 0
        %s286 = scalar_select %p285, %s22, 0
        %s287 = smul.addr %s286, 4
        %s288 = scalar_lea.vmem %s0, %s287
        %p289 = pneg %p55
        %p290 = pneg %p52
        %s291 = sand.u32 %s72, 1
        %s292 = sand.u32 %s72, 1
        %s293 = smul.addr %s292, 32
        %s294 = scalar_lea.vmem [#allocation3], %s293
        %p295 = pneg %p85
        %p296 = pneg %p82
        %p297 = pneg %p106
        %p298 = pneg %p103
        %s299 = sand.u32 %s121, 1
        %s300 = sand.u32 %s121, 1
        %s301 = smul.addr %s300, 32
        %s302 = scalar_lea.vmem [#allocation4], %s301
        %p303 = pneg %p134
        %p304 = pneg %p131
        %p305 = pneg %p162
        %p306 = pneg %p159
        %s307 = sand.u32 %s149, 1
        %s308 = sand.u32 %s149, 1
        %s309 = smul.addr %s308, 32
        %s310 = scalar_lea.vmem [#allocation5], %s309
        %p311 = scmp.lt.s32.totalorder %s22, 0
        %s312 = scalar_select %p311, %s22, 0
        %s313 = smul.addr %s312, 4
        %s314 = scalar_lea.vmem %s0, %s313
        %s315 = smul.u32 2, %s22
        %s316 = smul.u32 4, %s21
        %s317 = smul.u32 4, %s21
        %s318 = smul.u32 4, %s21
        %p320 = scmp.eq.s32.totalorder %s22, 0
        // Predicated region
        $region83: #{pan_forward.41} parent=73 // pred_check
          %p321 = pneg %p320
        $region84: #{pan_forward.41} parent=73 // pred_check_branch
          %323 = sbr.rel (%p321) target = $region86
        $region85: #{pan_forward.41} parent=73 // pred_region
          %324 = vst [vmem:[#allocation2] sm:$0xff] 0.0
          %325 = vst [vmem:[#allocation2 + $0x8] sm:$0xff] 0.0
          %326 = vst [vmem:[#allocation2 + $0x10] sm:$0xff] 0.0
          %327 = vst [vmem:[#allocation2 + $0x18] sm:$0xff] 0.0
          %328 = vst [vmem:[#allocation2 + $0x20] sm:$0xff] 0.0
          %329 = vst [vmem:[#allocation2 + $0x28] sm:$0xff] 0.0
          %330 = vst [vmem:[#allocation2 + $0x30] sm:$0xff] 0.0
          %331 = vst [vmem:[#allocation2 + $0x38] sm:$0xff] 0.0
        $region86: #{pan_forward.41} parent=73 // pred_fallthru
          _
        %v332 = vld [vmem:[#allocation2] sm:$0xff]
        %v333 = vld [vmem:[#allocation2 + $0x8] sm:$0xff]
        %v334 = vld [vmem:[#allocation2 + $0x10] sm:$0xff]
        %v335 = vld [vmem:[#allocation2 + $0x18] sm:$0xff]
        %v336 = vld [vmem:[#allocation2 + $0x20] sm:$0xff]
        %v337 = vld [vmem:[#allocation2 + $0x28] sm:$0xff]
        %v338 = vld [vmem:[#allocation2 + $0x30] sm:$0xff]
        %v339 = vld [vmem:[#allocation2 + $0x38] sm:$0xff]
        %v340 = vld [vmem:[%s314] sm:$0xf]
        %v341 = vld [vmem:[%s314 + $0x4] sm:$0xf]
        %v342 = vld [vmem:[%s274] sm:$0xff]
        %v343 = vld [vmem:[%s274 + $0x8] sm:$0xff]
        %v344 = vld [vmem:[%s274 + $0x10] sm:$0xff]
        %v345 = vld [vmem:[%s274 + $0x18] sm:$0xff]
        %v348 = vunpack.c.l.b16 %v340
        %v349 = vunpack.c.l.b16 %v341
        %v350 = vpack.c.b16 %v349, %v348
        %v355 = vunpack.c.l.b16 %v342
        %v356 = vunpack.c.h.b16 %v342
        %v357 = vunpack.c.l.b16 %v343
        %v358 = vunpack.c.h.b16 %v343
        %v359 = vunpack.c.l.b16 %v344
        %v360 = vunpack.c.h.b16 %v344
        %v361 = vunpack.c.l.b16 %v345
        %v362 = vunpack.c.h.b16 %v345
        %v363 = vpack.c.b16 %v359, %v355
        %v364 = vpack.c.b16 %v360, %v356
        %v365 = vpack.c.b16 %v361, %v357
        %v366 = vpack.c.b16 %v362, %v358
        %vm371 = vcmask 130048
        %v373 = vsel %vm371, %v350, 0
        %375 = vmatpush.bf16.msra.mxu0 0
        %376 = vmatpush.bf16.msra.mxu0 0
        %377 = vmatpush.bf16.msra.mxu0 0
        %378 = vmatpush.bf16.msra.mxu0 0
        %379 = vmatpush.bf16.msra.mxu0 0
        %380 = vmatpush.bf16.msra.mxu0 0
        %381 = vmatpush.bf16.msra.mxu0 0
        %382 = vmatpush.bf16.msra.mxu0 %v363
        %383 = vmatmul.bf16.gmra.mxu0 %v373
        %v384 = vpop.f32.mrf.mxu0
        %v385 = vadd.f32 0.0, %v384
        %v386 = vpop.f32.mrf.mxu0
        %v387 = vadd.f32 0.0, %v386
        %388 = vdwg.mxu0
        %389 = vmatpush.bf16.msra.mxu0 0
        %390 = vmatpush.bf16.msra.mxu0 0
        %391 = vmatpush.bf16.msra.mxu0 0
        %392 = vmatpush.bf16.msra.mxu0 0
        %393 = vmatpush.bf16.msra.mxu0 0
        %394 = vmatpush.bf16.msra.mxu0 0
        %395 = vmatpush.bf16.msra.mxu0 0
        %396 = vmatpush.bf16.msra.mxu0 %v364
        %397 = vmatmul.bf16.gmra.mxu0 %v373
        %v398 = vpop.f32.mrf.mxu0
        %v399 = vadd.f32 0.0, %v398
        %v400 = vpop.f32.mrf.mxu0
        %v401 = vadd.f32 0.0, %v400
        %402 = vdwg.mxu0
        %403 = vmatpush.bf16.msra.mxu0 0
        %404 = vmatpush.bf16.msra.mxu0 0
        %405 = vmatpush.bf16.msra.mxu0 0
        %406 = vmatpush.bf16.msra.mxu0 0
        %407 = vmatpush.bf16.msra.mxu0 0
        %408 = vmatpush.bf16.msra.mxu0 0
        %409 = vmatpush.bf16.msra.mxu0 0
        %410 = vmatpush.bf16.msra.mxu0 %v365
        %411 = vmatmul.bf16.gmra.mxu0 %v373
        %v412 = vpop.f32.mrf.mxu0
        %v413 = vadd.f32 0.0, %v412
        %v414 = vpop.f32.mrf.mxu0
        %v415 = vadd.f32 0.0, %v414
        %416 = vdwg.mxu0
        %417 = vmatpush.bf16.msra.mxu0 0
        %418 = vmatpush.bf16.msra.mxu0 0
        %419 = vmatpush.bf16.msra.mxu0 0
        %420 = vmatpush.bf16.msra.mxu0 0
        %421 = vmatpush.bf16.msra.mxu0 0
        %422 = vmatpush.bf16.msra.mxu0 0
        %423 = vmatpush.bf16.msra.mxu0 0
        %424 = vmatpush.bf16.msra.mxu0 %v366
        %425 = vmatmul.bf16.gmra.mxu0 %v373
        %v426 = vpop.f32.mrf.mxu0
        %v427 = vadd.f32 0.0, %v426
        %v428 = vpop.f32.mrf.mxu0
        %v429 = vadd.f32 0.0, %v428
        %430 = vdwg.mxu0
        %v431 = vadd.f32 %v332, %v385
        %v432 = vadd.f32 %v333, %v399
        %v433 = vadd.f32 %v334, %v413
        %v434 = vadd.f32 %v335, %v427
        %v435 = vadd.f32 %v336, %v387
        %v436 = vadd.f32 %v337, %v401
        %v437 = vadd.f32 %v338, %v415
        %v438 = vadd.f32 %v339, %v429
        %439 = vst [vmem:[#allocation2] sm:$0xff] %v431
        %440 = vst [vmem:[#allocation2 + $0x8] sm:$0xff] %v432
        %441 = vst [vmem:[#allocation2 + $0x10] sm:$0xff] %v433
        %442 = vst [vmem:[#allocation2 + $0x18] sm:$0xff] %v434
        %443 = vst [vmem:[#allocation2 + $0x20] sm:$0xff] %v435
        %444 = vst [vmem:[#allocation2 + $0x28] sm:$0xff] %v436
        %445 = vst [vmem:[#allocation2 + $0x30] sm:$0xff] %v437
        %446 = vst [vmem:[#allocation2 + $0x38] sm:$0xff] %v438
        // Predicated region
        $region87: #{pan_forward.41} parent=73 // pred_check
          %p447 = pneg %p320
        $region88: #{pan_forward.41} parent=73 // pred_check_branch
          %449 = sbr.rel (%p447) target = $region90
        $region89: #{pan_forward.41} parent=73 // pred_region
          %v450 = vld [vmem:[#allocation2] sm:$0xff]
          %v451 = vld [vmem:[#allocation2 + $0x8] sm:$0xff]
          %v452 = vld [vmem:[#allocation2 + $0x10] sm:$0xff]
          %v453 = vld [vmem:[#allocation2 + $0x18] sm:$0xff]
          %v454 = vld [vmem:[#allocation2 + $0x20] sm:$0xff]
          %v455 = vld [vmem:[#allocation2 + $0x28] sm:$0xff]
          %v456 = vld [vmem:[#allocation2 + $0x30] sm:$0xff]
          %v457 = vld [vmem:[#allocation2 + $0x38] sm:$0xff]
          %v458 = vld [vmem:[%s2] sm:$0xff]
          %v459 = vld [vmem:[%s2 + $0x8] sm:$0xff]
          %461 = vset.pattern.permute.xlu0 0
          %462 = vperm.xlu0 %461, %v458
          %v463 = vpop.permute.xlu0 %462
          %466 = vset.pattern.permute.xlu0 0
          %467 = vperm.xlu0 %466, %v459
          %v468 = vpop.permute.xlu0 %467
          %v470 = vadd.f32 %v450, %v463
          %v471 = vadd.f32 %v451, %v463
          %v472 = vadd.f32 %v452, %v463
          %v473 = vadd.f32 %v453, %v463
          %v474 = vadd.f32 %v454, %v468
          %v475 = vadd.f32 %v455, %v468
          %v476 = vadd.f32 %v456, %v468
          %v477 = vadd.f32 %v457, %v468
          %v478 = vand.u32 2147483647, %v470
          %v479 = vand.u32 2147483647, %v471
          %v480 = vand.u32 2147483647, %v472
          %v481 = vand.u32 2147483647, %v473
          %v482 = vand.u32 2147483647, %v474
          %v483 = vand.u32 2147483647, %v475
          %v484 = vand.u32 2147483647, %v476
          %v485 = vand.u32 2147483647, %v477
          %v486 = vsub.f32 0.0, %v478
          %v487 = vsub.f32 0.0, %v479
          %v488 = vsub.f32 0.0, %v480
          %v489 = vsub.f32 0.0, %v481
          %v490 = vsub.f32 0.0, %v482
          %v491 = vsub.f32 0.0, %v483
          %v492 = vsub.f32 0.0, %v484
          %v493 = vsub.f32 0.0, %v485
          %v494 = vmul.f32 %v486, 1.442695
          %v495 = vpow.pop %v494
          %v496 = vmul.f32 %v487, 1.442695
          %v497 = vpow.pop %v496
          %v498 = vmul.f32 %v488, 1.442695
          %v499 = vpow.pop %v498
          %v500 = vmul.f32 %v489, 1.442695
          %v501 = vpow.pop %v500
          %v502 = vmul.f32 %v490, 1.442695
          %v503 = vpow.pop %v502
          %v504 = vmul.f32 %v491, 1.442695
          %v505 = vpow.pop %v504
          %v506 = vmul.f32 %v492, 1.442695
          %v507 = vpow.pop %v506
          %v508 = vmul.f32 %v493, 1.442695
          %v509 = vpow.pop %v508
          %vm510 = vcmp.ge.f32.partialorder %v470, 0.0
          %vm511 = vcmp.ge.f32.partialorder %v471, 0.0
          %vm512 = vcmp.ge.f32.partialorder %v472, 0.0
          %vm513 = vcmp.ge.f32.partialorder %v473, 0.0
          %vm514 = vcmp.ge.f32.partialorder %v474, 0.0
          %vm515 = vcmp.ge.f32.partialorder %v475, 0.0
          %vm516 = vcmp.ge.f32.partialorder %v476, 0.0
          %vm517 = vcmp.ge.f32.partialorder %v477, 0.0
          %v518 = vadd.f32 %v495, 1.0
          %v519 = vadd.f32 %v497, 1.0
          %v520 = vadd.f32 %v499, 1.0
          %v521 = vadd.f32 %v501, 1.0
          %v522 = vadd.f32 %v503, 1.0
          %v523 = vadd.f32 %v505, 1.0
          %v524 = vadd.f32 %v507, 1.0
          %v525 = vadd.f32 %v509, 1.0
          %v526 = vrcp.pop %v518
          %v527 = vmul.f32 %v518, %v526
          %v528 = vsub.f32 1.0, %v527
          %v529 = vmul.f32 %v526, %v528
          %v530 = vadd.f32 %v526, %v529
          %vm531 = vweird.f32 %v518
          %vm532 = vweird.f32 %v526
          %vm533 = vmor %vm531, %vm532
          %v534 = vsel %vm533, %v526, %v530
          %v535 = vand.u32 2147483647, %v518
          %vm536 = vcmp.eq.f32.partialorder %v535, 8.507059e+37
          %v537 = vand.u32 %v518, 2147483648
          %v538 = vor.u32 1.1754944e-38, %v537
          %v539 = vsel %vm536, %v538, %v534
          %v540 = vmul.f32 1.0, %v539
          %v541 = vrcp.pop %v519
          %v542 = vmul.f32 %v519, %v541
          %v543 = vsub.f32 1.0, %v542
          %v544 = vmul.f32 %v541, %v543
          %v545 = vadd.f32 %v541, %v544
          %vm546 = vweird.f32 %v519
          %vm547 = vweird.f32 %v541
          %vm548 = vmor %vm546, %vm547
          %v549 = vsel %vm548, %v541, %v545
          %v550 = vand.u32 2147483647, %v519
          %vm551 = vcmp.eq.f32.partialorder %v550, 8.507059e+37
          %v552 = vand.u32 %v519, 2147483648
          %v553 = vor.u32 1.1754944e-38, %v552
          %v554 = vsel %vm551, %v553, %v549
          %v555 = vmul.f32 1.0, %v554
          %v556 = vrcp.pop %v520
          %v557 = vmul.f32 %v520, %v556
          %v558 = vsub.f32 1.0, %v557
          %v559 = vmul.f32 %v556, %v558
          %v560 = vadd.f32 %v556, %v559
          %vm561 = vweird.f32 %v520
          %vm562 = vweird.f32 %v556
          %vm563 = vmor %vm561, %vm562
          %v564 = vsel %vm563, %v556, %v560
          %v565 = vand.u32 2147483647, %v520
          %vm566 = vcmp.eq.f32.partialorder %v565, 8.507059e+37
          %v567 = vand.u32 %v520, 2147483648
          %v568 = vor.u32 1.1754944e-38, %v567
          %v569 = vsel %vm566, %v568, %v564
          %v570 = vmul.f32 1.0, %v569
          %v571 = vrcp.pop %v521
          %v572 = vmul.f32 %v521, %v571
          %v573 = vsub.f32 1.0, %v572
          %v574 = vmul.f32 %v571, %v573
          %v575 = vadd.f32 %v571, %v574
          %vm576 = vweird.f32 %v521
          %vm577 = vweird.f32 %v571
          %vm578 = vmor %vm576, %vm577
          %v579 = vsel %vm578, %v571, %v575
          %v580 = vand.u32 2147483647, %v521
          %vm581 = vcmp.eq.f32.partialorder %v580, 8.507059e+37
          %v582 = vand.u32 %v521, 2147483648
          %v583 = vor.u32 1.1754944e-38, %v582
          %v584 = vsel %vm581, %v583, %v579
          %v585 = vmul.f32 1.0, %v584
          %v586 = vrcp.pop %v522
          %v587 = vmul.f32 %v522, %v586
          %v588 = vsub.f32 1.0, %v587
          %v589 = vmul.f32 %v586, %v588
          %v590 = vadd.f32 %v586, %v589
          %vm591 = vweird.f32 %v522
          %vm592 = vweird.f32 %v586
          %vm593 = vmor %vm591, %vm592
          %v594 = vsel %vm593, %v586, %v590
          %v595 = vand.u32 2147483647, %v522
          %vm596 = vcmp.eq.f32.partialorder %v595, 8.507059e+37
          %v597 = vand.u32 %v522, 2147483648
          %v598 = vor.u32 1.1754944e-38, %v597
          %v599 = vsel %vm596, %v598, %v594
          %v600 = vmul.f32 1.0, %v599
          %v601 = vrcp.pop %v523
          %v602 = vmul.f32 %v523, %v601
          %v603 = vsub.f32 1.0, %v602
          %v604 = vmul.f32 %v601, %v603
          %v605 = vadd.f32 %v601, %v604
          %vm606 = vweird.f32 %v523
          %vm607 = vweird.f32 %v601
          %vm608 = vmor %vm606, %vm607
          %v609 = vsel %vm608, %v601, %v605
          %v610 = vand.u32 2147483647, %v523
          %vm611 = vcmp.eq.f32.partialorder %v610, 8.507059e+37
          %v612 = vand.u32 %v523, 2147483648
          %v613 = vor.u32 1.1754944e-38, %v612
          %v614 = vsel %vm611, %v613, %v609
          %v615 = vmul.f32 1.0, %v614
          %v616 = vrcp.pop %v524
          %v617 = vmul.f32 %v524, %v616
          %v618 = vsub.f32 1.0, %v617
          %v619 = vmul.f32 %v616, %v618
          %v620 = vadd.f32 %v616, %v619
          %vm621 = vweird.f32 %v524
          %vm622 = vweird.f32 %v616
          %vm623 = vmor %vm621, %vm622
          %v624 = vsel %vm623, %v616, %v620
          %v625 = vand.u32 2147483647, %v524
          %vm626 = vcmp.eq.f32.partialorder %v625, 8.507059e+37
          %v627 = vand.u32 %v524, 2147483648
          %v628 = vor.u32 1.1754944e-38, %v627
          %v629 = vsel %vm626, %v628, %v624
          %v630 = vmul.f32 1.0, %v629
          %v631 = vrcp.pop %v525
          %v632 = vmul.f32 %v525, %v631
          %v633 = vsub.f32 1.0, %v632
          %v634 = vmul.f32 %v631, %v633
          %v635 = vadd.f32 %v631, %v634
          %vm636 = vweird.f32 %v525
          %vm637 = vweird.f32 %v631
          %vm638 = vmor %vm636, %vm637
          %v639 = vsel %vm638, %v631, %v635
          %v640 = vand.u32 2147483647, %v525
          %vm641 = vcmp.eq.f32.partialorder %v640, 8.507059e+37
          %v642 = vand.u32 %v525, 2147483648
          %v643 = vor.u32 1.1754944e-38, %v642
          %v644 = vsel %vm641, %v643, %v639
          %v645 = vmul.f32 1.0, %v644
          %v646 = vmul.f32 %v495, %v539
          %v647 = vmul.f32 %v497, %v554
          %v648 = vmul.f32 %v499, %v569
          %v649 = vmul.f32 %v501, %v584
          %v650 = vmul.f32 %v503, %v599
          %v651 = vmul.f32 %v505, %v614
          %v652 = vmul.f32 %v507, %v629
          %v653 = vmul.f32 %v509, %v644
          %v654 = vsel %vm510, %v540, %v646
          %v655 = vsel %vm511, %v555, %v647
          %v656 = vsel %vm512, %v570, %v648
          %v657 = vsel %vm513, %v585, %v649
          %v658 = vsel %vm514, %v600, %v650
          %v659 = vsel %vm515, %v615, %v651
          %v660 = vsel %vm516, %v630, %v652
          %v661 = vsel %vm517, %v645, %v653
          %v662 = vld [vmem:[%s281] sm:$0xff]
          %v663 = vld [vmem:[%s281 + $0x8] sm:$0xff]
          %v664 = vld [vmem:[%s281 + $0x10] sm:$0xff]
          %v665 = vld [vmem:[%s281 + $0x18] sm:$0xff]
          %v666 = vunpack.c.l.bf16 %v662
          %v667 = vunpack.c.h.bf16 %v662
          %v668 = vunpack.c.l.bf16 %v663
          %v669 = vunpack.c.h.bf16 %v663
          %v670 = vunpack.c.l.bf16 %v664
          %v671 = vunpack.c.h.bf16 %v664
          %v672 = vunpack.c.l.bf16 %v665
          %v673 = vunpack.c.h.bf16 %v665
          %v674 = vmul.f32 %v654, %v666
          %v675 = vmul.f32 %v655, %v667
          %v676 = vmul.f32 %v656, %v668
          %v677 = vmul.f32 %v657, %v669
          %v678 = vmul.f32 %v658, %v670
          %v679 = vmul.f32 %v659, %v671
          %v680 = vmul.f32 %v660, %v672
          %v681 = vmul.f32 %v661, %v673
          %vm682 = vcmp.ge.f32.partialorder %v674, 0.0
          %vm683 = vcmp.ge.f32.partialorder %v675, 0.0
          %vm684 = vcmp.ge.f32.partialorder %v676, 0.0
          %vm685 = vcmp.ge.f32.partialorder %v677, 0.0
          %vm686 = vcmp.ge.f32.partialorder %v678, 0.0
          %vm687 = vcmp.ge.f32.partialorder %v679, 0.0
          %vm688 = vcmp.ge.f32.partialorder %v680, 0.0
          %vm689 = vcmp.ge.f32.partialorder %v681, 0.0
          %v690 = vmul.f32 %v674, 0.2
          %v691 = vmul.f32 %v675, 0.2
          %v692 = vmul.f32 %v676, 0.2
          %v693 = vmul.f32 %v677, 0.2
          %v694 = vmul.f32 %v678, 0.2
          %v695 = vmul.f32 %v679, 0.2
          %v696 = vmul.f32 %v680, 0.2
          %v697 = vmul.f32 %v681, 0.2
          %v698 = vsel %vm682, %v674, %v690
          %v699 = vsel %vm683, %v675, %v691
          %v700 = vsel %vm684, %v676, %v692
          %v701 = vsel %vm685, %v677, %v693
          %v702 = vsel %vm686, %v678, %v694
          %v703 = vsel %vm687, %v679, %v695
          %v704 = vsel %vm688, %v680, %v696
          %v705 = vsel %vm689, %v681, %v697
          %v706 = vpack.c.bf16 %v699, %v698
          %v707 = vpack.c.bf16 %v701, %v700
          %v708 = vpack.c.bf16 %v703, %v702
          %v709 = vpack.c.bf16 %v705, %v704
          %710 = vst [vmem:[%s310] sm:$0xff] %v706
          %711 = vst [vmem:[%s310 + $0x8] sm:$0xff] %v707
          %712 = vst [vmem:[%s310 + $0x10] sm:$0xff] %v708
          %713 = vst [vmem:[%s310 + $0x18] sm:$0xff] %v709
        $region90: #{pan_forward.41} parent=73 // pred_fallthru
          _
        %s714 = sand.u32 %s149, 1
        %s715 = sand.u32 %s149, 1
        %s716 = smul.addr %s715, 32
        %s717 = scalar_lea.vmem [#allocation5], %s716
        // Predicated region
        $region91: #{pan_forward.41} parent=73 // pred_check
          %p718 = pneg %p159
        $region92: #{pan_forward.41} parent=73 // pred_check_branch
          %720 = sbr.rel (%p718) target = $region94
        $region93: #{pan_forward.41} parent=73 // pred_region
          %s721 = smul.u32 4, %s21
          %s722 = smul.addr %s20, 16
          %s723 = sadd.s32 %s721, %s722
          %s724 = smul.addr %s723, 4
          %s725 = scalar_lea.vmem %s4, %s724
          // Predicated region
          $region95: #{pan_forward.41} parent=93 // pred_check
            _
          $region96: #{pan_forward.41} parent=93 // pred_check_branch
            %727 = sbr.rel (0) target = $region98
          $region97: #{pan_forward.41} parent=93 // pred_region
            // Predicated region
            $region99: #{pan_forward.41} parent=97 // pred_check
              _
            $region100: #{pan_forward.41} parent=97 // pred_check_branch
              %729 = sbr.rel (0) target = $region102
            $region101: #{pan_forward.41} parent=97 // pred_region
              loop: start=0, step=1, limit=1
              $region103: #{pan_forward.41} parent=101 // loop_pre_header
                _
              $region104: #{pan_forward.41} parent=101 // loop_header
                %s731 = sphi 0, %s735
                %p732 = scmp.ge.s32.totalorder %s731, 1
                %s736 = sphi %s717, %s717
                %s737 = sphi %s725, %s725
              $region105: #{pan_forward.41} parent=101 // loop_header_branch
                %734 = sbr.rel (%p732) target = $region109
              $region106: #{pan_forward.41} parent=101 // loop_body
                %v738 = vld [vmem:[%s736] sm:$0xff]
                %739 = vst [vmem:[%s737] sm:$0xff] %v738
                %v740 = vld [vmem:[%s736 + $0x8] sm:$0xff]
                %741 = vst [vmem:[%s737 + $0x8] sm:$0xff] %v740
                %v742 = vld [vmem:[%s736 + $0x10] sm:$0xff]
                %743 = vst [vmem:[%s737 + $0x20] sm:$0xff] %v742
                %v744 = vld [vmem:[%s736 + $0x18] sm:$0xff]
                %745 = vst [vmem:[%s737 + $0x28] sm:$0xff] %v744
              $region107: #{pan_forward.41} parent=101 // loop_footer
                %s735 = sadd.s32 1, %s731
              $region108: #{pan_forward.41} parent=101 // loop_footer_branch
                %730 = sbr.rel target = $region104
              $region109: #{pan_forward.41} parent=101 // loop_exit
                _
            $region102: #{pan_forward.41} parent=97 // pred_fallthru
              _
            // Predicated region
            $region110: #{pan_forward.41} parent=97 // pred_check
              _
            $region111: #{pan_forward.41} parent=97 // pred_check_branch
              %747 = sbr.rel target = $region113
            $region112: #{pan_forward.41} parent=97 // pred_region
              _
            $region113: #{pan_forward.41} parent=97 // pred_fallthru
              _
          $region98: #{pan_forward.41} parent=93 // pred_fallthru
            _
          %748 = vnop
        $region94: #{pan_forward.41} parent=73 // pred_fallthru
          _
      $region74: #{pan_forward.41} parent=5 // pred_fallthru
        _
      %p749 = scmp.le.s32.totalorder 2, %s10
      // Predicated region
      $region114: #{pan_forward.41} parent=5 // pred_check
        %p750 = pneg %p749
      $region115: #{pan_forward.41} parent=5 // pred_check_branch
        %752 = sbr.rel (%p750) target = $region117
      $region116: #{pan_forward.41} parent=5 // pred_region
        %s753 = ssub.s32 %s10, 2
        // Predicated region
        $region118: #{pan_forward.41} parent=116 // pred_check
          %p754 = pneg %p165
        $region119: #{pan_forward.41} parent=116 // pred_check_branch
          %756 = sbr.rel (%p754) target = $region121
        $region120: #{pan_forward.41} parent=116 // pred_region
          %s757 = sand.u32 %s150, 1
          %s758 = sand.u32 %s150, 1
          %s759 = smul.addr %s758, 32
          %s760 = scalar_lea.vmem [#allocation5], %s759
        $region121: #{pan_forward.41} parent=116 // pred_fallthru
          _
      $region117: #{pan_forward.41} parent=5 // pred_fallthru
        _
    $region6: #{pan_forward.41} parent=1 // loop_footer
      %s14 = sadd.s32 1, %s10
    $region7: #{pan_forward.41} parent=1 // loop_footer_branch
      %9 = sbr.rel target = $region3
    $region8: #{pan_forward.41} parent=1 // loop_exit
      _

// kernel: pan_forward.42
$region0: #{pan_forward.42}
  #allocation0 [shape = 'u32[]', space=smem, size = 0x4, offset = 0x4, fixed_abs, tag = 'smem constant byte address 0x4 - core index']
  #allocation1 [shape = 'u32[72,128]{1,0:T(1,128)}', space=vmem, size = 0x9000, scoped, tag = 'internal scratch']
  #allocation2 [shape = 'f32[16,512]{1,0:T(8,128)}', space=vmem, size = 0x8000, scoped, tag = 'scratch operand']
  %s0 = inlined_call_operand.vmem [shape: bf16[16,144], index: 0, kind: input, shape index: {}]
  %s1 = inlined_call_operand.vmem [shape: bf16[2,144,1024], index: 1, kind: input, shape index: {}]
  %s2 = inlined_call_operand.vmem [shape: f32[16,1], index: 2, kind: input, shape index: {}]
  %s3 = inlined_call_operand.vmem [shape: bf16[2,16,1024], index: 3, kind: output, shape index: {}]
  %s4 = sld [smem:[#allocation0]]
  $region95: #{pan_forward.42} parent=0
    _
  %s6 = ssub.s32 1, %s4
  %s7 = scalar_select 0, %s6, %s4
  $region1: #{pan_forward.42} parent=0
    #allocation3 [shape = 'u8[294912]{0}', space=vmem, size = 0x48000, scoped, tag = 'input window, operand 1']
    #allocation4 [shape = 'u8[32768]{0}', space=vmem, size = 0x8000, scoped, tag = 'output window, operand 0']
    loop: start=0, step=1, limit=6
    $region2: #{pan_forward.42} parent=1 // loop_pre_header
      _
    $region3: #{pan_forward.42} parent=1 // loop_header
      %s9 = sphi 0, %s13
      %p10 = scmp.ge.s32.totalorder %s9, 6
      %s16 = sphi 0, %s35
      %s17 = sphi 0, %s31
      %s18 = sphi 0, %s27
      %s19 = sphi 0, %s16
      %s20 = sphi 0, %s17
      %s21 = sphi 0, %s18
      %s22 = sphi 0, %s19
      %s23 = sphi 0, %s20
      %s24 = sphi 0, %s21
      %s38 = sphi 0, %s40
      %s41 = sphi 0, %s38
      %s42 = sphi 0, %s41
      %s58 = sphi 0, %s42
      %s68 = sphi 0, %s70
      %s71 = sphi 0, %s68
      %s72 = sphi 0, %s71
      %s88 = sphi 0, %s72
      %s92 = sphi 0, %s92
      %s94 = sphi 0, %s92
      %s95 = sphi 0, %s94
      %s109 = sphi 0, %s95
      %s117 = sphi 0, %s119
      %s120 = sphi 0, %s117
      %s121 = sphi 0, %s120
      %s137 = sphi 0, %s121
    $region4: #{pan_forward.42} parent=1 // loop_header_branch
      %12 = sbr.rel (%p10) target = $region8
    $region5: #{pan_forward.42} parent=1 // loop_body
      %s14 = ssub.s32 %s9, 1
      %s15 = ssub.s32 %s9, 2
      %s25 = sadd.s32 1, %s18
      %p26 = scmp.ge.s32.totalorder %s25, 1
      %s27 = scalar_select %p26, 0, %s25
      %s28 = sadd.s32 1, %s17
      %s29 = scalar_select %p26, %s28, %s17
      %p30 = scmp.ge.s32.totalorder %s29, 2
      %s31 = scalar_select %p30, 0, %s29
      %s32 = sadd.s32 1, %s16
      %s33 = scalar_select %p30, %s32, %s16
      %p34 = scmp.ge.s32.totalorder %s33, 2
      %s35 = scalar_select %p34, 0, %s33
      %s36 = ssub.s32 %s18, %s27
      %p37 = scmp.eq.s32.totalorder %s36, 0
      %s39 = sadd.s32 %s38, 1
      %s40 = scalar_select %p37, %s38, %s39
      %p43 = pneg %p37
      %p44 = scmp.eq.s32.totalorder %s9, 3
      %p45 = por %p43, %p44
      %p46 = scmp.ne.s32.totalorder %s38, %s41
      %p47 = scmp.eq.s32.totalorder %s9, 0
      %p48 = por %p46, %p47
      %p49 = scmp.ne.s32.totalorder %s38, %s41
      %p50 = scmp.eq.s32.totalorder %s14, 3
      %p51 = por %p49, %p50
      %p52 = scmp.ne.s32.totalorder %s41, %s42
      %p53 = scmp.eq.s32.totalorder %s14, 0
      %p54 = por %p52, %p53
      %p55 = scmp.ne.s32.totalorder %s41, %s42
      %p56 = scmp.eq.s32.totalorder %s15, 3
      %p57 = por %p55, %p56
      %p59 = scmp.ne.s32.totalorder %s42, %s58
      %p60 = scmp.eq.s32.totalorder %s15, 0
      %p61 = por %p59, %p60
      %s62 = ssub.s32 %s16, %s35
      %s63 = ssub.s32 %s18, %s27
      %s64 = sor.u32 %s62, %s63
      %s65 = ssub.s32 %s17, %s31
      %s66 = sor.u32 %s64, %s65
      %p67 = scmp.eq.s32.totalorder %s66, 0
      %s69 = sadd.s32 %s68, 1
      %s70 = scalar_select %p67, %s68, %s69
      %p73 = pneg %p67
      %p74 = scmp.eq.s32.totalorder %s9, 3
      %p75 = por %p73, %p74
      %p76 = scmp.ne.s32.totalorder %s68, %s71
      %p77 = scmp.eq.s32.totalorder %s9, 0
      %p78 = por %p76, %p77
      %p79 = scmp.ne.s32.totalorder %s68, %s71
      %p80 = scmp.eq.s32.totalorder %s14, 3
      %p81 = por %p79, %p80
      %p82 = scmp.ne.s32.totalorder %s71, %s72
      %p83 = scmp.eq.s32.totalorder %s14, 0
      %p84 = por %p82, %p83
      %p85 = scmp.ne.s32.totalorder %s71, %s72
      %p86 = scmp.eq.s32.totalorder %s15, 3
      %p87 = por %p85, %p86
      %p89 = scmp.ne.s32.totalorder %s72, %s88
      %p90 = scmp.eq.s32.totalorder %s15, 0
      %p91 = por %p89, %p90
      %s93 = sadd.s32 %s92, 1
      %p96 = scmp.eq.s32.totalorder %s9, 3
      %p97 = scmp.ne.s32.totalorder %s92, %s94
      %p98 = scmp.eq.s32.totalorder %s9, 0
      %p99 = por %p97, %p98
      %p100 = scmp.ne.s32.totalorder %s92, %s94
      %p101 = scmp.eq.s32.totalorder %s14, 3
      %p102 = por %p100, %p101
      %p103 = scmp.ne.s32.totalorder %s94, %s95
      %p104 = scmp.eq.s32.totalorder %s14, 0
      %p105 = por %p103, %p104
      %p106 = scmp.ne.s32.totalorder %s94, %s95
      %p107 = scmp.eq.s32.totalorder %s15, 3
      %p108 = por %p106, %p107
      %p110 = scmp.ne.s32.totalorder %s95, %s109
      %p111 = scmp.eq.s32.totalorder %s15, 0
      %p112 = por %p110, %p111
      %s113 = ssub.s32 %s16, %s35
      %s114 = ssub.s32 %s17, %s31
      %s115 = sor.u32 %s113, %s114
      %p116 = scmp.eq.s32.totalorder %s115, 0
      %s118 = sadd.s32 %s117, 1
      %s119 = scalar_select %p116, %s117, %s118
      %p122 = pneg %p116
      %p123 = scmp.eq.s32.totalorder %s9, 3
      %p124 = por %p122, %p123
      %p125 = scmp.ne.s32.totalorder %s117, %s120
      %p126 = scmp.eq.s32.totalorder %s9, 0
      %p127 = por %p125, %p126
      %p128 = scmp.ne.s32.totalorder %s117, %s120
      %p129 = scmp.eq.s32.totalorder %s14, 3
      %p130 = por %p128, %p129
      %p131 = scmp.ne.s32.totalorder %s120, %s121
      %p132 = scmp.eq.s32.totalorder %s14, 0
      %p133 = por %p131, %p132
      %p134 = scmp.ne.s32.totalorder %s120, %s121
      %p135 = scmp.eq.s32.totalorder %s15, 3
      %p136 = por %p134, %p135
      %p138 = scmp.ne.s32.totalorder %s121, %s137
      %p139 = scmp.eq.s32.totalorder %s15, 0
      %p140 = por %p138, %p139
      %p141 = scmp.le.s32.totalorder 1, %s9
      %p142 = scmp.lt.s32.totalorder %s9, 5
      %p143 = pnand %p141, %p142
      %p144 = pneg %p143
      // Predicated region
      $region9: #{pan_forward.42} parent=5 // pred_check
        _
      $region10: #{pan_forward.42} parent=5 // pred_check_branch
        %146 = sbr.rel (%p143) target = $region12
      $region11: #{pan_forward.42} parent=5 // pred_region
        %s147 = ssub.s32 %s9, 1
        // Predicated region
        $region13: #{pan_forward.42} parent=11 // pred_check
          %p148 = pneg %p54
        $region14: #{pan_forward.42} parent=11 // pred_check_branch
          %150 = sbr.rel (%p148) target = $region16
        $region15: #{pan_forward.42} parent=11 // pred_region
          %s151 = smul.u32 2, %s21
          %p152 = scmp.lt.s32.totalorder %s151, 1
          %s153 = scalar_select %p152, %s151, 1
          %s154 = smul.addr %s153, 4
          %s155 = scalar_lea.vmem %s0, %s154
          %s156 = smul.u32 2, %s21
        $region16: #{pan_forward.42} parent=11 // pred_fallthru
          _
        // Predicated region
        $region17: #{pan_forward.42} parent=11 // pred_check
          %p157 = pneg %p105
        $region18: #{pan_forward.42} parent=11 // pred_check_branch
          %159 = sbr.rel (%p157) target = $region20
        $region19: #{pan_forward.42} parent=11 // pred_region
          _
        $region20: #{pan_forward.42} parent=11 // pred_fallthru
          _
      $region12: #{pan_forward.42} parent=5 // pred_fallthru
        _
      %p160 = scmp.lt.s32.totalorder %s9, 4
      // Predicated region
      $region21: #{pan_forward.42} parent=5 // pred_check
        %p161 = pneg %p160
      $region22: #{pan_forward.42} parent=5 // pred_check_branch
        %163 = sbr.rel (%p161) target = $region24
      $region23: #{pan_forward.42} parent=5 // pred_region
        // Predicated region
        $region25: #{pan_forward.42} parent=23 // pred_check
          %p164 = pneg %p78
        $region26: #{pan_forward.42} parent=23 // pred_check_branch
          %166 = sbr.rel (%p164) target = $region28
        $region27: #{pan_forward.42} parent=23 // pred_region
          %s167 = sand.u32 %s68, 1
          %s168 = sand.u32 %s68, 1
          %s169 = smul.addr %s168, 288
          %s170 = scalar_lea.vmem [#allocation3], %s169
          %s171 = smul.u32 18, %s18
          %s172 = smul.u32 4, %s17
          %s173 = smul.addr %s171, 8
          %s174 = sadd.s32 %s172, %s173
          %s175 = smul.addr %s16, 144
          %s176 = sadd.s32 %s174, %s175
          %s177 = smul.addr %s176, 4
          %s178 = scalar_lea.vmem %s1, %s177
          // Predicated region
          $region29: #{pan_forward.42} parent=27 // pred_check
            _
          $region30: #{pan_forward.42} parent=27 // pred_check_branch
            %180 = sbr.rel (0) target = $region32
          $region31: #{pan_forward.42} parent=27 // pred_region
            // Predicated region
            $region33: #{pan_forward.42} parent=31 // pred_check
              _
            $region34: #{pan_forward.42} parent=31 // pred_check_branch
              %182 = sbr.rel (0) target = $region36
            $region35: #{pan_forward.42} parent=31 // pred_region
              loop: start=0, step=1, limit=1
              $region37: #{pan_forward.42} parent=35 // loop_pre_header
                _
              $region38: #{pan_forward.42} parent=35 // loop_header
                %s184 = sphi 0, %s188
                %p185 = scmp.ge.s32.totalorder %s184, 1
                %s189 = sphi %s178, %s178
                %s190 = sphi %s170, %s170
              $region39: #{pan_forward.42} parent=35 // loop_header_branch
                %187 = sbr.rel (%p185) target = $region43
              $region40: #{pan_forward.42} parent=35 // loop_body
                %v191 = vld [vmem:[%s189] sm:$0xff]
                %192 = vst [vmem:[%s190] sm:$0xff] %v191
                %v193 = vld [vmem:[%s189 + $0x8] sm:$0xff]
                %194 = vst [vmem:[%s190 + $0x8] sm:$0xff] %v193
                %v195 = vld [vmem:[%s189 + $0x20] sm:$0xff]
                %196 = vst [vmem:[%s190 + $0x10] sm:$0xff] %v195
                %v197 = vld [vmem:[%s189 + $0x28] sm:$0xff]
                %198 = vst [vmem:[%s190 + $0x18] sm:$0xff] %v197
                %v199 = vld [vmem:[%s189 + $0x40] sm:$0xff]
                %200 = vst [vmem:[%s190 + $0x20] sm:$0xff] %v199
                %v201 = vld [vmem:[%s189 + $0x48] sm:$0xff]
                %202 = vst [vmem:[%s190 + $0x28] sm:$0xff] %v201
                %v203 = vld [vmem:[%s189 + $0x60] sm:$0xff]
                %204 = vst [vmem:[%s190 + $0x30] sm:$0xff] %v203
                %v205 = vld [vmem:[%s189 + $0x68] sm:$0xff]
                %206 = vst [vmem:[%s190 + $0x38] sm:$0xff] %v205
                %v207 = vld [vmem:[%s189 + $0x80] sm:$0xff]
                %208 = vst [vmem:[%s190 + $0x40] sm:$0xff] %v207
                %v209 = vld [vmem:[%s189 + $0x88] sm:$0xff]
                %210 = vst [vmem:[%s190 + $0x48] sm:$0xff] %v209
                %v211 = vld [vmem:[%s189 + $0xa0] sm:$0xff]
                %212 = vst [vmem:[%s190 + $0x50] sm:$0xff] %v211
                %v213 = vld [vmem:[%s189 + $0xa8] sm:$0xff]
                %214 = vst [vmem:[%s190 + $0x58] sm:$0xff] %v213
                %v215 = vld [vmem:[%s189 + $0xc0] sm:$0xff]
                %216 = vst [vmem:[%s190 + $0x60] sm:$0xff] %v215
                %v217 = vld [vmem:[%s189 + $0xc8] sm:$0xff]
                %218 = vst [vmem:[%s190 + $0x68] sm:$0xff] %v217
                %v219 = vld [vmem:[%s189 + $0xe0] sm:$0xff]
                %220 = vst [vmem:[%s190 + $0x70] sm:$0xff] %v219
                %v221 = vld [vmem:[%s189 + $0xe8] sm:$0xff]
                %222 = vst [vmem:[%s190 + $0x78] sm:$0xff] %v221
                %v223 = vld [vmem:[%s189 + $0x100] sm:$0xff]
                %224 = vst [vmem:[%s190 + $0x80] sm:$0xff] %v223
                %v225 = vld [vmem:[%s189 + $0x108] sm:$0xff]
                %226 = vst [vmem:[%s190 + $0x88] sm:$0xff] %v225
                %v227 = vld [vmem:[%s189 + $0x120] sm:$0xff]
                %228 = vst [vmem:[%s190 + $0x90] sm:$0xff] %v227
                %v229 = vld [vmem:[%s189 + $0x128] sm:$0xff]
                %230 = vst [vmem:[%s190 + $0x98] sm:$0xff] %v229
                %v231 = vld [vmem:[%s189 + $0x140] sm:$0xff]
                %232 = vst [vmem:[%s190 + $0xa0] sm:$0xff] %v231
                %v233 = vld [vmem:[%s189 + $0x148] sm:$0xff]
                %234 = vst [vmem:[%s190 + $0xa8] sm:$0xff] %v233
                %v235 = vld [vmem:[%s189 + $0x160] sm:$0xff]
                %236 = vst [vmem:[%s190 + $0xb0] sm:$0xff] %v235
                %v237 = vld [vmem:[%s189 + $0x168] sm:$0xff]
                %238 = vst [vmem:[%s190 + $0xb8] sm:$0xff] %v237
                %v239 = vld [vmem:[%s189 + $0x180] sm:$0xff]
                %240 = vst [vmem:[%s190 + $0xc0] sm:$0xff] %v239
                %v241 = vld [vmem:[%s189 + $0x188] sm:$0xff]
                %242 = vst [vmem:[%s190 + $0xc8] sm:$0xff] %v241
                %v243 = vld [vmem:[%s189 + $0x1a0] sm:$0xff]
                %244 = vst [vmem:[%s190 + $0xd0] sm:$0xff] %v243
                %v245 = vld [vmem:[%s189 + $0x1a8] sm:$0xff]
                %246 = vst [vmem:[%s190 + $0xd8] sm:$0xff] %v245
                %v247 = vld [vmem:[%s189 + $0x1c0] sm:$0xff]
                %248 = vst [vmem:[%s190 + $0xe0] sm:$0xff] %v247
                %v249 = vld [vmem:[%s189 + $0x1c8] sm:$0xff]
                %250 = vst [vmem:[%s190 + $0xe8] sm:$0xff] %v249
                %v251 = vld [vmem:[%s189 + $0x1e0] sm:$0xff]
                %252 = vst [vmem:[%s190 + $0xf0] sm:$0xff] %v251
                %v253 = vld [vmem:[%s189 + $0x1e8] sm:$0xff]
                %254 = vst [vmem:[%s190 + $0xf8] sm:$0xff] %v253
                %v255 = vld [vmem:[%s189 + $0x200] sm:$0xff]
                %256 = vst [vmem:[%s190 + $0x100] sm:$0xff] %v255
                %v257 = vld [vmem:[%s189 + $0x208] sm:$0xff]
                %258 = vst [vmem:[%s190 + $0x108] sm:$0xff] %v257
                %v259 = vld [vmem:[%s189 + $0x220] sm:$0xff]
                %260 = vst [vmem:[%s190 + $0x110] sm:$0xff] %v259
                %v261 = vld [vmem:[%s189 + $0x228] sm:$0xff]
                %262 = vst [vmem:[%s190 + $0x118] sm:$0xff] %v261
              $region41: #{pan_forward.42} parent=35 // loop_footer
                %s188 = sadd.s32 1, %s184
              $region42: #{pan_forward.42} parent=35 // loop_footer_branch
                %183 = sbr.rel target = $region38
              $region43: #{pan_forward.42} parent=35 // loop_exit
                _
            $region36: #{pan_forward.42} parent=31 // pred_fallthru
              _
            // Predicated region
            $region44: #{pan_forward.42} parent=31 // pred_check
              _
            $region45: #{pan_forward.42} parent=31 // pred_check_branch
              %264 = sbr.rel target = $region47
            $region46: #{pan_forward.42} parent=31 // pred_region
              _
            $region47: #{pan_forward.42} parent=31 // pred_fallthru
              _
          $region32: #{pan_forward.42} parent=27 // pred_fallthru
            _
          %265 = vnop
        $region28: #{pan_forward.42} parent=23 // pred_fallthru
          _
      $region24: #{pan_forward.42} parent=5 // pred_fallthru
        _
      %p266 = scmp.le.s32.totalorder 1, %s9
      %p267 = scmp.lt.s32.totalorder %s9, 5
      %p268 = pnand %p266, %p267
      %p269 = pneg %p268
      // Predicated region
      $region48: #{pan_forward.42} parent=5 // pred_check
        _
      $region49: #{pan_forward.42} parent=5 // pred_check_branch
        %271 = sbr.rel (%p268) target = $region51
      $region50: #{pan_forward.42} parent=5 // pred_region
        %s272 = ssub.s32 %s9, 1
        %s273 = sand.u32 %s71, 1
        %s274 = sand.u32 %s71, 1
        %s275 = smul.addr %s274, 288
        %s276 = scalar_lea.vmem [#allocation3], %s275
        // Predicated region
        $region52: #{pan_forward.42} parent=50 // pred_check
          %p277 = pneg %p84
        $region53: #{pan_forward.42} parent=50 // pred_check_branch
          %279 = sbr.rel (%p277) target = $region55
        $region54: #{pan_forward.42} parent=50 // pred_region
          _
        $region55: #{pan_forward.42} parent=50 // pred_fallthru
          _
        %s280 = smul.u32 2, %s21
        %p281 = scmp.lt.s32.totalorder %s280, 1
        %s282 = scalar_select %p281, %s280, 1
        %s283 = smul.addr %s282, 4
        %s284 = scalar_lea.vmem %s0, %s283
        %p285 = pneg %p54
        %p286 = pneg %p51
        %s287 = sand.u32 %s71, 1
        %s288 = sand.u32 %s71, 1
        %s289 = smul.addr %s288, 288
        %s290 = scalar_lea.vmem [#allocation3], %s289
        %p291 = pneg %p84
        %p292 = pneg %p81
        %p293 = pneg %p105
        %p294 = pneg %p102
        %p295 = pneg %p133
        %p296 = pneg %p130
        %s297 = sand.u32 %s120, 1
        %s298 = sand.u32 %s120, 1
        %s299 = smul.addr %s298, 32
        %s300 = scalar_lea.vmem [#allocation4], %s299
        %s301 = smul.u32 2, %s21
        %p302 = scmp.lt.s32.totalorder %s301, 1
        %s303 = scalar_select %p302, %s301, 1
        %s304 = smul.addr %s303, 4
        %s305 = scalar_lea.vmem %s0, %s304
        %s306 = smul.u32 2, %s21
        %s307 = smul.u32 18, %s21
        %s308 = smul.u32 4, %s20
        %s309 = smul.u32 4, %s20
        %p311 = scmp.eq.s32.totalorder %s21, 0
        // Predicated region
        $region56: #{pan_forward.42} parent=50 // pred_check
          %p312 = pneg %p311
        $region57: #{pan_forward.42} parent=50 // pred_check_branch
          %314 = sbr.rel (%p312) target = $region59
        $region58: #{pan_forward.42} parent=50 // pred_region
          %315 = vst [vmem:[#allocation2] sm:$0xff] 0.0
          %316 = vst [vmem:[#allocation2 + $0x8] sm:$0xff] 0.0
          %317 = vst [vmem:[#allocation2 + $0x10] sm:$0xff] 0.0
          %318 = vst [vmem:[#allocation2 + $0x18] sm:$0xff] 0.0
          %319 = vst [vmem:[#allocation2 + $0x20] sm:$0xff] 0.0
          %320 = vst [vmem:[#allocation2 + $0x28] sm:$0xff] 0.0
          %321 = vst [vmem:[#allocation2 + $0x30] sm:$0xff] 0.0
          %322 = vst [vmem:[#allocation2 + $0x38] sm:$0xff] 0.0
        $region59: #{pan_forward.42} parent=50 // pred_fallthru
          _
        %v323 = vld [vmem:[#allocation2] sm:$0xff]
        %v324 = vld [vmem:[#allocation2 + $0x8] sm:$0xff]
        %v325 = vld [vmem:[#allocation2 + $0x10] sm:$0xff]
        %v326 = vld [vmem:[#allocation2 + $0x18] sm:$0xff]
        %v327 = vld [vmem:[#allocation2 + $0x20] sm:$0xff]
        %v328 = vld [vmem:[#allocation2 + $0x28] sm:$0xff]
        %v329 = vld [vmem:[#allocation2 + $0x30] sm:$0xff]
        %v330 = vld [vmem:[#allocation2 + $0x38] sm:$0xff]
        %v331 = vld [vmem:[%s305] sm:$0xff]
        %v332 = vld [vmem:[%s305 + $0x8] sm:$0xff]
        %v333 = vld [vmem:[%s276] sm:$0xff]
        %v334 = vld [vmem:[%s276 + $0x8] sm:$0xff]
        %v335 = vld [vmem:[%s276 + $0x10] sm:$0xff]
        %v336 = vld [vmem:[%s276 + $0x18] sm:$0xff]
        %v337 = vld [vmem:[%s276 + $0x20] sm:$0xff]
        %v338 = vld [vmem:[%s276 + $0x28] sm:$0xff]
        %v339 = vld [vmem:[%s276 + $0x30] sm:$0xff]
        %v340 = vld [vmem:[%s276 + $0x38] sm:$0xff]
        %v341 = vld [vmem:[%s276 + $0x40] sm:$0xff]
        %v342 = vld [vmem:[%s276 + $0x48] sm:$0xff]
        %v343 = vld [vmem:[%s276 + $0x50] sm:$0xff]
        %v344 = vld [vmem:[%s276 + $0x58] sm:$0xff]
        %v345 = vld [vmem:[%s276 + $0x60] sm:$0xff]
        %v346 = vld [vmem:[%s276 + $0x68] sm:$0xff]
        %v347 = vld [vmem:[%s276 + $0x70] sm:$0xff]
        %v348 = vld [vmem:[%s276 + $0x78] sm:$0xff]
        %v349 = vld [vmem:[%s276 + $0x80] sm:$0xff]
        %v350 = vld [vmem:[%s276 + $0x88] sm:$0xff]
        %v351 = vld [vmem:[%s276 + $0x90] sm:$0xff]
        %v352 = vld [vmem:[%s276 + $0x98] sm:$0xff]
        %v353 = vld [vmem:[%s276 + $0xa0] sm:$0xff]
        %v354 = vld [vmem:[%s276 + $0xa8] sm:$0xff]
        %v355 = vld [vmem:[%s276 + $0xb0] sm:$0xff]
        %v356 = vld [vmem:[%s276 + $0xb8] sm:$0xff]
        %v357 = vld [vmem:[%s276 + $0xc0] sm:$0xff]
        %v358 = vld [vmem:[%s276 + $0xc8] sm:$0xff]
        %v359 = vld [vmem:[%s276 + $0xd0] sm:$0xff]
        %v360 = vld [vmem:[%s276 + $0xd8] sm:$0xff]
        %v361 = vld [vmem:[%s276 + $0xe0] sm:$0xff]
        %v362 = vld [vmem:[%s276 + $0xe8] sm:$0xff]
        %v363 = vld [vmem:[%s276 + $0xf0] sm:$0xff]
        %v364 = vld [vmem:[%s276 + $0xf8] sm:$0xff]
        %v365 = vld [vmem:[%s276 + $0x100] sm:$0xff]
        %v366 = vld [vmem:[%s276 + $0x108] sm:$0xff]
        %v367 = vld [vmem:[%s276 + $0x110] sm:$0xff]
        %v368 = vld [vmem:[%s276 + $0x118] sm:$0xff]
        %v371 = vunpack.c.l.b16 %v331
        %v372 = vunpack.c.h.b16 %v331
        %v373 = vunpack.c.l.b16 %v332
        %v374 = vunpack.c.h.b16 %v332
        %v375 = vpack.c.b16 %v373, %v371
        %v376 = vpack.c.b16 %v374, %v372
        %v414 = vunpack.c.l.b16 %v333
        %v415 = vunpack.c.h.b16 %v333
        %v416 = vunpack.c.l.b16 %v334
        %v417 = vunpack.c.h.b16 %v334
        %v418 = vunpack.c.l.b16 %v335
        %v419 = vunpack.c.h.b16 %v335
        %v420 = vunpack.c.l.b16 %v336
        %v421 = vunpack.c.h.b16 %v336
        %v422 = vunpack.c.l.b16 %v337
        %v423 = vunpack.c.h.b16 %v337
        %v424 = vunpack.c.l.b16 %v338
        %v425 = vunpack.c.h.b16 %v338
        %v426 = vunpack.c.l.b16 %v339
        %v427 = vunpack.c.h.b16 %v339
        %v428 = vunpack.c.l.b16 %v340
        %v429 = vunpack.c.h.b16 %v340
        %v430 = vunpack.c.l.b16 %v341
        %v431 = vunpack.c.h.b16 %v341
        %v432 = vunpack.c.l.b16 %v342
        %v433 = vunpack.c.h.b16 %v342
        %v434 = vunpack.c.l.b16 %v343
        %v435 = vunpack.c.h.b16 %v343
        %v436 = vunpack.c.l.b16 %v344
        %v437 = vunpack.c.h.b16 %v344
        %v438 = vunpack.c.l.b16 %v345
        %v439 = vunpack.c.h.b16 %v345
        %v440 = vunpack.c.l.b16 %v346
        %v441 = vunpack.c.h.b16 %v346
        %v442 = vunpack.c.l.b16 %v347
        %v443 = vunpack.c.h.b16 %v347
        %v444 = vunpack.c.l.b16 %v348
        %v445 = vunpack.c.h.b16 %v348
        %v446 = vunpack.c.l.b16 %v349
        %v447 = vunpack.c.h.b16 %v349
        %v448 = vunpack.c.l.b16 %v350
        %v449 = vunpack.c.h.b16 %v350
        %v450 = vunpack.c.l.b16 %v351
        %v451 = vunpack.c.h.b16 %v351
        %v452 = vunpack.c.l.b16 %v352
        %v453 = vunpack.c.h.b16 %v352
        %v454 = vunpack.c.l.b16 %v353
        %v455 = vunpack.c.h.b16 %v353
        %v456 = vunpack.c.l.b16 %v354
        %v457 = vunpack.c.h.b16 %v354
        %v458 = vunpack.c.l.b16 %v355
        %v459 = vunpack.c.h.b16 %v355
        %v460 = vunpack.c.l.b16 %v356
        %v461 = vunpack.c.h.b16 %v356
        %v462 = vunpack.c.l.b16 %v357
        %v463 = vunpack.c.h.b16 %v357
        %v464 = vunpack.c.l.b16 %v358
        %v465 = vunpack.c.h.b16 %v358
        %v466 = vunpack.c.l.b16 %v359
        %v467 = vunpack.c.h.b16 %v359
        %v468 = vunpack.c.l.b16 %v360
        %v469 = vunpack.c.h.b16 %v360
        %v470 = vunpack.c.l.b16 %v361
        %v471 = vunpack.c.h.b16 %v361
        %v472 = vunpack.c.l.b16 %v362
        %v473 = vunpack.c.h.b16 %v362
        %v474 = vunpack.c.l.b16 %v363
        %v475 = vunpack.c.h.b16 %v363
        %v476 = vunpack.c.l.b16 %v364
        %v477 = vunpack.c.h.b16 %v364
        %v478 = vunpack.c.l.b16 %v365
        %v479 = vunpack.c.h.b16 %v365
        %v480 = vunpack.c.l.b16 %v366
        %v481 = vunpack.c.h.b16 %v366
        %v482 = vunpack.c.l.b16 %v367
        %v483 = vunpack.c.h.b16 %v367
        %v484 = vunpack.c.l.b16 %v368
        %v485 = vunpack.c.h.b16 %v368
        %v486 = vpack.c.b16 %v418, %v414
        %v487 = vpack.c.b16 %v419, %v415
        %v488 = vpack.c.b16 %v420, %v416
        %v489 = vpack.c.b16 %v421, %v417
        %v490 = vpack.c.b16 %v426, %v422
        %v491 = vpack.c.b16 %v427, %v423
        %v492 = vpack.c.b16 %v428, %v424
        %v493 = vpack.c.b16 %v429, %v425
        %v494 = vpack.c.b16 %v434, %v430
        %v495 = vpack.c.b16 %v435, %v431
        %v496 = vpack.c.b16 %v436, %v432
        %v497 = vpack.c.b16 %v437, %v433
        %v498 = vpack.c.b16 %v442, %v438
        %v499 = vpack.c.b16 %v443, %v439
        %v500 = vpack.c.b16 %v444, %v440
        %v501 = vpack.c.b16 %v445, %v441
        %v502 = vpack.c.b16 %v450, %v446
        %v503 = vpack.c.b16 %v451, %v447
        %v504 = vpack.c.b16 %v452, %v448
        %v505 = vpack.c.b16 %v453, %v449
        %v506 = vpack.c.b16 %v458, %v454
        %v507 = vpack.c.b16 %v459, %v455
        %v508 = vpack.c.b16 %v460, %v456
        %v509 = vpack.c.b16 %v461, %v457
        %v510 = vpack.c.b16 %v466, %v462
        %v511 = vpack.c.b16 %v467, %v463
        %v512 = vpack.c.b16 %v468, %v464
        %v513 = vpack.c.b16 %v469, %v465
        %v514 = vpack.c.b16 %v474, %v470
        %v515 = vpack.c.b16 %v475, %v471
        %v516 = vpack.c.b16 %v476, %v472
        %v517 = vpack.c.b16 %v477, %v473
        %v518 = vpack.c.b16 %v482, %v478
        %v519 = vpack.c.b16 %v483, %v479
        %v520 = vpack.c.b16 %v484, %v480
        %v521 = vpack.c.b16 %v485, %v481
        %vm558 = vcmask 130048
        %v560 = vsel %vm558, %v376, 0
        %562 = vmatpush.bf16.msra.mxu0 %v514
        %563 = vmatpush.bf16.msra.mxu0 %v510
        %564 = vmatpush.bf16.msra.mxu0 %v506
        %565 = vmatpush.bf16.msra.mxu0 %v502
        %566 = vmatpush.bf16.msra.mxu0 %v498
        %567 = vmatpush.bf16.msra.mxu0 %v494
        %568 = vmatpush.bf16.msra.mxu0 %v490
        %569 = vmatpush.bf16.msra.mxu0 %v486
        %570 = vmatmul.bf16.gmra.mxu0 %v375
        %v571 = vpop.f32.mrf.mxu0
        %v572 = vadd.f32 0.0, %v571
        %v573 = vpop.f32.mrf.mxu0
        %v574 = vadd.f32 0.0, %v573
        %575 = vdwg.mxu0
        %576 = vmatpush.bf16.msra.mxu0 0
        %577 = vmatpush.bf16.msra.mxu0 0
        %578 = vmatpush.bf16.msra.mxu0 0
        %579 = vmatpush.bf16.msra.mxu0 0
        %580 = vmatpush.bf16.msra.mxu0 0
        %581 = vmatpush.bf16.msra.mxu0 0
        %582 = vmatpush.bf16.msra.mxu0 0
        %583 = vmatpush.bf16.msra.mxu0 %v518
        %584 = vmatmul.bf16.gmra.mxu0 %v560
        %v585 = vpop.f32.mrf.mxu0
        %v586 = vadd.f32 %v572, %v585
        %v587 = vpop.f32.mrf.mxu0
        %v588 = vadd.f32 %v574, %v587
        %589 = vdwg.mxu0
        %590 = vmatpush.bf16.msra.mxu0 %v515
        %591 = vmatpush.bf16.msra.mxu0 %v511
        %592 = vmatpush.bf16.msra.mxu0 %v507
        %593 = vmatpush.bf16.msra.mxu0 %v503
        %594 = vmatpush.bf16.msra.mxu0 %v499
        %595 = vmatpush.bf16.msra.mxu0 %v495
        %596 = vmatpush.bf16.msra.mxu0 %v491
        %597 = vmatpush.bf16.msra.mxu0 %v487
        %598 = vmatmul.bf16.gmra.mxu0 %v375
        %v599 = vpop.f32.mrf.mxu0
        %v600 = vadd.f32 0.0, %v599
        %v601 = vpop.f32.mrf.mxu0
        %v602 = vadd.f32 0.0, %v601
        %603 = vdwg.mxu0
        %604 = vmatpush.bf16.msra.mxu0 0
        %605 = vmatpush.bf16.msra.mxu0 0
        %606 = vmatpush.bf16.msra.mxu0 0
        %607 = vmatpush.bf16.msra.mxu0 0
        %608 = vmatpush.bf16.msra.mxu0 0
        %609 = vmatpush.bf16.msra.mxu0 0
        %610 = vmatpush.bf16.msra.mxu0 0
        %611 = vmatpush.bf16.msra.mxu0 %v519
        %612 = vmatmul.bf16.gmra.mxu0 %v560
        %v613 = vpop.f32.mrf.mxu0
        %v614 = vadd.f32 %v600, %v613
        %v615 = vpop.f32.mrf.mxu0
        %v616 = vadd.f32 %v602, %v615
        %617 = vdwg.mxu0
        %618 = vmatpush.bf16.msra.mxu0 %v516
        %619 = vmatpush.bf16.msra.mxu0 %v512
        %620 = vmatpush.bf16.msra.mxu0 %v508
        %621 = vmatpush.bf16.msra.mxu0 %v504
        %622 = vmatpush.bf16.msra.mxu0 %v500
        %623 = vmatpush.bf16.msra.mxu0 %v496
        %624 = vmatpush.bf16.msra.mxu0 %v492
        %625 = vmatpush.bf16.msra.mxu0 %v488
        %626 = vmatmul.bf16.gmra.mxu0 %v375
        %v627 = vpop.f32.mrf.mxu0
        %v628 = vadd.f32 0.0, %v627
        %v629 = vpop.f32.mrf.mxu0
        %v630 = vadd.f32 0.0, %v629
        %631 = vdwg.mxu0
        %632 = vmatpush.bf16.msra.mxu0 0
        %633 = vmatpush.bf16.msra.mxu0 0
        %634 = vmatpush.bf16.msra.mxu0 0
        %635 = vmatpush.bf16.msra.mxu0 0
        %636 = vmatpush.bf16.msra.mxu0 0
        %637 = vmatpush.bf16.msra.mxu0 0
        %638 = vmatpush.bf16.msra.mxu0 0
        %639 = vmatpush.bf16.msra.mxu0 %v520
        %640 = vmatmul.bf16.gmra.mxu0 %v560
        %v641 = vpop.f32.mrf.mxu0
        %v642 = vadd.f32 %v628, %v641
        %v643 = vpop.f32.mrf.mxu0
        %v644 = vadd.f32 %v630, %v643
        %645 = vdwg.mxu0
        %646 = vmatpush.bf16.msra.mxu0 %v517
        %647 = vmatpush.bf16.msra.mxu0 %v513
        %648 = vmatpush.bf16.msra.mxu0 %v509
        %649 = vmatpush.bf16.msra.mxu0 %v505
        %650 = vmatpush.bf16.msra.mxu0 %v501
        %651 = vmatpush.bf16.msra.mxu0 %v497
        %652 = vmatpush.bf16.msra.mxu0 %v493
        %653 = vmatpush.bf16.msra.mxu0 %v489
        %654 = vmatmul.bf16.gmra.mxu0 %v375
        %v655 = vpop.f32.mrf.mxu0
        %v656 = vadd.f32 0.0, %v655
        %v657 = vpop.f32.mrf.mxu0
        %v658 = vadd.f32 0.0, %v657
        %659 = vdwg.mxu0
        %660 = vmatpush.bf16.msra.mxu0 0
        %661 = vmatpush.bf16.msra.mxu0 0
        %662 = vmatpush.bf16.msra.mxu0 0
        %663 = vmatpush.bf16.msra.mxu0 0
        %664 = vmatpush.bf16.msra.mxu0 0
        %665 = vmatpush.bf16.msra.mxu0 0
        %666 = vmatpush.bf16.msra.mxu0 0
        %667 = vmatpush.bf16.msra.mxu0 %v521
        %668 = vmatmul.bf16.gmra.mxu0 %v560
        %v669 = vpop.f32.mrf.mxu0
        %v670 = vadd.f32 %v656, %v669
        %v671 = vpop.f32.mrf.mxu0
        %v672 = vadd.f32 %v658, %v671
        %673 = vdwg.mxu0
        %v674 = vadd.f32 %v323, %v586
        %v675 = vadd.f32 %v324, %v614
        %v676 = vadd.f32 %v325, %v642
        %v677 = vadd.f32 %v326, %v670
        %v678 = vadd.f32 %v327, %v588
        %v679 = vadd.f32 %v328, %v616
        %v680 = vadd.f32 %v329, %v644
        %v681 = vadd.f32 %v330, %v672
        %682 = vst [vmem:[#allocation2] sm:$0xff] %v674
        %683 = vst [vmem:[#allocation2 + $0x8] sm:$0xff] %v675
        %684 = vst [vmem:[#allocation2 + $0x10] sm:$0xff] %v676
        %685 = vst [vmem:[#allocation2 + $0x18] sm:$0xff] %v677
        %686 = vst [vmem:[#allocation2 + $0x20] sm:$0xff] %v678
        %687 = vst [vmem:[#allocation2 + $0x28] sm:$0xff] %v679
        %688 = vst [vmem:[#allocation2 + $0x30] sm:$0xff] %v680
        %689 = vst [vmem:[#allocation2 + $0x38] sm:$0xff] %v681
        // Predicated region
        $region60: #{pan_forward.42} parent=50 // pred_check
          %p690 = pneg %p311
        $region61: #{pan_forward.42} parent=50 // pred_check_branch
          %692 = sbr.rel (%p690) target = $region63
        $region62: #{pan_forward.42} parent=50 // pred_region
          %v693 = vld [vmem:[#allocation2] sm:$0xff]
          %v694 = vld [vmem:[#allocation2 + $0x8] sm:$0xff]
          %v695 = vld [vmem:[#allocation2 + $0x10] sm:$0xff]
          %v696 = vld [vmem:[#allocation2 + $0x18] sm:$0xff]
          %v697 = vld [vmem:[#allocation2 + $0x20] sm:$0xff]
          %v698 = vld [vmem:[#allocation2 + $0x28] sm:$0xff]
          %v699 = vld [vmem:[#allocation2 + $0x30] sm:$0xff]
          %v700 = vld [vmem:[#allocation2 + $0x38] sm:$0xff]
          %v701 = vld [vmem:[%s2] sm:$0xff]
          %v702 = vld [vmem:[%s2 + $0x8] sm:$0xff]
          %704 = vset.pattern.permute.xlu0 0
          %705 = vperm.xlu0 %704, %v701
          %v706 = vpop.permute.xlu0 %705
          %709 = vset.pattern.permute.xlu0 0
          %710 = vperm.xlu0 %709, %v702
          %v711 = vpop.permute.xlu0 %710
          %v713 = vadd.f32 %v693, %v706
          %v714 = vadd.f32 %v694, %v706
          %v715 = vadd.f32 %v695, %v706
          %v716 = vadd.f32 %v696, %v706
          %v717 = vadd.f32 %v697, %v711
          %v718 = vadd.f32 %v698, %v711
          %v719 = vadd.f32 %v699, %v711
          %v720 = vadd.f32 %v700, %v711
          %vm721 = vcmp.ge.f32.partialorder %v713, 0.0
          %vm722 = vcmp.ge.f32.partialorder %v714, 0.0
          %vm723 = vcmp.ge.f32.partialorder %v715, 0.0
          %vm724 = vcmp.ge.f32.partialorder %v716, 0.0
          %vm725 = vcmp.ge.f32.partialorder %v717, 0.0
          %vm726 = vcmp.ge.f32.partialorder %v718, 0.0
          %vm727 = vcmp.ge.f32.partialorder %v719, 0.0
          %vm728 = vcmp.ge.f32.partialorder %v720, 0.0
          %v729 = vmul.f32 %v713, 0.2
          %v730 = vmul.f32 %v714, 0.2
          %v731 = vmul.f32 %v715, 0.2
          %v732 = vmul.f32 %v716, 0.2
          %v733 = vmul.f32 %v717, 0.2
          %v734 = vmul.f32 %v718, 0.2
          %v735 = vmul.f32 %v719, 0.2
          %v736 = vmul.f32 %v720, 0.2
          %v737 = vsel %vm721, %v713, %v729
          %v738 = vsel %vm722, %v714, %v730
          %v739 = vsel %vm723, %v715, %v731
          %v740 = vsel %vm724, %v716, %v732
          %v741 = vsel %vm725, %v717, %v733
          %v742 = vsel %vm726, %v718, %v734
          %v743 = vsel %vm727, %v719, %v735
          %v744 = vsel %vm728, %v720, %v736
          %v745 = vpack.c.bf16 %v738, %v737
          %v746 = vpack.c.bf16 %v740, %v739
          %v747 = vpack.c.bf16 %v742, %v741
          %v748 = vpack.c.bf16 %v744, %v743
          %749 = vst [vmem:[%s300] sm:$0xff] %v745
          %750 = vst [vmem:[%s300 + $0x8] sm:$0xff] %v746
          %751 = vst [vmem:[%s300 + $0x10] sm:$0xff] %v747
          %752 = vst [vmem:[%s300 + $0x18] sm:$0xff] %v748
        $region63: #{pan_forward.42} parent=50 // pred_fallthru
          _
        %s753 = sand.u32 %s120, 1
        %s754 = sand.u32 %s120, 1
        %s755 = smul.addr %s754, 32
        %s756 = scalar_lea.vmem [#allocation4], %s755
        // Predicated region
        $region64: #{pan_forward.42} parent=50 // pred_check
          %p757 = pneg %p130
        $region65: #{pan_forward.42} parent=50 // pred_check_branch
          %759 = sbr.rel (%p757) target = $region67
        $region66: #{pan_forward.42} parent=50 // pred_region
          %s760 = smul.u32 4, %s20
          %s761 = smul.addr %s19, 16
          %s762 = sadd.s32 %s760, %s761
          %s763 = smul.addr %s762, 4
          %s764 = scalar_lea.vmem %s3, %s763
          // Predicated region
          $region68: #{pan_forward.42} parent=66 // pred_check
            _
          $region69: #{pan_forward.42} parent=66 // pred_check_branch
            %766 = sbr.rel (0) target = $region71
          $region70: #{pan_forward.42} parent=66 // pred_region
            // Predicated region
            $region72: #{pan_forward.42} parent=70 // pred_check
              _
            $region73: #{pan_forward.42} parent=70 // pred_check_branch
              %768 = sbr.rel (0) target = $region75
            $region74: #{pan_forward.42} parent=70 // pred_region
              loop: start=0, step=1, limit=1
              $region76: #{pan_forward.42} parent=74 // loop_pre_header
                _
              $region77: #{pan_forward.42} parent=74 // loop_header
                %s770 = sphi 0, %s774
                %p771 = scmp.ge.s32.totalorder %s770, 1
                %s775 = sphi %s756, %s756
                %s776 = sphi %s764, %s764
              $region78: #{pan_forward.42} parent=74 // loop_header_branch
                %773 = sbr.rel (%p771) target = $region82
              $region79: #{pan_forward.42} parent=74 // loop_body
                %v777 = vld [vmem:[%s775] sm:$0xff]
                %778 = vst [vmem:[%s776] sm:$0xff] %v777
                %v779 = vld [vmem:[%s775 + $0x8] sm:$0xff]
                %780 = vst [vmem:[%s776 + $0x8] sm:$0xff] %v779
                %v781 = vld [vmem:[%s775 + $0x10] sm:$0xff]
                %782 = vst [vmem:[%s776 + $0x20] sm:$0xff] %v781
                %v783 = vld [vmem:[%s775 + $0x18] sm:$0xff]
                %784 = vst [vmem:[%s776 + $0x28] sm:$0xff] %v783
              $region80: #{pan_forward.42} parent=74 // loop_footer
                %s774 = sadd.s32 1, %s770
              $region81: #{pan_forward.42} parent=74 // loop_footer_branch
                %769 = sbr.rel target = $region77
              $region82: #{pan_forward.42} parent=74 // loop_exit
                _
            $region75: #{pan_forward.42} parent=70 // pred_fallthru
              _
            // Predicated region
            $region83: #{pan_forward.42} parent=70 // pred_check
              _
            $region84: #{pan_forward.42} parent=70 // pred_check_branch
              %786 = sbr.rel target = $region86
            $region85: #{pan_forward.42} parent=70 // pred_region
              _
            $region86: #{pan_forward.42} parent=70 // pred_fallthru
              _
          $region71: #{pan_forward.42} parent=66 // pred_fallthru
            _
          %787 = vnop
        $region67: #{pan_forward.42} parent=50 // pred_fallthru
          _
      $region51: #{pan_forward.42} parent=5 // pred_fallthru
        _
      %p788 = scmp.le.s32.totalorder 2, %s9
      // Predicated region
      $region87: #{pan_forward.42} parent=5 // pred_check
        %p789 = pneg %p788
      $region88: #{pan_forward.42} parent=5 // pred_check_branch
        %791 = sbr.rel (%p789) target = $region90
      $region89: #{pan_forward.42} parent=5 // pred_region
        %s792 = ssub.s32 %s9, 2
        // Predicated region
        $region91: #{pan_forward.42} parent=89 // pred_check
          %p793 = pneg %p136
        $region92: #{pan_forward.42} parent=89 // pred_check_branch
          %795 = sbr.rel (%p793) target = $region94
        $region93: #{pan_forward.42} parent=89 // pred_region
          %s796 = sand.u32 %s121, 1
          %s797 = sand.u32 %s121, 1
          %s798 = smul.addr %s797, 32
          %s799 = scalar_lea.vmem [#allocation4], %s798
        $region94: #{pan_forward.42} parent=89 // pred_fallthru
          _
      $region90: #{pan_forward.42} parent=5 // pred_fallthru
        _
    $region6: #{pan_forward.42} parent=1 // loop_footer
      %s13 = sadd.s32 1, %s9
    $region7: #{pan_forward.42} parent=1 // loop_footer_branch
      %8 = sbr.rel target = $region3
    $region8: #{pan_forward.42} parent=1 // loop_exit
      _

// kernel: pan_forward.43
$region0: #{pan_forward.43}
  #allocation0 [shape = 'u32[]', space=smem, size = 0x4, offset = 0x4, fixed_abs, tag = 'smem constant byte address 0x4 - core index']
  #allocation1 [shape = 'u32[72,128]{1,0:T(1,128)}', space=vmem, size = 0x9000, scoped, tag = 'internal scratch']
  #allocation2 [shape = 'f32[32,128]{1,0:T(8,128)}', space=vmem, size = 0x4000, scoped, tag = 'scratch operand']
  %s0 = inlined_call_operand.vmem [shape: bf16[32,16], index: 0, kind: input, shape index: {}]
  %s1 = inlined_call_operand.vmem [shape: bf16[1,16,128], index: 1, kind: input, shape index: {}]
  %s2 = inlined_call_operand.vmem [shape: f32[1,32,128], index: 2, kind: output, shape index: {}]
  %s3 = sld [smem:[#allocation0]]
  $region26: #{pan_forward.43} parent=0
    _
  %s5 = ssub.s32 1, %s3
  %s6 = scalar_select 0, %s5, %s3
  // Predicated region
  $region2: #{pan_forward.43} parent=0 // pred_check
    _
  $region3: #{pan_forward.43} parent=0 // pred_check_branch
    %8 = sbr.rel (0) target = $region5
  $region4: #{pan_forward.43} parent=0 // pred_region
    _
  $region5: #{pan_forward.43} parent=0 // pred_fallthru
    _
  // Predicated region
  $region6: #{pan_forward.43} parent=0 // pred_check
    _
  $region7: #{pan_forward.43} parent=0 // pred_check_branch
    %10 = sbr.rel (0) target = $region9
  $region8: #{pan_forward.43} parent=0 // pred_region
    _
  $region9: #{pan_forward.43} parent=0 // pred_fallthru
    _
  %p12 = scmp.eq.s32.totalorder 0, 0
  // Predicated region
  $region10: #{pan_forward.43} parent=0 // pred_check
    %p13 = pneg %p12
  $region11: #{pan_forward.43} parent=0 // pred_check_branch
    %15 = sbr.rel (%p13) target = $region13
  $region12: #{pan_forward.43} parent=0 // pred_region
    %16 = vst [vmem:[#allocation2] sm:$0xff] 0.0
    %17 = vst [vmem:[#allocation2 + $0x8] sm:$0xff] 0.0
    %18 = vst [vmem:[#allocation2 + $0x10] sm:$0xff] 0.0
    %19 = vst [vmem:[#allocation2 + $0x18] sm:$0xff] 0.0
  $region13: #{pan_forward.43} parent=0 // pred_fallthru
    _
  %v20 = vld [vmem:[#allocation2] sm:$0xff]
  %v21 = vld [vmem:[#allocation2 + $0x8] sm:$0xff]
  %v22 = vld [vmem:[#allocation2 + $0x10] sm:$0xff]
  %v23 = vld [vmem:[#allocation2 + $0x18] sm:$0xff]
  %v24 = vld [vmem:[%s0] sm:$0xf]
  %v25 = vld [vmem:[%s0 + $0x4] sm:$0xf]
  %v26 = vld [vmem:[%s0 + $0x8] sm:$0xf]
  %v27 = vld [vmem:[%s0 + $0xc] sm:$0xf]
  %v28 = vld [vmem:[%s1] sm:$0xf]
  %v29 = vld [vmem:[%s1 + $0x4] sm:$0xf]
  %v34 = vunpack.c.l.b16 %v24
  %v35 = vunpack.c.l.b16 %v25
  %v36 = vunpack.c.l.b16 %v26
  %v37 = vunpack.c.l.b16 %v27
  %v38 = vpack.c.b16 %v35, %v34
  %v39 = vpack.c.b16 %v37, %v36
  %v42 = vunpack.c.l.b16 %v28
  %v43 = vunpack.c.l.b16 %v29
  %v44 = vpack.c.b16 %v43, %v42
  %vm46 = vcmask 130048
  %v48 = vsel %vm46, %v38, 0
  %v51 = vsel %vm46, %v39, 0
  %53 = vmatpush.bf16.msra.mxu0 0
  %54 = vmatpush.bf16.msra.mxu0 0
  %55 = vmatpush.bf16.msra.mxu0 0
  %56 = vmatpush.bf16.msra.mxu0 0
  %57 = vmatpush.bf16.msra.mxu0 0
  %58 = vmatpush.bf16.msra.mxu0 0
  %59 = vmatpush.bf16.msra.mxu0 0
  %60 = vmatpush.bf16.msra.mxu0 %v44
  %61 = vmatmul.bf16.gmra.mxu0 %v48
  %v62 = vpop.f32.mrf.mxu0
  %v63 = vadd.f32 0.0, %v62
  %v64 = vpop.f32.mrf.mxu0
  %v65 = vadd.f32 0.0, %v64
  %66 = vmatmul.bf16.gmra.mxu0 %v51
  %v67 = vpop.f32.mrf.mxu0
  %v68 = vadd.f32 0.0, %v67
  %v69 = vpop.f32.mrf.mxu0
  %v70 = vadd.f32 0.0, %v69
  %71 = vdwg.mxu0
  %v72 = vadd.f32 %v20, %v63
  %v73 = vadd.f32 %v21, %v65
  %v74 = vadd.f32 %v22, %v68
  %v75 = vadd.f32 %v23, %v70
  %76 = vst [vmem:[#allocation2] sm:$0xff] %v72
  %77 = vst [vmem:[#allocation2 + $0x8] sm:$0xff] %v73
  %78 = vst [vmem:[#allocation2 + $0x10] sm:$0xff] %v74
  %79 = vst [vmem:[#allocation2 + $0x18] sm:$0xff] %v75
  // Predicated region
  $region14: #{pan_forward.43} parent=0 // pred_check
    %p80 = pneg %p12
  $region15: #{pan_forward.43} parent=0 // pred_check_branch
    %82 = sbr.rel (%p80) target = $region17
  $region16: #{pan_forward.43} parent=0 // pred_region
    %v83 = vld [vmem:[#allocation2] sm:$0xff]
    %v84 = vld [vmem:[#allocation2 + $0x8] sm:$0xff]
    %v85 = vld [vmem:[#allocation2 + $0x10] sm:$0xff]
    %v86 = vld [vmem:[#allocation2 + $0x18] sm:$0xff]
    %87 = vst [vmem:[%s2] sm:$0xff] %v83
    %88 = vst [vmem:[%s2 + $0x8] sm:$0xff] %v84
    %89 = vst [vmem:[%s2 + $0x10] sm:$0xff] %v85
    %90 = vst [vmem:[%s2 + $0x18] sm:$0xff] %v86
  $region17: #{pan_forward.43} parent=0 // pred_fallthru
    _
  // Predicated region
  $region18: #{pan_forward.43} parent=0 // pred_check
    _
  $region19: #{pan_forward.43} parent=0 // pred_check_branch
    %92 = sbr.rel (0) target = $region21
  $region20: #{pan_forward.43} parent=0 // pred_region
    _
  $region21: #{pan_forward.43} parent=0 // pred_fallthru
    _
  // Predicated region
  $region22: #{pan_forward.43} parent=0 // pred_check
    _
  $region23: #{pan_forward.43} parent=0 // pred_check_branch
    %94 = sbr.rel (0) target = $region25
  $region24: #{pan_forward.43} parent=0 // pred_region
    _
  $region25: #{pan_forward.43} parent=0 // pred_fallthru
    _

// kernel: squeeze.19
$region0: #{squeeze.19}
  %s0 = inlined_call_operand.vmem [shape: f32[1,32,192], index: 0, kind: input, shape index: {}]
  %s1 = inlined_call_operand.vmem [shape: f32[32,2,3,32], index: 1, kind: output, shape index: {}]
  $region1: #{squeeze.19} parent=0
    #allocation0 [shape = 'u8[262144]{0}', space=vmem, size = 0x40000, scoped, tag = 'scoped mem for output reshape']
    %v2 = vld [vmem:[%s0] sm:$0xff]
    %vm3 = vcmask 261120
    %4 = vst.msk [vmem:[#allocation0] ss:$16 sm:$0x3] %vm3, %v2
    %5 = vst.msk [vmem:[#allocation0] ss:$16 sm:$0xc] %vm3, %v2
    %6 = vst.msk [vmem:[#allocation0] ss:$16 sm:$0x30] %vm3, %v2
    %7 = vst.msk [vmem:[#allocation0] ss:$16 sm:$0xc0] %vm3, %v2
    %s8 = scalar_lea.vmem %s0, 8
    %v9 = vld [vmem:[%s8] sm:$0xff]
    %vm10 = vcmask 261120
    %s11 = scalar_lea.vmem [#allocation0], 9
    %12 = vst.msk [vmem:[%s11] ss:$16 sm:$0x3] %vm10, %v9
    %s13 = scalar_lea.vmem [#allocation0], 9
    %14 = vst.msk [vmem:[%s13] ss:$16 sm:$0xc] %vm10, %v9
    %s15 = scalar_lea.vmem [#allocation0], 9
    %16 = vst.msk [vmem:[%s15] ss:$16 sm:$0x30] %vm10, %v9
    %s17 = scalar_lea.vmem [#allocation0], 9
    %18 = vst.msk [vmem:[%s17] ss:$16 sm:$0xc0] %vm10, %v9
    %s19 = scalar_lea.vmem %s0, 16
    %v20 = vld [vmem:[%s19] sm:$0xff]
    %vm21 = vcmask 261120
    %s22 = scalar_lea.vmem [#allocation0], 128
    %23 = vst.msk [vmem:[%s22] ss:$16 sm:$0x3] %vm21, %v20
    %s24 = scalar_lea.vmem [#allocation0], 128
    %25 = vst.msk [vmem:[%s24] ss:$16 sm:$0xc] %vm21, %v20
    %s26 = scalar_lea.vmem [#allocation0], 128
    %27 = vst.msk [vmem:[%s26] ss:$16 sm:$0x30] %vm21, %v20
    %s28 = scalar_lea.vmem [#allocation0], 128
    %29 = vst.msk [vmem:[%s28] ss:$16 sm:$0xc0] %vm21, %v20
    %s30 = scalar_lea.vmem %s0, 24
    %v31 = vld [vmem:[%s30] sm:$0xff]
    %vm32 = vcmask 261120
    %s33 = scalar_lea.vmem [#allocation0], 137
    %34 = vst.msk [vmem:[%s33] ss:$16 sm:$0x3] %vm32, %v31
    %s35 = scalar_lea.vmem [#allocation0], 137
    %36 = vst.msk [vmem:[%s35] ss:$16 sm:$0xc] %vm32, %v31
    %s37 = scalar_lea.vmem [#allocation0], 137
    %38 = vst.msk [vmem:[%s37] ss:$16 sm:$0x30] %vm32, %v31
    %s39 = scalar_lea.vmem [#allocation0], 137
    %40 = vst.msk [vmem:[%s39] ss:$16 sm:$0xc0] %vm32, %v31
    %s41 = scalar_lea.vmem %s0, 32
    %v42 = vld [vmem:[%s41] sm:$0xff]
    %vm43 = vcmask 261120
    %s44 = scalar_lea.vmem [#allocation0], 256
    %45 = vst.msk [vmem:[%s44] ss:$16 sm:$0x3] %vm43, %v42
    %s46 = scalar_lea.vmem [#allocation0], 256
    %47 = vst.msk [vmem:[%s46] ss:$16 sm:$0xc] %vm43, %v42
    %s48 = scalar_lea.vmem [#allocation0], 256
    %49 = vst.msk [vmem:[%s48] ss:$16 sm:$0x30] %vm43, %v42
    %s50 = scalar_lea.vmem [#allocation0], 256
    %51 = vst.msk [vmem:[%s50] ss:$16 sm:$0xc0] %vm43, %v42
    %s52 = scalar_lea.vmem %s0, 40
    %v53 = vld [vmem:[%s52] sm:$0xff]
    %vm54 = vcmask 261120
    %s55 = scalar_lea.vmem [#allocation0], 265
    %56 = vst.msk [vmem:[%s55] ss:$16 sm:$0x3] %vm54, %v53
    %s57 = scalar_lea.vmem [#allocation0], 265
    %58 = vst.msk [vmem:[%s57] ss:$16 sm:$0xc] %vm54, %v53
    %s59 = scalar_lea.vmem [#allocation0], 265
    %60 = vst.msk [vmem:[%s59] ss:$16 sm:$0x30] %vm54, %v53
    %s61 = scalar_lea.vmem [#allocation0], 265
    %62 = vst.msk [vmem:[%s61] ss:$16 sm:$0xc0] %vm54, %v53
    %s63 = scalar_lea.vmem %s0, 48
    %v64 = vld [vmem:[%s63] sm:$0xff]
    %vm65 = vcmask 261120
    %s66 = scalar_lea.vmem [#allocation0], 384
    %67 = vst.msk [vmem:[%s66] ss:$16 sm:$0x3] %vm65, %v64
    %s68 = scalar_lea.vmem [#allocation0], 384
    %69 = vst.msk [vmem:[%s68] ss:$16 sm:$0xc] %vm65, %v64
    %s70 = scalar_lea.vmem [#allocation0], 384
    %71 = vst.msk [vmem:[%s70] ss:$16 sm:$0x30] %vm65, %v64
    %s72 = scalar_lea.vmem [#allocation0], 384
    %73 = vst.msk [vmem:[%s72] ss:$16 sm:$0xc0] %vm65, %v64
    %s74 = scalar_lea.vmem %s0, 56
    %v75 = vld [vmem:[%s74] sm:$0xff]
    %vm76 = vcmask 261120
    %s77 = scalar_lea.vmem [#allocation0], 393
    %78 = vst.msk [vmem:[%s77] ss:$16 sm:$0x3] %vm76, %v75
    %s79 = scalar_lea.vmem [#allocation0], 393
    %80 = vst.msk [vmem:[%s79] ss:$16 sm:$0xc] %vm76, %v75
    %s81 = scalar_lea.vmem [#allocation0], 393
    %82 = vst.msk [vmem:[%s81] ss:$16 sm:$0x30] %vm76, %v75
    %s83 = scalar_lea.vmem [#allocation0], 393
    %84 = vst.msk [vmem:[%s83] ss:$16 sm:$0xc0] %vm76, %v75
    %v85 = vld.sshfl [vmem:[%s0] sm:$0xff pattern:$0xb3a29180]
    %86 = vrot.lane.b32.xlu0 %v85, 96
    %v87 = vpop.permute.xlu0 %86
    %vm88 = vcmask 261120
    %s89 = scalar_lea.vmem [#allocation0], 1
    %90 = vst.msk [vmem:[%s89] ss:$9 sm:$0x3] %vm88, %v87
    %s91 = scalar_lea.vmem [#allocation0], 4294967295
    %92 = vst.msk [vmem:[%s91] ss:$9 sm:$0xc] %vm88, %v87
    %s93 = scalar_lea.vmem [#allocation0], 4294967293
    %94 = vst.msk [vmem:[%s93] ss:$9 sm:$0x30] %vm88, %v87
    %s95 = scalar_lea.vmem [#allocation0], 4294967291
    %96 = vst.msk [vmem:[%s95] ss:$9 sm:$0xc0] %vm88, %v87
    %s97 = scalar_lea.vmem %s0, 4
    %v98 = vld.sshfl [vmem:[%s97] sm:$0xff pattern:$0xb3a29180]
    %99 = vrot.lane.b32.xlu0 %v98, 96
    %v100 = vpop.permute.xlu0 %99
    %vm101 = vcmask 261120
    %s102 = scalar_lea.vmem [#allocation0], 65
    %103 = vst.msk [vmem:[%s102] ss:$9 sm:$0x3] %vm101, %v100
    %s104 = scalar_lea.vmem [#allocation0], 63
    %105 = vst.msk [vmem:[%s104] ss:$9 sm:$0xc] %vm101, %v100
    %s106 = scalar_lea.vmem [#allocation0], 61
    %107 = vst.msk [vmem:[%s106] ss:$9 sm:$0x30] %vm101, %v100
    %s108 = scalar_lea.vmem [#allocation0], 59
    %109 = vst.msk [vmem:[%s108] ss:$9 sm:$0xc0] %vm101, %v100
    %s110 = scalar_lea.vmem %s0, 16
    %v111 = vld.sshfl [vmem:[%s110] sm:$0xff pattern:$0xb3a29180]
    %112 = vrot.lane.b32.xlu0 %v111, 96
    %v113 = vpop.permute.xlu0 %112
    %vm114 = vcmask 261120
    %s115 = scalar_lea.vmem [#allocation0], 129
    %116 = vst.msk [vmem:[%s115] ss:$9 sm:$0x3] %vm114, %v113
    %s117 = scalar_lea.vmem [#allocation0], 127
    %118 = vst.msk [vmem:[%s117] ss:$9 sm:$0xc] %vm114, %v113
    %s119 = scalar_lea.vmem [#allocation0], 125
    %120 = vst.msk [vmem:[%s119] ss:$9 sm:$0x30] %vm114, %v113
    %s121 = scalar_lea.vmem [#allocation0], 123
    %122 = vst.msk [vmem:[%s121] ss:$9 sm:$0xc0] %vm114, %v113
    %s123 = scalar_lea.vmem %s0, 20
    %v124 = vld.sshfl [vmem:[%s123] sm:$0xff pattern:$0xb3a29180]
    %125 = vrot.lane.b32.xlu0 %v124, 96
    %v126 = vpop.permute.xlu0 %125
    %vm127 = vcmask 261120
    %s128 = scalar_lea.vmem [#allocation0], 193
    %129 = vst.msk [vmem:[%s128] ss:$9 sm:$0x3] %vm127, %v126
    %s130 = scalar_lea.vmem [#allocation0], 191
    %131 = vst.msk [vmem:[%s130] ss:$9 sm:$0xc] %vm127, %v126
    %s132 = scalar_lea.vmem [#allocation0], 189
    %133 = vst.msk [vmem:[%s132] ss:$9 sm:$0x30] %vm127, %v126
    %s134 = scalar_lea.vmem [#allocation0], 187
    %135 = vst.msk [vmem:[%s134] ss:$9 sm:$0xc0] %vm127, %v126
    %s136 = scalar_lea.vmem %s0, 32
    %v137 = vld.sshfl [vmem:[%s136] sm:$0xff pattern:$0xb3a29180]
    %138 = vrot.lane.b32.xlu0 %v137, 96
    %v139 = vpop.permute.xlu0 %138
    %vm140 = vcmask 261120
    %s141 = scalar_lea.vmem [#allocation0], 257
    %142 = vst.msk [vmem:[%s141] ss:$9 sm:$0x3] %vm140, %v139
    %s143 = scalar_lea.vmem [#allocation0], 255
    %144 = vst.msk [vmem:[%s143] ss:$9 sm:$0xc] %vm140, %v139
    %s145 = scalar_lea.vmem [#allocation0], 253
    %146 = vst.msk [vmem:[%s145] ss:$9 sm:$0x30] %vm140, %v139
    %s147 = scalar_lea.vmem [#allocation0], 251
    %148 = vst.msk [vmem:[%s147] ss:$9 sm:$0xc0] %vm140, %v139
    %s149 = scalar_lea.vmem %s0, 36
    %v150 = vld.sshfl [vmem:[%s149] sm:$0xff pattern:$0xb3a29180]
    %151 = vrot.lane.b32.xlu0 %v150, 96
    %v152 = vpop.permute.xlu0 %151
    %vm153 = vcmask 261120
    %s154 = scalar_lea.vmem [#allocation0], 321
    %155 = vst.msk [vmem:[%s154] ss:$9 sm:$0x3] %vm153, %v152
    %s156 = scalar_lea.vmem [#allocation0], 319
    %157 = vst.msk [vmem:[%s156] ss:$9 sm:$0xc] %vm153, %v152
    %s158 = scalar_lea.vmem [#allocation0], 317
    %159 = vst.msk [vmem:[%s158] ss:$9 sm:$0x30] %vm153, %v152
    %s160 = scalar_lea.vmem [#allocation0], 315
    %161 = vst.msk [vmem:[%s160] ss:$9 sm:$0xc0] %vm153, %v152
    %s162 = scalar_lea.vmem %s0, 48
    %v163 = vld.sshfl [vmem:[%s162] sm:$0xff pattern:$0xb3a29180]
    %164 = vrot.lane.b32.xlu0 %v163, 96
    %v165 = vpop.permute.xlu0 %164
    %vm166 = vcmask 261120
    %s167 = scalar_lea.vmem [#allocation0], 385
    %168 = vst.msk [vmem:[%s167] ss:$9 sm:$0x3] %vm166, %v165
    %s169 = scalar_lea.vmem [#allocation0], 383
    %170 = vst.msk [vmem:[%s169] ss:$9 sm:$0xc] %vm166, %v165
    %s171 = scalar_lea.vmem [#allocation0], 381
    %172 = vst.msk [vmem:[%s171] ss:$9 sm:$0x30] %vm166, %v165
    %s173 = scalar_lea.vmem [#allocation0], 379
    %174 = vst.msk [vmem:[%s173] ss:$9 sm:$0xc0] %vm166, %v165
    %s175 = scalar_lea.vmem %s0, 52
    %v176 = vld.sshfl [vmem:[%s175] sm:$0xff pattern:$0xb3a29180]
    %177 = vrot.lane.b32.xlu0 %v176, 96
    %v178 = vpop.permute.xlu0 %177
    %vm179 = vcmask 261120
    %s180 = scalar_lea.vmem [#allocation0], 449
    %181 = vst.msk [vmem:[%s180] ss:$9 sm:$0x3] %vm179, %v178
    %s182 = scalar_lea.vmem [#allocation0], 447
    %183 = vst.msk [vmem:[%s182] ss:$9 sm:$0xc] %vm179, %v178
    %s184 = scalar_lea.vmem [#allocation0], 445
    %185 = vst.msk [vmem:[%s184] ss:$9 sm:$0x30] %vm179, %v178
    %s186 = scalar_lea.vmem [#allocation0], 443
    %187 = vst.msk [vmem:[%s186] ss:$9 sm:$0xc0] %vm179, %v178
    %v188 = vld [vmem:[%s0] sm:$0xff]
    %189 = vrot.lane.b32.xlu0 %v188, 64
    %v190 = vpop.permute.xlu0 %189
    %vm191 = vcmask 261120
    %s192 = scalar_lea.vmem [#allocation0], 2
    %193 = vst.msk [vmem:[%s192] ss:$16 sm:$0x3] %vm191, %v190
    %s194 = scalar_lea.vmem [#allocation0], 2
    %195 = vst.msk [vmem:[%s194] ss:$16 sm:$0xc] %vm191, %v190
    %s196 = scalar_lea.vmem [#allocation0], 2
    %197 = vst.msk [vmem:[%s196] ss:$16 sm:$0x30] %vm191, %v190
    %s198 = scalar_lea.vmem [#allocation0], 2
    %199 = vst.msk [vmem:[%s198] ss:$16 sm:$0xc0] %vm191, %v190
    %s200 = scalar_lea.vmem %s0, 16
    %v201 = vld [vmem:[%s200] sm:$0xff]
    %202 = vrot.lane.b32.xlu0 %v201, 64
    %v203 = vpop.permute.xlu0 %202
    %vm204 = vcmask 261120
    %s205 = scalar_lea.vmem [#allocation0], 130
    %206 = vst.msk [vmem:[%s205] ss:$16 sm:$0x3] %vm204, %v203
    %s207 = scalar_lea.vmem [#allocation0], 130
    %208 = vst.msk [vmem:[%s207] ss:$16 sm:$0xc] %vm204, %v203
    %s209 = scalar_lea.vmem [#allocation0], 130
    %210 = vst.msk [vmem:[%s209] ss:$16 sm:$0x30] %vm204, %v203
    %s211 = scalar_lea.vmem [#allocation0], 130
    %212 = vst.msk [vmem:[%s211] ss:$16 sm:$0xc0] %vm204, %v203
    %s213 = scalar_lea.vmem %s0, 32
    %v214 = vld [vmem:[%s213] sm:$0xff]
    %215 = vrot.lane.b32.xlu0 %v214, 64
    %v216 = vpop.permute.xlu0 %215
    %vm217 = vcmask 261120
    %s218 = scalar_lea.vmem [#allocation0], 258
    %219 = vst.msk [vmem:[%s218] ss:$16 sm:$0x3] %vm217, %v216
    %s220 = scalar_lea.vmem [#allocation0], 258
    %221 = vst.msk [vmem:[%s220] ss:$16 sm:$0xc] %vm217, %v216
    %s222 = scalar_lea.vmem [#allocation0], 258
    %223 = vst.msk [vmem:[%s222] ss:$16 sm:$0x30] %vm217, %v216
    %s224 = scalar_lea.vmem [#allocation0], 258
    %225 = vst.msk [vmem:[%s224] ss:$16 sm:$0xc0] %vm217, %v216
    %s226 = scalar_lea.vmem %s0, 48
    %v227 = vld [vmem:[%s226] sm:$0xff]
    %228 = vrot.lane.b32.xlu0 %v227, 64
    %v229 = vpop.permute.xlu0 %228
    %vm230 = vcmask 261120
    %s231 = scalar_lea.vmem [#allocation0], 386
    %232 = vst.msk [vmem:[%s231] ss:$16 sm:$0x3] %vm230, %v229
    %s233 = scalar_lea.vmem [#allocation0], 386
    %234 = vst.msk [vmem:[%s233] ss:$16 sm:$0xc] %vm230, %v229
    %s235 = scalar_lea.vmem [#allocation0], 386
    %236 = vst.msk [vmem:[%s235] ss:$16 sm:$0x30] %vm230, %v229
    %s237 = scalar_lea.vmem [#allocation0], 386
    %238 = vst.msk [vmem:[%s237] ss:$16 sm:$0xc0] %vm230, %v229
    %v239 = vld [vmem:[%s0] sm:$0xff]
    %240 = vrot.lane.b32.xlu0 %v239, 32
    %v241 = vpop.permute.xlu0 %240
    %vm242 = vcmask 261120
    %s243 = scalar_lea.vmem [#allocation0], 8
    %244 = vst.msk [vmem:[%s243] ss:$16 sm:$0x3] %vm242, %v241
    %s245 = scalar_lea.vmem [#allocation0], 8
    %246 = vst.msk [vmem:[%s245] ss:$16 sm:$0xc] %vm242, %v241
    %s247 = scalar_lea.vmem [#allocation0], 8
    %248 = vst.msk [vmem:[%s247] ss:$16 sm:$0x30] %vm242, %v241
    %s249 = scalar_lea.vmem [#allocation0], 8
    %250 = vst.msk [vmem:[%s249] ss:$16 sm:$0xc0] %vm242, %v241
    %s251 = scalar_lea.vmem %s0, 16
    %v252 = vld [vmem:[%s251] sm:$0xff]
    %253 = vrot.lane.b32.xlu0 %v252, 32
    %v254 = vpop.permute.xlu0 %253
    %vm255 = vcmask 261120
    %s256 = scalar_lea.vmem [#allocation0], 136
    %257 = vst.msk [vmem:[%s256] ss:$16 sm:$0x3] %vm255, %v254
    %s258 = scalar_lea.vmem [#allocation0], 136
    %259 = vst.msk [vmem:[%s258] ss:$16 sm:$0xc] %vm255, %v254
    %s260 = scalar_lea.vmem [#allocation0], 136
    %261 = vst.msk [vmem:[%s260] ss:$16 sm:$0x30] %vm255, %v254
    %s262 = scalar_lea.vmem [#allocation0], 136
    %263 = vst.msk [vmem:[%s262] ss:$16 sm:$0xc0] %vm255, %v254
    %s264 = scalar_lea.vmem %s0, 32
    %v265 = vld [vmem:[%s264] sm:$0xff]
    %266 = vrot.lane.b32.xlu0 %v265, 32
    %v267 = vpop.permute.xlu0 %266
    %vm268 = vcmask 261120
    %s269 = scalar_lea.vmem [#allocation0], 264
    %270 = vst.msk [vmem:[%s269] ss:$16 sm:$0x3] %vm268, %v267
    %s271 = scalar_lea.vmem [#allocation0], 264
    %272 = vst.msk [vmem:[%s271] ss:$16 sm:$0xc] %vm268, %v267
    %s273 = scalar_lea.vmem [#allocation0], 264
    %274 = vst.msk [vmem:[%s273] ss:$16 sm:$0x30] %vm268, %v267
    %s275 = scalar_lea.vmem [#allocation0], 264
    %276 = vst.msk [vmem:[%s275] ss:$16 sm:$0xc0] %vm268, %v267
    %s277 = scalar_lea.vmem %s0, 48
    %v278 = vld [vmem:[%s277] sm:$0xff]
    %279 = vrot.lane.b32.xlu0 %v278, 32
    %v280 = vpop.permute.xlu0 %279
    %vm281 = vcmask 261120
    %s282 = scalar_lea.vmem [#allocation0], 392
    %283 = vst.msk [vmem:[%s282] ss:$16 sm:$0x3] %vm281, %v280
    %s284 = scalar_lea.vmem [#allocation0], 392
    %285 = vst.msk [vmem:[%s284] ss:$16 sm:$0xc] %vm281, %v280
    %s286 = scalar_lea.vmem [#allocation0], 392
    %287 = vst.msk [vmem:[%s286] ss:$16 sm:$0x30] %vm281, %v280
    %s288 = scalar_lea.vmem [#allocation0], 392
    %289 = vst.msk [vmem:[%s288] ss:$16 sm:$0xc0] %vm281, %v280
    %s291 = ssub.s32 16, 1
    %v292 = vld [vmem:[#allocation0] sm:%s291]
    %s294 = ssub.s32 16, 1
    %295 = vst [vmem:[%s1] sm:%s294] %v292
    %s296 = scalar_lea.vmem [#allocation0], 8
    %v297 = vld [vmem:[%s296] sm:%s291]
    %s299 = ssub.s32 16, 1
    %s300 = scalar_lea.vmem %s1, 4
    %301 = vst [vmem:[%s300] sm:%s299] %v297
    %s302 = scalar_lea.vmem [#allocation0], 16
    %v303 = vld [vmem:[%s302] sm:%s291]
    %s305 = ssub.s32 16, 1
    %s306 = scalar_lea.vmem %s1, 8
    %307 = vst [vmem:[%s306] sm:%s305] %v303
    %s308 = scalar_lea.vmem [#allocation0], 24
    %v309 = vld [vmem:[%s308] sm:%s291]
    %s311 = ssub.s32 16, 1
    %s312 = scalar_lea.vmem %s1, 12
    %313 = vst [vmem:[%s312] sm:%s311] %v309
    %s314 = scalar_lea.vmem [#allocation0], 32
    %v315 = vld [vmem:[%s314] sm:%s291]
    %s317 = ssub.s32 16, 1
    %s318 = scalar_lea.vmem %s1, 16
    %319 = vst [vmem:[%s318] sm:%s317] %v315
    %s320 = scalar_lea.vmem [#allocation0], 40
    %v321 = vld [vmem:[%s320] sm:%s291]
    %s323 = ssub.s32 16, 1
    %s324 = scalar_lea.vmem %s1, 20
    %325 = vst [vmem:[%s324] sm:%s323] %v321
    %s326 = scalar_lea.vmem [#allocation0], 48
    %v327 = vld [vmem:[%s326] sm:%s291]
    %s329 = ssub.s32 16, 1
    %s330 = scalar_lea.vmem %s1, 24
    %331 = vst [vmem:[%s330] sm:%s329] %v327
    %s332 = scalar_lea.vmem [#allocation0], 56
    %v333 = vld [vmem:[%s332] sm:%s291]
    %s335 = ssub.s32 16, 1
    %s336 = scalar_lea.vmem %s1, 28
    %337 = vst [vmem:[%s336] sm:%s335] %v333
    %s338 = scalar_lea.vmem [#allocation0], 64
    %v339 = vld [vmem:[%s338] sm:%s291]
    %s341 = ssub.s32 16, 1
    %s342 = scalar_lea.vmem %s1, 32
    %343 = vst [vmem:[%s342] sm:%s341] %v339
    %s344 = scalar_lea.vmem [#allocation0], 72
    %v345 = vld [vmem:[%s344] sm:%s291]
    %s347 = ssub.s32 16, 1
    %s348 = scalar_lea.vmem %s1, 36
    %349 = vst [vmem:[%s348] sm:%s347] %v345
    %s350 = scalar_lea.vmem [#allocation0], 80
    %v351 = vld [vmem:[%s350] sm:%s291]
    %s353 = ssub.s32 16, 1
    %s354 = scalar_lea.vmem %s1, 40
    %355 = vst [vmem:[%s354] sm:%s353] %v351
    %s356 = scalar_lea.vmem [#allocation0], 88
    %v357 = vld [vmem:[%s356] sm:%s291]
    %s359 = ssub.s32 16, 1
    %s360 = scalar_lea.vmem %s1, 44
    %361 = vst [vmem:[%s360] sm:%s359] %v357
    %s362 = scalar_lea.vmem [#allocation0], 96
    %v363 = vld [vmem:[%s362] sm:%s291]
    %s365 = ssub.s32 16, 1
    %s366 = scalar_lea.vmem %s1, 48
    %367 = vst [vmem:[%s366] sm:%s365] %v363
    %s368 = scalar_lea.vmem [#allocation0], 104
    %v369 = vld [vmem:[%s368] sm:%s291]
    %s371 = ssub.s32 16, 1
    %s372 = scalar_lea.vmem %s1, 52
    %373 = vst [vmem:[%s372] sm:%s371] %v369
    %s374 = scalar_lea.vmem [#allocation0], 112
    %v375 = vld [vmem:[%s374] sm:%s291]
    %s377 = ssub.s32 16, 1
    %s378 = scalar_lea.vmem %s1, 56
    %379 = vst [vmem:[%s378] sm:%s377] %v375
    %s380 = scalar_lea.vmem [#allocation0], 120
    %v381 = vld [vmem:[%s380] sm:%s291]
    %s383 = ssub.s32 16, 1
    %s384 = scalar_lea.vmem %s1, 60
    %385 = vst [vmem:[%s384] sm:%s383] %v381
    %s386 = scalar_lea.vmem [#allocation0], 128
    %v387 = vld [vmem:[%s386] sm:%s291]
    %s389 = ssub.s32 16, 1
    %s390 = scalar_lea.vmem %s1, 64
    %391 = vst [vmem:[%s390] sm:%s389] %v387
    %s392 = scalar_lea.vmem [#allocation0], 136
    %v393 = vld [vmem:[%s392] sm:%s291]
    %s395 = ssub.s32 16, 1
    %s396 = scalar_lea.vmem %s1, 68
    %397 = vst [vmem:[%s396] sm:%s395] %v393
    %s398 = scalar_lea.vmem [#allocation0], 144
    %v399 = vld [vmem:[%s398] sm:%s291]
    %s401 = ssub.s32 16, 1
    %s402 = scalar_lea.vmem %s1, 72
    %403 = vst [vmem:[%s402] sm:%s401] %v399
    %s404 = scalar_lea.vmem [#allocation0], 152
    %v405 = vld [vmem:[%s404] sm:%s291]
    %s407 = ssub.s32 16, 1
    %s408 = scalar_lea.vmem %s1, 76
    %409 = vst [vmem:[%s408] sm:%s407] %v405
    %s410 = scalar_lea.vmem [#allocation0], 160
    %v411 = vld [vmem:[%s410] sm:%s291]
    %s413 = ssub.s32 16, 1
    %s414 = scalar_lea.vmem %s1, 80
    %415 = vst [vmem:[%s414] sm:%s413] %v411
    %s416 = scalar_lea.vmem [#allocation0], 168
    %v417 = vld [vmem:[%s416] sm:%s291]
    %s419 = ssub.s32 16, 1
    %s420 = scalar_lea.vmem %s1, 84
    %421 = vst [vmem:[%s420] sm:%s419] %v417
    %s422 = scalar_lea.vmem [#allocation0], 176
    %v423 = vld [vmem:[%s422] sm:%s291]
    %s425 = ssub.s32 16, 1
    %s426 = scalar_lea.vmem %s1, 88
    %427 = vst [vmem:[%s426] sm:%s425] %v423
    %s428 = scalar_lea.vmem [#allocation0], 184
    %v429 = vld [vmem:[%s428] sm:%s291]
    %s431 = ssub.s32 16, 1
    %s432 = scalar_lea.vmem %s1, 92
    %433 = vst [vmem:[%s432] sm:%s431] %v429
    %s434 = scalar_lea.vmem [#allocation0], 192
    %v435 = vld [vmem:[%s434] sm:%s291]
    %s437 = ssub.s32 16, 1
    %s438 = scalar_lea.vmem %s1, 96
    %439 = vst [vmem:[%s438] sm:%s437] %v435
    %s440 = scalar_lea.vmem [#allocation0], 200
    %v441 = vld [vmem:[%s440] sm:%s291]
    %s443 = ssub.s32 16, 1
    %s444 = scalar_lea.vmem %s1, 100
    %445 = vst [vmem:[%s444] sm:%s443] %v441
    %s446 = scalar_lea.vmem [#allocation0], 208
    %v447 = vld [vmem:[%s446] sm:%s291]
    %s449 = ssub.s32 16, 1
    %s450 = scalar_lea.vmem %s1, 104
    %451 = vst [vmem:[%s450] sm:%s449] %v447
    %s452 = scalar_lea.vmem [#allocation0], 216
    %v453 = vld [vmem:[%s452] sm:%s291]
    %s455 = ssub.s32 16, 1
    %s456 = scalar_lea.vmem %s1, 108
    %457 = vst [vmem:[%s456] sm:%s455] %v453
    %s458 = scalar_lea.vmem [#allocation0], 224
    %v459 = vld [vmem:[%s458] sm:%s291]
    %s461 = ssub.s32 16, 1
    %s462 = scalar_lea.vmem %s1, 112
    %463 = vst [vmem:[%s462] sm:%s461] %v459
    %s464 = scalar_lea.vmem [#allocation0], 232
    %v465 = vld [vmem:[%s464] sm:%s291]
    %s467 = ssub.s32 16, 1
    %s468 = scalar_lea.vmem %s1, 116
    %469 = vst [vmem:[%s468] sm:%s467] %v465
    %s470 = scalar_lea.vmem [#allocation0], 240
    %v471 = vld [vmem:[%s470] sm:%s291]
    %s473 = ssub.s32 16, 1
    %s474 = scalar_lea.vmem %s1, 120
    %475 = vst [vmem:[%s474] sm:%s473] %v471
    %s476 = scalar_lea.vmem [#allocation0], 248
    %v477 = vld [vmem:[%s476] sm:%s291]
    %s479 = ssub.s32 16, 1
    %s480 = scalar_lea.vmem %s1, 124
    %481 = vst [vmem:[%s480] sm:%s479] %v477
    %s482 = scalar_lea.vmem [#allocation0], 256
    %v483 = vld [vmem:[%s482] sm:%s291]
    %s485 = ssub.s32 16, 1
    %s486 = scalar_lea.vmem %s1, 128
    %487 = vst [vmem:[%s486] sm:%s485] %v483
    %s488 = scalar_lea.vmem [#allocation0], 264
    %v489 = vld [vmem:[%s488] sm:%s291]
    %s491 = ssub.s32 16, 1
    %s492 = scalar_lea.vmem %s1, 132
    %493 = vst [vmem:[%s492] sm:%s491] %v489
    %s494 = scalar_lea.vmem [#allocation0], 272
    %v495 = vld [vmem:[%s494] sm:%s291]
    %s497 = ssub.s32 16, 1
    %s498 = scalar_lea.vmem %s1, 136
    %499 = vst [vmem:[%s498] sm:%s497] %v495
    %s500 = scalar_lea.vmem [#allocation0], 280
    %v501 = vld [vmem:[%s500] sm:%s291]
    %s503 = ssub.s32 16, 1
    %s504 = scalar_lea.vmem %s1, 140
    %505 = vst [vmem:[%s504] sm:%s503] %v501
    %s506 = scalar_lea.vmem [#allocation0], 288
    %v507 = vld [vmem:[%s506] sm:%s291]
    %s509 = ssub.s32 16, 1
    %s510 = scalar_lea.vmem %s1, 144
    %511 = vst [vmem:[%s510] sm:%s509] %v507
    %s512 = scalar_lea.vmem [#allocation0], 296
    %v513 = vld [vmem:[%s512] sm:%s291]
    %s515 = ssub.s32 16, 1
    %s516 = scalar_lea.vmem %s1, 148
    %517 = vst [vmem:[%s516] sm:%s515] %v513
    %s518 = scalar_lea.vmem [#allocation0], 304
    %v519 = vld [vmem:[%s518] sm:%s291]
    %s521 = ssub.s32 16, 1
    %s522 = scalar_lea.vmem %s1, 152
    %523 = vst [vmem:[%s522] sm:%s521] %v519
    %s524 = scalar_lea.vmem [#allocation0], 312
    %v525 = vld [vmem:[%s524] sm:%s291]
    %s527 = ssub.s32 16, 1
    %s528 = scalar_lea.vmem %s1, 156
    %529 = vst [vmem:[%s528] sm:%s527] %v525
    %s530 = scalar_lea.vmem [#allocation0], 320
    %v531 = vld [vmem:[%s530] sm:%s291]
    %s533 = ssub.s32 16, 1
    %s534 = scalar_lea.vmem %s1, 160
    %535 = vst [vmem:[%s534] sm:%s533] %v531
    %s536 = scalar_lea.vmem [#allocation0], 328
    %v537 = vld [vmem:[%s536] sm:%s291]
    %s539 = ssub.s32 16, 1
    %s540 = scalar_lea.vmem %s1, 164
    %541 = vst [vmem:[%s540] sm:%s539] %v537
    %s542 = scalar_lea.vmem [#allocation0], 336
    %v543 = vld [vmem:[%s542] sm:%s291]
    %s545 = ssub.s32 16, 1
    %s546 = scalar_lea.vmem %s1, 168
    %547 = vst [vmem:[%s546] sm:%s545] %v543
    %s548 = scalar_lea.vmem [#allocation0], 344
    %v549 = vld [vmem:[%s548] sm:%s291]
    %s551 = ssub.s32 16, 1
    %s552 = scalar_lea.vmem %s1, 172
    %553 = vst [vmem:[%s552] sm:%s551] %v549
    %s554 = scalar_lea.vmem [#allocation0], 352
    %v555 = vld [vmem:[%s554] sm:%s291]
    %s557 = ssub.s32 16, 1
    %s558 = scalar_lea.vmem %s1, 176
    %559 = vst [vmem:[%s558] sm:%s557] %v555
    %s560 = scalar_lea.vmem [#allocation0], 360
    %v561 = vld [vmem:[%s560] sm:%s291]
    %s563 = ssub.s32 16, 1
    %s564 = scalar_lea.vmem %s1, 180
    %565 = vst [vmem:[%s564] sm:%s563] %v561
    %s566 = scalar_lea.vmem [#allocation0], 368
    %v567 = vld [vmem:[%s566] sm:%s291]
    %s569 = ssub.s32 16, 1
    %s570 = scalar_lea.vmem %s1, 184
    %571 = vst [vmem:[%s570] sm:%s569] %v567
    %s572 = scalar_lea.vmem [#allocation0], 376
    %v573 = vld [vmem:[%s572] sm:%s291]
    %s575 = ssub.s32 16, 1
    %s576 = scalar_lea.vmem %s1, 188
    %577 = vst [vmem:[%s576] sm:%s575] %v573
    %s578 = scalar_lea.vmem [#allocation0], 384
    %v579 = vld [vmem:[%s578] sm:%s291]
    %s581 = ssub.s32 16, 1
    %s582 = scalar_lea.vmem %s1, 192
    %583 = vst [vmem:[%s582] sm:%s581] %v579
    %s584 = scalar_lea.vmem [#allocation0], 392
    %v585 = vld [vmem:[%s584] sm:%s291]
    %s587 = ssub.s32 16, 1
    %s588 = scalar_lea.vmem %s1, 196
    %589 = vst [vmem:[%s588] sm:%s587] %v585
    %s590 = scalar_lea.vmem [#allocation0], 400
    %v591 = vld [vmem:[%s590] sm:%s291]
    %s593 = ssub.s32 16, 1
    %s594 = scalar_lea.vmem %s1, 200
    %595 = vst [vmem:[%s594] sm:%s593] %v591
    %s596 = scalar_lea.vmem [#allocation0], 408
    %v597 = vld [vmem:[%s596] sm:%s291]
    %s599 = ssub.s32 16, 1
    %s600 = scalar_lea.vmem %s1, 204
    %601 = vst [vmem:[%s600] sm:%s599] %v597
    %s602 = scalar_lea.vmem [#allocation0], 416
    %v603 = vld [vmem:[%s602] sm:%s291]
    %s605 = ssub.s32 16, 1
    %s606 = scalar_lea.vmem %s1, 208
    %607 = vst [vmem:[%s606] sm:%s605] %v603
    %s608 = scalar_lea.vmem [#allocation0], 424
    %v609 = vld [vmem:[%s608] sm:%s291]
    %s611 = ssub.s32 16, 1
    %s612 = scalar_lea.vmem %s1, 212
    %613 = vst [vmem:[%s612] sm:%s611] %v609
    %s614 = scalar_lea.vmem [#allocation0], 432
    %v615 = vld [vmem:[%s614] sm:%s291]
    %s617 = ssub.s32 16, 1
    %s618 = scalar_lea.vmem %s1, 216
    %619 = vst [vmem:[%s618] sm:%s617] %v615
    %s620 = scalar_lea.vmem [#allocation0], 440
    %v621 = vld [vmem:[%s620] sm:%s291]
    %s623 = ssub.s32 16, 1
    %s624 = scalar_lea.vmem %s1, 220
    %625 = vst [vmem:[%s624] sm:%s623] %v621
    %s626 = scalar_lea.vmem [#allocation0], 448
    %v627 = vld [vmem:[%s626] sm:%s291]
    %s629 = ssub.s32 16, 1
    %s630 = scalar_lea.vmem %s1, 224
    %631 = vst [vmem:[%s630] sm:%s629] %v627
    %s632 = scalar_lea.vmem [#allocation0], 456
    %v633 = vld [vmem:[%s632] sm:%s291]
    %s635 = ssub.s32 16, 1
    %s636 = scalar_lea.vmem %s1, 228
    %637 = vst [vmem:[%s636] sm:%s635] %v633
    %s638 = scalar_lea.vmem [#allocation0], 464
    %v639 = vld [vmem:[%s638] sm:%s291]
    %s641 = ssub.s32 16, 1
    %s642 = scalar_lea.vmem %s1, 232
    %643 = vst [vmem:[%s642] sm:%s641] %v639
    %s644 = scalar_lea.vmem [#allocation0], 472
    %v645 = vld [vmem:[%s644] sm:%s291]
    %s647 = ssub.s32 16, 1
    %s648 = scalar_lea.vmem %s1, 236
    %649 = vst [vmem:[%s648] sm:%s647] %v645
    %s650 = scalar_lea.vmem [#allocation0], 480
    %v651 = vld [vmem:[%s650] sm:%s291]
    %s653 = ssub.s32 16, 1
    %s654 = scalar_lea.vmem %s1, 240
    %655 = vst [vmem:[%s654] sm:%s653] %v651
    %s656 = scalar_lea.vmem [#allocation0], 488
    %v657 = vld [vmem:[%s656] sm:%s291]
    %s659 = ssub.s32 16, 1
    %s660 = scalar_lea.vmem %s1, 244
    %661 = vst [vmem:[%s660] sm:%s659] %v657
    %s662 = scalar_lea.vmem [#allocation0], 496
    %v663 = vld [vmem:[%s662] sm:%s291]
    %s665 = ssub.s32 16, 1
    %s666 = scalar_lea.vmem %s1, 248
    %667 = vst [vmem:[%s666] sm:%s665] %v663
    %s668 = scalar_lea.vmem [#allocation0], 504
    %v669 = vld [vmem:[%s668] sm:%s291]
    %s671 = ssub.s32 16, 1
    %s672 = scalar_lea.vmem %s1, 252
    %673 = vst [vmem:[%s672] sm:%s671] %v669

// kernel: pan_forward.44
$region0: #{pan_forward.44}
  #allocation0 [shape = 'u32[]', space=smem, size = 0x4, offset = 0x4, fixed_abs, tag = 'smem constant byte address 0x4 - core index']
  #allocation1 [shape = 'u32[72,128]{1,0:T(1,128)}', space=vmem, size = 0x9000, scoped, tag = 'internal scratch']
  #allocation2 [shape = 'f32[32,256]{1,0:T(8,128)}', space=vmem, size = 0x8000, scoped, tag = 'scratch operand']
  %s0 = inlined_call_operand.vmem [shape: bf16[32,16], index: 0, kind: input, shape index: {}]
  %s1 = inlined_call_operand.vmem [shape: bf16[1,16,256], index: 1, kind: input, shape index: {}]
  %s2 = inlined_call_operand.vmem [shape: f32[1,32,256], index: 2, kind: output, shape index: {}]
  %s3 = sld [smem:[#allocation0]]
  $region26: #{pan_forward.44} parent=0
    _
  %s5 = ssub.s32 1, %s3
  %s6 = scalar_select 0, %s5, %s3
  // Predicated region
  $region2: #{pan_forward.44} parent=0 // pred_check
    _
  $region3: #{pan_forward.44} parent=0 // pred_check_branch
    %8 = sbr.rel (0) target = $region5
  $region4: #{pan_forward.44} parent=0 // pred_region
    _
  $region5: #{pan_forward.44} parent=0 // pred_fallthru
    _
  // Predicated region
  $region6: #{pan_forward.44} parent=0 // pred_check
    _
  $region7: #{pan_forward.44} parent=0 // pred_check_branch
    %10 = sbr.rel (0) target = $region9
  $region8: #{pan_forward.44} parent=0 // pred_region
    _
  $region9: #{pan_forward.44} parent=0 // pred_fallthru
    _
  %p12 = scmp.eq.s32.totalorder 0, 0
  // Predicated region
  $region10: #{pan_forward.44} parent=0 // pred_check
    %p13 = pneg %p12
  $region11: #{pan_forward.44} parent=0 // pred_check_branch
    %15 = sbr.rel (%p13) target = $region13
  $region12: #{pan_forward.44} parent=0 // pred_region
    %16 = vst [vmem:[#allocation2] sm:$0xff] 0.0
    %17 = vst [vmem:[#allocation2 + $0x8] sm:$0xff] 0.0
    %18 = vst [vmem:[#allocation2 + $0x10] sm:$0xff] 0.0
    %19 = vst [vmem:[#allocation2 + $0x18] sm:$0xff] 0.0
    %20 = vst [vmem:[#allocation2 + $0x20] sm:$0xff] 0.0
    %21 = vst [vmem:[#allocation2 + $0x28] sm:$0xff] 0.0
    %22 = vst [vmem:[#allocation2 + $0x30] sm:$0xff] 0.0
    %23 = vst [vmem:[#allocation2 + $0x38] sm:$0xff] 0.0
  $region13: #{pan_forward.44} parent=0 // pred_fallthru
    _
  %v24 = vld [vmem:[#allocation2] sm:$0xff]
  %v25 = vld [vmem:[#allocation2 + $0x8] sm:$0xff]
  %v26 = vld [vmem:[#allocation2 + $0x10] sm:$0xff]
  %v27 = vld [vmem:[#allocation2 + $0x18] sm:$0xff]
  %v28 = vld [vmem:[#allocation2 + $0x20] sm:$0xff]
  %v29 = vld [vmem:[#allocation2 + $0x28] sm:$0xff]
  %v30 = vld [vmem:[#allocation2 + $0x30] sm:$0xff]
  %v31 = vld [vmem:[#allocation2 + $0x38] sm:$0xff]
  %v32 = vld [vmem:[%s0] sm:$0xf]
  %v33 = vld [vmem:[%s0 + $0x4] sm:$0xf]
  %v34 = vld [vmem:[%s0 + $0x8] sm:$0xf]
  %v35 = vld [vmem:[%s0 + $0xc] sm:$0xf]
  %v36 = vld [vmem:[%s1] sm:$0xff]
  %v37 = vld [vmem:[%s1 + $0x8] sm:$0xff]
  %v42 = vunpack.c.l.b16 %v32
  %v43 = vunpack.c.l.b16 %v33
  %v44 = vunpack.c.l.b16 %v34
  %v45 = vunpack.c.l.b16 %v35
  %v46 = vpack.c.b16 %v43, %v42
  %v47 = vpack.c.b16 %v45, %v44
  %v50 = vunpack.c.l.b16 %v36
  %v51 = vunpack.c.h.b16 %v36
  %v52 = vunpack.c.l.b16 %v37
  %v53 = vunpack.c.h.b16 %v37
  %v54 = vpack.c.b16 %v52, %v50
  %v55 = vpack.c.b16 %v53, %v51
  %vm58 = vcmask 130048
  %v60 = vsel %vm58, %v46, 0
  %v63 = vsel %vm58, %v47, 0
  %65 = vmatpush.bf16.msra.mxu0 0
  %66 = vmatpush.bf16.msra.mxu0 0
  %67 = vmatpush.bf16.msra.mxu0 0
  %68 = vmatpush.bf16.msra.mxu0 0
  %69 = vmatpush.bf16.msra.mxu0 0
  %70 = vmatpush.bf16.msra.mxu0 0
  %71 = vmatpush.bf16.msra.mxu0 0
  %72 = vmatpush.bf16.msra.mxu0 %v54
  %73 = vmatmul.bf16.gmra.mxu0 %v60
  %v74 = vpop.f32.mrf.mxu0
  %v75 = vadd.f32 0.0, %v74
  %v76 = vpop.f32.mrf.mxu0
  %v77 = vadd.f32 0.0, %v76
  %78 = vmatmul.bf16.gmra.mxu0 %v63
  %v79 = vpop.f32.mrf.mxu0
  %v80 = vadd.f32 0.0, %v79
  %v81 = vpop.f32.mrf.mxu0
  %v82 = vadd.f32 0.0, %v81
  %83 = vdwg.mxu0
  %84 = vmatpush.bf16.msra.mxu0 0
  %85 = vmatpush.bf16.msra.mxu0 0
  %86 = vmatpush.bf16.msra.mxu0 0
  %87 = vmatpush.bf16.msra.mxu0 0
  %88 = vmatpush.bf16.msra.mxu0 0
  %89 = vmatpush.bf16.msra.mxu0 0
  %90 = vmatpush.bf16.msra.mxu0 0
  %91 = vmatpush.bf16.msra.mxu0 %v55
  %92 = vmatmul.bf16.gmra.mxu0 %v60
  %v93 = vpop.f32.mrf.mxu0
  %v94 = vadd.f32 0.0, %v93
  %v95 = vpop.f32.mrf.mxu0
  %v96 = vadd.f32 0.0, %v95
  %97 = vmatmul.bf16.gmra.mxu0 %v63
  %v98 = vpop.f32.mrf.mxu0
  %v99 = vadd.f32 0.0, %v98
  %v100 = vpop.f32.mrf.mxu0
  %v101 = vadd.f32 0.0, %v100
  %102 = vdwg.mxu0
  %v103 = vadd.f32 %v24, %v75
  %v104 = vadd.f32 %v25, %v94
  %v105 = vadd.f32 %v26, %v77
  %v106 = vadd.f32 %v27, %v96
  %v107 = vadd.f32 %v28, %v80
  %v108 = vadd.f32 %v29, %v99
  %v109 = vadd.f32 %v30, %v82
  %v110 = vadd.f32 %v31, %v101
  %111 = vst [vmem:[#allocation2] sm:$0xff] %v103
  %112 = vst [vmem:[#allocation2 + $0x8] sm:$0xff] %v104
  %113 = vst [vmem:[#allocation2 + $0x10] sm:$0xff] %v105
  %114 = vst [vmem:[#allocation2 + $0x18] sm:$0xff] %v106
  %115 = vst [vmem:[#allocation2 + $0x20] sm:$0xff] %v107
  %116 = vst [vmem:[#allocation2 + $0x28] sm:$0xff] %v108
  %117 = vst [vmem:[#allocation2 + $0x30] sm:$0xff] %v109
  %118 = vst [vmem:[#allocation2 + $0x38] sm:$0xff] %v110
  // Predicated region
  $region14: #{pan_forward.44} parent=0 // pred_check
    %p119 = pneg %p12
  $region15: #{pan_forward.44} parent=0 // pred_check_branch
    %121 = sbr.rel (%p119) target = $region17
  $region16: #{pan_forward.44} parent=0 // pred_region
    %v122 = vld [vmem:[#allocation2] sm:$0xff]
    %v123 = vld [vmem:[#allocation2 + $0x8] sm:$0xff]
    %v124 = vld [vmem:[#allocation2 + $0x10] sm:$0xff]
    %v125 = vld [vmem:[#allocation2 + $0x18] sm:$0xff]
    %v126 = vld [vmem:[#allocation2 + $0x20] sm:$0xff]
    %v127 = vld [vmem:[#allocation2 + $0x28] sm:$0xff]
    %v128 = vld [vmem:[#allocation2 + $0x30] sm:$0xff]
    %v129 = vld [vmem:[#allocation2 + $0x38] sm:$0xff]
    %130 = vst [vmem:[%s2] sm:$0xff] %v122
    %131 = vst [vmem:[%s2 + $0x8] sm:$0xff] %v123
    %132 = vst [vmem:[%s2 + $0x10] sm:$0xff] %v124
    %133 = vst [vmem:[%s2 + $0x18] sm:$0xff] %v125
    %134 = vst [vmem:[%s2 + $0x20] sm:$0xff] %v126
    %135 = vst [vmem:[%s2 + $0x28] sm:$0xff] %v127
    %136 = vst [vmem:[%s2 + $0x30] sm:$0xff] %v128
    %137 = vst [vmem:[%s2 + $0x38] sm:$0xff] %v129
  $region17: #{pan_forward.44} parent=0 // pred_fallthru
    _
  // Predicated region
  $region18: #{pan_forward.44} parent=0 // pred_check
    _
  $region19: #{pan_forward.44} parent=0 // pred_check_branch
    %139 = sbr.rel (0) target = $region21
  $region20: #{pan_forward.44} parent=0 // pred_region
    _
  $region21: #{pan_forward.44} parent=0 // pred_fallthru
    _
  // Predicated region
  $region22: #{pan_forward.44} parent=0 // pred_check
    _
  $region23: #{pan_forward.44} parent=0 // pred_check_branch
    %141 = sbr.rel (0) target = $region25
  $region24: #{pan_forward.44} parent=0 // pred_region
    _
  $region25: #{pan_forward.44} parent=0 // pred_fallthru
    _

// kernel: pan_forward.45
$region0: #{pan_forward.45}
  #allocation0 [shape = 'u32[]', space=smem, size = 0x4, offset = 0x4, fixed_abs, tag = 'smem constant byte address 0x4 - core index']
  #allocation1 [shape = 'u32[72,128]{1,0:T(1,128)}', space=vmem, size = 0x9000, scoped, tag = 'internal scratch']
  #allocation2 [shape = 'f32[3,512]{1,0:T(4,128)}', space=vmem, size = 0x2000, scoped, tag = 'scratch operand']
  %s0 = inlined_call_operand.vmem [shape: bf16[3,144], index: 0, kind: input, shape index: {}]
  %s1 = inlined_call_operand.vmem [shape: bf16[2,144,1024], index: 1, kind: input, shape index: {}]
  %s2 = inlined_call_operand.vmem [shape: f32[3,1], index: 2, kind: input, shape index: {}]
  %s3 = inlined_call_operand.vmem [shape: f32[2,3,1024], index: 3, kind: input, shape index: {}]
  %s4 = inlined_call_operand.vmem [shape: f32[2,3,1024], index: 4, kind: output, shape index: {}]
  %s5 = sld [smem:[#allocation0]]
  $region80: #{pan_forward.45} parent=0
    _
  %s7 = ssub.s32 1, %s5
  %s8 = scalar_select 0, %s7, %s5
  $region1: #{pan_forward.45} parent=0
    #allocation3 [shape = 'u8[294912]{0}', space=vmem, size = 0x48000, scoped, tag = 'input window, operand 1']
    loop: start=0, step=1, limit=6
    $region2: #{pan_forward.45} parent=1 // loop_pre_header
      _
    $region3: #{pan_forward.45} parent=1 // loop_header
      %s10 = sphi 0, %s14
      %p11 = scmp.ge.s32.totalorder %s10, 6
      %s17 = sphi 0, %s36
      %s18 = sphi 0, %s32
      %s19 = sphi 0, %s28
      %s20 = sphi 0, %s17
      %s21 = sphi 0, %s18
      %s22 = sphi 0, %s19
      %s23 = sphi 0, %s20
      %s24 = sphi 0, %s21
      %s25 = sphi 0, %s22
      %s39 = sphi 0, %s41
      %s42 = sphi 0, %s39
      %s43 = sphi 0, %s42
      %s59 = sphi 0, %s43
      %s69 = sphi 0, %s71
      %s72 = sphi 0, %s69
      %s73 = sphi 0, %s72
      %s89 = sphi 0, %s73
      %s93 = sphi 0, %s93
      %s95 = sphi 0, %s93
      %s96 = sphi 0, %s95
      %s110 = sphi 0, %s96
      %s118 = sphi 0, %s120
      %s121 = sphi 0, %s118
      %s122 = sphi 0, %s121
      %s138 = sphi 0, %s122
      %s146 = sphi 0, %s148
      %s149 = sphi 0, %s146
      %s150 = sphi 0, %s149
      %s166 = sphi 0, %s150
    $region4: #{pan_forward.45} parent=1 // loop_header_branch
      %13 = sbr.rel (%p11) target = $region8
    $region5: #{pan_forward.45} parent=1 // loop_body
      %s15 = ssub.s32 %s10, 1
      %s16 = ssub.s32 %s10, 2
      %s26 = sadd.s32 1, %s19
      %p27 = scmp.ge.s32.totalorder %s26, 1
      %s28 = scalar_select %p27, 0, %s26
      %s29 = sadd.s32 1, %s18
      %s30 = scalar_select %p27, %s29, %s18
      %p31 = scmp.ge.s32.totalorder %s30, 2
      %s32 = scalar_select %p31, 0, %s30
      %s33 = sadd.s32 1, %s17
      %s34 = scalar_select %p31, %s33, %s17
      %p35 = scmp.ge.s32.totalorder %s34, 2
      %s36 = scalar_select %p35, 0, %s34
      %s37 = ssub.s32 %s19, %s28
      %p38 = scmp.eq.s32.totalorder %s37, 0
      %s40 = sadd.s32 %s39, 1
      %s41 = scalar_select %p38, %s39, %s40
      %p44 = pneg %p38
      %p45 = scmp.eq.s32.totalorder %s10, 3
      %p46 = por %p44, %p45
      %p47 = scmp.ne.s32.totalorder %s39, %s42
      %p48 = scmp.eq.s32.totalorder %s10, 0
      %p49 = por %p47, %p48
      %p50 = scmp.ne.s32.totalorder %s39, %s42
      %p51 = scmp.eq.s32.totalorder %s15, 3
      %p52 = por %p50, %p51
      %p53 = scmp.ne.s32.totalorder %s42, %s43
      %p54 = scmp.eq.s32.totalorder %s15, 0
      %p55 = por %p53, %p54
      %p56 = scmp.ne.s32.totalorder %s42, %s43
      %p57 = scmp.eq.s32.totalorder %s16, 3
      %p58 = por %p56, %p57
      %p60 = scmp.ne.s32.totalorder %s43, %s59
      %p61 = scmp.eq.s32.totalorder %s16, 0
      %p62 = por %p60, %p61
      %s63 = ssub.s32 %s17, %s36
      %s64 = ssub.s32 %s19, %s28
      %s65 = sor.u32 %s63, %s64
      %s66 = ssub.s32 %s18, %s32
      %s67 = sor.u32 %s65, %s66
      %p68 = scmp.eq.s32.totalorder %s67, 0
      %s70 = sadd.s32 %s69, 1
      %s71 = scalar_select %p68, %s69, %s70
      %p74 = pneg %p68
      %p75 = scmp.eq.s32.totalorder %s10, 3
      %p76 = por %p74, %p75
      %p77 = scmp.ne.s32.totalorder %s69, %s72
      %p78 = scmp.eq.s32.totalorder %s10, 0
      %p79 = por %p77, %p78
      %p80 = scmp.ne.s32.totalorder %s69, %s72
      %p81 = scmp.eq.s32.totalorder %s15, 3
      %p82 = por %p80, %p81
      %p83 = scmp.ne.s32.totalorder %s72, %s73
      %p84 = scmp.eq.s32.totalorder %s15, 0
      %p85 = por %p83, %p84
      %p86 = scmp.ne.s32.totalorder %s72, %s73
      %p87 = scmp.eq.s32.totalorder %s16, 3
      %p88 = por %p86, %p87
      %p90 = scmp.ne.s32.totalorder %s73, %s89
      %p91 = scmp.eq.s32.totalorder %s16, 0
      %p92 = por %p90, %p91
      %s94 = sadd.s32 %s93, 1
      %p97 = scmp.eq.s32.totalorder %s10, 3
      %p98 = scmp.ne.s32.totalorder %s93, %s95
      %p99 = scmp.eq.s32.totalorder %s10, 0
      %p100 = por %p98, %p99
      %p101 = scmp.ne.s32.totalorder %s93, %s95
      %p102 = scmp.eq.s32.totalorder %s15, 3
      %p103 = por %p101, %p102
      %p104 = scmp.ne.s32.totalorder %s95, %s96
      %p105 = scmp.eq.s32.totalorder %s15, 0
      %p106 = por %p104, %p105
      %p107 = scmp.ne.s32.totalorder %s95, %s96
      %p108 = scmp.eq.s32.totalorder %s16, 3
      %p109 = por %p107, %p108
      %p111 = scmp.ne.s32.totalorder %s96, %s110
      %p112 = scmp.eq.s32.totalorder %s16, 0
      %p113 = por %p111, %p112
      %s114 = ssub.s32 %s17, %s36
      %s115 = ssub.s32 %s18, %s32
      %s116 = sor.u32 %s114, %s115
      %p117 = scmp.eq.s32.totalorder %s116, 0
      %s119 = sadd.s32 %s118, 1
      %s120 = scalar_select %p117, %s118, %s119
      %p123 = pneg %p117
      %p124 = scmp.eq.s32.totalorder %s10, 3
      %p125 = por %p123, %p124
      %p126 = scmp.ne.s32.totalorder %s118, %s121
      %p127 = scmp.eq.s32.totalorder %s10, 0
      %p128 = por %p126, %p127
      %p129 = scmp.ne.s32.totalorder %s118, %s121
      %p130 = scmp.eq.s32.totalorder %s15, 3
      %p131 = por %p129, %p130
      %p132 = scmp.ne.s32.totalorder %s121, %s122
      %p133 = scmp.eq.s32.totalorder %s15, 0
      %p134 = por %p132, %p133
      %p135 = scmp.ne.s32.totalorder %s121, %s122
      %p136 = scmp.eq.s32.totalorder %s16, 3
      %p137 = por %p135, %p136
      %p139 = scmp.ne.s32.totalorder %s122, %s138
      %p140 = scmp.eq.s32.totalorder %s16, 0
      %p141 = por %p139, %p140
      %s142 = ssub.s32 %s17, %s36
      %s143 = ssub.s32 %s18, %s32
      %s144 = sor.u32 %s142, %s143
      %p145 = scmp.eq.s32.totalorder %s144, 0
      %s147 = sadd.s32 %s146, 1
      %s148 = scalar_select %p145, %s146, %s147
      %p151 = pneg %p145
      %p152 = scmp.eq.s32.totalorder %s10, 3
      %p153 = por %p151, %p152
      %p154 = scmp.ne.s32.totalorder %s146, %s149
      %p155 = scmp.eq.s32.totalorder %s10, 0
      %p156 = por %p154, %p155
      %p157 = scmp.ne.s32.totalorder %s146, %s149
      %p158 = scmp.eq.s32.totalorder %s15, 3
      %p159 = por %p157, %p158
      %p160 = scmp.ne.s32.totalorder %s149, %s150
      %p161 = scmp.eq.s32.totalorder %s15, 0
      %p162 = por %p160, %p161
      %p163 = scmp.ne.s32.totalorder %s149, %s150
      %p164 = scmp.eq.s32.totalorder %s16, 3
      %p165 = por %p163, %p164
      %p167 = scmp.ne.s32.totalorder %s150, %s166
      %p168 = scmp.eq.s32.totalorder %s16, 0
      %p169 = por %p167, %p168
      %p170 = scmp.le.s32.totalorder 1, %s10
      %p171 = scmp.lt.s32.totalorder %s10, 5
      %p172 = pnand %p170, %p171
      %p173 = pneg %p172
      // Predicated region
      $region9: #{pan_forward.45} parent=5 // pred_check
        _
      $region10: #{pan_forward.45} parent=5 // pred_check_branch
        %175 = sbr.rel (%p172) target = $region12
      $region11: #{pan_forward.45} parent=5 // pred_region
        %s176 = ssub.s32 %s10, 1
        // Predicated region
        $region13: #{pan_forward.45} parent=11 // pred_check
          %p177 = pneg %p55
        $region14: #{pan_forward.45} parent=11 // pred_check_branch
          %179 = sbr.rel (%p177) target = $region16
        $region15: #{pan_forward.45} parent=11 // pred_region
          %s180 = smul.u32 2, %s22
          %p181 = scmp.lt.s32.totalorder %s180, 1
          %s182 = scalar_select %p181, %s180, 1
          %s183 = smul.addr %s182, 2
          %s184 = scalar_lea.vmem %s0, %s183
          %s185 = smul.u32 2, %s22
        $region16: #{pan_forward.45} parent=11 // pred_fallthru
          _
        // Predicated region
        $region17: #{pan_forward.45} parent=11 // pred_check
          %p186 = pneg %p106
        $region18: #{pan_forward.45} parent=11 // pred_check_branch
          %188 = sbr.rel (%p186) target = $region20
        $region19: #{pan_forward.45} parent=11 // pred_region
          _
        $region20: #{pan_forward.45} parent=11 // pred_fallthru
          _
      $region12: #{pan_forward.45} parent=5 // pred_fallthru
        _
      %p189 = scmp.lt.s32.totalorder %s10, 4
      // Predicated region
      $region21: #{pan_forward.45} parent=5 // pred_check
        %p190 = pneg %p189
      $region22: #{pan_forward.45} parent=5 // pred_check_branch
        %192 = sbr.rel (%p190) target = $region24
      $region23: #{pan_forward.45} parent=5 // pred_region
        // Predicated region
        $region25: #{pan_forward.45} parent=23 // pred_check
          %p193 = pneg %p79
        $region26: #{pan_forward.45} parent=23 // pred_check_branch
          %195 = sbr.rel (%p193) target = $region28
        $region27: #{pan_forward.45} parent=23 // pred_region
          %s196 = sand.u32 %s69, 1
          %s197 = sand.u32 %s69, 1
          %s198 = smul.addr %s197, 288
          %s199 = scalar_lea.vmem [#allocation3], %s198
          %s200 = smul.u32 18, %s19
          %s201 = smul.u32 4, %s18
          %s202 = smul.addr %s200, 8
          %s203 = sadd.s32 %s201, %s202
          %s204 = smul.addr %s17, 144
          %s205 = sadd.s32 %s203, %s204
          %s206 = smul.addr %s205, 4
          %s207 = scalar_lea.vmem %s1, %s206
          // Predicated region
          $region29: #{pan_forward.45} parent=27 // pred_check
            _
          $region30: #{pan_forward.45} parent=27 // pred_check_branch
            %209 = sbr.rel (0) target = $region32
          $region31: #{pan_forward.45} parent=27 // pred_region
            // Predicated region
            $region33: #{pan_forward.45} parent=31 // pred_check
              _
            $region34: #{pan_forward.45} parent=31 // pred_check_branch
              %211 = sbr.rel (0) target = $region36
            $region35: #{pan_forward.45} parent=31 // pred_region
              loop: start=0, step=1, limit=1
              $region37: #{pan_forward.45} parent=35 // loop_pre_header
                _
              $region38: #{pan_forward.45} parent=35 // loop_header
                %s213 = sphi 0, %s217
                %p214 = scmp.ge.s32.totalorder %s213, 1
                %s218 = sphi %s207, %s207
                %s219 = sphi %s199, %s199
              $region39: #{pan_forward.45} parent=35 // loop_header_branch
                %216 = sbr.rel (%p214) target = $region43
              $region40: #{pan_forward.45} parent=35 // loop_body
                %v220 = vld [vmem:[%s218] sm:$0xff]
                %221 = vst [vmem:[%s219] sm:$0xff] %v220
                %v222 = vld [vmem:[%s218 + $0x8] sm:$0xff]
                %223 = vst [vmem:[%s219 + $0x8] sm:$0xff] %v222
                %v224 = vld [vmem:[%s218 + $0x20] sm:$0xff]
                %225 = vst [vmem:[%s219 + $0x10] sm:$0xff] %v224
                %v226 = vld [vmem:[%s218 + $0x28] sm:$0xff]
                %227 = vst [vmem:[%s219 + $0x18] sm:$0xff] %v226
                %v228 = vld [vmem:[%s218 + $0x40] sm:$0xff]
                %229 = vst [vmem:[%s219 + $0x20] sm:$0xff] %v228
                %v230 = vld [vmem:[%s218 + $0x48] sm:$0xff]
                %231 = vst [vmem:[%s219 + $0x28] sm:$0xff] %v230
                %v232 = vld [vmem:[%s218 + $0x60] sm:$0xff]
                %233 = vst [vmem:[%s219 + $0x30] sm:$0xff] %v232
                %v234 = vld [vmem:[%s218 + $0x68] sm:$0xff]
                %235 = vst [vmem:[%s219 + $0x38] sm:$0xff] %v234
                %v236 = vld [vmem:[%s218 + $0x80] sm:$0xff]
                %237 = vst [vmem:[%s219 + $0x40] sm:$0xff] %v236
                %v238 = vld [vmem:[%s218 + $0x88] sm:$0xff]
                %239 = vst [vmem:[%s219 + $0x48] sm:$0xff] %v238
                %v240 = vld [vmem:[%s218 + $0xa0] sm:$0xff]
                %241 = vst [vmem:[%s219 + $0x50] sm:$0xff] %v240
                %v242 = vld [vmem:[%s218 + $0xa8] sm:$0xff]
                %243 = vst [vmem:[%s219 + $0x58] sm:$0xff] %v242
                %v244 = vld [vmem:[%s218 + $0xc0] sm:$0xff]
                %245 = vst [vmem:[%s219 + $0x60] sm:$0xff] %v244
                %v246 = vld [vmem:[%s218 + $0xc8] sm:$0xff]
                %247 = vst [vmem:[%s219 + $0x68] sm:$0xff] %v246
                %v248 = vld [vmem:[%s218 + $0xe0] sm:$0xff]
                %249 = vst [vmem:[%s219 + $0x70] sm:$0xff] %v248
                %v250 = vld [vmem:[%s218 + $0xe8] sm:$0xff]
                %251 = vst [vmem:[%s219 + $0x78] sm:$0xff] %v250
                %v252 = vld [vmem:[%s218 + $0x100] sm:$0xff]
                %253 = vst [vmem:[%s219 + $0x80] sm:$0xff] %v252
                %v254 = vld [vmem:[%s218 + $0x108] sm:$0xff]
                %255 = vst [vmem:[%s219 + $0x88] sm:$0xff] %v254
                %v256 = vld [vmem:[%s218 + $0x120] sm:$0xff]
                %257 = vst [vmem:[%s219 + $0x90] sm:$0xff] %v256
                %v258 = vld [vmem:[%s218 + $0x128] sm:$0xff]
                %259 = vst [vmem:[%s219 + $0x98] sm:$0xff] %v258
                %v260 = vld [vmem:[%s218 + $0x140] sm:$0xff]
                %261 = vst [vmem:[%s219 + $0xa0] sm:$0xff] %v260
                %v262 = vld [vmem:[%s218 + $0x148] sm:$0xff]
                %263 = vst [vmem:[%s219 + $0xa8] sm:$0xff] %v262
                %v264 = vld [vmem:[%s218 + $0x160] sm:$0xff]
                %265 = vst [vmem:[%s219 + $0xb0] sm:$0xff] %v264
                %v266 = vld [vmem:[%s218 + $0x168] sm:$0xff]
                %267 = vst [vmem:[%s219 + $0xb8] sm:$0xff] %v266
                %v268 = vld [vmem:[%s218 + $0x180] sm:$0xff]
                %269 = vst [vmem:[%s219 + $0xc0] sm:$0xff] %v268
                %v270 = vld [vmem:[%s218 + $0x188] sm:$0xff]
                %271 = vst [vmem:[%s219 + $0xc8] sm:$0xff] %v270
                %v272 = vld [vmem:[%s218 + $0x1a0] sm:$0xff]
                %273 = vst [vmem:[%s219 + $0xd0] sm:$0xff] %v272
                %v274 = vld [vmem:[%s218 + $0x1a8] sm:$0xff]
                %275 = vst [vmem:[%s219 + $0xd8] sm:$0xff] %v274
                %v276 = vld [vmem:[%s218 + $0x1c0] sm:$0xff]
                %277 = vst [vmem:[%s219 + $0xe0] sm:$0xff] %v276
                %v278 = vld [vmem:[%s218 + $0x1c8] sm:$0xff]
                %279 = vst [vmem:[%s219 + $0xe8] sm:$0xff] %v278
                %v280 = vld [vmem:[%s218 + $0x1e0] sm:$0xff]
                %281 = vst [vmem:[%s219 + $0xf0] sm:$0xff] %v280
                %v282 = vld [vmem:[%s218 + $0x1e8] sm:$0xff]
                %283 = vst [vmem:[%s219 + $0xf8] sm:$0xff] %v282
                %v284 = vld [vmem:[%s218 + $0x200] sm:$0xff]
                %285 = vst [vmem:[%s219 + $0x100] sm:$0xff] %v284
                %v286 = vld [vmem:[%s218 + $0x208] sm:$0xff]
                %287 = vst [vmem:[%s219 + $0x108] sm:$0xff] %v286
                %v288 = vld [vmem:[%s218 + $0x220] sm:$0xff]
                %289 = vst [vmem:[%s219 + $0x110] sm:$0xff] %v288
                %v290 = vld [vmem:[%s218 + $0x228] sm:$0xff]
                %291 = vst [vmem:[%s219 + $0x118] sm:$0xff] %v290
              $region41: #{pan_forward.45} parent=35 // loop_footer
                %s217 = sadd.s32 1, %s213
              $region42: #{pan_forward.45} parent=35 // loop_footer_branch
                %212 = sbr.rel target = $region38
              $region43: #{pan_forward.45} parent=35 // loop_exit
                _
            $region36: #{pan_forward.45} parent=31 // pred_fallthru
              _
            // Predicated region
            $region44: #{pan_forward.45} parent=31 // pred_check
              _
            $region45: #{pan_forward.45} parent=31 // pred_check_branch
              %293 = sbr.rel target = $region47
            $region46: #{pan_forward.45} parent=31 // pred_region
              _
            $region47: #{pan_forward.45} parent=31 // pred_fallthru
              _
          $region32: #{pan_forward.45} parent=27 // pred_fallthru
            _
          %294 = vnop
        $region28: #{pan_forward.45} parent=23 // pred_fallthru
          _
        // Predicated region
        $region48: #{pan_forward.45} parent=23 // pred_check
          %p295 = pneg %p128
        $region49: #{pan_forward.45} parent=23 // pred_check_branch
          %297 = sbr.rel (%p295) target = $region51
        $region50: #{pan_forward.45} parent=23 // pred_region
          %s298 = smul.u32 4, %s18
          %p299 = scmp.lt.s32.totalorder %s17, 1
          %s300 = scalar_select %p299, %s17, 1
          %p301 = scmp.lt.s32.totalorder %s298, 7
          %s302 = scalar_select %p301, %s298, 7
          %s303 = smul.addr %s300, 8
          %s304 = sadd.s32 %s302, %s303
          %s305 = smul.addr %s304, 4
          %s306 = scalar_lea.vmem %s3, %s305
          %s307 = smul.u32 4, %s18
        $region51: #{pan_forward.45} parent=23 // pred_fallthru
          _
      $region24: #{pan_forward.45} parent=5 // pred_fallthru
        _
      %p308 = scmp.le.s32.totalorder 1, %s10
      %p309 = scmp.lt.s32.totalorder %s10, 5
      %p310 = pnand %p308, %p309
      %p311 = pneg %p310
      // Predicated region
      $region52: #{pan_forward.45} parent=5 // pred_check
        _
      $region53: #{pan_forward.45} parent=5 // pred_check_branch
        %313 = sbr.rel (%p310) target = $region55
      $region54: #{pan_forward.45} parent=5 // pred_region
        %s314 = ssub.s32 %s10, 1
        %s315 = sand.u32 %s72, 1
        %s316 = sand.u32 %s72, 1
        %s317 = smul.addr %s316, 288
        %s318 = scalar_lea.vmem [#allocation3], %s317
        // Predicated region
        $region56: #{pan_forward.45} parent=54 // pred_check
          %p319 = pneg %p85
        $region57: #{pan_forward.45} parent=54 // pred_check_branch
          %321 = sbr.rel (%p319) target = $region59
        $region58: #{pan_forward.45} parent=54 // pred_region
          _
        $region59: #{pan_forward.45} parent=54 // pred_fallthru
          _
        %s322 = smul.u32 2, %s22
        %p323 = scmp.lt.s32.totalorder %s322, 1
        %s324 = scalar_select %p323, %s322, 1
        %s325 = smul.addr %s324, 2
        %s326 = scalar_lea.vmem %s0, %s325
        %p327 = pneg %p55
        %p328 = pneg %p52
        %s329 = sand.u32 %s72, 1
        %s330 = sand.u32 %s72, 1
        %s331 = smul.addr %s330, 288
        %s332 = scalar_lea.vmem [#allocation3], %s331
        %p333 = pneg %p85
        %p334 = pneg %p82
        %p335 = pneg %p106
        %p336 = pneg %p103
        %s337 = smul.u32 4, %s21
        %p338 = scmp.lt.s32.totalorder %s20, 1
        %s339 = scalar_select %p338, %s20, 1
        %p340 = scmp.lt.s32.totalorder %s337, 7
        %s341 = scalar_select %p340, %s337, 7
        %s342 = smul.addr %s339, 8
        %s343 = sadd.s32 %s341, %s342
        %s344 = smul.addr %s343, 4
        %s345 = scalar_lea.vmem %s3, %s344
        %p346 = pneg %p134
        %p347 = pneg %p131
        %p348 = pneg %p162
        %p349 = pneg %p159
        %s350 = smul.u32 4, %s21
        %p351 = scmp.lt.s32.totalorder %s20, 1
        %s352 = scalar_select %p351, %s20, 1
        %p353 = scmp.lt.s32.totalorder %s350, 7
        %s354 = scalar_select %p353, %s350, 7
        %s355 = smul.addr %s352, 8
        %s356 = sadd.s32 %s354, %s355
        %s357 = smul.addr %s356, 4
        %s358 = scalar_lea.vmem %s4, %s357
        %s359 = smul.u32 2, %s22
        %p360 = scmp.lt.s32.totalorder %s359, 1
        %s361 = scalar_select %p360, %s359, 1
        %s362 = smul.addr %s361, 2
        %s363 = scalar_lea.vmem %s0, %s362
        %s364 = smul.u32 2, %s22
        %s365 = smul.u32 18, %s22
        %s366 = smul.u32 4, %s21
        %s367 = smul.u32 4, %s21
        %p368 = scmp.lt.s32.totalorder %s20, 1
        %s369 = scalar_select %p368, %s20, 1
        %p370 = scmp.lt.s32.totalorder %s367, 7
        %s371 = scalar_select %p370, %s367, 7
        %s372 = smul.addr %s369, 8
        %s373 = sadd.s32 %s371, %s372
        %s374 = smul.addr %s373, 4
        %s375 = scalar_lea.vmem %s3, %s374
        %s376 = smul.u32 4, %s21
        %s377 = smul.u32 4, %s21
        %p378 = scmp.lt.s32.totalorder %s20, 1
        %s379 = scalar_select %p378, %s20, 1
        %p380 = scmp.lt.s32.totalorder %s377, 7
        %s381 = scalar_select %p380, %s377, 7
        %s382 = smul.addr %s379, 8
        %s383 = sadd.s32 %s381, %s382
        %s384 = smul.addr %s383, 4
        %s385 = scalar_lea.vmem %s4, %s384
        %s386 = smul.u32 4, %s21
        %p388 = scmp.eq.s32.totalorder %s22, 0
        // Predicated region
        $region60: #{pan_forward.45} parent=54 // pred_check
          %p389 = pneg %p388
        $region61: #{pan_forward.45} parent=54 // pred_check_branch
          %391 = sbr.rel (%p389) target = $region63
        $region62: #{pan_forward.45} parent=54 // pred_region
          %392 = vst [vmem:[#allocation2] sm:$0x77] 0.0
          %393 = vst [vmem:[#allocation2 + $0x8] sm:$0x77] 0.0
        $region63: #{pan_forward.45} parent=54 // pred_fallthru
          _
        %v394 = vld [vmem:[#allocation2] sm:$0x77]
        %v395 = vld [vmem:[#allocation2 + $0x8] sm:$0x77]
        %v396 = vld [vmem:[%s363] sm:$0xf]
        %v397 = vld [vmem:[%s318] sm:$0xff]
        %v398 = vld [vmem:[%s318 + $0x8] sm:$0xff]
        %v399 = vld [vmem:[%s318 + $0x10] sm:$0xff]
        %v400 = vld [vmem:[%s318 + $0x18] sm:$0xff]
        %v401 = vld [vmem:[%s318 + $0x20] sm:$0xff]
        %v402 = vld [vmem:[%s318 + $0x28] sm:$0xff]
        %v403 = vld [vmem:[%s318 + $0x30] sm:$0xff]
        %v404 = vld [vmem:[%s318 + $0x38] sm:$0xff]
        %v405 = vld [vmem:[%s318 + $0x40] sm:$0xff]
        %v406 = vld [vmem:[%s318 + $0x48] sm:$0xff]
        %v407 = vld [vmem:[%s318 + $0x50] sm:$0xff]
        %v408 = vld [vmem:[%s318 + $0x58] sm:$0xff]
        %v409 = vld [vmem:[%s318 + $0x60] sm:$0xff]
        %v410 = vld [vmem:[%s318 + $0x68] sm:$0xff]
        %v411 = vld [vmem:[%s318 + $0x70] sm:$0xff]
        %v412 = vld [vmem:[%s318 + $0x78] sm:$0xff]
        %v413 = vld [vmem:[%s318 + $0x80] sm:$0xff]
        %v414 = vld [vmem:[%s318 + $0x88] sm:$0xff]
        %v415 = vld [vmem:[%s318 + $0x90] sm:$0xff]
        %v416 = vld [vmem:[%s318 + $0x98] sm:$0xff]
        %v417 = vld [vmem:[%s318 + $0xa0] sm:$0xff]
        %v418 = vld [vmem:[%s318 + $0xa8] sm:$0xff]
        %v419 = vld [vmem:[%s318 + $0xb0] sm:$0xff]
        %v420 = vld [vmem:[%s318 + $0xb8] sm:$0xff]
        %v421 = vld [vmem:[%s318 + $0xc0] sm:$0xff]
        %v422 = vld [vmem:[%s318 + $0xc8] sm:$0xff]
        %v423 = vld [vmem:[%s318 + $0xd0] sm:$0xff]
        %v424 = vld [vmem:[%s318 + $0xd8] sm:$0xff]
        %v425 = vld [vmem:[%s318 + $0xe0] sm:$0xff]
        %v426 = vld [vmem:[%s318 + $0xe8] sm:$0xff]
        %v427 = vld [vmem:[%s318 + $0xf0] sm:$0xff]
        %v428 = vld [vmem:[%s318 + $0xf8] sm:$0xff]
        %v429 = vld [vmem:[%s318 + $0x100] sm:$0xff]
        %v430 = vld [vmem:[%s318 + $0x108] sm:$0xff]
        %v431 = vld [vmem:[%s318 + $0x110] sm:$0xff]
        %v432 = vld [vmem:[%s318 + $0x118] sm:$0xff]
        %434 = vst [vmem:[#allocation1] ss:$4 sm:$0xff] %v396
        %v435 = vld.sshfl [vmem:[#allocation1] sm:$0xff pattern:$0x73625140]
        %v436 = vld.sshfl [vmem:[#allocation1 + $0x8] sm:$0xff pattern:$0x73625140]
        %v474 = vunpack.c.l.b16 %v397
        %v475 = vunpack.c.h.b16 %v397
        %v476 = vunpack.c.l.b16 %v398
        %v477 = vunpack.c.h.b16 %v398
        %v478 = vunpack.c.l.b16 %v399
        %v479 = vunpack.c.h.b16 %v399
        %v480 = vunpack.c.l.b16 %v400
        %v481 = vunpack.c.h.b16 %v400
        %v482 = vunpack.c.l.b16 %v401
        %v483 = vunpack.c.h.b16 %v401
        %v484 = vunpack.c.l.b16 %v402
        %v485 = vunpack.c.h.b16 %v402
        %v486 = vunpack.c.l.b16 %v403
        %v487 = vunpack.c.h.b16 %v403
        %v488 = vunpack.c.l.b16 %v404
        %v489 = vunpack.c.h.b16 %v404
        %v490 = vunpack.c.l.b16 %v405
        %v491 = vunpack.c.h.b16 %v405
        %v492 = vunpack.c.l.b16 %v406
        %v493 = vunpack.c.h.b16 %v406
        %v494 = vunpack.c.l.b16 %v407
        %v495 = vunpack.c.h.b16 %v407
        %v496 = vunpack.c.l.b16 %v408
        %v497 = vunpack.c.h.b16 %v408
        %v498 = vunpack.c.l.b16 %v409
        %v499 = vunpack.c.h.b16 %v409
        %v500 = vunpack.c.l.b16 %v410
        %v501 = vunpack.c.h.b16 %v410
        %v502 = vunpack.c.l.b16 %v411
        %v503 = vunpack.c.h.b16 %v411
        %v504 = vunpack.c.l.b16 %v412
        %v505 = vunpack.c.h.b16 %v412
        %v506 = vunpack.c.l.b16 %v413
        %v507 = vunpack.c.h.b16 %v413
        %v508 = vunpack.c.l.b16 %v414
        %v509 = vunpack.c.h.b16 %v414
        %v510 = vunpack.c.l.b16 %v415
        %v511 = vunpack.c.h.b16 %v415
        %v512 = vunpack.c.l.b16 %v416
        %v513 = vunpack.c.h.b16 %v416
        %v514 = vunpack.c.l.b16 %v417
        %v515 = vunpack.c.h.b16 %v417
        %v516 = vunpack.c.l.b16 %v418
        %v517 = vunpack.c.h.b16 %v418
        %v518 = vunpack.c.l.b16 %v419
        %v519 = vunpack.c.h.b16 %v419
        %v520 = vunpack.c.l.b16 %v420
        %v521 = vunpack.c.h.b16 %v420
        %v522 = vunpack.c.l.b16 %v421
        %v523 = vunpack.c.h.b16 %v421
        %v524 = vunpack.c.l.b16 %v422
        %v525 = vunpack.c.h.b16 %v422
        %v526 = vunpack.c.l.b16 %v423
        %v527 = vunpack.c.h.b16 %v423
        %v528 = vunpack.c.l.b16 %v424
        %v529 = vunpack.c.h.b16 %v424
        %v530 = vunpack.c.l.b16 %v425
        %v531 = vunpack.c.h.b16 %v425
        %v532 = vunpack.c.l.b16 %v426
        %v533 = vunpack.c.h.b16 %v426
        %v534 = vunpack.c.l.b16 %v427
        %v535 = vunpack.c.h.b16 %v427
        %v536 = vunpack.c.l.b16 %v428
        %v537 = vunpack.c.h.b16 %v428
        %v538 = vunpack.c.l.b16 %v429
        %v539 = vunpack.c.h.b16 %v429
        %v540 = vunpack.c.l.b16 %v430
        %v541 = vunpack.c.h.b16 %v430
        %v542 = vunpack.c.l.b16 %v431
        %v543 = vunpack.c.h.b16 %v431
        %v544 = vunpack.c.l.b16 %v432
        %v545 = vunpack.c.h.b16 %v432
        %v546 = vpack.c.b16 %v478, %v474
        %v547 = vpack.c.b16 %v479, %v475
        %v548 = vpack.c.b16 %v480, %v476
        %v549 = vpack.c.b16 %v481, %v477
        %v550 = vpack.c.b16 %v486, %v482
        %v551 = vpack.c.b16 %v487, %v483
        %v552 = vpack.c.b16 %v488, %v484
        %v553 = vpack.c.b16 %v489, %v485
        %v554 = vpack.c.b16 %v494, %v490
        %v555 = vpack.c.b16 %v495, %v491
        %v556 = vpack.c.b16 %v496, %v492
        %v557 = vpack.c.b16 %v497, %v493
        %v558 = vpack.c.b16 %v502, %v498
        %v559 = vpack.c.b16 %v503, %v499
        %v560 = vpack.c.b16 %v504, %v500
        %v561 = vpack.c.b16 %v505, %v501
        %v562 = vpack.c.b16 %v510, %v506
        %v563 = vpack.c.b16 %v511, %v507
        %v564 = vpack.c.b16 %v512, %v508
        %v565 = vpack.c.b16 %v513, %v509
        %v566 = vpack.c.b16 %v518, %v514
        %v567 = vpack.c.b16 %v519, %v515
        %v568 = vpack.c.b16 %v520, %v516
        %v569 = vpack.c.b16 %v521, %v517
        %v570 = vpack.c.b16 %v526, %v522
        %v571 = vpack.c.b16 %v527, %v523
        %v572 = vpack.c.b16 %v528, %v524
        %v573 = vpack.c.b16 %v529, %v525
        %v574 = vpack.c.b16 %v534, %v530
        %v575 = vpack.c.b16 %v535, %v531
        %v576 = vpack.c.b16 %v536, %v532
        %v577 = vpack.c.b16 %v537, %v533
        %v578 = vpack.c.b16 %v542, %v538
        %v579 = vpack.c.b16 %v543, %v539
        %v580 = vpack.c.b16 %v544, %v540
        %v581 = vpack.c.b16 %v545, %v541
        %vm618 = vcmask 130048
        %v619 = vsel %vm618, %v436, 0
        %621 = vmatpush.bf16.msra.mxu0 %v574
        %622 = vmatpush.bf16.msra.mxu0 %v570
        %623 = vmatpush.bf16.msra.mxu0 %v566
        %624 = vmatpush.bf16.msra.mxu0 %v562
        %625 = vmatpush.bf16.msra.mxu0 %v558
        %626 = vmatpush.bf16.msra.mxu0 %v554
        %627 = vmatpush.bf16.msra.mxu0 %v550
        %628 = vmatpush.bf16.msra.mxu0 %v546
        %629 = vmatmul.bf16.gmra.mxu0 %v435
        %v630 = vpop.f32.mrf.mxu0
        %v631 = vadd.f32 0.0, %v630
        %v632 = vpop.f32.mrf.mxu0
        %633 = vdwg.mxu0
        %634 = vmatpush.bf16.msra.mxu0 0
        %635 = vmatpush.bf16.msra.mxu0 0
        %636 = vmatpush.bf16.msra.mxu0 0
        %637 = vmatpush.bf16.msra.mxu0 0
        %638 = vmatpush.bf16.msra.mxu0 0
        %639 = vmatpush.bf16.msra.mxu0 0
        %640 = vmatpush.bf16.msra.mxu0 0
        %641 = vmatpush.bf16.msra.mxu0 %v578
        %642 = vmatmul.bf16.gmra.mxu0 %v619
        %v643 = vpop.f32.mrf.mxu0
        %v644 = vadd.f32 %v631, %v643
        %v645 = vpop.f32.mrf.mxu0
        %646 = vdwg.mxu0
        %647 = vmatpush.bf16.msra.mxu0 %v575
        %648 = vmatpush.bf16.msra.mxu0 %v571
        %649 = vmatpush.bf16.msra.mxu0 %v567
        %650 = vmatpush.bf16.msra.mxu0 %v563
        %651 = vmatpush.bf16.msra.mxu0 %v559
        %652 = vmatpush.bf16.msra.mxu0 %v555
        %653 = vmatpush.bf16.msra.mxu0 %v551
        %654 = vmatpush.bf16.msra.mxu0 %v547
        %655 = vmatmul.bf16.gmra.mxu0 %v435
        %v656 = vpop.f32.mrf.mxu0
        %v657 = vadd.f32 0.0, %v656
        %v658 = vpop.f32.mrf.mxu0
        %659 = vdwg.mxu0
        %660 = vmatpush.bf16.msra.mxu0 0
        %661 = vmatpush.bf16.msra.mxu0 0
        %662 = vmatpush.bf16.msra.mxu0 0
        %663 = vmatpush.bf16.msra.mxu0 0
        %664 = vmatpush.bf16.msra.mxu0 0
        %665 = vmatpush.bf16.msra.mxu0 0
        %666 = vmatpush.bf16.msra.mxu0 0
        %667 = vmatpush.bf16.msra.mxu0 %v579
        %668 = vmatmul.bf16.gmra.mxu0 %v619
        %v669 = vpop.f32.mrf.mxu0
        %v670 = vadd.f32 %v657, %v669
        %v671 = vpop.f32.mrf.mxu0
        %672 = vdwg.mxu0
        %673 = vmatpush.bf16.msra.mxu0 %v576
        %674 = vmatpush.bf16.msra.mxu0 %v572
        %675 = vmatpush.bf16.msra.mxu0 %v568
        %676 = vmatpush.bf16.msra.mxu0 %v564
        %677 = vmatpush.bf16.msra.mxu0 %v560
        %678 = vmatpush.bf16.msra.mxu0 %v556
        %679 = vmatpush.bf16.msra.mxu0 %v552
        %680 = vmatpush.bf16.msra.mxu0 %v548
        %681 = vmatmul.bf16.gmra.mxu0 %v435
        %v682 = vpop.f32.mrf.mxu0
        %v683 = vadd.f32 0.0, %v682
        %v684 = vpop.f32.mrf.mxu0
        %685 = vdwg.mxu0
        %686 = vmatpush.bf16.msra.mxu0 0
        %687 = vmatpush.bf16.msra.mxu0 0
        %688 = vmatpush.bf16.msra.mxu0 0
        %689 = vmatpush.bf16.msra.mxu0 0
        %690 = vmatpush.bf16.msra.mxu0 0
        %691 = vmatpush.bf16.msra.mxu0 0
        %692 = vmatpush.bf16.msra.mxu0 0
        %693 = vmatpush.bf16.msra.mxu0 %v580
        %694 = vmatmul.bf16.gmra.mxu0 %v619
        %v695 = vpop.f32.mrf.mxu0
        %v696 = vadd.f32 %v683, %v695
        %v697 = vpop.f32.mrf.mxu0
        %698 = vdwg.mxu0
        %699 = vmatpush.bf16.msra.mxu0 %v577
        %700 = vmatpush.bf16.msra.mxu0 %v573
        %701 = vmatpush.bf16.msra.mxu0 %v569
        %702 = vmatpush.bf16.msra.mxu0 %v565
        %703 = vmatpush.bf16.msra.mxu0 %v561
        %704 = vmatpush.bf16.msra.mxu0 %v557
        %705 = vmatpush.bf16.msra.mxu0 %v553
        %706 = vmatpush.bf16.msra.mxu0 %v549
        %707 = vmatmul.bf16.gmra.mxu0 %v435
        %v708 = vpop.f32.mrf.mxu0
        %v709 = vadd.f32 0.0, %v708
        %v710 = vpop.f32.mrf.mxu0
        %711 = vdwg.mxu0
        %712 = vmatpush.bf16.msra.mxu0 0
        %713 = vmatpush.bf16.msra.mxu0 0
        %714 = vmatpush.bf16.msra.mxu0 0
        %715 = vmatpush.bf16.msra.mxu0 0
        %716 = vmatpush.bf16.msra.mxu0 0
        %717 = vmatpush.bf16.msra.mxu0 0
        %718 = vmatpush.bf16.msra.mxu0 0
        %719 = vmatpush.bf16.msra.mxu0 %v581
        %720 = vmatmul.bf16.gmra.mxu0 %v619
        %v721 = vpop.f32.mrf.mxu0
        %v722 = vadd.f32 %v709, %v721
        %v723 = vpop.f32.mrf.mxu0
        %724 = vdwg.mxu0
        %v729 = vrot.slane %v670, 4
        %v730 = vrot.slane %v722, 4
        %vm731 = vcmask 1043456
        %v732 = vsel %vm731, %v644, %v729
        %v733 = vsel %vm731, %v696, %v730
        %v736 = vadd.f32 %v394, %v732
        %v737 = vadd.f32 %v395, %v733
        %738 = vst [vmem:[#allocation2] sm:$0x77] %v736
        %739 = vst [vmem:[#allocation2 + $0x8] sm:$0x77] %v737
        // Predicated region
        $region64: #{pan_forward.45} parent=54 // pred_check
          %p740 = pneg %p388
        $region65: #{pan_forward.45} parent=54 // pred_check_branch
          %742 = sbr.rel (%p740) target = $region67
        $region66: #{pan_forward.45} parent=54 // pred_region
          %v743 = vld [vmem:[#allocation2] sm:$0x77]
          %v744 = vld [vmem:[#allocation2 + $0x8] sm:$0x77]
          %v745 = vld [vmem:[%s2] sm:$0x7]
          %747 = vset.pattern.permute.xlu0 0
          %748 = vperm.xlu0 %747, %v745
          %v749 = vpop.permute.xlu0 %748
          %v751 = vunpack.c.l.s4 839922192
          %v752 = vunpack.c.0.s8 %v751
          %v753 = vperm.slane %v749, %v752
          %v755 = vadd.f32 %v743, %v753
          %v756 = vadd.f32 %v744, %v753
          %v757 = vld [vmem:[%s375] sm:$0x77]
          %v758 = vld [vmem:[%s375 + $0x8] sm:$0x77]
          %v759 = vadd.f32 %v755, %v757
          %v760 = vadd.f32 %v756, %v758
          %761 = vst [vmem:[%s385] sm:$0x77] %v759
          %762 = vst [vmem:[%s385 + $0x8] sm:$0x77] %v760
        $region67: #{pan_forward.45} parent=54 // pred_fallthru
          _
        %s763 = smul.u32 4, %s21
        %p764 = scmp.lt.s32.totalorder %s20, 1
        %s765 = scalar_select %p764, %s20, 1
        %p766 = scmp.lt.s32.totalorder %s763, 7
        %s767 = scalar_select %p766, %s763, 7
        %s768 = smul.addr %s765, 8
        %s769 = sadd.s32 %s767, %s768
        %s770 = smul.addr %s769, 4
        %s771 = scalar_lea.vmem %s4, %s770
        // Predicated region
        $region68: #{pan_forward.45} parent=54 // pred_check
          %p772 = pneg %p159
        $region69: #{pan_forward.45} parent=54 // pred_check_branch
          %774 = sbr.rel (%p772) target = $region71
        $region70: #{pan_forward.45} parent=54 // pred_region
          %s775 = smul.u32 4, %s21
        $region71: #{pan_forward.45} parent=54 // pred_fallthru
          _
      $region55: #{pan_forward.45} parent=5 // pred_fallthru
        _
      %p776 = scmp.le.s32.totalorder 2, %s10
      // Predicated region
      $region72: #{pan_forward.45} parent=5 // pred_check
        %p777 = pneg %p776
      $region73: #{pan_forward.45} parent=5 // pred_check_branch
        %779 = sbr.rel (%p777) target = $region75
      $region74: #{pan_forward.45} parent=5 // pred_region
        %s780 = ssub.s32 %s10, 2
        // Predicated region
        $region76: #{pan_forward.45} parent=74 // pred_check
          %p781 = pneg %p165
        $region77: #{pan_forward.45} parent=74 // pred_check_branch
          %783 = sbr.rel (%p781) target = $region79
        $region78: #{pan_forward.45} parent=74 // pred_region
          %s784 = smul.u32 4, %s24
          %p785 = scmp.lt.s32.totalorder %s23, 1
          %s786 = scalar_select %p785, %s23, 1
          %p787 = scmp.lt.s32.totalorder %s784, 7
          %s788 = scalar_select %p787, %s784, 7
          %s789 = smul.addr %s786, 8
          %s790 = sadd.s32 %s788, %s789
          %s791 = smul.addr %s790, 4
          %s792 = scalar_lea.vmem %s4, %s791
        $region79: #{pan_forward.45} parent=74 // pred_fallthru
          _
      $region75: #{pan_forward.45} parent=5 // pred_fallthru
        _
    $region6: #{pan_forward.45} parent=1 // loop_footer
      %s14 = sadd.s32 1, %s10
    $region7: #{pan_forward.45} parent=1 // loop_footer_branch
      %9 = sbr.rel target = $region3
    $region8: #{pan_forward.45} parent=1 // loop_exit
      _

</llo_original>
